<compile_context>
chip_gen: v5e
topology: v5e:2x2
jax: 0.10.0
libtpu: 0.0.40
codegen_flags: <defaults>
</compile_context>

<pallas_src>
import math
import jax
import jax.numpy as jnp
from jax.experimental import pallas as pl
from jax.experimental.pallas import tpu as pltpu

# ----------------------------- YIN configuration -----------------------------
SR         = 16000
DOWN_SR    = 16000          # sr == down_sr -> AF.resample is the identity
FRAME_TIME = 0.01
FREQ_MIN   = 75.0
FREQ_MAX   = 600.0
THRESHOLD  = 0.2
MEDIAN_WIN = 3

STRIDES = int(DOWN_SR * FRAME_TIME)                 # 160
TMAX    = int(DOWN_SR // FREQ_MIN)                  # 213
TMIN    = int(DOWN_SR // FREQ_MAX)                  # 26
C       = TMAX - TMIN                               # 187
W       = int(2 ** math.ceil(math.log2(TMAX))) + 1  # 257

# ---- lag-loop tiling ----
NUM_GROUPS = (TMAX + 7) // 8                        # 27 groups of 8 lags
TMAX_PAD   = NUM_GROUPS * 8                         # 216
KW         = ((W + 7) // 8) * 8                     # 264  zero-padded frame length
SEG        = KW + 8                                 # 272  rows per shifted-base segment

# TODO(synk): torchaudio sinc resampling (sr != down_sr) is not implemented; we pin
#             sr == down_sr so the resample step is exactly the identity.


def _make_buckets(groups_per_bucket=4):
    """Buckets of lag groups sharing one static (trimmed) window length.

    For group g (lags 8g .. 8g+7) the lag products vanish for time rows >= W - 8g,
    so the window only needs round8(W - 8g) rows.  Bucketing keeps the emitted code
    small while recovering most of the redundant autocorrelation work.
    """
    buckets = []
    g = 0
    while g < NUM_GROUPS:
        g_stop = min(g + groups_per_bucket, NUM_GROUPS)
        need = W if g == 0 else (W - 8 * g)          # max valid rows within the bucket
        glen = ((need + 7) // 8) * 8
        buckets.append((g, g_stop, glen))
        g = g_stop
    return tuple(buckets)


AC_BUCKETS = _make_buckets(4)
# time rows of fpT actually read by the kernel (window reads + the base read)
P_PAD = max(KW, max(8 * (g_stop - 1) + glen for (_, g_stop, glen) in AC_BUCKETS))
P_PAD = ((P_PAD + 7) // 8) * 8                      # 288


def yin_kernel(fpT_ref, d_ref, trit_ref, out_ref, corr_ref, sbase_ref):
    """Per-lane (per-frame) YIN for one tile of `F` frames.

    fpT_ref  : (P_PAD, F)         frame samples, time on sublanes, frames on lanes
                                  (rows >= W are the zero-extension of each frame)
    d_ref    : (TMAX, KW)         constant-folded  flip+total-prefix  difference matrix
    trit_ref : (TMAX-1, TMAX-1)   lower-triangular ones -> lag cumsum via MXU
    out_ref  : (1, F)             per-frame pitch (Hz), lane-dense
    corr_ref : (TMAX_PAD, F)      VMEM scratch, autocorrelation per lag
    sbase_ref: (8*SEG, F)         VMEM scratch, 8 sub-lag-shifted copies of the base frame
    """
    F = fpT_ref.shape[1]
    f32 = jnp.float32

    # ---- build the 8 sub-lag shifted copies of the base frame (once per tile) -------
    # segment j:  sbase[j*SEG + j + k, n] = fpT[k, n]   (k < KW), leading j rows zero.
    base = fpT_ref[0:KW, :]                                   # (KW, F); rows >= W are 0
    zero8 = jnp.zeros((8, F), f32)
    sbase_ref[pl.ds(0, KW), :] = base                         # j = 0: aligned store
    for j in range(1, 8):
        sbase_ref[pl.ds(j * SEG, 8), :] = zero8               # only the gap rows need 0s
        sbase_ref[pl.ds(j * SEG + j, KW), :] = base           # one-time shifted store

    # ---- autocorrelation: corr[t, n] = sum_i s[i, n] * s[i + t, n], 8 lags / trip ----
    # Window trimmed to the valid overlap per bucket; time reduction on VPU/XLU
    # (no fp32->bf16 emulated MXU matmuls in the hot loop).
    for (g0, g1, glen) in AC_BUCKETS:
        @pl.loop(g0, g1)
        def _(g, glen=glen):
            start = pl.multiple_of(g * 8, 8)
            win = fpT_ref[pl.ds(start, glen), :]              # (glen, F) aligned load
            rows = []
            for j in range(8):                                # unrolled inner lags
                prod = sbase_ref[pl.ds(j * SEG, glen), :] * win        # VPU
                rows.append(jnp.sum(prod, axis=0, keepdims=True))      # VPU adds + XLU
            corr_ref[pl.ds(start, 8), :] = jnp.concatenate(rows, axis=0)  # aligned store

    # ---- cumulative mean normalized difference (CMND) --------------------------------
    sig = fpT_ref[0:KW, :]
    energy = sig * sig                                        # (KW, F), rows >= W are 0
    corr = corr_ref[0:TMAX, :]                                # (TMAX, F)
    diff = jnp.dot(d_ref[...], energy,
                   preferred_element_type=f32) - 2.0 * corr   # (TMAX, F)

    d1 = diff[1:, :]                                          # (TMAX-1, F)
    cumd = jnp.dot(trit_ref[...], d1, preferred_element_type=f32)      # (TMAX-1, F)
    lag = (jax.lax.broadcasted_iota(jnp.int32, (TMAX - 1, 1), 0) + 1).astype(f32)
    cumdiff = d1 / (cumd + 1e-7) * lag
    ones_f = jnp.ones((1, F), f32)
    cmnd = jnp.concatenate([ones_f, cumdiff], axis=0)[TMIN:, :]        # (C, F)

    # ---- pitch sampling ---------------------------------------------------------------
    idx = jax.lax.broadcasted_iota(jnp.int32, (C, F), 0)

    # first lag below threshold (torch: argmax of bool, 0 -> C)
    below = cmnd < THRESHOLD
    ti = jnp.min(jnp.where(below, idx, C), axis=0, keepdims=True)      # (1, F)
    ti = jnp.where(ti == 0, C, ti)
    thold = ti <= idx                                                  # (C, F)

    # local minima of cmnd (localmin)
    dstep = cmnd[1:, :] - cmnd[:-1, :]                                 # (C-1, F)
    zrow = jnp.zeros((1, F), f32)
    dleft = jnp.concatenate([zrow, dstep], axis=0)
    dright = jnp.concatenate([dstep, zrow], axis=0)
    lmin = (dleft <= 0.0) & (dright >= 0.0)

    cand = thold & lmin
    tau = jnp.min(jnp.where(cand, idx, C), axis=0, keepdims=True)      # (1, F)
    tau = jnp.where(tau == C, 0, tau)
    # NOTE: torch's `tau[tau == C - 1] == 0` is a comparison (a no-op); reproduced as no-op.

    # parabolic interpolation (guarded denominator; identical under the select)
    p_ = cmnd[:-2, :]
    c_ = cmnd[1:-1, :]
    n_ = cmnd[2:, :]
    a = n_ + p_ - 2.0 * c_
    b = 0.5 * (n_ - p_)
    a_safe = jnp.where(a == 0.0, 1.0, a)
    shifts = jnp.where(jnp.abs(b) >= jnp.abs(a), 0.0, -b / a_safe)
    pshifts = jnp.concatenate([zrow, shifts, zrow], axis=0)            # (C, F)

    # gather pshifts at tau via one-hot reduction
    ps_tau = jnp.sum(jnp.where(idx == tau, pshifts, 0.0), axis=0, keepdims=True)  # (1, F)

    period = tau.astype(f32) + float(TMIN + 1) + ps_tau
    out_ref[...] = jnp.where(tau > 0, float(DOWN_SR) / period, 0.0)    # (1, F) lane-dense


def _pick_lane_tile(n_lanes):
    """Frames (lanes) per grid step: big enough to amortize per-step overhead,
    small enough to keep >= 2 grid steps (v7x megacore) and a modest VMEM footprint."""
    tiles128 = (n_lanes + 127) // 128
    return 128 * max(1, min(4, tiles128 // 2))


@jax.jit
def yin_pitch(x):
    """x: [B, T] float32 audio -> [B, T//STRIDES + 1 - MEDIAN_WIN + 1] pitch (Hz)."""
    x = x.astype(jnp.float32)
    B, T = x.shape
    n_frames = T // STRIDES + 1
    S = n_frames - MEDIAN_WIN + 1

    # framing: F.pad(down, [0, w]).unfold(-1, w, strides), built as one vectorized gather
    padded = jnp.pad(x, ((0, 0), (0, W)))                              # (B, T+W)
    gidx = jnp.arange(n_frames)[None, :] * STRIDES + jnp.arange(W)[:, None]   # (W, F)
    framesT = padded[:, gidx]                                          # (B, W, F)
    framesT = jnp.transpose(framesT, (1, 0, 2)).reshape(W, B * n_frames)      # (W, B*F)

    # lane packing: batch x frames on lanes, padded to a multiple of LANE_TILE;
    # time rows >= W are the zero-extension of each frame (needed for shifted windows).
    L = B * n_frames
    lane_tile = _pick_lane_tile(L)
    L_pad = ((L + lane_tile - 1) // lane_tile) * lane_tile
    fpT = jnp.pad(framesT, ((0, P_PAD - W), (0, L_pad - L)))           # (P_PAD, L_pad)

    # constant-folded difference matrix:
    #   diff = flip(cumsum[-TMAX:]) + cumsum[-1] - cumsum[:TMAX] - 2*corr == D@energy - 2*corr
    ivec = jnp.arange(W)[None, :]
    tvec = jnp.arange(TMAX)[:, None]
    D = ((ivec <= (W - 1 - tvec)).astype(jnp.float32)
         + 1.0
         - (ivec <= tvec).astype(jnp.float32))                         # (TMAX, W)
    D = jnp.pad(D, ((0, 0), (0, KW - W)))                              # (TMAX, KW)
    tri_t = jnp.tril(jnp.ones((TMAX - 1, TMAX - 1), jnp.float32))

    pitch = pl.pallas_call(
        yin_kernel,
        out_shape=jax.ShapeDtypeStruct((1, L_pad), jnp.float32),
        grid_spec=pltpu.PrefetchScalarGridSpec(
            num_scalar_prefetch=0,
            grid=(L_pad // lane_tile,),
            in_specs=[
                pl.BlockSpec((P_PAD, lane_tile), lambda i: (0, i)),
                pl.BlockSpec((TMAX, KW), lambda i: (0, 0)),
                pl.BlockSpec((TMAX - 1, TMAX - 1), lambda i: (0, 0)),
            ],
            out_specs=pl.BlockSpec((1, lane_tile), lambda i: (0, i)),
            scratch_shapes=[
                pltpu.VMEM((TMAX_PAD, lane_tile), jnp.float32),        # corr
                pltpu.VMEM((8 * SEG, lane_tile), jnp.float32),         # shifted bases
            ],
        ),
        compiler_params=pltpu.CompilerParams(
            dimension_semantics=("parallel",),
            vmem_limit_bytes=48 * 1024 * 1024,
        ),
    )(fpT, D, tri_t)

    # unpack lanes -> (B, n_frames), drop padded lanes
    pitch = pitch[0, :L].reshape(B, n_frames)

    # median smoothing, window = 3 (cross-frame, trivial -> JAX glue): med3 = sum - max - min
    x0 = pitch[:, 0:S]
    x1 = pitch[:, 1:S + 1]
    x2 = pitch[:, 2:S + 2]
    mx = jnp.maximum(jnp.maximum(x0, x1), x2)
    mn = jnp.minimum(jnp.minimum(x0, x1), x2)
    return x0 + x1 + x2 - mx - mn


if __name__ == "__main__":
    key = jax.random.PRNGKey(0)
    B, T = 2, 1600                       # small input: 0.1 s of 16 kHz audio per item
    x = jax.random.normal(key, (B, T), dtype=jnp.float32)

    pitch = yin_pitch(x)
    jax.block_until_ready(pitch)

    expected_S = T // STRIDES + 1 - MEDIAN_WIN + 1   # 9
    assert pitch.shape == (B, expected_S), pitch.shape
    assert pitch.dtype == jnp.float32
    assert bool(jnp.all(jnp.isfinite(pitch)))
    print("KERNEL_OK")
</pallas_src>

<mosaic_0001>
module attributes {stable_mosaic.version = 11 : i64} {
  func.func @yin_kernel(%arg0: i32, %arg1: memref<288x128xf32, #tpu.memory_space<vmem>>, %arg2: memref<213x264xf32, #tpu.memory_space<vmem>>, %arg3: memref<212x212xf32, #tpu.memory_space<vmem>>, %arg4: memref<1x128xf32, #tpu.memory_space<vmem>>, %arg5: memref<216x128xf32, #tpu.memory_space<vmem>>, %arg6: memref<2176x128xf32, #tpu.memory_space<vmem>>) attributes {dimension_semantics = [#tpu.dimension_semantics<parallel>], iteration_bounds = array<i64: 1>, scalar_prefetch = 0 : i64, scratch_operands = 2 : i64, tpu.core_type = #tpu.core_type<tc>, window_params = [{transform_indices = @transform_0, window_bounds = array<i64: 288, 128>}, {pipeline_mode = #tpu.pipeline_mode<synchronous>, transform_indices = @transform_1, window_bounds = array<i64: 213, 264>}, {pipeline_mode = #tpu.pipeline_mode<synchronous>, transform_indices = @transform_2, window_bounds = array<i64: 212, 212>}, {transform_indices = @transform_3, window_bounds = array<i64: 1, 128>}]} {
    %c0 = arith.constant 0 : index
    %c0_0 = arith.constant 0 : index
    %0 = vector.load %arg1[%c0, %c0_0] : memref<288x128xf32, #tpu.memory_space<vmem>>, vector<264x128xf32>
    %cst = arith.constant 0.000000e+00 : f32
    %1 = vector.broadcast %cst : f32 to vector<8x128xf32>
    %c0_1 = arith.constant 0 : index
    %c0_2 = arith.constant 0 : index
    %2 = vector.load %arg6[%c0_1, %c0_2] : memref<2176x128xf32, #tpu.memory_space<vmem>>, vector<264x128xf32>
    tpu.vector_store %arg6[%c0_1, %c0_2], %0 {strides = array<i32>} : memref<2176x128xf32, #tpu.memory_space<vmem>>, vector<264x128xf32>,
    %c272 = arith.constant 272 : index
    %c0_3 = arith.constant 0 : index
    %3 = vector.load %arg6[%c272, %c0_3] : memref<2176x128xf32, #tpu.memory_space<vmem>>, vector<8x128xf32>
    tpu.vector_store %arg6[%c272, %c0_3], %1 {strides = array<i32>} : memref<2176x128xf32, #tpu.memory_space<vmem>>, vector<8x128xf32>,
    %c273 = arith.constant 273 : index
    %c0_4 = arith.constant 0 : index
    %4 = vector.load %arg6[%c273, %c0_4] : memref<2176x128xf32, #tpu.memory_space<vmem>>, vector<264x128xf32>
    tpu.vector_store %arg6[%c273, %c0_4], %0 {strides = array<i32>} : memref<2176x128xf32, #tpu.memory_space<vmem>>, vector<264x128xf32>,
    %c544 = arith.constant 544 : index
    %c0_5 = arith.constant 0 : index
    %5 = vector.load %arg6[%c544, %c0_5] : memref<2176x128xf32, #tpu.memory_space<vmem>>, vector<8x128xf32>
    tpu.vector_store %arg6[%c544, %c0_5], %1 {strides = array<i32>} : memref<2176x128xf32, #tpu.memory_space<vmem>>, vector<8x128xf32>,
    %c546 = arith.constant 546 : index
    %c0_6 = arith.constant 0 : index
    %6 = vector.load %arg6[%c546, %c0_6] : memref<2176x128xf32, #tpu.memory_space<vmem>>, vector<264x128xf32>
    tpu.vector_store %arg6[%c546, %c0_6], %0 {strides = array<i32>} : memref<2176x128xf32, #tpu.memory_space<vmem>>, vector<264x128xf32>,
    %c816 = arith.constant 816 : index
    %c0_7 = arith.constant 0 : index
    %7 = vector.load %arg6[%c816, %c0_7] : memref<2176x128xf32, #tpu.memory_space<vmem>>, vector<8x128xf32>
    tpu.vector_store %arg6[%c816, %c0_7], %1 {strides = array<i32>} : memref<2176x128xf32, #tpu.memory_space<vmem>>, vector<8x128xf32>,
    %c819 = arith.constant 819 : index
    %c0_8 = arith.constant 0 : index
    %8 = vector.load %arg6[%c819, %c0_8] : memref<2176x128xf32, #tpu.memory_space<vmem>>, vector<264x128xf32>
    tpu.vector_store %arg6[%c819, %c0_8], %0 {strides = array<i32>} : memref<2176x128xf32, #tpu.memory_space<vmem>>, vector<264x128xf32>,
    %c1088 = arith.constant 1088 : index
    %c0_9 = arith.constant 0 : index
    %9 = vector.load %arg6[%c1088, %c0_9] : memref<2176x128xf32, #tpu.memory_space<vmem>>, vector<8x128xf32>
    tpu.vector_store %arg6[%c1088, %c0_9], %1 {strides = array<i32>} : memref<2176x128xf32, #tpu.memory_space<vmem>>, vector<8x128xf32>,
    %c1092 = arith.constant 1092 : index
    %c0_10 = arith.constant 0 : index
    %10 = vector.load %arg6[%c1092, %c0_10] : memref<2176x128xf32, #tpu.memory_space<vmem>>, vector<264x128xf32>
    tpu.vector_store %arg6[%c1092, %c0_10], %0 {strides = array<i32>} : memref<2176x128xf32, #tpu.memory_space<vmem>>, vector<264x128xf32>,
    %c1360 = arith.constant 1360 : index
    %c0_11 = arith.constant 0 : index
    %11 = vector.load %arg6[%c1360, %c0_11] : memref<2176x128xf32, #tpu.memory_space<vmem>>, vector<8x128xf32>
    tpu.vector_store %arg6[%c1360, %c0_11], %1 {strides = array<i32>} : memref<2176x128xf32, #tpu.memory_space<vmem>>, vector<8x128xf32>,
    %c1365 = arith.constant 1365 : index
    %c0_12 = arith.constant 0 : index
    %12 = vector.load %arg6[%c1365, %c0_12] : memref<2176x128xf32, #tpu.memory_space<vmem>>, vector<264x128xf32>
    tpu.vector_store %arg6[%c1365, %c0_12], %0 {strides = array<i32>} : memref<2176x128xf32, #tpu.memory_space<vmem>>, vector<264x128xf32>,
    %c1632 = arith.constant 1632 : index
    %c0_13 = arith.constant 0 : index
    %13 = vector.load %arg6[%c1632, %c0_13] : memref<2176x128xf32, #tpu.memory_space<vmem>>, vector<8x128xf32>
    tpu.vector_store %arg6[%c1632, %c0_13], %1 {strides = array<i32>} : memref<2176x128xf32, #tpu.memory_space<vmem>>, vector<8x128xf32>,
    %c1638 = arith.constant 1638 : index
    %c0_14 = arith.constant 0 : index
    %14 = vector.load %arg6[%c1638, %c0_14] : memref<2176x128xf32, #tpu.memory_space<vmem>>, vector<264x128xf32>
    tpu.vector_store %arg6[%c1638, %c0_14], %0 {strides = array<i32>} : memref<2176x128xf32, #tpu.memory_space<vmem>>, vector<264x128xf32>,
    %c1904 = arith.constant 1904 : index
    %c0_15 = arith.constant 0 : index
    %15 = vector.load %arg6[%c1904, %c0_15] : memref<2176x128xf32, #tpu.memory_space<vmem>>, vector<8x128xf32>
    tpu.vector_store %arg6[%c1904, %c0_15], %1 {strides = array<i32>} : memref<2176x128xf32, #tpu.memory_space<vmem>>, vector<8x128xf32>,
    %c1911 = arith.constant 1911 : index
    %c0_16 = arith.constant 0 : index
    %16 = vector.load %arg6[%c1911, %c0_16] : memref<2176x128xf32, #tpu.memory_space<vmem>>, vector<264x128xf32>
    tpu.vector_store %arg6[%c1911, %c0_16], %0 {strides = array<i32>} : memref<2176x128xf32, #tpu.memory_space<vmem>>, vector<264x128xf32>,
    %c0_i32 = arith.constant 0 : i32
    %c4_i32 = arith.constant 4 : i32
    %17 = arith.addi %c0_i32, %c4_i32 : i32
    %c1_i32 = arith.constant 1 : i32
    scf.for %arg7 = %c0_i32 to %17 step %c1_i32  : i32 {
      %c1_i32_80 = arith.constant 1 : i32
      %120 = arith.muli %arg7, %c1_i32_80 : i32
      %c0_i32_81 = arith.constant 0 : i32
      %121 = arith.addi %c0_i32_81, %120 : i32
      %c8_i32 = arith.constant 8 : i32
      %122 = arith.muli %121, %c8_i32 : i32
      %123 = tpu.assume_multiple %122, 8 : i32
      %124 = arith.index_cast %123 : i32 to index
      %c0_82 = arith.constant 0 : index
      %125 = vector.load %arg1[%124, %c0_82] : memref<288x128xf32, #tpu.memory_space<vmem>>, vector<264x128xf32>
      %c0_83 = arith.constant 0 : index
      %c0_84 = arith.constant 0 : index
      %126 = vector.load %arg6[%c0_83, %c0_84] : memref<2176x128xf32, #tpu.memory_space<vmem>>, vector<264x128xf32>
      %127 = arith.mulf %126, %125 : vector<264x128xf32>
      %cst_85 = arith.constant dense<0.000000e+00> : vector<128xf32>
      %128 = vector.multi_reduction <add>, %127, %cst_85 [0] : vector<264x128xf32> to vector<128xf32>
      %129 = vector.shape_cast %128 : vector<128xf32> to vector<1x128xf32>
      %c272_86 = arith.constant 272 : index
      %c0_87 = arith.constant 0 : index
      %130 = vector.load %arg6[%c272_86, %c0_87] : memref<2176x128xf32, #tpu.memory_space<vmem>>, vector<264x128xf32>
      %131 = arith.mulf %130, %125 : vector<264x128xf32>
      %cst_88 = arith.constant dense<0.000000e+00> : vector<128xf32>
      %132 = vector.multi_reduction <add>, %131, %cst_88 [0] : vector<264x128xf32> to vector<128xf32>
      %133 = vector.shape_cast %132 : vector<128xf32> to vector<1x128xf32>
      %c544_89 = arith.constant 544 : index
      %c0_90 = arith.constant 0 : index
      %134 = vector.load %arg6[%c544_89, %c0_90] : memref<2176x128xf32, #tpu.memory_space<vmem>>, vector<264x128xf32>
      %135 = arith.mulf %134, %125 : vector<264x128xf32>
      %cst_91 = arith.constant dense<0.000000e+00> : vector<128xf32>
      %136 = vector.multi_reduction <add>, %135, %cst_91 [0] : vector<264x128xf32> to vector<128xf32>
      %137 = vector.shape_cast %136 : vector<128xf32> to vector<1x128xf32>
      %c816_92 = arith.constant 816 : index
      %c0_93 = arith.constant 0 : index
      %138 = vector.load %arg6[%c816_92, %c0_93] : memref<2176x128xf32, #tpu.memory_space<vmem>>, vector<264x128xf32>
      %139 = arith.mulf %138, %125 : vector<264x128xf32>
      %cst_94 = arith.constant dense<0.000000e+00> : vector<128xf32>
      %140 = vector.multi_reduction <add>, %139, %cst_94 [0] : vector<264x128xf32> to vector<128xf32>
      %141 = vector.shape_cast %140 : vector<128xf32> to vector<1x128xf32>
      %c1088_95 = arith.constant 1088 : index
      %c0_96 = arith.constant 0 : index
      %142 = vector.load %arg6[%c1088_95, %c0_96] : memref<2176x128xf32, #tpu.memory_space<vmem>>, vector<264x128xf32>
      %143 = arith.mulf %142, %125 : vector<264x128xf32>
      %cst_97 = arith.constant dense<0.000000e+00> : vector<128xf32>
      %144 = vector.multi_reduction <add>, %143, %cst_97 [0] : vector<264x128xf32> to vector<128xf32>
      %145 = vector.shape_cast %144 : vector<128xf32> to vector<1x128xf32>
      %c1360_98 = arith.constant 1360 : index
      %c0_99 = arith.constant 0 : index
      %146 = vector.load %arg6[%c1360_98, %c0_99] : memref<2176x128xf32, #tpu.memory_space<vmem>>, vector<264x128xf32>
      %147 = arith.mulf %146, %125 : vector<264x128xf32>
      %cst_100 = arith.constant dense<0.000000e+00> : vector<128xf32>
      %148 = vector.multi_reduction <add>, %147, %cst_100 [0] : vector<264x128xf32> to vector<128xf32>
      %149 = vector.shape_cast %148 : vector<128xf32> to vector<1x128xf32>
      %c1632_101 = arith.constant 1632 : index
      %c0_102 = arith.constant 0 : index
      %150 = vector.load %arg6[%c1632_101, %c0_102] : memref<2176x128xf32, #tpu.memory_space<vmem>>, vector<264x128xf32>
      %151 = arith.mulf %150, %125 : vector<264x128xf32>
      %cst_103 = arith.constant dense<0.000000e+00> : vector<128xf32>
      %152 = vector.multi_reduction <add>, %151, %cst_103 [0] : vector<264x128xf32> to vector<128xf32>
      %153 = vector.shape_cast %152 : vector<128xf32> to vector<1x128xf32>
      %c1904_104 = arith.constant 1904 : index
      %c0_105 = arith.constant 0 : index
      %154 = vector.load %arg6[%c1904_104, %c0_105] : memref<2176x128xf32, #tpu.memory_space<vmem>>, vector<264x128xf32>
      %155 = arith.mulf %154, %125 : vector<264x128xf32>
      %cst_106 = arith.constant dense<0.000000e+00> : vector<128xf32>
      %156 = vector.multi_reduction <add>, %155, %cst_106 [0] : vector<264x128xf32> to vector<128xf32>
      %157 = vector.shape_cast %156 : vector<128xf32> to vector<1x128xf32>
      %158 = tpu.concatenate %129, %133, %137, %141, %145, %149, %153, %157 in 0 : vector<1x128xf32>, vector<1x128xf32>, vector<1x128xf32>, vector<1x128xf32>, vector<1x128xf32>, vector<1x128xf32>, vector<1x128xf32>, vector<1x128xf32> -> vector<8x128xf32>
      %159 = arith.index_cast %123 : i32 to index
      %c0_107 = arith.constant 0 : index
      %160 = vector.load %arg5[%159, %c0_107] : memref<216x128xf32, #tpu.memory_space<vmem>>, vector<8x128xf32>
      tpu.vector_store %arg5[%159, %c0_107], %158 {strides = array<i32>} : memref<216x128xf32, #tpu.memory_space<vmem>>, vector<8x128xf32>,
    }
    %c4_i32_17 = arith.constant 4 : i32
    %c0_i32_18 = arith.constant 0 : i32
    %c4_i32_19 = arith.constant 4 : i32
    %18 = arith.addi %c0_i32_18, %c4_i32_19 : i32
    %c1_i32_20 = arith.constant 1 : i32
    scf.for %arg7 = %c0_i32_18 to %18 step %c1_i32_20  : i32 {
      %c1_i32_80 = arith.constant 1 : i32
      %120 = arith.muli %arg7, %c1_i32_80 : i32
      %c4_i32_81 = arith.constant 4 : i32
      %121 = arith.addi %c4_i32_81, %120 : i32
      %c8_i32 = arith.constant 8 : i32
      %122 = arith.muli %121, %c8_i32 : i32
      %123 = tpu.assume_multiple %122, 8 : i32
      %124 = arith.index_cast %123 : i32 to index
      %c0_82 = arith.constant 0 : index
      %125 = vector.load %arg1[%124, %c0_82] : memref<288x128xf32, #tpu.memory_space<vmem>>, vector<232x128xf32>
      %c0_83 = arith.constant 0 : index
      %c0_84 = arith.constant 0 : index
      %126 = vector.load %arg6[%c0_83, %c0_84] : memref<2176x128xf32, #tpu.memory_space<vmem>>, vector<232x128xf32>
      %127 = arith.mulf %126, %125 : vector<232x128xf32>
      %cst_85 = arith.constant dense<0.000000e+00> : vector<128xf32>
      %128 = vector.multi_reduction <add>, %127, %cst_85 [0] : vector<232x128xf32> to vector<128xf32>
      %129 = vector.shape_cast %128 : vector<128xf32> to vector<1x128xf32>
      %c272_86 = arith.constant 272 : index
      %c0_87 = arith.constant 0 : index
      %130 = vector.load %arg6[%c272_86, %c0_87] : memref<2176x128xf32, #tpu.memory_space<vmem>>, vector<232x128xf32>
      %131 = arith.mulf %130, %125 : vector<232x128xf32>
      %cst_88 = arith.constant dense<0.000000e+00> : vector<128xf32>
      %132 = vector.multi_reduction <add>, %131, %cst_88 [0] : vector<232x128xf32> to vector<128xf32>
      %133 = vector.shape_cast %132 : vector<128xf32> to vector<1x128xf32>
      %c544_89 = arith.constant 544 : index
      %c0_90 = arith.constant 0 : index
      %134 = vector.load %arg6[%c544_89, %c0_90] : memref<2176x128xf32, #tpu.memory_space<vmem>>, vector<232x128xf32>
      %135 = arith.mulf %134, %125 : vector<232x128xf32>
      %cst_91 = arith.constant dense<0.000000e+00> : vector<128xf32>
      %136 = vector.multi_reduction <add>, %135, %cst_91 [0] : vector<232x128xf32> to vector<128xf32>
      %137 = vector.shape_cast %136 : vector<128xf32> to vector<1x128xf32>
      %c816_92 = arith.constant 816 : index
      %c0_93 = arith.constant 0 : index
      %138 = vector.load %arg6[%c816_92, %c0_93] : memref<2176x128xf32, #tpu.memory_space<vmem>>, vector<232x128xf32>
      %139 = arith.mulf %138, %125 : vector<232x128xf32>
      %cst_94 = arith.constant dense<0.000000e+00> : vector<128xf32>
      %140 = vector.multi_reduction <add>, %139, %cst_94 [0] : vector<232x128xf32> to vector<128xf32>
      %141 = vector.shape_cast %140 : vector<128xf32> to vector<1x128xf32>
      %c1088_95 = arith.constant 1088 : index
      %c0_96 = arith.constant 0 : index
      %142 = vector.load %arg6[%c1088_95, %c0_96] : memref<2176x128xf32, #tpu.memory_space<vmem>>, vector<232x128xf32>
      %143 = arith.mulf %142, %125 : vector<232x128xf32>
      %cst_97 = arith.constant dense<0.000000e+00> : vector<128xf32>
      %144 = vector.multi_reduction <add>, %143, %cst_97 [0] : vector<232x128xf32> to vector<128xf32>
      %145 = vector.shape_cast %144 : vector<128xf32> to vector<1x128xf32>
      %c1360_98 = arith.constant 1360 : index
      %c0_99 = arith.constant 0 : index
      %146 = vector.load %arg6[%c1360_98, %c0_99] : memref<2176x128xf32, #tpu.memory_space<vmem>>, vector<232x128xf32>
      %147 = arith.mulf %146, %125 : vector<232x128xf32>
      %cst_100 = arith.constant dense<0.000000e+00> : vector<128xf32>
      %148 = vector.multi_reduction <add>, %147, %cst_100 [0] : vector<232x128xf32> to vector<128xf32>
      %149 = vector.shape_cast %148 : vector<128xf32> to vector<1x128xf32>
      %c1632_101 = arith.constant 1632 : index
      %c0_102 = arith.constant 0 : index
      %150 = vector.load %arg6[%c1632_101, %c0_102] : memref<2176x128xf32, #tpu.memory_space<vmem>>, vector<232x128xf32>
      %151 = arith.mulf %150, %125 : vector<232x128xf32>
      %cst_103 = arith.constant dense<0.000000e+00> : vector<128xf32>
      %152 = vector.multi_reduction <add>, %151, %cst_103 [0] : vector<232x128xf32> to vector<128xf32>
      %153 = vector.shape_cast %152 : vector<128xf32> to vector<1x128xf32>
      %c1904_104 = arith.constant 1904 : index
      %c0_105 = arith.constant 0 : index
      %154 = vector.load %arg6[%c1904_104, %c0_105] : memref<2176x128xf32, #tpu.memory_space<vmem>>, vector<232x128xf32>
      %155 = arith.mulf %154, %125 : vector<232x128xf32>
      %cst_106 = arith.constant dense<0.000000e+00> : vector<128xf32>
      %156 = vector.multi_reduction <add>, %155, %cst_106 [0] : vector<232x128xf32> to vector<128xf32>
      %157 = vector.shape_cast %156 : vector<128xf32> to vector<1x128xf32>
      %158 = tpu.concatenate %129, %133, %137, %141, %145, %149, %153, %157 in 0 : vector<1x128xf32>, vector<1x128xf32>, vector<1x128xf32>, vector<1x128xf32>, vector<1x128xf32>, vector<1x128xf32>, vector<1x128xf32>, vector<1x128xf32> -> vector<8x128xf32>
      %159 = arith.index_cast %123 : i32 to index
      %c0_107 = arith.constant 0 : index
      %160 = vector.load %arg5[%159, %c0_107] : memref<216x128xf32, #tpu.memory_space<vmem>>, vector<8x128xf32>
      tpu.vector_store %arg5[%159, %c0_107], %158 {strides = array<i32>} : memref<216x128xf32, #tpu.memory_space<vmem>>, vector<8x128xf32>,
    }
    %c4_i32_21 = arith.constant 4 : i32
    %c0_i32_22 = arith.constant 0 : i32
    %c4_i32_23 = arith.constant 4 : i32
    %19 = arith.addi %c0_i32_22, %c4_i32_23 : i32
    %c1_i32_24 = arith.constant 1 : i32
    scf.for %arg7 = %c0_i32_22 to %19 step %c1_i32_24  : i32 {
      %c1_i32_80 = arith.constant 1 : i32
      %120 = arith.muli %arg7, %c1_i32_80 : i32
      %c8_i32 = arith.constant 8 : i32
      %121 = arith.addi %c8_i32, %120 : i32
      %c8_i32_81 = arith.constant 8 : i32
      %122 = arith.muli %121, %c8_i32_81 : i32
      %123 = tpu.assume_multiple %122, 8 : i32
      %124 = arith.index_cast %123 : i32 to index
      %c0_82 = arith.constant 0 : index
      %125 = vector.load %arg1[%124, %c0_82] : memref<288x128xf32, #tpu.memory_space<vmem>>, vector<200x128xf32>
      %c0_83 = arith.constant 0 : index
      %c0_84 = arith.constant 0 : index
      %126 = vector.load %arg6[%c0_83, %c0_84] : memref<2176x128xf32, #tpu.memory_space<vmem>>, vector<200x128xf32>
      %127 = arith.mulf %126, %125 : vector<200x128xf32>
      %cst_85 = arith.constant dense<0.000000e+00> : vector<128xf32>
      %128 = vector.multi_reduction <add>, %127, %cst_85 [0] : vector<200x128xf32> to vector<128xf32>
      %129 = vector.shape_cast %128 : vector<128xf32> to vector<1x128xf32>
      %c272_86 = arith.constant 272 : index
      %c0_87 = arith.constant 0 : index
      %130 = vector.load %arg6[%c272_86, %c0_87] : memref<2176x128xf32, #tpu.memory_space<vmem>>, vector<200x128xf32>
      %131 = arith.mulf %130, %125 : vector<200x128xf32>
      %cst_88 = arith.constant dense<0.000000e+00> : vector<128xf32>
      %132 = vector.multi_reduction <add>, %131, %cst_88 [0] : vector<200x128xf32> to vector<128xf32>
      %133 = vector.shape_cast %132 : vector<128xf32> to vector<1x128xf32>
      %c544_89 = arith.constant 544 : index
      %c0_90 = arith.constant 0 : index
      %134 = vector.load %arg6[%c544_89, %c0_90] : memref<2176x128xf32, #tpu.memory_space<vmem>>, vector<200x128xf32>
      %135 = arith.mulf %134, %125 : vector<200x128xf32>
      %cst_91 = arith.constant dense<0.000000e+00> : vector<128xf32>
      %136 = vector.multi_reduction <add>, %135, %cst_91 [0] : vector<200x128xf32> to vector<128xf32>
      %137 = vector.shape_cast %136 : vector<128xf32> to vector<1x128xf32>
      %c816_92 = arith.constant 816 : index
      %c0_93 = arith.constant 0 : index
      %138 = vector.load %arg6[%c816_92, %c0_93] : memref<2176x128xf32, #tpu.memory_space<vmem>>, vector<200x128xf32>
      %139 = arith.mulf %138, %125 : vector<200x128xf32>
      %cst_94 = arith.constant dense<0.000000e+00> : vector<128xf32>
      %140 = vector.multi_reduction <add>, %139, %cst_94 [0] : vector<200x128xf32> to vector<128xf32>
      %141 = vector.shape_cast %140 : vector<128xf32> to vector<1x128xf32>
      %c1088_95 = arith.constant 1088 : index
      %c0_96 = arith.constant 0 : index
      %142 = vector.load %arg6[%c1088_95, %c0_96] : memref<2176x128xf32, #tpu.memory_space<vmem>>, vector<200x128xf32>
      %143 = arith.mulf %142, %125 : vector<200x128xf32>
      %cst_97 = arith.constant dense<0.000000e+00> : vector<128xf32>
      %144 = vector.multi_reduction <add>, %143, %cst_97 [0] : vector<200x128xf32> to vector<128xf32>
      %145 = vector.shape_cast %144 : vector<128xf32> to vector<1x128xf32>
      %c1360_98 = arith.constant 1360 : index
      %c0_99 = arith.constant 0 : index
      %146 = vector.load %arg6[%c1360_98, %c0_99] : memref<2176x128xf32, #tpu.memory_space<vmem>>, vector<200x128xf32>
      %147 = arith.mulf %146, %125 : vector<200x128xf32>
      %cst_100 = arith.constant dense<0.000000e+00> : vector<128xf32>
      %148 = vector.multi_reduction <add>, %147, %cst_100 [0] : vector<200x128xf32> to vector<128xf32>
      %149 = vector.shape_cast %148 : vector<128xf32> to vector<1x128xf32>
      %c1632_101 = arith.constant 1632 : index
      %c0_102 = arith.constant 0 : index
      %150 = vector.load %arg6[%c1632_101, %c0_102] : memref<2176x128xf32, #tpu.memory_space<vmem>>, vector<200x128xf32>
      %151 = arith.mulf %150, %125 : vector<200x128xf32>
      %cst_103 = arith.constant dense<0.000000e+00> : vector<128xf32>
      %152 = vector.multi_reduction <add>, %151, %cst_103 [0] : vector<200x128xf32> to vector<128xf32>
      %153 = vector.shape_cast %152 : vector<128xf32> to vector<1x128xf32>
      %c1904_104 = arith.constant 1904 : index
      %c0_105 = arith.constant 0 : index
      %154 = vector.load %arg6[%c1904_104, %c0_105] : memref<2176x128xf32, #tpu.memory_space<vmem>>, vector<200x128xf32>
      %155 = arith.mulf %154, %125 : vector<200x128xf32>
      %cst_106 = arith.constant dense<0.000000e+00> : vector<128xf32>
      %156 = vector.multi_reduction <add>, %155, %cst_106 [0] : vector<200x128xf32> to vector<128xf32>
      %157 = vector.shape_cast %156 : vector<128xf32> to vector<1x128xf32>
      %158 = tpu.concatenate %129, %133, %137, %141, %145, %149, %153, %157 in 0 : vector<1x128xf32>, vector<1x128xf32>, vector<1x128xf32>, vector<1x128xf32>, vector<1x128xf32>, vector<1x128xf32>, vector<1x128xf32>, vector<1x128xf32> -> vector<8x128xf32>
      %159 = arith.index_cast %123 : i32 to index
      %c0_107 = arith.constant 0 : index
      %160 = vector.load %arg5[%159, %c0_107] : memref<216x128xf32, #tpu.memory_space<vmem>>, vector<8x128xf32>
      tpu.vector_store %arg5[%159, %c0_107], %158 {strides = array<i32>} : memref<216x128xf32, #tpu.memory_space<vmem>>, vector<8x128xf32>,
    }
    %c4_i32_25 = arith.constant 4 : i32
    %c0_i32_26 = arith.constant 0 : i32
    %c4_i32_27 = arith.constant 4 : i32
    %20 = arith.addi %c0_i32_26, %c4_i32_27 : i32
    %c1_i32_28 = arith.constant 1 : i32
    scf.for %arg7 = %c0_i32_26 to %20 step %c1_i32_28  : i32 {
      %c1_i32_80 = arith.constant 1 : i32
      %120 = arith.muli %arg7, %c1_i32_80 : i32
      %c12_i32 = arith.constant 12 : i32
      %121 = arith.addi %c12_i32, %120 : i32
      %c8_i32 = arith.constant 8 : i32
      %122 = arith.muli %121, %c8_i32 : i32
      %123 = tpu.assume_multiple %122, 8 : i32
      %124 = arith.index_cast %123 : i32 to index
      %c0_81 = arith.constant 0 : index
      %125 = vector.load %arg1[%124, %c0_81] : memref<288x128xf32, #tpu.memory_space<vmem>>, vector<168x128xf32>
      %c0_82 = arith.constant 0 : index
      %c0_83 = arith.constant 0 : index
      %126 = vector.load %arg6[%c0_82, %c0_83] : memref<2176x128xf32, #tpu.memory_space<vmem>>, vector<168x128xf32>
      %127 = arith.mulf %126, %125 : vector<168x128xf32>
      %cst_84 = arith.constant dense<0.000000e+00> : vector<128xf32>
      %128 = vector.multi_reduction <add>, %127, %cst_84 [0] : vector<168x128xf32> to vector<128xf32>
      %129 = vector.shape_cast %128 : vector<128xf32> to vector<1x128xf32>
      %c272_85 = arith.constant 272 : index
      %c0_86 = arith.constant 0 : index
      %130 = vector.load %arg6[%c272_85, %c0_86] : memref<2176x128xf32, #tpu.memory_space<vmem>>, vector<168x128xf32>
      %131 = arith.mulf %130, %125 : vector<168x128xf32>
      %cst_87 = arith.constant dense<0.000000e+00> : vector<128xf32>
      %132 = vector.multi_reduction <add>, %131, %cst_87 [0] : vector<168x128xf32> to vector<128xf32>
      %133 = vector.shape_cast %132 : vector<128xf32> to vector<1x128xf32>
      %c544_88 = arith.constant 544 : index
      %c0_89 = arith.constant 0 : index
      %134 = vector.load %arg6[%c544_88, %c0_89] : memref<2176x128xf32, #tpu.memory_space<vmem>>, vector<168x128xf32>
      %135 = arith.mulf %134, %125 : vector<168x128xf32>
      %cst_90 = arith.constant dense<0.000000e+00> : vector<128xf32>
      %136 = vector.multi_reduction <add>, %135, %cst_90 [0] : vector<168x128xf32> to vector<128xf32>
      %137 = vector.shape_cast %136 : vector<128xf32> to vector<1x128xf32>
      %c816_91 = arith.constant 816 : index
      %c0_92 = arith.constant 0 : index
      %138 = vector.load %arg6[%c816_91, %c0_92] : memref<2176x128xf32, #tpu.memory_space<vmem>>, vector<168x128xf32>
      %139 = arith.mulf %138, %125 : vector<168x128xf32>
      %cst_93 = arith.constant dense<0.000000e+00> : vector<128xf32>
      %140 = vector.multi_reduction <add>, %139, %cst_93 [0] : vector<168x128xf32> to vector<128xf32>
      %141 = vector.shape_cast %140 : vector<128xf32> to vector<1x128xf32>
      %c1088_94 = arith.constant 1088 : index
      %c0_95 = arith.constant 0 : index
      %142 = vector.load %arg6[%c1088_94, %c0_95] : memref<2176x128xf32, #tpu.memory_space<vmem>>, vector<168x128xf32>
      %143 = arith.mulf %142, %125 : vector<168x128xf32>
      %cst_96 = arith.constant dense<0.000000e+00> : vector<128xf32>
      %144 = vector.multi_reduction <add>, %143, %cst_96 [0] : vector<168x128xf32> to vector<128xf32>
      %145 = vector.shape_cast %144 : vector<128xf32> to vector<1x128xf32>
      %c1360_97 = arith.constant 1360 : index
      %c0_98 = arith.constant 0 : index
      %146 = vector.load %arg6[%c1360_97, %c0_98] : memref<2176x128xf32, #tpu.memory_space<vmem>>, vector<168x128xf32>
      %147 = arith.mulf %146, %125 : vector<168x128xf32>
      %cst_99 = arith.constant dense<0.000000e+00> : vector<128xf32>
      %148 = vector.multi_reduction <add>, %147, %cst_99 [0] : vector<168x128xf32> to vector<128xf32>
      %149 = vector.shape_cast %148 : vector<128xf32> to vector<1x128xf32>
      %c1632_100 = arith.constant 1632 : index
      %c0_101 = arith.constant 0 : index
      %150 = vector.load %arg6[%c1632_100, %c0_101] : memref<2176x128xf32, #tpu.memory_space<vmem>>, vector<168x128xf32>
      %151 = arith.mulf %150, %125 : vector<168x128xf32>
      %cst_102 = arith.constant dense<0.000000e+00> : vector<128xf32>
      %152 = vector.multi_reduction <add>, %151, %cst_102 [0] : vector<168x128xf32> to vector<128xf32>
      %153 = vector.shape_cast %152 : vector<128xf32> to vector<1x128xf32>
      %c1904_103 = arith.constant 1904 : index
      %c0_104 = arith.constant 0 : index
      %154 = vector.load %arg6[%c1904_103, %c0_104] : memref<2176x128xf32, #tpu.memory_space<vmem>>, vector<168x128xf32>
      %155 = arith.mulf %154, %125 : vector<168x128xf32>
      %cst_105 = arith.constant dense<0.000000e+00> : vector<128xf32>
      %156 = vector.multi_reduction <add>, %155, %cst_105 [0] : vector<168x128xf32> to vector<128xf32>
      %157 = vector.shape_cast %156 : vector<128xf32> to vector<1x128xf32>
      %158 = tpu.concatenate %129, %133, %137, %141, %145, %149, %153, %157 in 0 : vector<1x128xf32>, vector<1x128xf32>, vector<1x128xf32>, vector<1x128xf32>, vector<1x128xf32>, vector<1x128xf32>, vector<1x128xf32>, vector<1x128xf32> -> vector<8x128xf32>
      %159 = arith.index_cast %123 : i32 to index
      %c0_106 = arith.constant 0 : index
      %160 = vector.load %arg5[%159, %c0_106] : memref<216x128xf32, #tpu.memory_space<vmem>>, vector<8x128xf32>
      tpu.vector_store %arg5[%159, %c0_106], %158 {strides = array<i32>} : memref<216x128xf32, #tpu.memory_space<vmem>>, vector<8x128xf32>,
    }
    %c4_i32_29 = arith.constant 4 : i32
    %c0_i32_30 = arith.constant 0 : i32
    %c4_i32_31 = arith.constant 4 : i32
    %21 = arith.addi %c0_i32_30, %c4_i32_31 : i32
    %c1_i32_32 = arith.constant 1 : i32
    scf.for %arg7 = %c0_i32_30 to %21 step %c1_i32_32  : i32 {
      %c1_i32_80 = arith.constant 1 : i32
      %120 = arith.muli %arg7, %c1_i32_80 : i32
      %c16_i32 = arith.constant 16 : i32
      %121 = arith.addi %c16_i32, %120 : i32
      %c8_i32 = arith.constant 8 : i32
      %122 = arith.muli %121, %c8_i32 : i32
      %123 = tpu.assume_multiple %122, 8 : i32
      %124 = arith.index_cast %123 : i32 to index
      %c0_81 = arith.constant 0 : index
      %125 = vector.load %arg1[%124, %c0_81] : memref<288x128xf32, #tpu.memory_space<vmem>>, vector<136x128xf32>
      %c0_82 = arith.constant 0 : index
      %c0_83 = arith.constant 0 : index
      %126 = vector.load %arg6[%c0_82, %c0_83] : memref<2176x128xf32, #tpu.memory_space<vmem>>, vector<136x128xf32>
      %127 = arith.mulf %126, %125 : vector<136x128xf32>
      %cst_84 = arith.constant dense<0.000000e+00> : vector<128xf32>
      %128 = vector.multi_reduction <add>, %127, %cst_84 [0] : vector<136x128xf32> to vector<128xf32>
      %129 = vector.shape_cast %128 : vector<128xf32> to vector<1x128xf32>
      %c272_85 = arith.constant 272 : index
      %c0_86 = arith.constant 0 : index
      %130 = vector.load %arg6[%c272_85, %c0_86] : memref<2176x128xf32, #tpu.memory_space<vmem>>, vector<136x128xf32>
      %131 = arith.mulf %130, %125 : vector<136x128xf32>
      %cst_87 = arith.constant dense<0.000000e+00> : vector<128xf32>
      %132 = vector.multi_reduction <add>, %131, %cst_87 [0] : vector<136x128xf32> to vector<128xf32>
      %133 = vector.shape_cast %132 : vector<128xf32> to vector<1x128xf32>
      %c544_88 = arith.constant 544 : index
      %c0_89 = arith.constant 0 : index
      %134 = vector.load %arg6[%c544_88, %c0_89] : memref<2176x128xf32, #tpu.memory_space<vmem>>, vector<136x128xf32>
      %135 = arith.mulf %134, %125 : vector<136x128xf32>
      %cst_90 = arith.constant dense<0.000000e+00> : vector<128xf32>
      %136 = vector.multi_reduction <add>, %135, %cst_90 [0] : vector<136x128xf32> to vector<128xf32>
      %137 = vector.shape_cast %136 : vector<128xf32> to vector<1x128xf32>
      %c816_91 = arith.constant 816 : index
      %c0_92 = arith.constant 0 : index
      %138 = vector.load %arg6[%c816_91, %c0_92] : memref<2176x128xf32, #tpu.memory_space<vmem>>, vector<136x128xf32>
      %139 = arith.mulf %138, %125 : vector<136x128xf32>
      %cst_93 = arith.constant dense<0.000000e+00> : vector<128xf32>
      %140 = vector.multi_reduction <add>, %139, %cst_93 [0] : vector<136x128xf32> to vector<128xf32>
      %141 = vector.shape_cast %140 : vector<128xf32> to vector<1x128xf32>
      %c1088_94 = arith.constant 1088 : index
      %c0_95 = arith.constant 0 : index
      %142 = vector.load %arg6[%c1088_94, %c0_95] : memref<2176x128xf32, #tpu.memory_space<vmem>>, vector<136x128xf32>
      %143 = arith.mulf %142, %125 : vector<136x128xf32>
      %cst_96 = arith.constant dense<0.000000e+00> : vector<128xf32>
      %144 = vector.multi_reduction <add>, %143, %cst_96 [0] : vector<136x128xf32> to vector<128xf32>
      %145 = vector.shape_cast %144 : vector<128xf32> to vector<1x128xf32>
      %c1360_97 = arith.constant 1360 : index
      %c0_98 = arith.constant 0 : index
      %146 = vector.load %arg6[%c1360_97, %c0_98] : memref<2176x128xf32, #tpu.memory_space<vmem>>, vector<136x128xf32>
      %147 = arith.mulf %146, %125 : vector<136x128xf32>
      %cst_99 = arith.constant dense<0.000000e+00> : vector<128xf32>
      %148 = vector.multi_reduction <add>, %147, %cst_99 [0] : vector<136x128xf32> to vector<128xf32>
      %149 = vector.shape_cast %148 : vector<128xf32> to vector<1x128xf32>
      %c1632_100 = arith.constant 1632 : index
      %c0_101 = arith.constant 0 : index
      %150 = vector.load %arg6[%c1632_100, %c0_101] : memref<2176x128xf32, #tpu.memory_space<vmem>>, vector<136x128xf32>
      %151 = arith.mulf %150, %125 : vector<136x128xf32>
      %cst_102 = arith.constant dense<0.000000e+00> : vector<128xf32>
      %152 = vector.multi_reduction <add>, %151, %cst_102 [0] : vector<136x128xf32> to vector<128xf32>
      %153 = vector.shape_cast %152 : vector<128xf32> to vector<1x128xf32>
      %c1904_103 = arith.constant 1904 : index
      %c0_104 = arith.constant 0 : index
      %154 = vector.load %arg6[%c1904_103, %c0_104] : memref<2176x128xf32, #tpu.memory_space<vmem>>, vector<136x128xf32>
      %155 = arith.mulf %154, %125 : vector<136x128xf32>
      %cst_105 = arith.constant dense<0.000000e+00> : vector<128xf32>
      %156 = vector.multi_reduction <add>, %155, %cst_105 [0] : vector<136x128xf32> to vector<128xf32>
      %157 = vector.shape_cast %156 : vector<128xf32> to vector<1x128xf32>
      %158 = tpu.concatenate %129, %133, %137, %141, %145, %149, %153, %157 in 0 : vector<1x128xf32>, vector<1x128xf32>, vector<1x128xf32>, vector<1x128xf32>, vector<1x128xf32>, vector<1x128xf32>, vector<1x128xf32>, vector<1x128xf32> -> vector<8x128xf32>
      %159 = arith.index_cast %123 : i32 to index
      %c0_106 = arith.constant 0 : index
      %160 = vector.load %arg5[%159, %c0_106] : memref<216x128xf32, #tpu.memory_space<vmem>>, vector<8x128xf32>
      tpu.vector_store %arg5[%159, %c0_106], %158 {strides = array<i32>} : memref<216x128xf32, #tpu.memory_space<vmem>>, vector<8x128xf32>,
    }
    %c4_i32_33 = arith.constant 4 : i32
    %c0_i32_34 = arith.constant 0 : i32
    %c4_i32_35 = arith.constant 4 : i32
    %22 = arith.addi %c0_i32_34, %c4_i32_35 : i32
    %c1_i32_36 = arith.constant 1 : i32
    scf.for %arg7 = %c0_i32_34 to %22 step %c1_i32_36  : i32 {
      %c1_i32_80 = arith.constant 1 : i32
      %120 = arith.muli %arg7, %c1_i32_80 : i32
      %c20_i32 = arith.constant 20 : i32
      %121 = arith.addi %c20_i32, %120 : i32
      %c8_i32 = arith.constant 8 : i32
      %122 = arith.muli %121, %c8_i32 : i32
      %123 = tpu.assume_multiple %122, 8 : i32
      %124 = arith.index_cast %123 : i32 to index
      %c0_81 = arith.constant 0 : index
      %125 = vector.load %arg1[%124, %c0_81] : memref<288x128xf32, #tpu.memory_space<vmem>>, vector<104x128xf32>
      %c0_82 = arith.constant 0 : index
      %c0_83 = arith.constant 0 : index
      %126 = vector.load %arg6[%c0_82, %c0_83] : memref<2176x128xf32, #tpu.memory_space<vmem>>, vector<104x128xf32>
      %127 = arith.mulf %126, %125 : vector<104x128xf32>
      %cst_84 = arith.constant dense<0.000000e+00> : vector<128xf32>
      %128 = vector.multi_reduction <add>, %127, %cst_84 [0] : vector<104x128xf32> to vector<128xf32>
      %129 = vector.shape_cast %128 : vector<128xf32> to vector<1x128xf32>
      %c272_85 = arith.constant 272 : index
      %c0_86 = arith.constant 0 : index
      %130 = vector.load %arg6[%c272_85, %c0_86] : memref<2176x128xf32, #tpu.memory_space<vmem>>, vector<104x128xf32>
      %131 = arith.mulf %130, %125 : vector<104x128xf32>
      %cst_87 = arith.constant dense<0.000000e+00> : vector<128xf32>
      %132 = vector.multi_reduction <add>, %131, %cst_87 [0] : vector<104x128xf32> to vector<128xf32>
      %133 = vector.shape_cast %132 : vector<128xf32> to vector<1x128xf32>
      %c544_88 = arith.constant 544 : index
      %c0_89 = arith.constant 0 : index
      %134 = vector.load %arg6[%c544_88, %c0_89] : memref<2176x128xf32, #tpu.memory_space<vmem>>, vector<104x128xf32>
      %135 = arith.mulf %134, %125 : vector<104x128xf32>
      %cst_90 = arith.constant dense<0.000000e+00> : vector<128xf32>
      %136 = vector.multi_reduction <add>, %135, %cst_90 [0] : vector<104x128xf32> to vector<128xf32>
      %137 = vector.shape_cast %136 : vector<128xf32> to vector<1x128xf32>
      %c816_91 = arith.constant 816 : index
      %c0_92 = arith.constant 0 : index
      %138 = vector.load %arg6[%c816_91, %c0_92] : memref<2176x128xf32, #tpu.memory_space<vmem>>, vector<104x128xf32>
      %139 = arith.mulf %138, %125 : vector<104x128xf32>
      %cst_93 = arith.constant dense<0.000000e+00> : vector<128xf32>
      %140 = vector.multi_reduction <add>, %139, %cst_93 [0] : vector<104x128xf32> to vector<128xf32>
      %141 = vector.shape_cast %140 : vector<128xf32> to vector<1x128xf32>
      %c1088_94 = arith.constant 1088 : index
      %c0_95 = arith.constant 0 : index
      %142 = vector.load %arg6[%c1088_94, %c0_95] : memref<2176x128xf32, #tpu.memory_space<vmem>>, vector<104x128xf32>
      %143 = arith.mulf %142, %125 : vector<104x128xf32>
      %cst_96 = arith.constant dense<0.000000e+00> : vector<128xf32>
      %144 = vector.multi_reduction <add>, %143, %cst_96 [0] : vector<104x128xf32> to vector<128xf32>
      %145 = vector.shape_cast %144 : vector<128xf32> to vector<1x128xf32>
      %c1360_97 = arith.constant 1360 : index
      %c0_98 = arith.constant 0 : index
      %146 = vector.load %arg6[%c1360_97, %c0_98] : memref<2176x128xf32, #tpu.memory_space<vmem>>, vector<104x128xf32>
      %147 = arith.mulf %146, %125 : vector<104x128xf32>
      %cst_99 = arith.constant dense<0.000000e+00> : vector<128xf32>
      %148 = vector.multi_reduction <add>, %147, %cst_99 [0] : vector<104x128xf32> to vector<128xf32>
      %149 = vector.shape_cast %148 : vector<128xf32> to vector<1x128xf32>
      %c1632_100 = arith.constant 1632 : index
      %c0_101 = arith.constant 0 : index
      %150 = vector.load %arg6[%c1632_100, %c0_101] : memref<2176x128xf32, #tpu.memory_space<vmem>>, vector<104x128xf32>
      %151 = arith.mulf %150, %125 : vector<104x128xf32>
      %cst_102 = arith.constant dense<0.000000e+00> : vector<128xf32>
      %152 = vector.multi_reduction <add>, %151, %cst_102 [0] : vector<104x128xf32> to vector<128xf32>
      %153 = vector.shape_cast %152 : vector<128xf32> to vector<1x128xf32>
      %c1904_103 = arith.constant 1904 : index
      %c0_104 = arith.constant 0 : index
      %154 = vector.load %arg6[%c1904_103, %c0_104] : memref<2176x128xf32, #tpu.memory_space<vmem>>, vector<104x128xf32>
      %155 = arith.mulf %154, %125 : vector<104x128xf32>
      %cst_105 = arith.constant dense<0.000000e+00> : vector<128xf32>
      %156 = vector.multi_reduction <add>, %155, %cst_105 [0] : vector<104x128xf32> to vector<128xf32>
      %157 = vector.shape_cast %156 : vector<128xf32> to vector<1x128xf32>
      %158 = tpu.concatenate %129, %133, %137, %141, %145, %149, %153, %157 in 0 : vector<1x128xf32>, vector<1x128xf32>, vector<1x128xf32>, vector<1x128xf32>, vector<1x128xf32>, vector<1x128xf32>, vector<1x128xf32>, vector<1x128xf32> -> vector<8x128xf32>
      %159 = arith.index_cast %123 : i32 to index
      %c0_106 = arith.constant 0 : index
      %160 = vector.load %arg5[%159, %c0_106] : memref<216x128xf32, #tpu.memory_space<vmem>>, vector<8x128xf32>
      tpu.vector_store %arg5[%159, %c0_106], %158 {strides = array<i32>} : memref<216x128xf32, #tpu.memory_space<vmem>>, vector<8x128xf32>,
    }
    %c4_i32_37 = arith.constant 4 : i32
    %c0_i32_38 = arith.constant 0 : i32
    %c3_i32 = arith.constant 3 : i32
    %23 = arith.addi %c0_i32_38, %c3_i32 : i32
    %c1_i32_39 = arith.constant 1 : i32
    scf.for %arg7 = %c0_i32_38 to %23 step %c1_i32_39  : i32 {
      %c1_i32_80 = arith.constant 1 : i32
      %120 = arith.muli %arg7, %c1_i32_80 : i32
      %c24_i32 = arith.constant 24 : i32
      %121 = arith.addi %c24_i32, %120 : i32
      %c8_i32 = arith.constant 8 : i32
      %122 = arith.muli %121, %c8_i32 : i32
      %123 = tpu.assume_multiple %122, 8 : i32
      %124 = arith.index_cast %123 : i32 to index
      %c0_81 = arith.constant 0 : index
      %125 = vector.load %arg1[%124, %c0_81] : memref<288x128xf32, #tpu.memory_space<vmem>>, vector<72x128xf32>
      %c0_82 = arith.constant 0 : index
      %c0_83 = arith.constant 0 : index
      %126 = vector.load %arg6[%c0_82, %c0_83] : memref<2176x128xf32, #tpu.memory_space<vmem>>, vector<72x128xf32>
      %127 = arith.mulf %126, %125 : vector<72x128xf32>
      %cst_84 = arith.constant dense<0.000000e+00> : vector<128xf32>
      %128 = vector.multi_reduction <add>, %127, %cst_84 [0] : vector<72x128xf32> to vector<128xf32>
      %129 = vector.shape_cast %128 : vector<128xf32> to vector<1x128xf32>
      %c272_85 = arith.constant 272 : index
      %c0_86 = arith.constant 0 : index
      %130 = vector.load %arg6[%c272_85, %c0_86] : memref<2176x128xf32, #tpu.memory_space<vmem>>, vector<72x128xf32>
      %131 = arith.mulf %130, %125 : vector<72x128xf32>
      %cst_87 = arith.constant dense<0.000000e+00> : vector<128xf32>
      %132 = vector.multi_reduction <add>, %131, %cst_87 [0] : vector<72x128xf32> to vector<128xf32>
      %133 = vector.shape_cast %132 : vector<128xf32> to vector<1x128xf32>
      %c544_88 = arith.constant 544 : index
      %c0_89 = arith.constant 0 : index
      %134 = vector.load %arg6[%c544_88, %c0_89] : memref<2176x128xf32, #tpu.memory_space<vmem>>, vector<72x128xf32>
      %135 = arith.mulf %134, %125 : vector<72x128xf32>
      %cst_90 = arith.constant dense<0.000000e+00> : vector<128xf32>
      %136 = vector.multi_reduction <add>, %135, %cst_90 [0] : vector<72x128xf32> to vector<128xf32>
      %137 = vector.shape_cast %136 : vector<128xf32> to vector<1x128xf32>
      %c816_91 = arith.constant 816 : index
      %c0_92 = arith.constant 0 : index
      %138 = vector.load %arg6[%c816_91, %c0_92] : memref<2176x128xf32, #tpu.memory_space<vmem>>, vector<72x128xf32>
      %139 = arith.mulf %138, %125 : vector<72x128xf32>
      %cst_93 = arith.constant dense<0.000000e+00> : vector<128xf32>
      %140 = vector.multi_reduction <add>, %139, %cst_93 [0] : vector<72x128xf32> to vector<128xf32>
      %141 = vector.shape_cast %140 : vector<128xf32> to vector<1x128xf32>
      %c1088_94 = arith.constant 1088 : index
      %c0_95 = arith.constant 0 : index
      %142 = vector.load %arg6[%c1088_94, %c0_95] : memref<2176x128xf32, #tpu.memory_space<vmem>>, vector<72x128xf32>
      %143 = arith.mulf %142, %125 : vector<72x128xf32>
      %cst_96 = arith.constant dense<0.000000e+00> : vector<128xf32>
      %144 = vector.multi_reduction <add>, %143, %cst_96 [0] : vector<72x128xf32> to vector<128xf32>
      %145 = vector.shape_cast %144 : vector<128xf32> to vector<1x128xf32>
      %c1360_97 = arith.constant 1360 : index
      %c0_98 = arith.constant 0 : index
      %146 = vector.load %arg6[%c1360_97, %c0_98] : memref<2176x128xf32, #tpu.memory_space<vmem>>, vector<72x128xf32>
      %147 = arith.mulf %146, %125 : vector<72x128xf32>
      %cst_99 = arith.constant dense<0.000000e+00> : vector<128xf32>
      %148 = vector.multi_reduction <add>, %147, %cst_99 [0] : vector<72x128xf32> to vector<128xf32>
      %149 = vector.shape_cast %148 : vector<128xf32> to vector<1x128xf32>
      %c1632_100 = arith.constant 1632 : index
      %c0_101 = arith.constant 0 : index
      %150 = vector.load %arg6[%c1632_100, %c0_101] : memref<2176x128xf32, #tpu.memory_space<vmem>>, vector<72x128xf32>
      %151 = arith.mulf %150, %125 : vector<72x128xf32>
      %cst_102 = arith.constant dense<0.000000e+00> : vector<128xf32>
      %152 = vector.multi_reduction <add>, %151, %cst_102 [0] : vector<72x128xf32> to vector<128xf32>
      %153 = vector.shape_cast %152 : vector<128xf32> to vector<1x128xf32>
      %c1904_103 = arith.constant 1904 : index
      %c0_104 = arith.constant 0 : index
      %154 = vector.load %arg6[%c1904_103, %c0_104] : memref<2176x128xf32, #tpu.memory_space<vmem>>, vector<72x128xf32>
      %155 = arith.mulf %154, %125 : vector<72x128xf32>
      %cst_105 = arith.constant dense<0.000000e+00> : vector<128xf32>
      %156 = vector.multi_reduction <add>, %155, %cst_105 [0] : vector<72x128xf32> to vector<128xf32>
      %157 = vector.shape_cast %156 : vector<128xf32> to vector<1x128xf32>
      %158 = tpu.concatenate %129, %133, %137, %141, %145, %149, %153, %157 in 0 : vector<1x128xf32>, vector<1x128xf32>, vector<1x128xf32>, vector<1x128xf32>, vector<1x128xf32>, vector<1x128xf32>, vector<1x128xf32>, vector<1x128xf32> -> vector<8x128xf32>
      %159 = arith.index_cast %123 : i32 to index
      %c0_106 = arith.constant 0 : index
      %160 = vector.load %arg5[%159, %c0_106] : memref<216x128xf32, #tpu.memory_space<vmem>>, vector<8x128xf32>
      tpu.vector_store %arg5[%159, %c0_106], %158 {strides = array<i32>} : memref<216x128xf32, #tpu.memory_space<vmem>>, vector<8x128xf32>,
    }
    %c3_i32_40 = arith.constant 3 : i32
    %c0_41 = arith.constant 0 : index
    %c0_42 = arith.constant 0 : index
    %24 = vector.load %arg1[%c0_41, %c0_42] : memref<288x128xf32, #tpu.memory_space<vmem>>, vector<264x128xf32>
    %25 = arith.mulf %24, %24 : vector<264x128xf32>
    %c0_43 = arith.constant 0 : index
    %c0_44 = arith.constant 0 : index
    %26 = vector.load %arg5[%c0_43, %c0_44] : memref<216x128xf32, #tpu.memory_space<vmem>>, vector<213x128xf32>
    %c0_45 = arith.constant 0 : index
    %c0_46 = arith.constant 0 : index
    %27 = vector.load %arg2[%c0_45, %c0_46] : memref<213x264xf32, #tpu.memory_space<vmem>>, vector<213x264xf32>
    %cst_47 = arith.constant dense<0.000000e+00> : vector<213x128xf32>
    %28 = tpu.matmul %27, %25, %cst_47 {dimension_numbers = #tpu.dot_dimension_numbers<[1], [0], [0], [1], [0, 0, 1, 1], [], []>} : vector<213x264xf32>, vector<264x128xf32>, vector<213x128xf32> -> vector<213x128xf32>
    %cst_48 = arith.constant 2.000000e+00 : f32
    %29 = vector.broadcast %cst_48 : f32 to vector<213x128xf32>
    %30 = arith.mulf %29, %26 : vector<213x128xf32>
    %31 = arith.subf %28, %30 : vector<213x128xf32>
    %32 = vector.extract_strided_slice %31 {offsets = [1, 0], sizes = [212, 128], strides = [1, 1]} : vector<213x128xf32> to vector<212x128xf32>
    %c0_49 = arith.constant 0 : index
    %c0_50 = arith.constant 0 : index
    %33 = vector.load %arg3[%c0_49, %c0_50] : memref<212x212xf32, #tpu.memory_space<vmem>>, vector<212x212xf32>
    %cst_51 = arith.constant dense<0.000000e+00> : vector<212x128xf32>
    %34 = tpu.matmul %33, %32, %cst_51 {dimension_numbers = #tpu.dot_dimension_numbers<[1], [0], [0], [1], [0, 0, 1, 1], [], []>} : vector<212x212xf32>, vector<212x128xf32>, vector<212x128xf32> -> vector<212x128xf32>
    %35 = tpu.iota {dimensions = array<i32: 0>} : vector<212x1xi32>
    %c1_i32_52 = arith.constant 1 : i32
    %36 = vector.broadcast %c1_i32_52 : i32 to vector<212x1xi32>
    %37 = arith.addi %35, %36 : vector<212x1xi32>
    %38 = arith.sitofp %37 : vector<212x1xi32> to vector<212x1xf32>
    %cst_53 = arith.constant 1.000000e-07 : f32
    %39 = vector.broadcast %cst_53 : f32 to vector<212x128xf32>
    %40 = arith.addf %34, %39 : vector<212x128xf32>
    %41 = arith.divf %32, %40 : vector<212x128xf32>
    %42 = vector.broadcast %38 : vector<212x1xf32> to vector<212x128xf32>
    %43 = arith.mulf %41, %42 : vector<212x128xf32>
    %cst_54 = arith.constant 1.000000e+00 : f32
    %44 = vector.broadcast %cst_54 : f32 to vector<1x128xf32>
    %45 = tpu.concatenate %44, %43 in 0 : vector<1x128xf32>, vector<212x128xf32> -> vector<213x128xf32>
    %46 = vector.extract_strided_slice %45 {offsets = [26, 0], sizes = [187, 128], strides = [1, 1]} : vector<213x128xf32> to vector<187x128xf32>
    %47 = tpu.iota {dimensions = array<i32: 0>} : vector<187x128xi32>
    %cst_55 = arith.constant 2.000000e-01 : f32
    %48 = vector.broadcast %cst_55 : f32 to vector<187x128xf32>
    %49 = arith.cmpf olt, %46, %48 : vector<187x128xf32>
    %c187_i32 = arith.constant 187 : i32
    %50 = vector.broadcast %c187_i32 : i32 to vector<187x128xi32>
    %51 = arith.select %49, %47, %50 : vector<187x128xi1>, vector<187x128xi32>
    %cst_56 = arith.constant dense<2147483647> : vector<128xi32>
    %52 = vector.multi_reduction <minsi>, %51, %cst_56 [0] : vector<187x128xi32> to vector<128xi32>
    %53 = vector.shape_cast %52 : vector<128xi32> to vector<1x128xi32>
    %c0_i32_57 = arith.constant 0 : i32
    %54 = vector.broadcast %c0_i32_57 : i32 to vector<1x128xi32>
    %55 = arith.cmpi eq, %53, %54 : vector<1x128xi32>
    %c187_i32_58 = arith.constant 187 : i32
    %56 = vector.broadcast %c187_i32_58 : i32 to vector<1x128xi32>
    %57 = arith.select %55, %56, %53 : vector<1x128xi1>, vector<1x128xi32>
    %58 = vector.broadcast %57 : vector<1x128xi32> to vector<187x128xi32>
    %59 = arith.cmpi sle, %58, %47 : vector<187x128xi32>
    %60 = vector.extract_strided_slice %46 {offsets = [1, 0], sizes = [186, 128], strides = [1, 1]} : vector<187x128xf32> to vector<186x128xf32>
    %61 = vector.extract_strided_slice %46 {offsets = [0, 0], sizes = [186, 128], strides = [1, 1]} : vector<187x128xf32> to vector<186x128xf32>
    %62 = arith.subf %60, %61 : vector<186x128xf32>
    %cst_59 = arith.constant 0.000000e+00 : f32
    %63 = vector.broadcast %cst_59 : f32 to vector<1x128xf32>
    %64 = tpu.concatenate %63, %62 in 0 : vector<1x128xf32>, vector<186x128xf32> -> vector<187x128xf32>
    %65 = tpu.concatenate %62, %63 in 0 : vector<186x128xf32>, vector<1x128xf32> -> vector<187x128xf32>
    %cst_60 = arith.constant 0.000000e+00 : f32
    %66 = vector.broadcast %cst_60 : f32 to vector<187x128xf32>
    %67 = arith.cmpf ole, %64, %66 : vector<187x128xf32>
    %cst_61 = arith.constant 0.000000e+00 : f32
    %68 = vector.broadcast %cst_61 : f32 to vector<187x128xf32>
    %69 = arith.cmpf oge, %65, %68 : vector<187x128xf32>
    %70 = arith.andi %67, %69 : vector<187x128xi1>
    %71 = arith.andi %59, %70 : vector<187x128xi1>
    %c187_i32_62 = arith.constant 187 : i32
    %72 = vector.broadcast %c187_i32_62 : i32 to vector<187x128xi32>
    %73 = arith.select %71, %47, %72 : vector<187x128xi1>, vector<187x128xi32>
    %cst_63 = arith.constant dense<2147483647> : vector<128xi32>
    %74 = vector.multi_reduction <minsi>, %73, %cst_63 [0] : vector<187x128xi32> to vector<128xi32>
    %75 = vector.shape_cast %74 : vector<128xi32> to vector<1x128xi32>
    %c187_i32_64 = arith.constant 187 : i32
    %76 = vector.broadcast %c187_i32_64 : i32 to vector<1x128xi32>
    %77 = arith.cmpi eq, %75, %76 : vector<1x128xi32>
    %c0_i32_65 = arith.constant 0 : i32
    %78 = vector.broadcast %c0_i32_65 : i32 to vector<1x128xi32>
    %79 = arith.select %77, %78, %75 : vector<1x128xi1>, vector<1x128xi32>
    %80 = vector.extract_strided_slice %46 {offsets = [0, 0], sizes = [185, 128], strides = [1, 1]} : vector<187x128xf32> to vector<185x128xf32>
    %81 = vector.extract_strided_slice %46 {offsets = [1, 0], sizes = [185, 128], strides = [1, 1]} : vector<187x128xf32> to vector<185x128xf32>
    %82 = vector.extract_strided_slice %46 {offsets = [2, 0], sizes = [185, 128], strides = [1, 1]} : vector<187x128xf32> to vector<185x128xf32>
    %83 = arith.addf %82, %80 : vector<185x128xf32>
    %cst_66 = arith.constant 2.000000e+00 : f32
    %84 = vector.broadcast %cst_66 : f32 to vector<185x128xf32>
    %85 = arith.mulf %84, %81 : vector<185x128xf32>
    %86 = arith.subf %83, %85 : vector<185x128xf32>
    %87 = arith.subf %82, %80 : vector<185x128xf32>
    %cst_67 = arith.constant 5.000000e-01 : f32
    %88 = vector.broadcast %cst_67 : f32 to vector<185x128xf32>
    %89 = arith.mulf %88, %87 : vector<185x128xf32>
    %cst_68 = arith.constant 0.000000e+00 : f32
    %90 = vector.broadcast %cst_68 : f32 to vector<185x128xf32>
    %91 = arith.cmpf oeq, %86, %90 : vector<185x128xf32>
    %cst_69 = arith.constant 1.000000e+00 : f32
    %92 = vector.broadcast %cst_69 : f32 to vector<185x128xf32>
    %93 = arith.select %91, %92, %86 : vector<185x128xi1>, vector<185x128xf32>
    %94 = math.absf %89 : vector<185x128xf32>
    %95 = math.absf %86 : vector<185x128xf32>
    %96 = arith.cmpf oge, %94, %95 : vector<185x128xf32>
    %cst_70 = arith.constant 0.000000e+00 : f32
    %97 = vector.broadcast %cst_70 : f32 to vector<185x128xf32>
    %98 = arith.subf %97, %89 : vector<185x128xf32>
    %99 = arith.divf %98, %93 : vector<185x128xf32>
    %cst_71 = arith.constant 0.000000e+00 : f32
    %100 = vector.broadcast %cst_71 : f32 to vector<185x128xf32>
    %101 = arith.select %96, %100, %99 : vector<185x128xi1>, vector<185x128xf32>
    %102 = tpu.concatenate %63, %101, %63 in 0 : vector<1x128xf32>, vector<185x128xf32>, vector<1x128xf32> -> vector<187x128xf32>
    %103 = vector.broadcast %79 : vector<1x128xi32> to vector<187x128xi32>
    %104 = arith.cmpi eq, %47, %103 : vector<187x128xi32>
    %cst_72 = arith.constant 0.000000e+00 : f32
    %105 = vector.broadcast %cst_72 : f32 to vector<187x128xf32>
    %106 = arith.select %104, %102, %105 : vector<187x128xi1>, vector<187x128xf32>
    %cst_73 = arith.constant dense<0.000000e+00> : vector<128xf32>
    %107 = vector.multi_reduction <add>, %106, %cst_73 [0] : vector<187x128xf32> to vector<128xf32>
    %108 = vector.shape_cast %107 : vector<128xf32> to vector<1x128xf32>
    %109 = arith.sitofp %79 : vector<1x128xi32> to vector<1x128xf32>
    %cst_74 = arith.constant 2.700000e+01 : f32
    %110 = vector.broadcast %cst_74 : f32 to vector<1x128xf32>
    %111 = arith.addf %109, %110 : vector<1x128xf32>
    %112 = arith.addf %111, %108 : vector<1x128xf32>
    %c0_i32_75 = arith.constant 0 : i32
    %113 = vector.broadcast %c0_i32_75 : i32 to vector<1x128xi32>
    %114 = arith.cmpi sgt, %79, %113 : vector<1x128xi32>
    %cst_76 = arith.constant 1.600000e+04 : f32
    %115 = vector.broadcast %cst_76 : f32 to vector<1x128xf32>
    %116 = arith.divf %115, %112 : vector<1x128xf32>
    %cst_77 = arith.constant 0.000000e+00 : f32
    %117 = vector.broadcast %cst_77 : f32 to vector<1x128xf32>
    %118 = arith.select %114, %116, %117 : vector<1x128xi1>, vector<1x128xf32>
    %c0_78 = arith.constant 0 : index
    %c0_79 = arith.constant 0 : index
    %119 = vector.load %arg4[%c0_78, %c0_79] : memref<1x128xf32, #tpu.memory_space<vmem>>, vector<1x128xf32>
    tpu.vector_store %arg4[%c0_78, %c0_79], %118 {strides = array<i32>} : memref<1x128xf32, #tpu.memory_space<vmem>>, vector<1x128xf32>,
    return
  }
  func.func @transform_0(%arg0: i32) -> (i32, i32) {
    %c0_i32 = arith.constant 0 : i32
    %c0_i32_0 = arith.constant 0 : i32
    return %c0_i32, %arg0 : i32, i32
  }
  func.func @transform_1(%arg0: i32) -> (i32, i32) {
    %c0_i32 = arith.constant 0 : i32
    %c0_i32_0 = arith.constant 0 : i32
    %c0_i32_1 = arith.constant 0 : i32
    return %c0_i32, %c0_i32_0 : i32, i32
  }
  func.func @transform_2(%arg0: i32) -> (i32, i32) {
    %c0_i32 = arith.constant 0 : i32
    %c0_i32_0 = arith.constant 0 : i32
    %c0_i32_1 = arith.constant 0 : i32
    return %c0_i32, %c0_i32_0 : i32, i32
  }
  func.func @transform_3(%arg0: i32) -> (i32, i32) {
    %c0_i32 = arith.constant 0 : i32
    %c0_i32_0 = arith.constant 0 : i32
    return %c0_i32, %arg0 : i32, i32
  }
}

</mosaic_0001>

<llo_original>
// kernel: squeeze.1
$region0: #{squeeze.1}
  %s0 = inlined_call_operand.vmem [shape: f32[22], index: 0, kind: input, shape index: {}]
  %s1 = inlined_call_operand.vmem [shape: f32[2,11], index: 1, kind: output, shape index: {}]
  $region1: #{squeeze.1} parent=0
    #allocation0 [shape = 'u8[4096]{0}', space=vmem, size = 0x1000, scoped, tag = 'scoped mem for output reshape']
    #allocation1 [shape = 'u8[4096]{0}', space=vmem, size = 0x1000, scoped, tag = 'scoped mem for input reshape']
    %s3 = ssub.s32 2, 1
    %v4 = vld [vmem:[%s0] sm:%s3]
    %5 = vst [vmem:[#allocation1] sm:%s3] %v4
    %v6 = vld [vmem:[#allocation1] sm:$0x1]
    %vm7 = vcmask 89088
    %8 = vst.msk [vmem:[#allocation0] sm:$0x1] %vm7, %v6
    %v9 = vld [vmem:[#allocation1] sm:$0x1]
    %10 = vrot.lane.b32.xlu0 %v9, 117
    %v11 = vpop.permute.xlu0 %10
    %vm12 = vcmask 89088
    %s13 = scalar_lea.vmem [#allocation0], 1
    %14 = vst.msk [vmem:[%s13] sm:$0x1] %vm12, %v11
    %s16 = ssub.s32 4, 1
    %v17 = vld [vmem:[#allocation0] sm:%s16]
    %s19 = ssub.s32 4, 1
    %20 = vst [vmem:[%s1] sm:%s19] %v17

// kernel: yin_pitch.1
$region0: #{yin_pitch.1}
  #allocation0 [shape = 'u32[]', space=smem, size = 0x4, offset = 0x4, fixed_abs, tag = 'smem constant byte address 0x4 - core index']
  #allocation1 [shape = 'u32[72,128]{1,0:T(1,128)}', space=vmem, size = 0x9000, scoped, tag = 'internal scratch']
  #allocation2 [shape = 'f32[216,128]{1,0:T(8,128)}', space=vmem, size = 0x1b000, scoped, tag = 'scratch operand']
  #allocation3 [shape = 'f32[2176,128]{1,0:T(8,128)}', space=vmem, size = 0x110000, scoped, tag = 'scratch operand']
  %s0 = inlined_call_operand.vmem [shape: f32[288,128], index: 0, kind: input, shape index: {}]
  %s1 = inlined_call_operand.vmem [shape: f32[213,264], index: 1, kind: input, shape index: {}]
  %s2 = inlined_call_operand.vmem [shape: f32[212,212], index: 2, kind: input, shape index: {}]
  %s3 = inlined_call_operand.vmem [shape: f32[1,128], index: 3, kind: output, shape index: {}]
  %s4 = sld [smem:[#allocation0]]
  $region71: #{yin_pitch.1} parent=0
    _
  %s6 = ssub.s32 1, %s4
  %s7 = scalar_select 0, %s6, %s4
  // Predicated region
  $region2: #{yin_pitch.1} parent=0 // pred_check
    _
  $region3: #{yin_pitch.1} parent=0 // pred_check_branch
    %9 = sbr.rel (0) target = $region5
  $region4: #{yin_pitch.1} parent=0 // pred_region
    _
  $region5: #{yin_pitch.1} parent=0 // pred_fallthru
    _
  // Predicated region
  $region6: #{yin_pitch.1} parent=0 // pred_check
    _
  $region7: #{yin_pitch.1} parent=0 // pred_check_branch
    %11 = sbr.rel (0) target = $region9
  $region8: #{yin_pitch.1} parent=0 // pred_region
    _
  $region9: #{yin_pitch.1} parent=0 // pred_fallthru
    _
  // Predicated region
  $region10: #{yin_pitch.1} parent=0 // pred_check
    _
  $region11: #{yin_pitch.1} parent=0 // pred_check_branch
    %13 = sbr.rel (0) target = $region13
  $region12: #{yin_pitch.1} parent=0 // pred_region
    _
  $region13: #{yin_pitch.1} parent=0 // pred_fallthru
    _
  %v14 = vld [vmem:[%s0] sm:$0xff]
  %v15 = vld [vmem:[%s0 + $0x8] sm:$0xff]
  %v16 = vld [vmem:[%s0 + $0x10] sm:$0xff]
  %v17 = vld [vmem:[%s0 + $0x18] sm:$0xff]
  %v18 = vld [vmem:[%s0 + $0x20] sm:$0xff]
  %v19 = vld [vmem:[%s0 + $0x28] sm:$0xff]
  %v20 = vld [vmem:[%s0 + $0x30] sm:$0xff]
  %v21 = vld [vmem:[%s0 + $0x38] sm:$0xff]
  %v22 = vld [vmem:[%s0 + $0x40] sm:$0xff]
  %v23 = vld [vmem:[%s0 + $0x48] sm:$0xff]
  %v24 = vld [vmem:[%s0 + $0x50] sm:$0xff]
  %v25 = vld [vmem:[%s0 + $0x58] sm:$0xff]
  %v26 = vld [vmem:[%s0 + $0x60] sm:$0xff]
  %v27 = vld [vmem:[%s0 + $0x68] sm:$0xff]
  %v28 = vld [vmem:[%s0 + $0x70] sm:$0xff]
  %v29 = vld [vmem:[%s0 + $0x78] sm:$0xff]
  %v30 = vld [vmem:[%s0 + $0x80] sm:$0xff]
  %v31 = vld [vmem:[%s0 + $0x88] sm:$0xff]
  %v32 = vld [vmem:[%s0 + $0x90] sm:$0xff]
  %v33 = vld [vmem:[%s0 + $0x98] sm:$0xff]
  %v34 = vld [vmem:[%s0 + $0xa0] sm:$0xff]
  %v35 = vld [vmem:[%s0 + $0xa8] sm:$0xff]
  %v36 = vld [vmem:[%s0 + $0xb0] sm:$0xff]
  %v37 = vld [vmem:[%s0 + $0xb8] sm:$0xff]
  %v38 = vld [vmem:[%s0 + $0xc0] sm:$0xff]
  %v39 = vld [vmem:[%s0 + $0xc8] sm:$0xff]
  %v40 = vld [vmem:[%s0 + $0xd0] sm:$0xff]
  %v41 = vld [vmem:[%s0 + $0xd8] sm:$0xff]
  %v42 = vld [vmem:[%s0 + $0xe0] sm:$0xff]
  %v43 = vld [vmem:[%s0 + $0xe8] sm:$0xff]
  %v44 = vld [vmem:[%s0 + $0xf0] sm:$0xff]
  %v45 = vld [vmem:[%s0 + $0xf8] sm:$0xff]
  %v46 = vld [vmem:[%s0 + $0x100] sm:$0xff]
  %47 = vst [vmem:[#allocation3] sm:$0xff] %v14
  %48 = vst [vmem:[#allocation3 + $0x8] sm:$0xff] %v15
  %49 = vst [vmem:[#allocation3 + $0x10] sm:$0xff] %v16
  %50 = vst [vmem:[#allocation3 + $0x18] sm:$0xff] %v17
  %51 = vst [vmem:[#allocation3 + $0x20] sm:$0xff] %v18
  %52 = vst [vmem:[#allocation3 + $0x28] sm:$0xff] %v19
  %53 = vst [vmem:[#allocation3 + $0x30] sm:$0xff] %v20
  %54 = vst [vmem:[#allocation3 + $0x38] sm:$0xff] %v21
  %55 = vst [vmem:[#allocation3 + $0x40] sm:$0xff] %v22
  %56 = vst [vmem:[#allocation3 + $0x48] sm:$0xff] %v23
  %57 = vst [vmem:[#allocation3 + $0x50] sm:$0xff] %v24
  %58 = vst [vmem:[#allocation3 + $0x58] sm:$0xff] %v25
  %59 = vst [vmem:[#allocation3 + $0x60] sm:$0xff] %v26
  %60 = vst [vmem:[#allocation3 + $0x68] sm:$0xff] %v27
  %61 = vst [vmem:[#allocation3 + $0x70] sm:$0xff] %v28
  %62 = vst [vmem:[#allocation3 + $0x78] sm:$0xff] %v29
  %63 = vst [vmem:[#allocation3 + $0x80] sm:$0xff] %v30
  %64 = vst [vmem:[#allocation3 + $0x88] sm:$0xff] %v31
  %65 = vst [vmem:[#allocation3 + $0x90] sm:$0xff] %v32
  %66 = vst [vmem:[#allocation3 + $0x98] sm:$0xff] %v33
  %67 = vst [vmem:[#allocation3 + $0xa0] sm:$0xff] %v34
  %68 = vst [vmem:[#allocation3 + $0xa8] sm:$0xff] %v35
  %69 = vst [vmem:[#allocation3 + $0xb0] sm:$0xff] %v36
  %70 = vst [vmem:[#allocation3 + $0xb8] sm:$0xff] %v37
  %71 = vst [vmem:[#allocation3 + $0xc0] sm:$0xff] %v38
  %72 = vst [vmem:[#allocation3 + $0xc8] sm:$0xff] %v39
  %73 = vst [vmem:[#allocation3 + $0xd0] sm:$0xff] %v40
  %74 = vst [vmem:[#allocation3 + $0xd8] sm:$0xff] %v41
  %75 = vst [vmem:[#allocation3 + $0xe0] sm:$0xff] %v42
  %76 = vst [vmem:[#allocation3 + $0xe8] sm:$0xff] %v43
  %77 = vst [vmem:[#allocation3 + $0xf0] sm:$0xff] %v44
  %78 = vst [vmem:[#allocation3 + $0xf8] sm:$0xff] %v45
  %79 = vst [vmem:[#allocation3 + $0x100] sm:$0xff] %v46
  %80 = vst [vmem:[#allocation3 + $0x110] sm:$0xff] 0.0
  %81 = vst [vmem:[#allocation3 + $0x111] sm:$0xff] %v14
  %82 = vst [vmem:[#allocation3 + $0x119] sm:$0xff] %v15
  %83 = vst [vmem:[#allocation3 + $0x121] sm:$0xff] %v16
  %84 = vst [vmem:[#allocation3 + $0x129] sm:$0xff] %v17
  %85 = vst [vmem:[#allocation3 + $0x131] sm:$0xff] %v18
  %86 = vst [vmem:[#allocation3 + $0x139] sm:$0xff] %v19
  %87 = vst [vmem:[#allocation3 + $0x141] sm:$0xff] %v20
  %88 = vst [vmem:[#allocation3 + $0x149] sm:$0xff] %v21
  %89 = vst [vmem:[#allocation3 + $0x151] sm:$0xff] %v22
  %90 = vst [vmem:[#allocation3 + $0x159] sm:$0xff] %v23
  %91 = vst [vmem:[#allocation3 + $0x161] sm:$0xff] %v24
  %92 = vst [vmem:[#allocation3 + $0x169] sm:$0xff] %v25
  %93 = vst [vmem:[#allocation3 + $0x171] sm:$0xff] %v26
  %94 = vst [vmem:[#allocation3 + $0x179] sm:$0xff] %v27
  %95 = vst [vmem:[#allocation3 + $0x181] sm:$0xff] %v28
  %96 = vst [vmem:[#allocation3 + $0x189] sm:$0xff] %v29
  %97 = vst [vmem:[#allocation3 + $0x191] sm:$0xff] %v30
  %98 = vst [vmem:[#allocation3 + $0x199] sm:$0xff] %v31
  %99 = vst [vmem:[#allocation3 + $0x1a1] sm:$0xff] %v32
  %100 = vst [vmem:[#allocation3 + $0x1a9] sm:$0xff] %v33
  %101 = vst [vmem:[#allocation3 + $0x1b1] sm:$0xff] %v34
  %102 = vst [vmem:[#allocation3 + $0x1b9] sm:$0xff] %v35
  %103 = vst [vmem:[#allocation3 + $0x1c1] sm:$0xff] %v36
  %104 = vst [vmem:[#allocation3 + $0x1c9] sm:$0xff] %v37
  %105 = vst [vmem:[#allocation3 + $0x1d1] sm:$0xff] %v38
  %106 = vst [vmem:[#allocation3 + $0x1d9] sm:$0xff] %v39
  %107 = vst [vmem:[#allocation3 + $0x1e1] sm:$0xff] %v40
  %108 = vst [vmem:[#allocation3 + $0x1e9] sm:$0xff] %v41
  %109 = vst [vmem:[#allocation3 + $0x1f1] sm:$0xff] %v42
  %110 = vst [vmem:[#allocation3 + $0x1f9] sm:$0xff] %v43
  %111 = vst [vmem:[#allocation3 + $0x201] sm:$0xff] %v44
  %112 = vst [vmem:[#allocation3 + $0x209] sm:$0xff] %v45
  %113 = vst [vmem:[#allocation3 + $0x211] sm:$0xff] %v46
  %114 = vst [vmem:[#allocation3 + $0x220] sm:$0xff] 0.0
  %115 = vst [vmem:[#allocation3 + $0x222] sm:$0xff] %v14
  %116 = vst [vmem:[#allocation3 + $0x22a] sm:$0xff] %v15
  %117 = vst [vmem:[#allocation3 + $0x232] sm:$0xff] %v16
  %118 = vst [vmem:[#allocation3 + $0x23a] sm:$0xff] %v17
  %119 = vst [vmem:[#allocation3 + $0x242] sm:$0xff] %v18
  %120 = vst [vmem:[#allocation3 + $0x24a] sm:$0xff] %v19
  %121 = vst [vmem:[#allocation3 + $0x252] sm:$0xff] %v20
  %122 = vst [vmem:[#allocation3 + $0x25a] sm:$0xff] %v21
  %123 = vst [vmem:[#allocation3 + $0x262] sm:$0xff] %v22
  %124 = vst [vmem:[#allocation3 + $0x26a] sm:$0xff] %v23
  %125 = vst [vmem:[#allocation3 + $0x272] sm:$0xff] %v24
  %126 = vst [vmem:[#allocation3 + $0x27a] sm:$0xff] %v25
  %127 = vst [vmem:[#allocation3 + $0x282] sm:$0xff] %v26
  %128 = vst [vmem:[#allocation3 + $0x28a] sm:$0xff] %v27
  %129 = vst [vmem:[#allocation3 + $0x292] sm:$0xff] %v28
  %130 = vst [vmem:[#allocation3 + $0x29a] sm:$0xff] %v29
  %131 = vst [vmem:[#allocation3 + $0x2a2] sm:$0xff] %v30
  %132 = vst [vmem:[#allocation3 + $0x2aa] sm:$0xff] %v31
  %133 = vst [vmem:[#allocation3 + $0x2b2] sm:$0xff] %v32
  %134 = vst [vmem:[#allocation3 + $0x2ba] sm:$0xff] %v33
  %135 = vst [vmem:[#allocation3 + $0x2c2] sm:$0xff] %v34
  %136 = vst [vmem:[#allocation3 + $0x2ca] sm:$0xff] %v35
  %137 = vst [vmem:[#allocation3 + $0x2d2] sm:$0xff] %v36
  %138 = vst [vmem:[#allocation3 + $0x2da] sm:$0xff] %v37
  %139 = vst [vmem:[#allocation3 + $0x2e2] sm:$0xff] %v38
  %140 = vst [vmem:[#allocation3 + $0x2ea] sm:$0xff] %v39
  %141 = vst [vmem:[#allocation3 + $0x2f2] sm:$0xff] %v40
  %142 = vst [vmem:[#allocation3 + $0x2fa] sm:$0xff] %v41
  %143 = vst [vmem:[#allocation3 + $0x302] sm:$0xff] %v42
  %144 = vst [vmem:[#allocation3 + $0x30a] sm:$0xff] %v43
  %145 = vst [vmem:[#allocation3 + $0x312] sm:$0xff] %v44
  %146 = vst [vmem:[#allocation3 + $0x31a] sm:$0xff] %v45
  %147 = vst [vmem:[#allocation3 + $0x322] sm:$0xff] %v46
  %148 = vst [vmem:[#allocation3 + $0x330] sm:$0xff] 0.0
  %149 = vst [vmem:[#allocation3 + $0x333] sm:$0xff] %v14
  %150 = vst [vmem:[#allocation3 + $0x33b] sm:$0xff] %v15
  %151 = vst [vmem:[#allocation3 + $0x343] sm:$0xff] %v16
  %152 = vst [vmem:[#allocation3 + $0x34b] sm:$0xff] %v17
  %153 = vst [vmem:[#allocation3 + $0x353] sm:$0xff] %v18
  %154 = vst [vmem:[#allocation3 + $0x35b] sm:$0xff] %v19
  %155 = vst [vmem:[#allocation3 + $0x363] sm:$0xff] %v20
  %156 = vst [vmem:[#allocation3 + $0x36b] sm:$0xff] %v21
  %157 = vst [vmem:[#allocation3 + $0x373] sm:$0xff] %v22
  %158 = vst [vmem:[#allocation3 + $0x37b] sm:$0xff] %v23
  %159 = vst [vmem:[#allocation3 + $0x383] sm:$0xff] %v24
  %160 = vst [vmem:[#allocation3 + $0x38b] sm:$0xff] %v25
  %161 = vst [vmem:[#allocation3 + $0x393] sm:$0xff] %v26
  %162 = vst [vmem:[#allocation3 + $0x39b] sm:$0xff] %v27
  %163 = vst [vmem:[#allocation3 + $0x3a3] sm:$0xff] %v28
  %164 = vst [vmem:[#allocation3 + $0x3ab] sm:$0xff] %v29
  %165 = vst [vmem:[#allocation3 + $0x3b3] sm:$0xff] %v30
  %166 = vst [vmem:[#allocation3 + $0x3bb] sm:$0xff] %v31
  %167 = vst [vmem:[#allocation3 + $0x3c3] sm:$0xff] %v32
  %168 = vst [vmem:[#allocation3 + $0x3cb] sm:$0xff] %v33
  %169 = vst [vmem:[#allocation3 + $0x3d3] sm:$0xff] %v34
  %170 = vst [vmem:[#allocation3 + $0x3db] sm:$0xff] %v35
  %171 = vst [vmem:[#allocation3 + $0x3e3] sm:$0xff] %v36
  %172 = vst [vmem:[#allocation3 + $0x3eb] sm:$0xff] %v37
  %173 = vst [vmem:[#allocation3 + $0x3f3] sm:$0xff] %v38
  %174 = vst [vmem:[#allocation3 + $0x3fb] sm:$0xff] %v39
  %175 = vst [vmem:[#allocation3 + $0x403] sm:$0xff] %v40
  %176 = vst [vmem:[#allocation3 + $0x40b] sm:$0xff] %v41
  %177 = vst [vmem:[#allocation3 + $0x413] sm:$0xff] %v42
  %178 = vst [vmem:[#allocation3 + $0x41b] sm:$0xff] %v43
  %179 = vst [vmem:[#allocation3 + $0x423] sm:$0xff] %v44
  %180 = vst [vmem:[#allocation3 + $0x42b] sm:$0xff] %v45
  %181 = vst [vmem:[#allocation3 + $0x433] sm:$0xff] %v46
  %182 = vst [vmem:[#allocation3 + $0x440] sm:$0xff] 0.0
  %183 = vst [vmem:[#allocation3 + $0x444] sm:$0xff] %v14
  %184 = vst [vmem:[#allocation3 + $0x44c] sm:$0xff] %v15
  %185 = vst [vmem:[#allocation3 + $0x454] sm:$0xff] %v16
  %186 = vst [vmem:[#allocation3 + $0x45c] sm:$0xff] %v17
  %187 = vst [vmem:[#allocation3 + $0x464] sm:$0xff] %v18
  %188 = vst [vmem:[#allocation3 + $0x46c] sm:$0xff] %v19
  %189 = vst [vmem:[#allocation3 + $0x474] sm:$0xff] %v20
  %190 = vst [vmem:[#allocation3 + $0x47c] sm:$0xff] %v21
  %191 = vst [vmem:[#allocation3 + $0x484] sm:$0xff] %v22
  %192 = vst [vmem:[#allocation3 + $0x48c] sm:$0xff] %v23
  %193 = vst [vmem:[#allocation3 + $0x494] sm:$0xff] %v24
  %194 = vst [vmem:[#allocation3 + $0x49c] sm:$0xff] %v25
  %195 = vst [vmem:[#allocation3 + $0x4a4] sm:$0xff] %v26
  %196 = vst [vmem:[#allocation3 + $0x4ac] sm:$0xff] %v27
  %197 = vst [vmem:[#allocation3 + $0x4b4] sm:$0xff] %v28
  %198 = vst [vmem:[#allocation3 + $0x4bc] sm:$0xff] %v29
  %199 = vst [vmem:[#allocation3 + $0x4c4] sm:$0xff] %v30
  %200 = vst [vmem:[#allocation3 + $0x4cc] sm:$0xff] %v31
  %201 = vst [vmem:[#allocation3 + $0x4d4] sm:$0xff] %v32
  %202 = vst [vmem:[#allocation3 + $0x4dc] sm:$0xff] %v33
  %203 = vst [vmem:[#allocation3 + $0x4e4] sm:$0xff] %v34
  %204 = vst [vmem:[#allocation3 + $0x4ec] sm:$0xff] %v35
  %205 = vst [vmem:[#allocation3 + $0x4f4] sm:$0xff] %v36
  %206 = vst [vmem:[#allocation3 + $0x4fc] sm:$0xff] %v37
  %207 = vst [vmem:[#allocation3 + $0x504] sm:$0xff] %v38
  %208 = vst [vmem:[#allocation3 + $0x50c] sm:$0xff] %v39
  %209 = vst [vmem:[#allocation3 + $0x514] sm:$0xff] %v40
  %210 = vst [vmem:[#allocation3 + $0x51c] sm:$0xff] %v41
  %211 = vst [vmem:[#allocation3 + $0x524] sm:$0xff] %v42
  %212 = vst [vmem:[#allocation3 + $0x52c] sm:$0xff] %v43
  %213 = vst [vmem:[#allocation3 + $0x534] sm:$0xff] %v44
  %214 = vst [vmem:[#allocation3 + $0x53c] sm:$0xff] %v45
  %215 = vst [vmem:[#allocation3 + $0x544] sm:$0xff] %v46
  %216 = vst [vmem:[#allocation3 + $0x550] sm:$0xff] 0.0
  %217 = vst [vmem:[#allocation3 + $0x555] sm:$0xff] %v14
  %218 = vst [vmem:[#allocation3 + $0x55d] sm:$0xff] %v15
  %219 = vst [vmem:[#allocation3 + $0x565] sm:$0xff] %v16
  %220 = vst [vmem:[#allocation3 + $0x56d] sm:$0xff] %v17
  %221 = vst [vmem:[#allocation3 + $0x575] sm:$0xff] %v18
  %222 = vst [vmem:[#allocation3 + $0x57d] sm:$0xff] %v19
  %223 = vst [vmem:[#allocation3 + $0x585] sm:$0xff] %v20
  %224 = vst [vmem:[#allocation3 + $0x58d] sm:$0xff] %v21
  %225 = vst [vmem:[#allocation3 + $0x595] sm:$0xff] %v22
  %226 = vst [vmem:[#allocation3 + $0x59d] sm:$0xff] %v23
  %227 = vst [vmem:[#allocation3 + $0x5a5] sm:$0xff] %v24
  %228 = vst [vmem:[#allocation3 + $0x5ad] sm:$0xff] %v25
  %229 = vst [vmem:[#allocation3 + $0x5b5] sm:$0xff] %v26
  %230 = vst [vmem:[#allocation3 + $0x5bd] sm:$0xff] %v27
  %231 = vst [vmem:[#allocation3 + $0x5c5] sm:$0xff] %v28
  %232 = vst [vmem:[#allocation3 + $0x5cd] sm:$0xff] %v29
  %233 = vst [vmem:[#allocation3 + $0x5d5] sm:$0xff] %v30
  %234 = vst [vmem:[#allocation3 + $0x5dd] sm:$0xff] %v31
  %235 = vst [vmem:[#allocation3 + $0x5e5] sm:$0xff] %v32
  %236 = vst [vmem:[#allocation3 + $0x5ed] sm:$0xff] %v33
  %237 = vst [vmem:[#allocation3 + $0x5f5] sm:$0xff] %v34
  %238 = vst [vmem:[#allocation3 + $0x5fd] sm:$0xff] %v35
  %239 = vst [vmem:[#allocation3 + $0x605] sm:$0xff] %v36
  %240 = vst [vmem:[#allocation3 + $0x60d] sm:$0xff] %v37
  %241 = vst [vmem:[#allocation3 + $0x615] sm:$0xff] %v38
  %242 = vst [vmem:[#allocation3 + $0x61d] sm:$0xff] %v39
  %243 = vst [vmem:[#allocation3 + $0x625] sm:$0xff] %v40
  %244 = vst [vmem:[#allocation3 + $0x62d] sm:$0xff] %v41
  %245 = vst [vmem:[#allocation3 + $0x635] sm:$0xff] %v42
  %246 = vst [vmem:[#allocation3 + $0x63d] sm:$0xff] %v43
  %247 = vst [vmem:[#allocation3 + $0x645] sm:$0xff] %v44
  %248 = vst [vmem:[#allocation3 + $0x64d] sm:$0xff] %v45
  %249 = vst [vmem:[#allocation3 + $0x655] sm:$0xff] %v46
  %250 = vst [vmem:[#allocation3 + $0x660] sm:$0xff] 0.0
  %251 = vst [vmem:[#allocation3 + $0x666] sm:$0xff] %v14
  %252 = vst [vmem:[#allocation3 + $0x66e] sm:$0xff] %v15
  %253 = vst [vmem:[#allocation3 + $0x676] sm:$0xff] %v16
  %254 = vst [vmem:[#allocation3 + $0x67e] sm:$0xff] %v17
  %255 = vst [vmem:[#allocation3 + $0x686] sm:$0xff] %v18
  %256 = vst [vmem:[#allocation3 + $0x68e] sm:$0xff] %v19
  %257 = vst [vmem:[#allocation3 + $0x696] sm:$0xff] %v20
  %258 = vst [vmem:[#allocation3 + $0x69e] sm:$0xff] %v21
  %259 = vst [vmem:[#allocation3 + $0x6a6] sm:$0xff] %v22
  %260 = vst [vmem:[#allocation3 + $0x6ae] sm:$0xff] %v23
  %261 = vst [vmem:[#allocation3 + $0x6b6] sm:$0xff] %v24
  %262 = vst [vmem:[#allocation3 + $0x6be] sm:$0xff] %v25
  %263 = vst [vmem:[#allocation3 + $0x6c6] sm:$0xff] %v26
  %264 = vst [vmem:[#allocation3 + $0x6ce] sm:$0xff] %v27
  %265 = vst [vmem:[#allocation3 + $0x6d6] sm:$0xff] %v28
  %266 = vst [vmem:[#allocation3 + $0x6de] sm:$0xff] %v29
  %267 = vst [vmem:[#allocation3 + $0x6e6] sm:$0xff] %v30
  %268 = vst [vmem:[#allocation3 + $0x6ee] sm:$0xff] %v31
  %269 = vst [vmem:[#allocation3 + $0x6f6] sm:$0xff] %v32
  %270 = vst [vmem:[#allocation3 + $0x6fe] sm:$0xff] %v33
  %271 = vst [vmem:[#allocation3 + $0x706] sm:$0xff] %v34
  %272 = vst [vmem:[#allocation3 + $0x70e] sm:$0xff] %v35
  %273 = vst [vmem:[#allocation3 + $0x716] sm:$0xff] %v36
  %274 = vst [vmem:[#allocation3 + $0x71e] sm:$0xff] %v37
  %275 = vst [vmem:[#allocation3 + $0x726] sm:$0xff] %v38
  %276 = vst [vmem:[#allocation3 + $0x72e] sm:$0xff] %v39
  %277 = vst [vmem:[#allocation3 + $0x736] sm:$0xff] %v40
  %278 = vst [vmem:[#allocation3 + $0x73e] sm:$0xff] %v41
  %279 = vst [vmem:[#allocation3 + $0x746] sm:$0xff] %v42
  %280 = vst [vmem:[#allocation3 + $0x74e] sm:$0xff] %v43
  %281 = vst [vmem:[#allocation3 + $0x756] sm:$0xff] %v44
  %282 = vst [vmem:[#allocation3 + $0x75e] sm:$0xff] %v45
  %283 = vst [vmem:[#allocation3 + $0x766] sm:$0xff] %v46
  %284 = vst [vmem:[#allocation3 + $0x770] sm:$0xff] 0.0
  %285 = vst [vmem:[#allocation3 + $0x777] sm:$0xff] %v14
  %286 = vst [vmem:[#allocation3 + $0x77f] sm:$0xff] %v15
  %287 = vst [vmem:[#allocation3 + $0x787] sm:$0xff] %v16
  %288 = vst [vmem:[#allocation3 + $0x78f] sm:$0xff] %v17
  %289 = vst [vmem:[#allocation3 + $0x797] sm:$0xff] %v18
  %290 = vst [vmem:[#allocation3 + $0x79f] sm:$0xff] %v19
  %291 = vst [vmem:[#allocation3 + $0x7a7] sm:$0xff] %v20
  %292 = vst [vmem:[#allocation3 + $0x7af] sm:$0xff] %v21
  %293 = vst [vmem:[#allocation3 + $0x7b7] sm:$0xff] %v22
  %294 = vst [vmem:[#allocation3 + $0x7bf] sm:$0xff] %v23
  %295 = vst [vmem:[#allocation3 + $0x7c7] sm:$0xff] %v24
  %296 = vst [vmem:[#allocation3 + $0x7cf] sm:$0xff] %v25
  %297 = vst [vmem:[#allocation3 + $0x7d7] sm:$0xff] %v26
  %298 = vst [vmem:[#allocation3 + $0x7df] sm:$0xff] %v27
  %299 = vst [vmem:[#allocation3 + $0x7e7] sm:$0xff] %v28
  %300 = vst [vmem:[#allocation3 + $0x7ef] sm:$0xff] %v29
  %301 = vst [vmem:[#allocation3 + $0x7f7] sm:$0xff] %v30
  %302 = vst [vmem:[#allocation3 + $0x7ff] sm:$0xff] %v31
  %303 = vst [vmem:[#allocation3 + $0x807] sm:$0xff] %v32
  %304 = vst [vmem:[#allocation3 + $0x80f] sm:$0xff] %v33
  %305 = vst [vmem:[#allocation3 + $0x817] sm:$0xff] %v34
  %306 = vst [vmem:[#allocation3 + $0x81f] sm:$0xff] %v35
  %307 = vst [vmem:[#allocation3 + $0x827] sm:$0xff] %v36
  %308 = vst [vmem:[#allocation3 + $0x82f] sm:$0xff] %v37
  %309 = vst [vmem:[#allocation3 + $0x837] sm:$0xff] %v38
  %310 = vst [vmem:[#allocation3 + $0x83f] sm:$0xff] %v39
  %311 = vst [vmem:[#allocation3 + $0x847] sm:$0xff] %v40
  %312 = vst [vmem:[#allocation3 + $0x84f] sm:$0xff] %v41
  %313 = vst [vmem:[#allocation3 + $0x857] sm:$0xff] %v42
  %314 = vst [vmem:[#allocation3 + $0x85f] sm:$0xff] %v43
  %315 = vst [vmem:[#allocation3 + $0x867] sm:$0xff] %v44
  %316 = vst [vmem:[#allocation3 + $0x86f] sm:$0xff] %v45
  %317 = vst [vmem:[#allocation3 + $0x877] sm:$0xff] %v46
  loop: start=0, step=1, limit=4
  $region14: #{yin_pitch.1} parent=0 // loop_pre_header
    _
  $region15: #{yin_pitch.1} parent=0 // loop_header
    %s319 = sphi 0, %s323
    %p320 = scmp.ge.s32.totalorder %s319, 4
  $region16: #{yin_pitch.1} parent=0 // loop_header_branch
    %322 = sbr.rel (%p320) target = $region20
  $region17: #{yin_pitch.1} parent=0 // loop_body
    %s324 = smul.u32 %s319, 8
    %s325 = scalar_lea.vmem %s0, %s324
    %v326 = vld [vmem:[%s325] sm:$0xff]
    %v327 = vld [vmem:[%s325 + $0x8] sm:$0xff]
    %v328 = vld [vmem:[%s325 + $0x10] sm:$0xff]
    %v329 = vld [vmem:[%s325 + $0x18] sm:$0xff]
    %v330 = vld [vmem:[%s325 + $0x20] sm:$0xff]
    %v331 = vld [vmem:[%s325 + $0x28] sm:$0xff]
    %v332 = vld [vmem:[%s325 + $0x30] sm:$0xff]
    %v333 = vld [vmem:[%s325 + $0x38] sm:$0xff]
    %v334 = vld [vmem:[%s325 + $0x40] sm:$0xff]
    %v335 = vld [vmem:[%s325 + $0x48] sm:$0xff]
    %v336 = vld [vmem:[%s325 + $0x50] sm:$0xff]
    %v337 = vld [vmem:[%s325 + $0x58] sm:$0xff]
    %v338 = vld [vmem:[%s325 + $0x60] sm:$0xff]
    %v339 = vld [vmem:[%s325 + $0x68] sm:$0xff]
    %v340 = vld [vmem:[%s325 + $0x70] sm:$0xff]
    %v341 = vld [vmem:[%s325 + $0x78] sm:$0xff]
    %v342 = vld [vmem:[%s325 + $0x80] sm:$0xff]
    %v343 = vld [vmem:[%s325 + $0x88] sm:$0xff]
    %v344 = vld [vmem:[%s325 + $0x90] sm:$0xff]
    %v345 = vld [vmem:[%s325 + $0x98] sm:$0xff]
    %v346 = vld [vmem:[%s325 + $0xa0] sm:$0xff]
    %v347 = vld [vmem:[%s325 + $0xa8] sm:$0xff]
    %v348 = vld [vmem:[%s325 + $0xb0] sm:$0xff]
    %v349 = vld [vmem:[%s325 + $0xb8] sm:$0xff]
    %v350 = vld [vmem:[%s325 + $0xc0] sm:$0xff]
    %v351 = vld [vmem:[%s325 + $0xc8] sm:$0xff]
    %v352 = vld [vmem:[%s325 + $0xd0] sm:$0xff]
    %v353 = vld [vmem:[%s325 + $0xd8] sm:$0xff]
    %v354 = vld [vmem:[%s325 + $0xe0] sm:$0xff]
    %v355 = vld [vmem:[%s325 + $0xe8] sm:$0xff]
    %v356 = vld [vmem:[%s325 + $0xf0] sm:$0xff]
    %v357 = vld [vmem:[%s325 + $0xf8] sm:$0xff]
    %v358 = vld [vmem:[%s325 + $0x100] sm:$0xff]
    %v359 = vld [vmem:[#allocation3] sm:$0xff]
    %v360 = vld [vmem:[#allocation3 + $0x8] sm:$0xff]
    %v361 = vld [vmem:[#allocation3 + $0x10] sm:$0xff]
    %v362 = vld [vmem:[#allocation3 + $0x18] sm:$0xff]
    %v363 = vld [vmem:[#allocation3 + $0x20] sm:$0xff]
    %v364 = vld [vmem:[#allocation3 + $0x28] sm:$0xff]
    %v365 = vld [vmem:[#allocation3 + $0x30] sm:$0xff]
    %v366 = vld [vmem:[#allocation3 + $0x38] sm:$0xff]
    %v367 = vld [vmem:[#allocation3 + $0x40] sm:$0xff]
    %v368 = vld [vmem:[#allocation3 + $0x48] sm:$0xff]
    %v369 = vld [vmem:[#allocation3 + $0x50] sm:$0xff]
    %v370 = vld [vmem:[#allocation3 + $0x58] sm:$0xff]
    %v371 = vld [vmem:[#allocation3 + $0x60] sm:$0xff]
    %v372 = vld [vmem:[#allocation3 + $0x68] sm:$0xff]
    %v373 = vld [vmem:[#allocation3 + $0x70] sm:$0xff]
    %v374 = vld [vmem:[#allocation3 + $0x78] sm:$0xff]
    %v375 = vld [vmem:[#allocation3 + $0x80] sm:$0xff]
    %v376 = vld [vmem:[#allocation3 + $0x88] sm:$0xff]
    %v377 = vld [vmem:[#allocation3 + $0x90] sm:$0xff]
    %v378 = vld [vmem:[#allocation3 + $0x98] sm:$0xff]
    %v379 = vld [vmem:[#allocation3 + $0xa0] sm:$0xff]
    %v380 = vld [vmem:[#allocation3 + $0xa8] sm:$0xff]
    %v381 = vld [vmem:[#allocation3 + $0xb0] sm:$0xff]
    %v382 = vld [vmem:[#allocation3 + $0xb8] sm:$0xff]
    %v383 = vld [vmem:[#allocation3 + $0xc0] sm:$0xff]
    %v384 = vld [vmem:[#allocation3 + $0xc8] sm:$0xff]
    %v385 = vld [vmem:[#allocation3 + $0xd0] sm:$0xff]
    %v386 = vld [vmem:[#allocation3 + $0xd8] sm:$0xff]
    %v387 = vld [vmem:[#allocation3 + $0xe0] sm:$0xff]
    %v388 = vld [vmem:[#allocation3 + $0xe8] sm:$0xff]
    %v389 = vld [vmem:[#allocation3 + $0xf0] sm:$0xff]
    %v390 = vld [vmem:[#allocation3 + $0xf8] sm:$0xff]
    %v391 = vld [vmem:[#allocation3 + $0x100] sm:$0xff]
    %v392 = vmul.f32 %v359, %v326
    %v393 = vmul.f32 %v360, %v327
    %v394 = vmul.f32 %v361, %v328
    %v395 = vmul.f32 %v362, %v329
    %v396 = vmul.f32 %v363, %v330
    %v397 = vmul.f32 %v364, %v331
    %v398 = vmul.f32 %v365, %v332
    %v399 = vmul.f32 %v366, %v333
    %v400 = vmul.f32 %v367, %v334
    %v401 = vmul.f32 %v368, %v335
    %v402 = vmul.f32 %v369, %v336
    %v403 = vmul.f32 %v370, %v337
    %v404 = vmul.f32 %v371, %v338
    %v405 = vmul.f32 %v372, %v339
    %v406 = vmul.f32 %v373, %v340
    %v407 = vmul.f32 %v374, %v341
    %v408 = vmul.f32 %v375, %v342
    %v409 = vmul.f32 %v376, %v343
    %v410 = vmul.f32 %v377, %v344
    %v411 = vmul.f32 %v378, %v345
    %v412 = vmul.f32 %v379, %v346
    %v413 = vmul.f32 %v380, %v347
    %v414 = vmul.f32 %v381, %v348
    %v415 = vmul.f32 %v382, %v349
    %v416 = vmul.f32 %v383, %v350
    %v417 = vmul.f32 %v384, %v351
    %v418 = vmul.f32 %v385, %v352
    %v419 = vmul.f32 %v386, %v353
    %v420 = vmul.f32 %v387, %v354
    %v421 = vmul.f32 %v388, %v355
    %v422 = vmul.f32 %v389, %v356
    %v423 = vmul.f32 %v390, %v357
    %v424 = vmul.f32 %v391, %v358
    %v425 = vadd.f32 %v392, %v393
    %v426 = vadd.f32 %v425, %v394
    %v427 = vadd.f32 %v426, %v395
    %v428 = vadd.f32 %v427, %v396
    %v429 = vadd.f32 %v428, %v397
    %v430 = vadd.f32 %v429, %v398
    %v431 = vadd.f32 %v430, %v399
    %v432 = vadd.f32 %v431, %v400
    %v433 = vadd.f32 %v432, %v401
    %v434 = vadd.f32 %v433, %v402
    %v435 = vadd.f32 %v434, %v403
    %v436 = vadd.f32 %v435, %v404
    %v437 = vadd.f32 %v436, %v405
    %v438 = vadd.f32 %v437, %v406
    %v439 = vadd.f32 %v438, %v407
    %v440 = vadd.f32 %v439, %v408
    %v441 = vadd.f32 %v440, %v409
    %v442 = vadd.f32 %v441, %v410
    %v443 = vadd.f32 %v442, %v411
    %v444 = vadd.f32 %v443, %v412
    %v445 = vadd.f32 %v444, %v413
    %v446 = vadd.f32 %v445, %v414
    %v447 = vadd.f32 %v446, %v415
    %v448 = vadd.f32 %v447, %v416
    %v449 = vadd.f32 %v448, %v417
    %v450 = vadd.f32 %v449, %v418
    %v451 = vadd.f32 %v450, %v419
    %v452 = vadd.f32 %v451, %v420
    %v453 = vadd.f32 %v452, %v421
    %v454 = vadd.f32 %v453, %v422
    %v455 = vadd.f32 %v454, %v423
    %v456 = vadd.f32 %v455, %v424
    %v457 = vrot.slane %v456, 4
    %v458 = vadd.f32 %v456, %v457
    %v459 = vrot.slane %v458, 2
    %v460 = vadd.f32 %v458, %v459
    %v461 = vrot.slane %v460, 1
    %v462 = vadd.f32 %v460, %v461
    %v463 = vld [vmem:[#allocation3 + $0x110] sm:$0xff]
    %v464 = vld [vmem:[#allocation3 + $0x118] sm:$0xff]
    %v465 = vld [vmem:[#allocation3 + $0x120] sm:$0xff]
    %v466 = vld [vmem:[#allocation3 + $0x128] sm:$0xff]
    %v467 = vld [vmem:[#allocation3 + $0x130] sm:$0xff]
    %v468 = vld [vmem:[#allocation3 + $0x138] sm:$0xff]
    %v469 = vld [vmem:[#allocation3 + $0x140] sm:$0xff]
    %v470 = vld [vmem:[#allocation3 + $0x148] sm:$0xff]
    %v471 = vld [vmem:[#allocation3 + $0x150] sm:$0xff]
    %v472 = vld [vmem:[#allocation3 + $0x158] sm:$0xff]
    %v473 = vld [vmem:[#allocation3 + $0x160] sm:$0xff]
    %v474 = vld [vmem:[#allocation3 + $0x168] sm:$0xff]
    %v475 = vld [vmem:[#allocation3 + $0x170] sm:$0xff]
    %v476 = vld [vmem:[#allocation3 + $0x178] sm:$0xff]
    %v477 = vld [vmem:[#allocation3 + $0x180] sm:$0xff]
    %v478 = vld [vmem:[#allocation3 + $0x188] sm:$0xff]
    %v479 = vld [vmem:[#allocation3 + $0x190] sm:$0xff]
    %v480 = vld [vmem:[#allocation3 + $0x198] sm:$0xff]
    %v481 = vld [vmem:[#allocation3 + $0x1a0] sm:$0xff]
    %v482 = vld [vmem:[#allocation3 + $0x1a8] sm:$0xff]
    %v483 = vld [vmem:[#allocation3 + $0x1b0] sm:$0xff]
    %v484 = vld [vmem:[#allocation3 + $0x1b8] sm:$0xff]
    %v485 = vld [vmem:[#allocation3 + $0x1c0] sm:$0xff]
    %v486 = vld [vmem:[#allocation3 + $0x1c8] sm:$0xff]
    %v487 = vld [vmem:[#allocation3 + $0x1d0] sm:$0xff]
    %v488 = vld [vmem:[#allocation3 + $0x1d8] sm:$0xff]
    %v489 = vld [vmem:[#allocation3 + $0x1e0] sm:$0xff]
    %v490 = vld [vmem:[#allocation3 + $0x1e8] sm:$0xff]
    %v491 = vld [vmem:[#allocation3 + $0x1f0] sm:$0xff]
    %v492 = vld [vmem:[#allocation3 + $0x1f8] sm:$0xff]
    %v493 = vld [vmem:[#allocation3 + $0x200] sm:$0xff]
    %v494 = vld [vmem:[#allocation3 + $0x208] sm:$0xff]
    %v495 = vld [vmem:[#allocation3 + $0x210] sm:$0xff]
    %v496 = vmul.f32 %v463, %v326
    %v497 = vmul.f32 %v464, %v327
    %v498 = vmul.f32 %v465, %v328
    %v499 = vmul.f32 %v466, %v329
    %v500 = vmul.f32 %v467, %v330
    %v501 = vmul.f32 %v468, %v331
    %v502 = vmul.f32 %v469, %v332
    %v503 = vmul.f32 %v470, %v333
    %v504 = vmul.f32 %v471, %v334
    %v505 = vmul.f32 %v472, %v335
    %v506 = vmul.f32 %v473, %v336
    %v507 = vmul.f32 %v474, %v337
    %v508 = vmul.f32 %v475, %v338
    %v509 = vmul.f32 %v476, %v339
    %v510 = vmul.f32 %v477, %v340
    %v511 = vmul.f32 %v478, %v341
    %v512 = vmul.f32 %v479, %v342
    %v513 = vmul.f32 %v480, %v343
    %v514 = vmul.f32 %v481, %v344
    %v515 = vmul.f32 %v482, %v345
    %v516 = vmul.f32 %v483, %v346
    %v517 = vmul.f32 %v484, %v347
    %v518 = vmul.f32 %v485, %v348
    %v519 = vmul.f32 %v486, %v349
    %v520 = vmul.f32 %v487, %v350
    %v521 = vmul.f32 %v488, %v351
    %v522 = vmul.f32 %v489, %v352
    %v523 = vmul.f32 %v490, %v353
    %v524 = vmul.f32 %v491, %v354
    %v525 = vmul.f32 %v492, %v355
    %v526 = vmul.f32 %v493, %v356
    %v527 = vmul.f32 %v494, %v357
    %v528 = vmul.f32 %v495, %v358
    %v529 = vadd.f32 %v496, %v497
    %v530 = vadd.f32 %v529, %v498
    %v531 = vadd.f32 %v530, %v499
    %v532 = vadd.f32 %v531, %v500
    %v533 = vadd.f32 %v532, %v501
    %v534 = vadd.f32 %v533, %v502
    %v535 = vadd.f32 %v534, %v503
    %v536 = vadd.f32 %v535, %v504
    %v537 = vadd.f32 %v536, %v505
    %v538 = vadd.f32 %v537, %v506
    %v539 = vadd.f32 %v538, %v507
    %v540 = vadd.f32 %v539, %v508
    %v541 = vadd.f32 %v540, %v509
    %v542 = vadd.f32 %v541, %v510
    %v543 = vadd.f32 %v542, %v511
    %v544 = vadd.f32 %v543, %v512
    %v545 = vadd.f32 %v544, %v513
    %v546 = vadd.f32 %v545, %v514
    %v547 = vadd.f32 %v546, %v515
    %v548 = vadd.f32 %v547, %v516
    %v549 = vadd.f32 %v548, %v517
    %v550 = vadd.f32 %v549, %v518
    %v551 = vadd.f32 %v550, %v519
    %v552 = vadd.f32 %v551, %v520
    %v553 = vadd.f32 %v552, %v521
    %v554 = vadd.f32 %v553, %v522
    %v555 = vadd.f32 %v554, %v523
    %v556 = vadd.f32 %v555, %v524
    %v557 = vadd.f32 %v556, %v525
    %v558 = vadd.f32 %v557, %v526
    %v559 = vadd.f32 %v558, %v527
    %v560 = vadd.f32 %v559, %v528
    %v561 = vrot.slane %v560, 4
    %v562 = vadd.f32 %v560, %v561
    %v563 = vrot.slane %v562, 2
    %v564 = vadd.f32 %v562, %v563
    %v565 = vrot.slane %v564, 1
    %v566 = vadd.f32 %v564, %v565
    %v567 = vld [vmem:[#allocation3 + $0x220] sm:$0xff]
    %v568 = vld [vmem:[#allocation3 + $0x228] sm:$0xff]
    %v569 = vld [vmem:[#allocation3 + $0x230] sm:$0xff]
    %v570 = vld [vmem:[#allocation3 + $0x238] sm:$0xff]
    %v571 = vld [vmem:[#allocation3 + $0x240] sm:$0xff]
    %v572 = vld [vmem:[#allocation3 + $0x248] sm:$0xff]
    %v573 = vld [vmem:[#allocation3 + $0x250] sm:$0xff]
    %v574 = vld [vmem:[#allocation3 + $0x258] sm:$0xff]
    %v575 = vld [vmem:[#allocation3 + $0x260] sm:$0xff]
    %v576 = vld [vmem:[#allocation3 + $0x268] sm:$0xff]
    %v577 = vld [vmem:[#allocation3 + $0x270] sm:$0xff]
    %v578 = vld [vmem:[#allocation3 + $0x278] sm:$0xff]
    %v579 = vld [vmem:[#allocation3 + $0x280] sm:$0xff]
    %v580 = vld [vmem:[#allocation3 + $0x288] sm:$0xff]
    %v581 = vld [vmem:[#allocation3 + $0x290] sm:$0xff]
    %v582 = vld [vmem:[#allocation3 + $0x298] sm:$0xff]
    %v583 = vld [vmem:[#allocation3 + $0x2a0] sm:$0xff]
    %v584 = vld [vmem:[#allocation3 + $0x2a8] sm:$0xff]
    %v585 = vld [vmem:[#allocation3 + $0x2b0] sm:$0xff]
    %v586 = vld [vmem:[#allocation3 + $0x2b8] sm:$0xff]
    %v587 = vld [vmem:[#allocation3 + $0x2c0] sm:$0xff]
    %v588 = vld [vmem:[#allocation3 + $0x2c8] sm:$0xff]
    %v589 = vld [vmem:[#allocation3 + $0x2d0] sm:$0xff]
    %v590 = vld [vmem:[#allocation3 + $0x2d8] sm:$0xff]
    %v591 = vld [vmem:[#allocation3 + $0x2e0] sm:$0xff]
    %v592 = vld [vmem:[#allocation3 + $0x2e8] sm:$0xff]
    %v593 = vld [vmem:[#allocation3 + $0x2f0] sm:$0xff]
    %v594 = vld [vmem:[#allocation3 + $0x2f8] sm:$0xff]
    %v595 = vld [vmem:[#allocation3 + $0x300] sm:$0xff]
    %v596 = vld [vmem:[#allocation3 + $0x308] sm:$0xff]
    %v597 = vld [vmem:[#allocation3 + $0x310] sm:$0xff]
    %v598 = vld [vmem:[#allocation3 + $0x318] sm:$0xff]
    %v599 = vld [vmem:[#allocation3 + $0x320] sm:$0xff]
    %v600 = vmul.f32 %v567, %v326
    %v601 = vmul.f32 %v568, %v327
    %v602 = vmul.f32 %v569, %v328
    %v603 = vmul.f32 %v570, %v329
    %v604 = vmul.f32 %v571, %v330
    %v605 = vmul.f32 %v572, %v331
    %v606 = vmul.f32 %v573, %v332
    %v607 = vmul.f32 %v574, %v333
    %v608 = vmul.f32 %v575, %v334
    %v609 = vmul.f32 %v576, %v335
    %v610 = vmul.f32 %v577, %v336
    %v611 = vmul.f32 %v578, %v337
    %v612 = vmul.f32 %v579, %v338
    %v613 = vmul.f32 %v580, %v339
    %v614 = vmul.f32 %v581, %v340
    %v615 = vmul.f32 %v582, %v341
    %v616 = vmul.f32 %v583, %v342
    %v617 = vmul.f32 %v584, %v343
    %v618 = vmul.f32 %v585, %v344
    %v619 = vmul.f32 %v586, %v345
    %v620 = vmul.f32 %v587, %v346
    %v621 = vmul.f32 %v588, %v347
    %v622 = vmul.f32 %v589, %v348
    %v623 = vmul.f32 %v590, %v349
    %v624 = vmul.f32 %v591, %v350
    %v625 = vmul.f32 %v592, %v351
    %v626 = vmul.f32 %v593, %v352
    %v627 = vmul.f32 %v594, %v353
    %v628 = vmul.f32 %v595, %v354
    %v629 = vmul.f32 %v596, %v355
    %v630 = vmul.f32 %v597, %v356
    %v631 = vmul.f32 %v598, %v357
    %v632 = vmul.f32 %v599, %v358
    %v633 = vadd.f32 %v600, %v601
    %v634 = vadd.f32 %v633, %v602
    %v635 = vadd.f32 %v634, %v603
    %v636 = vadd.f32 %v635, %v604
    %v637 = vadd.f32 %v636, %v605
    %v638 = vadd.f32 %v637, %v606
    %v639 = vadd.f32 %v638, %v607
    %v640 = vadd.f32 %v639, %v608
    %v641 = vadd.f32 %v640, %v609
    %v642 = vadd.f32 %v641, %v610
    %v643 = vadd.f32 %v642, %v611
    %v644 = vadd.f32 %v643, %v612
    %v645 = vadd.f32 %v644, %v613
    %v646 = vadd.f32 %v645, %v614
    %v647 = vadd.f32 %v646, %v615
    %v648 = vadd.f32 %v647, %v616
    %v649 = vadd.f32 %v648, %v617
    %v650 = vadd.f32 %v649, %v618
    %v651 = vadd.f32 %v650, %v619
    %v652 = vadd.f32 %v651, %v620
    %v653 = vadd.f32 %v652, %v621
    %v654 = vadd.f32 %v653, %v622
    %v655 = vadd.f32 %v654, %v623
    %v656 = vadd.f32 %v655, %v624
    %v657 = vadd.f32 %v656, %v625
    %v658 = vadd.f32 %v657, %v626
    %v659 = vadd.f32 %v658, %v627
    %v660 = vadd.f32 %v659, %v628
    %v661 = vadd.f32 %v660, %v629
    %v662 = vadd.f32 %v661, %v630
    %v663 = vadd.f32 %v662, %v631
    %v664 = vadd.f32 %v663, %v632
    %v665 = vrot.slane %v664, 4
    %v666 = vadd.f32 %v664, %v665
    %v667 = vrot.slane %v666, 2
    %v668 = vadd.f32 %v666, %v667
    %v669 = vrot.slane %v668, 1
    %v670 = vadd.f32 %v668, %v669
    %v671 = vld [vmem:[#allocation3 + $0x330] sm:$0xff]
    %v672 = vld [vmem:[#allocation3 + $0x338] sm:$0xff]
    %v673 = vld [vmem:[#allocation3 + $0x340] sm:$0xff]
    %v674 = vld [vmem:[#allocation3 + $0x348] sm:$0xff]
    %v675 = vld [vmem:[#allocation3 + $0x350] sm:$0xff]
    %v676 = vld [vmem:[#allocation3 + $0x358] sm:$0xff]
    %v677 = vld [vmem:[#allocation3 + $0x360] sm:$0xff]
    %v678 = vld [vmem:[#allocation3 + $0x368] sm:$0xff]
    %v679 = vld [vmem:[#allocation3 + $0x370] sm:$0xff]
    %v680 = vld [vmem:[#allocation3 + $0x378] sm:$0xff]
    %v681 = vld [vmem:[#allocation3 + $0x380] sm:$0xff]
    %v682 = vld [vmem:[#allocation3 + $0x388] sm:$0xff]
    %v683 = vld [vmem:[#allocation3 + $0x390] sm:$0xff]
    %v684 = vld [vmem:[#allocation3 + $0x398] sm:$0xff]
    %v685 = vld [vmem:[#allocation3 + $0x3a0] sm:$0xff]
    %v686 = vld [vmem:[#allocation3 + $0x3a8] sm:$0xff]
    %v687 = vld [vmem:[#allocation3 + $0x3b0] sm:$0xff]
    %v688 = vld [vmem:[#allocation3 + $0x3b8] sm:$0xff]
    %v689 = vld [vmem:[#allocation3 + $0x3c0] sm:$0xff]
    %v690 = vld [vmem:[#allocation3 + $0x3c8] sm:$0xff]
    %v691 = vld [vmem:[#allocation3 + $0x3d0] sm:$0xff]
    %v692 = vld [vmem:[#allocation3 + $0x3d8] sm:$0xff]
    %v693 = vld [vmem:[#allocation3 + $0x3e0] sm:$0xff]
    %v694 = vld [vmem:[#allocation3 + $0x3e8] sm:$0xff]
    %v695 = vld [vmem:[#allocation3 + $0x3f0] sm:$0xff]
    %v696 = vld [vmem:[#allocation3 + $0x3f8] sm:$0xff]
    %v697 = vld [vmem:[#allocation3 + $0x400] sm:$0xff]
    %v698 = vld [vmem:[#allocation3 + $0x408] sm:$0xff]
    %v699 = vld [vmem:[#allocation3 + $0x410] sm:$0xff]
    %v700 = vld [vmem:[#allocation3 + $0x418] sm:$0xff]
    %v701 = vld [vmem:[#allocation3 + $0x420] sm:$0xff]
    %v702 = vld [vmem:[#allocation3 + $0x428] sm:$0xff]
    %v703 = vld [vmem:[#allocation3 + $0x430] sm:$0xff]
    %v704 = vmul.f32 %v671, %v326
    %v705 = vmul.f32 %v672, %v327
    %v706 = vmul.f32 %v673, %v328
    %v707 = vmul.f32 %v674, %v329
    %v708 = vmul.f32 %v675, %v330
    %v709 = vmul.f32 %v676, %v331
    %v710 = vmul.f32 %v677, %v332
    %v711 = vmul.f32 %v678, %v333
    %v712 = vmul.f32 %v679, %v334
    %v713 = vmul.f32 %v680, %v335
    %v714 = vmul.f32 %v681, %v336
    %v715 = vmul.f32 %v682, %v337
    %v716 = vmul.f32 %v683, %v338
    %v717 = vmul.f32 %v684, %v339
    %v718 = vmul.f32 %v685, %v340
    %v719 = vmul.f32 %v686, %v341
    %v720 = vmul.f32 %v687, %v342
    %v721 = vmul.f32 %v688, %v343
    %v722 = vmul.f32 %v689, %v344
    %v723 = vmul.f32 %v690, %v345
    %v724 = vmul.f32 %v691, %v346
    %v725 = vmul.f32 %v692, %v347
    %v726 = vmul.f32 %v693, %v348
    %v727 = vmul.f32 %v694, %v349
    %v728 = vmul.f32 %v695, %v350
    %v729 = vmul.f32 %v696, %v351
    %v730 = vmul.f32 %v697, %v352
    %v731 = vmul.f32 %v698, %v353
    %v732 = vmul.f32 %v699, %v354
    %v733 = vmul.f32 %v700, %v355
    %v734 = vmul.f32 %v701, %v356
    %v735 = vmul.f32 %v702, %v357
    %v736 = vmul.f32 %v703, %v358
    %v737 = vadd.f32 %v704, %v705
    %v738 = vadd.f32 %v737, %v706
    %v739 = vadd.f32 %v738, %v707
    %v740 = vadd.f32 %v739, %v708
    %v741 = vadd.f32 %v740, %v709
    %v742 = vadd.f32 %v741, %v710
    %v743 = vadd.f32 %v742, %v711
    %v744 = vadd.f32 %v743, %v712
    %v745 = vadd.f32 %v744, %v713
    %v746 = vadd.f32 %v745, %v714
    %v747 = vadd.f32 %v746, %v715
    %v748 = vadd.f32 %v747, %v716
    %v749 = vadd.f32 %v748, %v717
    %v750 = vadd.f32 %v749, %v718
    %v751 = vadd.f32 %v750, %v719
    %v752 = vadd.f32 %v751, %v720
    %v753 = vadd.f32 %v752, %v721
    %v754 = vadd.f32 %v753, %v722
    %v755 = vadd.f32 %v754, %v723
    %v756 = vadd.f32 %v755, %v724
    %v757 = vadd.f32 %v756, %v725
    %v758 = vadd.f32 %v757, %v726
    %v759 = vadd.f32 %v758, %v727
    %v760 = vadd.f32 %v759, %v728
    %v761 = vadd.f32 %v760, %v729
    %v762 = vadd.f32 %v761, %v730
    %v763 = vadd.f32 %v762, %v731
    %v764 = vadd.f32 %v763, %v732
    %v765 = vadd.f32 %v764, %v733
    %v766 = vadd.f32 %v765, %v734
    %v767 = vadd.f32 %v766, %v735
    %v768 = vadd.f32 %v767, %v736
    %v769 = vrot.slane %v768, 4
    %v770 = vadd.f32 %v768, %v769
    %v771 = vrot.slane %v770, 2
    %v772 = vadd.f32 %v770, %v771
    %v773 = vrot.slane %v772, 1
    %v774 = vadd.f32 %v772, %v773
    %v775 = vld [vmem:[#allocation3 + $0x440] sm:$0xff]
    %v776 = vld [vmem:[#allocation3 + $0x448] sm:$0xff]
    %v777 = vld [vmem:[#allocation3 + $0x450] sm:$0xff]
    %v778 = vld [vmem:[#allocation3 + $0x458] sm:$0xff]
    %v779 = vld [vmem:[#allocation3 + $0x460] sm:$0xff]
    %v780 = vld [vmem:[#allocation3 + $0x468] sm:$0xff]
    %v781 = vld [vmem:[#allocation3 + $0x470] sm:$0xff]
    %v782 = vld [vmem:[#allocation3 + $0x478] sm:$0xff]
    %v783 = vld [vmem:[#allocation3 + $0x480] sm:$0xff]
    %v784 = vld [vmem:[#allocation3 + $0x488] sm:$0xff]
    %v785 = vld [vmem:[#allocation3 + $0x490] sm:$0xff]
    %v786 = vld [vmem:[#allocation3 + $0x498] sm:$0xff]
    %v787 = vld [vmem:[#allocation3 + $0x4a0] sm:$0xff]
    %v788 = vld [vmem:[#allocation3 + $0x4a8] sm:$0xff]
    %v789 = vld [vmem:[#allocation3 + $0x4b0] sm:$0xff]
    %v790 = vld [vmem:[#allocation3 + $0x4b8] sm:$0xff]
    %v791 = vld [vmem:[#allocation3 + $0x4c0] sm:$0xff]
    %v792 = vld [vmem:[#allocation3 + $0x4c8] sm:$0xff]
    %v793 = vld [vmem:[#allocation3 + $0x4d0] sm:$0xff]
    %v794 = vld [vmem:[#allocation3 + $0x4d8] sm:$0xff]
    %v795 = vld [vmem:[#allocation3 + $0x4e0] sm:$0xff]
    %v796 = vld [vmem:[#allocation3 + $0x4e8] sm:$0xff]
    %v797 = vld [vmem:[#allocation3 + $0x4f0] sm:$0xff]
    %v798 = vld [vmem:[#allocation3 + $0x4f8] sm:$0xff]
    %v799 = vld [vmem:[#allocation3 + $0x500] sm:$0xff]
    %v800 = vld [vmem:[#allocation3 + $0x508] sm:$0xff]
    %v801 = vld [vmem:[#allocation3 + $0x510] sm:$0xff]
    %v802 = vld [vmem:[#allocation3 + $0x518] sm:$0xff]
    %v803 = vld [vmem:[#allocation3 + $0x520] sm:$0xff]
    %v804 = vld [vmem:[#allocation3 + $0x528] sm:$0xff]
    %v805 = vld [vmem:[#allocation3 + $0x530] sm:$0xff]
    %v806 = vld [vmem:[#allocation3 + $0x538] sm:$0xff]
    %v807 = vld [vmem:[#allocation3 + $0x540] sm:$0xff]
    %v808 = vmul.f32 %v775, %v326
    %v809 = vmul.f32 %v776, %v327
    %v810 = vmul.f32 %v777, %v328
    %v811 = vmul.f32 %v778, %v329
    %v812 = vmul.f32 %v779, %v330
    %v813 = vmul.f32 %v780, %v331
    %v814 = vmul.f32 %v781, %v332
    %v815 = vmul.f32 %v782, %v333
    %v816 = vmul.f32 %v783, %v334
    %v817 = vmul.f32 %v784, %v335
    %v818 = vmul.f32 %v785, %v336
    %v819 = vmul.f32 %v786, %v337
    %v820 = vmul.f32 %v787, %v338
    %v821 = vmul.f32 %v788, %v339
    %v822 = vmul.f32 %v789, %v340
    %v823 = vmul.f32 %v790, %v341
    %v824 = vmul.f32 %v791, %v342
    %v825 = vmul.f32 %v792, %v343
    %v826 = vmul.f32 %v793, %v344
    %v827 = vmul.f32 %v794, %v345
    %v828 = vmul.f32 %v795, %v346
    %v829 = vmul.f32 %v796, %v347
    %v830 = vmul.f32 %v797, %v348
    %v831 = vmul.f32 %v798, %v349
    %v832 = vmul.f32 %v799, %v350
    %v833 = vmul.f32 %v800, %v351
    %v834 = vmul.f32 %v801, %v352
    %v835 = vmul.f32 %v802, %v353
    %v836 = vmul.f32 %v803, %v354
    %v837 = vmul.f32 %v804, %v355
    %v838 = vmul.f32 %v805, %v356
    %v839 = vmul.f32 %v806, %v357
    %v840 = vmul.f32 %v807, %v358
    %v841 = vadd.f32 %v808, %v809
    %v842 = vadd.f32 %v841, %v810
    %v843 = vadd.f32 %v842, %v811
    %v844 = vadd.f32 %v843, %v812
    %v845 = vadd.f32 %v844, %v813
    %v846 = vadd.f32 %v845, %v814
    %v847 = vadd.f32 %v846, %v815
    %v848 = vadd.f32 %v847, %v816
    %v849 = vadd.f32 %v848, %v817
    %v850 = vadd.f32 %v849, %v818
    %v851 = vadd.f32 %v850, %v819
    %v852 = vadd.f32 %v851, %v820
    %v853 = vadd.f32 %v852, %v821
    %v854 = vadd.f32 %v853, %v822
    %v855 = vadd.f32 %v854, %v823
    %v856 = vadd.f32 %v855, %v824
    %v857 = vadd.f32 %v856, %v825
    %v858 = vadd.f32 %v857, %v826
    %v859 = vadd.f32 %v858, %v827
    %v860 = vadd.f32 %v859, %v828
    %v861 = vadd.f32 %v860, %v829
    %v862 = vadd.f32 %v861, %v830
    %v863 = vadd.f32 %v862, %v831
    %v864 = vadd.f32 %v863, %v832
    %v865 = vadd.f32 %v864, %v833
    %v866 = vadd.f32 %v865, %v834
    %v867 = vadd.f32 %v866, %v835
    %v868 = vadd.f32 %v867, %v836
    %v869 = vadd.f32 %v868, %v837
    %v870 = vadd.f32 %v869, %v838
    %v871 = vadd.f32 %v870, %v839
    %v872 = vadd.f32 %v871, %v840
    %v873 = vrot.slane %v872, 4
    %v874 = vadd.f32 %v872, %v873
    %v875 = vrot.slane %v874, 2
    %v876 = vadd.f32 %v874, %v875
    %v877 = vrot.slane %v876, 1
    %v878 = vadd.f32 %v876, %v877
    %v879 = vld [vmem:[#allocation3 + $0x550] sm:$0xff]
    %v880 = vld [vmem:[#allocation3 + $0x558] sm:$0xff]
    %v881 = vld [vmem:[#allocation3 + $0x560] sm:$0xff]
    %v882 = vld [vmem:[#allocation3 + $0x568] sm:$0xff]
    %v883 = vld [vmem:[#allocation3 + $0x570] sm:$0xff]
    %v884 = vld [vmem:[#allocation3 + $0x578] sm:$0xff]
    %v885 = vld [vmem:[#allocation3 + $0x580] sm:$0xff]
    %v886 = vld [vmem:[#allocation3 + $0x588] sm:$0xff]
    %v887 = vld [vmem:[#allocation3 + $0x590] sm:$0xff]
    %v888 = vld [vmem:[#allocation3 + $0x598] sm:$0xff]
    %v889 = vld [vmem:[#allocation3 + $0x5a0] sm:$0xff]
    %v890 = vld [vmem:[#allocation3 + $0x5a8] sm:$0xff]
    %v891 = vld [vmem:[#allocation3 + $0x5b0] sm:$0xff]
    %v892 = vld [vmem:[#allocation3 + $0x5b8] sm:$0xff]
    %v893 = vld [vmem:[#allocation3 + $0x5c0] sm:$0xff]
    %v894 = vld [vmem:[#allocation3 + $0x5c8] sm:$0xff]
    %v895 = vld [vmem:[#allocation3 + $0x5d0] sm:$0xff]
    %v896 = vld [vmem:[#allocation3 + $0x5d8] sm:$0xff]
    %v897 = vld [vmem:[#allocation3 + $0x5e0] sm:$0xff]
    %v898 = vld [vmem:[#allocation3 + $0x5e8] sm:$0xff]
    %v899 = vld [vmem:[#allocation3 + $0x5f0] sm:$0xff]
    %v900 = vld [vmem:[#allocation3 + $0x5f8] sm:$0xff]
    %v901 = vld [vmem:[#allocation3 + $0x600] sm:$0xff]
    %v902 = vld [vmem:[#allocation3 + $0x608] sm:$0xff]
    %v903 = vld [vmem:[#allocation3 + $0x610] sm:$0xff]
    %v904 = vld [vmem:[#allocation3 + $0x618] sm:$0xff]
    %v905 = vld [vmem:[#allocation3 + $0x620] sm:$0xff]
    %v906 = vld [vmem:[#allocation3 + $0x628] sm:$0xff]
    %v907 = vld [vmem:[#allocation3 + $0x630] sm:$0xff]
    %v908 = vld [vmem:[#allocation3 + $0x638] sm:$0xff]
    %v909 = vld [vmem:[#allocation3 + $0x640] sm:$0xff]
    %v910 = vld [vmem:[#allocation3 + $0x648] sm:$0xff]
    %v911 = vld [vmem:[#allocation3 + $0x650] sm:$0xff]
    %v912 = vmul.f32 %v879, %v326
    %v913 = vmul.f32 %v880, %v327
    %v914 = vmul.f32 %v881, %v328
    %v915 = vmul.f32 %v882, %v329
    %v916 = vmul.f32 %v883, %v330
    %v917 = vmul.f32 %v884, %v331
    %v918 = vmul.f32 %v885, %v332
    %v919 = vmul.f32 %v886, %v333
    %v920 = vmul.f32 %v887, %v334
    %v921 = vmul.f32 %v888, %v335
    %v922 = vmul.f32 %v889, %v336
    %v923 = vmul.f32 %v890, %v337
    %v924 = vmul.f32 %v891, %v338
    %v925 = vmul.f32 %v892, %v339
    %v926 = vmul.f32 %v893, %v340
    %v927 = vmul.f32 %v894, %v341
    %v928 = vmul.f32 %v895, %v342
    %v929 = vmul.f32 %v896, %v343
    %v930 = vmul.f32 %v897, %v344
    %v931 = vmul.f32 %v898, %v345
    %v932 = vmul.f32 %v899, %v346
    %v933 = vmul.f32 %v900, %v347
    %v934 = vmul.f32 %v901, %v348
    %v935 = vmul.f32 %v902, %v349
    %v936 = vmul.f32 %v903, %v350
    %v937 = vmul.f32 %v904, %v351
    %v938 = vmul.f32 %v905, %v352
    %v939 = vmul.f32 %v906, %v353
    %v940 = vmul.f32 %v907, %v354
    %v941 = vmul.f32 %v908, %v355
    %v942 = vmul.f32 %v909, %v356
    %v943 = vmul.f32 %v910, %v357
    %v944 = vmul.f32 %v911, %v358
    %v945 = vadd.f32 %v912, %v913
    %v946 = vadd.f32 %v945, %v914
    %v947 = vadd.f32 %v946, %v915
    %v948 = vadd.f32 %v947, %v916
    %v949 = vadd.f32 %v948, %v917
    %v950 = vadd.f32 %v949, %v918
    %v951 = vadd.f32 %v950, %v919
    %v952 = vadd.f32 %v951, %v920
    %v953 = vadd.f32 %v952, %v921
    %v954 = vadd.f32 %v953, %v922
    %v955 = vadd.f32 %v954, %v923
    %v956 = vadd.f32 %v955, %v924
    %v957 = vadd.f32 %v956, %v925
    %v958 = vadd.f32 %v957, %v926
    %v959 = vadd.f32 %v958, %v927
    %v960 = vadd.f32 %v959, %v928
    %v961 = vadd.f32 %v960, %v929
    %v962 = vadd.f32 %v961, %v930
    %v963 = vadd.f32 %v962, %v931
    %v964 = vadd.f32 %v963, %v932
    %v965 = vadd.f32 %v964, %v933
    %v966 = vadd.f32 %v965, %v934
    %v967 = vadd.f32 %v966, %v935
    %v968 = vadd.f32 %v967, %v936
    %v969 = vadd.f32 %v968, %v937
    %v970 = vadd.f32 %v969, %v938
    %v971 = vadd.f32 %v970, %v939
    %v972 = vadd.f32 %v971, %v940
    %v973 = vadd.f32 %v972, %v941
    %v974 = vadd.f32 %v973, %v942
    %v975 = vadd.f32 %v974, %v943
    %v976 = vadd.f32 %v975, %v944
    %v977 = vrot.slane %v976, 4
    %v978 = vadd.f32 %v976, %v977
    %v979 = vrot.slane %v978, 2
    %v980 = vadd.f32 %v978, %v979
    %v981 = vrot.slane %v980, 1
    %v982 = vadd.f32 %v980, %v981
    %v983 = vld [vmem:[#allocation3 + $0x660] sm:$0xff]
    %v984 = vld [vmem:[#allocation3 + $0x668] sm:$0xff]
    %v985 = vld [vmem:[#allocation3 + $0x670] sm:$0xff]
    %v986 = vld [vmem:[#allocation3 + $0x678] sm:$0xff]
    %v987 = vld [vmem:[#allocation3 + $0x680] sm:$0xff]
    %v988 = vld [vmem:[#allocation3 + $0x688] sm:$0xff]
    %v989 = vld [vmem:[#allocation3 + $0x690] sm:$0xff]
    %v990 = vld [vmem:[#allocation3 + $0x698] sm:$0xff]
    %v991 = vld [vmem:[#allocation3 + $0x6a0] sm:$0xff]
    %v992 = vld [vmem:[#allocation3 + $0x6a8] sm:$0xff]
    %v993 = vld [vmem:[#allocation3 + $0x6b0] sm:$0xff]
    %v994 = vld [vmem:[#allocation3 + $0x6b8] sm:$0xff]
    %v995 = vld [vmem:[#allocation3 + $0x6c0] sm:$0xff]
    %v996 = vld [vmem:[#allocation3 + $0x6c8] sm:$0xff]
    %v997 = vld [vmem:[#allocation3 + $0x6d0] sm:$0xff]
    %v998 = vld [vmem:[#allocation3 + $0x6d8] sm:$0xff]
    %v999 = vld [vmem:[#allocation3 + $0x6e0] sm:$0xff]
    %v1000 = vld [vmem:[#allocation3 + $0x6e8] sm:$0xff]
    %v1001 = vld [vmem:[#allocation3 + $0x6f0] sm:$0xff]
    %v1002 = vld [vmem:[#allocation3 + $0x6f8] sm:$0xff]
    %v1003 = vld [vmem:[#allocation3 + $0x700] sm:$0xff]
    %v1004 = vld [vmem:[#allocation3 + $0x708] sm:$0xff]
    %v1005 = vld [vmem:[#allocation3 + $0x710] sm:$0xff]
    %v1006 = vld [vmem:[#allocation3 + $0x718] sm:$0xff]
    %v1007 = vld [vmem:[#allocation3 + $0x720] sm:$0xff]
    %v1008 = vld [vmem:[#allocation3 + $0x728] sm:$0xff]
    %v1009 = vld [vmem:[#allocation3 + $0x730] sm:$0xff]
    %v1010 = vld [vmem:[#allocation3 + $0x738] sm:$0xff]
    %v1011 = vld [vmem:[#allocation3 + $0x740] sm:$0xff]
    %v1012 = vld [vmem:[#allocation3 + $0x748] sm:$0xff]
    %v1013 = vld [vmem:[#allocation3 + $0x750] sm:$0xff]
    %v1014 = vld [vmem:[#allocation3 + $0x758] sm:$0xff]
    %v1015 = vld [vmem:[#allocation3 + $0x760] sm:$0xff]
    %v1016 = vmul.f32 %v983, %v326
    %v1017 = vmul.f32 %v984, %v327
    %v1018 = vmul.f32 %v985, %v328
    %v1019 = vmul.f32 %v986, %v329
    %v1020 = vmul.f32 %v987, %v330
    %v1021 = vmul.f32 %v988, %v331
    %v1022 = vmul.f32 %v989, %v332
    %v1023 = vmul.f32 %v990, %v333
    %v1024 = vmul.f32 %v991, %v334
    %v1025 = vmul.f32 %v992, %v335
    %v1026 = vmul.f32 %v993, %v336
    %v1027 = vmul.f32 %v994, %v337
    %v1028 = vmul.f32 %v995, %v338
    %v1029 = vmul.f32 %v996, %v339
    %v1030 = vmul.f32 %v997, %v340
    %v1031 = vmul.f32 %v998, %v341
    %v1032 = vmul.f32 %v999, %v342
    %v1033 = vmul.f32 %v1000, %v343
    %v1034 = vmul.f32 %v1001, %v344
    %v1035 = vmul.f32 %v1002, %v345
    %v1036 = vmul.f32 %v1003, %v346
    %v1037 = vmul.f32 %v1004, %v347
    %v1038 = vmul.f32 %v1005, %v348
    %v1039 = vmul.f32 %v1006, %v349
    %v1040 = vmul.f32 %v1007, %v350
    %v1041 = vmul.f32 %v1008, %v351
    %v1042 = vmul.f32 %v1009, %v352
    %v1043 = vmul.f32 %v1010, %v353
    %v1044 = vmul.f32 %v1011, %v354
    %v1045 = vmul.f32 %v1012, %v355
    %v1046 = vmul.f32 %v1013, %v356
    %v1047 = vmul.f32 %v1014, %v357
    %v1048 = vmul.f32 %v1015, %v358
    %v1049 = vadd.f32 %v1016, %v1017
    %v1050 = vadd.f32 %v1049, %v1018
    %v1051 = vadd.f32 %v1050, %v1019
    %v1052 = vadd.f32 %v1051, %v1020
    %v1053 = vadd.f32 %v1052, %v1021
    %v1054 = vadd.f32 %v1053, %v1022
    %v1055 = vadd.f32 %v1054, %v1023
    %v1056 = vadd.f32 %v1055, %v1024
    %v1057 = vadd.f32 %v1056, %v1025
    %v1058 = vadd.f32 %v1057, %v1026
    %v1059 = vadd.f32 %v1058, %v1027
    %v1060 = vadd.f32 %v1059, %v1028
    %v1061 = vadd.f32 %v1060, %v1029
    %v1062 = vadd.f32 %v1061, %v1030
    %v1063 = vadd.f32 %v1062, %v1031
    %v1064 = vadd.f32 %v1063, %v1032
    %v1065 = vadd.f32 %v1064, %v1033
    %v1066 = vadd.f32 %v1065, %v1034
    %v1067 = vadd.f32 %v1066, %v1035
    %v1068 = vadd.f32 %v1067, %v1036
    %v1069 = vadd.f32 %v1068, %v1037
    %v1070 = vadd.f32 %v1069, %v1038
    %v1071 = vadd.f32 %v1070, %v1039
    %v1072 = vadd.f32 %v1071, %v1040
    %v1073 = vadd.f32 %v1072, %v1041
    %v1074 = vadd.f32 %v1073, %v1042
    %v1075 = vadd.f32 %v1074, %v1043
    %v1076 = vadd.f32 %v1075, %v1044
    %v1077 = vadd.f32 %v1076, %v1045
    %v1078 = vadd.f32 %v1077, %v1046
    %v1079 = vadd.f32 %v1078, %v1047
    %v1080 = vadd.f32 %v1079, %v1048
    %v1081 = vrot.slane %v1080, 4
    %v1082 = vadd.f32 %v1080, %v1081
    %v1083 = vrot.slane %v1082, 2
    %v1084 = vadd.f32 %v1082, %v1083
    %v1085 = vrot.slane %v1084, 1
    %v1086 = vadd.f32 %v1084, %v1085
    %v1087 = vld [vmem:[#allocation3 + $0x770] sm:$0xff]
    %v1088 = vld [vmem:[#allocation3 + $0x778] sm:$0xff]
    %v1089 = vld [vmem:[#allocation3 + $0x780] sm:$0xff]
    %v1090 = vld [vmem:[#allocation3 + $0x788] sm:$0xff]
    %v1091 = vld [vmem:[#allocation3 + $0x790] sm:$0xff]
    %v1092 = vld [vmem:[#allocation3 + $0x798] sm:$0xff]
    %v1093 = vld [vmem:[#allocation3 + $0x7a0] sm:$0xff]
    %v1094 = vld [vmem:[#allocation3 + $0x7a8] sm:$0xff]
    %v1095 = vld [vmem:[#allocation3 + $0x7b0] sm:$0xff]
    %v1096 = vld [vmem:[#allocation3 + $0x7b8] sm:$0xff]
    %v1097 = vld [vmem:[#allocation3 + $0x7c0] sm:$0xff]
    %v1098 = vld [vmem:[#allocation3 + $0x7c8] sm:$0xff]
    %v1099 = vld [vmem:[#allocation3 + $0x7d0] sm:$0xff]
    %v1100 = vld [vmem:[#allocation3 + $0x7d8] sm:$0xff]
    %v1101 = vld [vmem:[#allocation3 + $0x7e0] sm:$0xff]
    %v1102 = vld [vmem:[#allocation3 + $0x7e8] sm:$0xff]
    %v1103 = vld [vmem:[#allocation3 + $0x7f0] sm:$0xff]
    %v1104 = vld [vmem:[#allocation3 + $0x7f8] sm:$0xff]
    %v1105 = vld [vmem:[#allocation3 + $0x800] sm:$0xff]
    %v1106 = vld [vmem:[#allocation3 + $0x808] sm:$0xff]
    %v1107 = vld [vmem:[#allocation3 + $0x810] sm:$0xff]
    %v1108 = vld [vmem:[#allocation3 + $0x818] sm:$0xff]
    %v1109 = vld [vmem:[#allocation3 + $0x820] sm:$0xff]
    %v1110 = vld [vmem:[#allocation3 + $0x828] sm:$0xff]
    %v1111 = vld [vmem:[#allocation3 + $0x830] sm:$0xff]
    %v1112 = vld [vmem:[#allocation3 + $0x838] sm:$0xff]
    %v1113 = vld [vmem:[#allocation3 + $0x840] sm:$0xff]
    %v1114 = vld [vmem:[#allocation3 + $0x848] sm:$0xff]
    %v1115 = vld [vmem:[#allocation3 + $0x850] sm:$0xff]
    %v1116 = vld [vmem:[#allocation3 + $0x858] sm:$0xff]
    %v1117 = vld [vmem:[#allocation3 + $0x860] sm:$0xff]
    %v1118 = vld [vmem:[#allocation3 + $0x868] sm:$0xff]
    %v1119 = vld [vmem:[#allocation3 + $0x870] sm:$0xff]
    %v1120 = vmul.f32 %v1087, %v326
    %v1121 = vmul.f32 %v1088, %v327
    %v1122 = vmul.f32 %v1089, %v328
    %v1123 = vmul.f32 %v1090, %v329
    %v1124 = vmul.f32 %v1091, %v330
    %v1125 = vmul.f32 %v1092, %v331
    %v1126 = vmul.f32 %v1093, %v332
    %v1127 = vmul.f32 %v1094, %v333
    %v1128 = vmul.f32 %v1095, %v334
    %v1129 = vmul.f32 %v1096, %v335
    %v1130 = vmul.f32 %v1097, %v336
    %v1131 = vmul.f32 %v1098, %v337
    %v1132 = vmul.f32 %v1099, %v338
    %v1133 = vmul.f32 %v1100, %v339
    %v1134 = vmul.f32 %v1101, %v340
    %v1135 = vmul.f32 %v1102, %v341
    %v1136 = vmul.f32 %v1103, %v342
    %v1137 = vmul.f32 %v1104, %v343
    %v1138 = vmul.f32 %v1105, %v344
    %v1139 = vmul.f32 %v1106, %v345
    %v1140 = vmul.f32 %v1107, %v346
    %v1141 = vmul.f32 %v1108, %v347
    %v1142 = vmul.f32 %v1109, %v348
    %v1143 = vmul.f32 %v1110, %v349
    %v1144 = vmul.f32 %v1111, %v350
    %v1145 = vmul.f32 %v1112, %v351
    %v1146 = vmul.f32 %v1113, %v352
    %v1147 = vmul.f32 %v1114, %v353
    %v1148 = vmul.f32 %v1115, %v354
    %v1149 = vmul.f32 %v1116, %v355
    %v1150 = vmul.f32 %v1117, %v356
    %v1151 = vmul.f32 %v1118, %v357
    %v1152 = vmul.f32 %v1119, %v358
    %v1153 = vadd.f32 %v1120, %v1121
    %v1154 = vadd.f32 %v1153, %v1122
    %v1155 = vadd.f32 %v1154, %v1123
    %v1156 = vadd.f32 %v1155, %v1124
    %v1157 = vadd.f32 %v1156, %v1125
    %v1158 = vadd.f32 %v1157, %v1126
    %v1159 = vadd.f32 %v1158, %v1127
    %v1160 = vadd.f32 %v1159, %v1128
    %v1161 = vadd.f32 %v1160, %v1129
    %v1162 = vadd.f32 %v1161, %v1130
    %v1163 = vadd.f32 %v1162, %v1131
    %v1164 = vadd.f32 %v1163, %v1132
    %v1165 = vadd.f32 %v1164, %v1133
    %v1166 = vadd.f32 %v1165, %v1134
    %v1167 = vadd.f32 %v1166, %v1135
    %v1168 = vadd.f32 %v1167, %v1136
    %v1169 = vadd.f32 %v1168, %v1137
    %v1170 = vadd.f32 %v1169, %v1138
    %v1171 = vadd.f32 %v1170, %v1139
    %v1172 = vadd.f32 %v1171, %v1140
    %v1173 = vadd.f32 %v1172, %v1141
    %v1174 = vadd.f32 %v1173, %v1142
    %v1175 = vadd.f32 %v1174, %v1143
    %v1176 = vadd.f32 %v1175, %v1144
    %v1177 = vadd.f32 %v1176, %v1145
    %v1178 = vadd.f32 %v1177, %v1146
    %v1179 = vadd.f32 %v1178, %v1147
    %v1180 = vadd.f32 %v1179, %v1148
    %v1181 = vadd.f32 %v1180, %v1149
    %v1182 = vadd.f32 %v1181, %v1150
    %v1183 = vadd.f32 %v1182, %v1151
    %v1184 = vadd.f32 %v1183, %v1152
    %v1185 = vrot.slane %v1184, 4
    %v1186 = vadd.f32 %v1184, %v1185
    %v1187 = vrot.slane %v1186, 2
    %v1188 = vadd.f32 %v1186, %v1187
    %v1189 = vrot.slane %v1188, 1
    %v1190 = vadd.f32 %v1188, %v1189
    %vm1191 = vcmask 1040384
    %v1192 = vsel %vm1191, %v462, %v566
    %vm1193 = vcmask 1041408
    %v1194 = vsel %vm1193, %v1192, %v670
    %vm1195 = vcmask 1042432
    %v1196 = vsel %vm1195, %v1194, %v774
    %vm1197 = vcmask 1043456
    %v1198 = vsel %vm1197, %v1196, %v878
    %vm1199 = vcmask 1044480
    %v1200 = vsel %vm1199, %v1198, %v982
    %vm1201 = vcmask 1045504
    %v1202 = vsel %vm1201, %v1200, %v1086
    %vm1203 = vcmask 1046528
    %v1204 = vsel %vm1203, %v1202, %v1190
    %s1205 = scalar_lea.vmem [#allocation2], %s324
    %1206 = vst [vmem:[%s1205] sm:$0xff] %v1204
  $region18: #{yin_pitch.1} parent=0 // loop_footer
    %s323 = sadd.s32 1, %s319
  $region19: #{yin_pitch.1} parent=0 // loop_footer_branch
    %318 = sbr.rel target = $region15
  $region20: #{yin_pitch.1} parent=0 // loop_exit
    _
  loop: start=0, step=1, limit=4
  $region21: #{yin_pitch.1} parent=0 // loop_pre_header
    _
  $region22: #{yin_pitch.1} parent=0 // loop_header
    %s1208 = sphi 0, %s1212
    %p1209 = scmp.ge.s32.totalorder %s1208, 4
  $region23: #{yin_pitch.1} parent=0 // loop_header_branch
    %1211 = sbr.rel (%p1209) target = $region27
  $region24: #{yin_pitch.1} parent=0 // loop_body
    %s1213 = sadd.s32 %s1208, 4
    %s1214 = smul.u32 %s1213, 8
    %s1215 = scalar_lea.vmem %s0, %s1214
    %v1216 = vld [vmem:[%s1215] sm:$0xff]
    %v1217 = vld [vmem:[%s1215 + $0x8] sm:$0xff]
    %v1218 = vld [vmem:[%s1215 + $0x10] sm:$0xff]
    %v1219 = vld [vmem:[%s1215 + $0x18] sm:$0xff]
    %v1220 = vld [vmem:[%s1215 + $0x20] sm:$0xff]
    %v1221 = vld [vmem:[%s1215 + $0x28] sm:$0xff]
    %v1222 = vld [vmem:[%s1215 + $0x30] sm:$0xff]
    %v1223 = vld [vmem:[%s1215 + $0x38] sm:$0xff]
    %v1224 = vld [vmem:[%s1215 + $0x40] sm:$0xff]
    %v1225 = vld [vmem:[%s1215 + $0x48] sm:$0xff]
    %v1226 = vld [vmem:[%s1215 + $0x50] sm:$0xff]
    %v1227 = vld [vmem:[%s1215 + $0x58] sm:$0xff]
    %v1228 = vld [vmem:[%s1215 + $0x60] sm:$0xff]
    %v1229 = vld [vmem:[%s1215 + $0x68] sm:$0xff]
    %v1230 = vld [vmem:[%s1215 + $0x70] sm:$0xff]
    %v1231 = vld [vmem:[%s1215 + $0x78] sm:$0xff]
    %v1232 = vld [vmem:[%s1215 + $0x80] sm:$0xff]
    %v1233 = vld [vmem:[%s1215 + $0x88] sm:$0xff]
    %v1234 = vld [vmem:[%s1215 + $0x90] sm:$0xff]
    %v1235 = vld [vmem:[%s1215 + $0x98] sm:$0xff]
    %v1236 = vld [vmem:[%s1215 + $0xa0] sm:$0xff]
    %v1237 = vld [vmem:[%s1215 + $0xa8] sm:$0xff]
    %v1238 = vld [vmem:[%s1215 + $0xb0] sm:$0xff]
    %v1239 = vld [vmem:[%s1215 + $0xb8] sm:$0xff]
    %v1240 = vld [vmem:[%s1215 + $0xc0] sm:$0xff]
    %v1241 = vld [vmem:[%s1215 + $0xc8] sm:$0xff]
    %v1242 = vld [vmem:[%s1215 + $0xd0] sm:$0xff]
    %v1243 = vld [vmem:[%s1215 + $0xd8] sm:$0xff]
    %v1244 = vld [vmem:[%s1215 + $0xe0] sm:$0xff]
    %v1245 = vld [vmem:[#allocation3] sm:$0xff]
    %v1246 = vld [vmem:[#allocation3 + $0x8] sm:$0xff]
    %v1247 = vld [vmem:[#allocation3 + $0x10] sm:$0xff]
    %v1248 = vld [vmem:[#allocation3 + $0x18] sm:$0xff]
    %v1249 = vld [vmem:[#allocation3 + $0x20] sm:$0xff]
    %v1250 = vld [vmem:[#allocation3 + $0x28] sm:$0xff]
    %v1251 = vld [vmem:[#allocation3 + $0x30] sm:$0xff]
    %v1252 = vld [vmem:[#allocation3 + $0x38] sm:$0xff]
    %v1253 = vld [vmem:[#allocation3 + $0x40] sm:$0xff]
    %v1254 = vld [vmem:[#allocation3 + $0x48] sm:$0xff]
    %v1255 = vld [vmem:[#allocation3 + $0x50] sm:$0xff]
    %v1256 = vld [vmem:[#allocation3 + $0x58] sm:$0xff]
    %v1257 = vld [vmem:[#allocation3 + $0x60] sm:$0xff]
    %v1258 = vld [vmem:[#allocation3 + $0x68] sm:$0xff]
    %v1259 = vld [vmem:[#allocation3 + $0x70] sm:$0xff]
    %v1260 = vld [vmem:[#allocation3 + $0x78] sm:$0xff]
    %v1261 = vld [vmem:[#allocation3 + $0x80] sm:$0xff]
    %v1262 = vld [vmem:[#allocation3 + $0x88] sm:$0xff]
    %v1263 = vld [vmem:[#allocation3 + $0x90] sm:$0xff]
    %v1264 = vld [vmem:[#allocation3 + $0x98] sm:$0xff]
    %v1265 = vld [vmem:[#allocation3 + $0xa0] sm:$0xff]
    %v1266 = vld [vmem:[#allocation3 + $0xa8] sm:$0xff]
    %v1267 = vld [vmem:[#allocation3 + $0xb0] sm:$0xff]
    %v1268 = vld [vmem:[#allocation3 + $0xb8] sm:$0xff]
    %v1269 = vld [vmem:[#allocation3 + $0xc0] sm:$0xff]
    %v1270 = vld [vmem:[#allocation3 + $0xc8] sm:$0xff]
    %v1271 = vld [vmem:[#allocation3 + $0xd0] sm:$0xff]
    %v1272 = vld [vmem:[#allocation3 + $0xd8] sm:$0xff]
    %v1273 = vld [vmem:[#allocation3 + $0xe0] sm:$0xff]
    %v1274 = vmul.f32 %v1245, %v1216
    %v1275 = vmul.f32 %v1246, %v1217
    %v1276 = vmul.f32 %v1247, %v1218
    %v1277 = vmul.f32 %v1248, %v1219
    %v1278 = vmul.f32 %v1249, %v1220
    %v1279 = vmul.f32 %v1250, %v1221
    %v1280 = vmul.f32 %v1251, %v1222
    %v1281 = vmul.f32 %v1252, %v1223
    %v1282 = vmul.f32 %v1253, %v1224
    %v1283 = vmul.f32 %v1254, %v1225
    %v1284 = vmul.f32 %v1255, %v1226
    %v1285 = vmul.f32 %v1256, %v1227
    %v1286 = vmul.f32 %v1257, %v1228
    %v1287 = vmul.f32 %v1258, %v1229
    %v1288 = vmul.f32 %v1259, %v1230
    %v1289 = vmul.f32 %v1260, %v1231
    %v1290 = vmul.f32 %v1261, %v1232
    %v1291 = vmul.f32 %v1262, %v1233
    %v1292 = vmul.f32 %v1263, %v1234
    %v1293 = vmul.f32 %v1264, %v1235
    %v1294 = vmul.f32 %v1265, %v1236
    %v1295 = vmul.f32 %v1266, %v1237
    %v1296 = vmul.f32 %v1267, %v1238
    %v1297 = vmul.f32 %v1268, %v1239
    %v1298 = vmul.f32 %v1269, %v1240
    %v1299 = vmul.f32 %v1270, %v1241
    %v1300 = vmul.f32 %v1271, %v1242
    %v1301 = vmul.f32 %v1272, %v1243
    %v1302 = vmul.f32 %v1273, %v1244
    %v1303 = vadd.f32 %v1274, %v1275
    %v1304 = vadd.f32 %v1303, %v1276
    %v1305 = vadd.f32 %v1304, %v1277
    %v1306 = vadd.f32 %v1305, %v1278
    %v1307 = vadd.f32 %v1306, %v1279
    %v1308 = vadd.f32 %v1307, %v1280
    %v1309 = vadd.f32 %v1308, %v1281
    %v1310 = vadd.f32 %v1309, %v1282
    %v1311 = vadd.f32 %v1310, %v1283
    %v1312 = vadd.f32 %v1311, %v1284
    %v1313 = vadd.f32 %v1312, %v1285
    %v1314 = vadd.f32 %v1313, %v1286
    %v1315 = vadd.f32 %v1314, %v1287
    %v1316 = vadd.f32 %v1315, %v1288
    %v1317 = vadd.f32 %v1316, %v1289
    %v1318 = vadd.f32 %v1317, %v1290
    %v1319 = vadd.f32 %v1318, %v1291
    %v1320 = vadd.f32 %v1319, %v1292
    %v1321 = vadd.f32 %v1320, %v1293
    %v1322 = vadd.f32 %v1321, %v1294
    %v1323 = vadd.f32 %v1322, %v1295
    %v1324 = vadd.f32 %v1323, %v1296
    %v1325 = vadd.f32 %v1324, %v1297
    %v1326 = vadd.f32 %v1325, %v1298
    %v1327 = vadd.f32 %v1326, %v1299
    %v1328 = vadd.f32 %v1327, %v1300
    %v1329 = vadd.f32 %v1328, %v1301
    %v1330 = vadd.f32 %v1329, %v1302
    %v1331 = vrot.slane %v1330, 4
    %v1332 = vadd.f32 %v1330, %v1331
    %v1333 = vrot.slane %v1332, 2
    %v1334 = vadd.f32 %v1332, %v1333
    %v1335 = vrot.slane %v1334, 1
    %v1336 = vadd.f32 %v1334, %v1335
    %v1337 = vld [vmem:[#allocation3 + $0x110] sm:$0xff]
    %v1338 = vld [vmem:[#allocation3 + $0x118] sm:$0xff]
    %v1339 = vld [vmem:[#allocation3 + $0x120] sm:$0xff]
    %v1340 = vld [vmem:[#allocation3 + $0x128] sm:$0xff]
    %v1341 = vld [vmem:[#allocation3 + $0x130] sm:$0xff]
    %v1342 = vld [vmem:[#allocation3 + $0x138] sm:$0xff]
    %v1343 = vld [vmem:[#allocation3 + $0x140] sm:$0xff]
    %v1344 = vld [vmem:[#allocation3 + $0x148] sm:$0xff]
    %v1345 = vld [vmem:[#allocation3 + $0x150] sm:$0xff]
    %v1346 = vld [vmem:[#allocation3 + $0x158] sm:$0xff]
    %v1347 = vld [vmem:[#allocation3 + $0x160] sm:$0xff]
    %v1348 = vld [vmem:[#allocation3 + $0x168] sm:$0xff]
    %v1349 = vld [vmem:[#allocation3 + $0x170] sm:$0xff]
    %v1350 = vld [vmem:[#allocation3 + $0x178] sm:$0xff]
    %v1351 = vld [vmem:[#allocation3 + $0x180] sm:$0xff]
    %v1352 = vld [vmem:[#allocation3 + $0x188] sm:$0xff]
    %v1353 = vld [vmem:[#allocation3 + $0x190] sm:$0xff]
    %v1354 = vld [vmem:[#allocation3 + $0x198] sm:$0xff]
    %v1355 = vld [vmem:[#allocation3 + $0x1a0] sm:$0xff]
    %v1356 = vld [vmem:[#allocation3 + $0x1a8] sm:$0xff]
    %v1357 = vld [vmem:[#allocation3 + $0x1b0] sm:$0xff]
    %v1358 = vld [vmem:[#allocation3 + $0x1b8] sm:$0xff]
    %v1359 = vld [vmem:[#allocation3 + $0x1c0] sm:$0xff]
    %v1360 = vld [vmem:[#allocation3 + $0x1c8] sm:$0xff]
    %v1361 = vld [vmem:[#allocation3 + $0x1d0] sm:$0xff]
    %v1362 = vld [vmem:[#allocation3 + $0x1d8] sm:$0xff]
    %v1363 = vld [vmem:[#allocation3 + $0x1e0] sm:$0xff]
    %v1364 = vld [vmem:[#allocation3 + $0x1e8] sm:$0xff]
    %v1365 = vld [vmem:[#allocation3 + $0x1f0] sm:$0xff]
    %v1366 = vmul.f32 %v1337, %v1216
    %v1367 = vmul.f32 %v1338, %v1217
    %v1368 = vmul.f32 %v1339, %v1218
    %v1369 = vmul.f32 %v1340, %v1219
    %v1370 = vmul.f32 %v1341, %v1220
    %v1371 = vmul.f32 %v1342, %v1221
    %v1372 = vmul.f32 %v1343, %v1222
    %v1373 = vmul.f32 %v1344, %v1223
    %v1374 = vmul.f32 %v1345, %v1224
    %v1375 = vmul.f32 %v1346, %v1225
    %v1376 = vmul.f32 %v1347, %v1226
    %v1377 = vmul.f32 %v1348, %v1227
    %v1378 = vmul.f32 %v1349, %v1228
    %v1379 = vmul.f32 %v1350, %v1229
    %v1380 = vmul.f32 %v1351, %v1230
    %v1381 = vmul.f32 %v1352, %v1231
    %v1382 = vmul.f32 %v1353, %v1232
    %v1383 = vmul.f32 %v1354, %v1233
    %v1384 = vmul.f32 %v1355, %v1234
    %v1385 = vmul.f32 %v1356, %v1235
    %v1386 = vmul.f32 %v1357, %v1236
    %v1387 = vmul.f32 %v1358, %v1237
    %v1388 = vmul.f32 %v1359, %v1238
    %v1389 = vmul.f32 %v1360, %v1239
    %v1390 = vmul.f32 %v1361, %v1240
    %v1391 = vmul.f32 %v1362, %v1241
    %v1392 = vmul.f32 %v1363, %v1242
    %v1393 = vmul.f32 %v1364, %v1243
    %v1394 = vmul.f32 %v1365, %v1244
    %v1395 = vadd.f32 %v1366, %v1367
    %v1396 = vadd.f32 %v1395, %v1368
    %v1397 = vadd.f32 %v1396, %v1369
    %v1398 = vadd.f32 %v1397, %v1370
    %v1399 = vadd.f32 %v1398, %v1371
    %v1400 = vadd.f32 %v1399, %v1372
    %v1401 = vadd.f32 %v1400, %v1373
    %v1402 = vadd.f32 %v1401, %v1374
    %v1403 = vadd.f32 %v1402, %v1375
    %v1404 = vadd.f32 %v1403, %v1376
    %v1405 = vadd.f32 %v1404, %v1377
    %v1406 = vadd.f32 %v1405, %v1378
    %v1407 = vadd.f32 %v1406, %v1379
    %v1408 = vadd.f32 %v1407, %v1380
    %v1409 = vadd.f32 %v1408, %v1381
    %v1410 = vadd.f32 %v1409, %v1382
    %v1411 = vadd.f32 %v1410, %v1383
    %v1412 = vadd.f32 %v1411, %v1384
    %v1413 = vadd.f32 %v1412, %v1385
    %v1414 = vadd.f32 %v1413, %v1386
    %v1415 = vadd.f32 %v1414, %v1387
    %v1416 = vadd.f32 %v1415, %v1388
    %v1417 = vadd.f32 %v1416, %v1389
    %v1418 = vadd.f32 %v1417, %v1390
    %v1419 = vadd.f32 %v1418, %v1391
    %v1420 = vadd.f32 %v1419, %v1392
    %v1421 = vadd.f32 %v1420, %v1393
    %v1422 = vadd.f32 %v1421, %v1394
    %v1423 = vrot.slane %v1422, 4
    %v1424 = vadd.f32 %v1422, %v1423
    %v1425 = vrot.slane %v1424, 2
    %v1426 = vadd.f32 %v1424, %v1425
    %v1427 = vrot.slane %v1426, 1
    %v1428 = vadd.f32 %v1426, %v1427
    %v1429 = vld [vmem:[#allocation3 + $0x220] sm:$0xff]
    %v1430 = vld [vmem:[#allocation3 + $0x228] sm:$0xff]
    %v1431 = vld [vmem:[#allocation3 + $0x230] sm:$0xff]
    %v1432 = vld [vmem:[#allocation3 + $0x238] sm:$0xff]
    %v1433 = vld [vmem:[#allocation3 + $0x240] sm:$0xff]
    %v1434 = vld [vmem:[#allocation3 + $0x248] sm:$0xff]
    %v1435 = vld [vmem:[#allocation3 + $0x250] sm:$0xff]
    %v1436 = vld [vmem:[#allocation3 + $0x258] sm:$0xff]
    %v1437 = vld [vmem:[#allocation3 + $0x260] sm:$0xff]
    %v1438 = vld [vmem:[#allocation3 + $0x268] sm:$0xff]
    %v1439 = vld [vmem:[#allocation3 + $0x270] sm:$0xff]
    %v1440 = vld [vmem:[#allocation3 + $0x278] sm:$0xff]
    %v1441 = vld [vmem:[#allocation3 + $0x280] sm:$0xff]
    %v1442 = vld [vmem:[#allocation3 + $0x288] sm:$0xff]
    %v1443 = vld [vmem:[#allocation3 + $0x290] sm:$0xff]
    %v1444 = vld [vmem:[#allocation3 + $0x298] sm:$0xff]
    %v1445 = vld [vmem:[#allocation3 + $0x2a0] sm:$0xff]
    %v1446 = vld [vmem:[#allocation3 + $0x2a8] sm:$0xff]
    %v1447 = vld [vmem:[#allocation3 + $0x2b0] sm:$0xff]
    %v1448 = vld [vmem:[#allocation3 + $0x2b8] sm:$0xff]
    %v1449 = vld [vmem:[#allocation3 + $0x2c0] sm:$0xff]
    %v1450 = vld [vmem:[#allocation3 + $0x2c8] sm:$0xff]
    %v1451 = vld [vmem:[#allocation3 + $0x2d0] sm:$0xff]
    %v1452 = vld [vmem:[#allocation3 + $0x2d8] sm:$0xff]
    %v1453 = vld [vmem:[#allocation3 + $0x2e0] sm:$0xff]
    %v1454 = vld [vmem:[#allocation3 + $0x2e8] sm:$0xff]
    %v1455 = vld [vmem:[#allocation3 + $0x2f0] sm:$0xff]
    %v1456 = vld [vmem:[#allocation3 + $0x2f8] sm:$0xff]
    %v1457 = vld [vmem:[#allocation3 + $0x300] sm:$0xff]
    %v1458 = vmul.f32 %v1429, %v1216
    %v1459 = vmul.f32 %v1430, %v1217
    %v1460 = vmul.f32 %v1431, %v1218
    %v1461 = vmul.f32 %v1432, %v1219
    %v1462 = vmul.f32 %v1433, %v1220
    %v1463 = vmul.f32 %v1434, %v1221
    %v1464 = vmul.f32 %v1435, %v1222
    %v1465 = vmul.f32 %v1436, %v1223
    %v1466 = vmul.f32 %v1437, %v1224
    %v1467 = vmul.f32 %v1438, %v1225
    %v1468 = vmul.f32 %v1439, %v1226
    %v1469 = vmul.f32 %v1440, %v1227
    %v1470 = vmul.f32 %v1441, %v1228
    %v1471 = vmul.f32 %v1442, %v1229
    %v1472 = vmul.f32 %v1443, %v1230
    %v1473 = vmul.f32 %v1444, %v1231
    %v1474 = vmul.f32 %v1445, %v1232
    %v1475 = vmul.f32 %v1446, %v1233
    %v1476 = vmul.f32 %v1447, %v1234
    %v1477 = vmul.f32 %v1448, %v1235
    %v1478 = vmul.f32 %v1449, %v1236
    %v1479 = vmul.f32 %v1450, %v1237
    %v1480 = vmul.f32 %v1451, %v1238
    %v1481 = vmul.f32 %v1452, %v1239
    %v1482 = vmul.f32 %v1453, %v1240
    %v1483 = vmul.f32 %v1454, %v1241
    %v1484 = vmul.f32 %v1455, %v1242
    %v1485 = vmul.f32 %v1456, %v1243
    %v1486 = vmul.f32 %v1457, %v1244
    %v1487 = vadd.f32 %v1458, %v1459
    %v1488 = vadd.f32 %v1487, %v1460
    %v1489 = vadd.f32 %v1488, %v1461
    %v1490 = vadd.f32 %v1489, %v1462
    %v1491 = vadd.f32 %v1490, %v1463
    %v1492 = vadd.f32 %v1491, %v1464
    %v1493 = vadd.f32 %v1492, %v1465
    %v1494 = vadd.f32 %v1493, %v1466
    %v1495 = vadd.f32 %v1494, %v1467
    %v1496 = vadd.f32 %v1495, %v1468
    %v1497 = vadd.f32 %v1496, %v1469
    %v1498 = vadd.f32 %v1497, %v1470
    %v1499 = vadd.f32 %v1498, %v1471
    %v1500 = vadd.f32 %v1499, %v1472
    %v1501 = vadd.f32 %v1500, %v1473
    %v1502 = vadd.f32 %v1501, %v1474
    %v1503 = vadd.f32 %v1502, %v1475
    %v1504 = vadd.f32 %v1503, %v1476
    %v1505 = vadd.f32 %v1504, %v1477
    %v1506 = vadd.f32 %v1505, %v1478
    %v1507 = vadd.f32 %v1506, %v1479
    %v1508 = vadd.f32 %v1507, %v1480
    %v1509 = vadd.f32 %v1508, %v1481
    %v1510 = vadd.f32 %v1509, %v1482
    %v1511 = vadd.f32 %v1510, %v1483
    %v1512 = vadd.f32 %v1511, %v1484
    %v1513 = vadd.f32 %v1512, %v1485
    %v1514 = vadd.f32 %v1513, %v1486
    %v1515 = vrot.slane %v1514, 4
    %v1516 = vadd.f32 %v1514, %v1515
    %v1517 = vrot.slane %v1516, 2
    %v1518 = vadd.f32 %v1516, %v1517
    %v1519 = vrot.slane %v1518, 1
    %v1520 = vadd.f32 %v1518, %v1519
    %v1521 = vld [vmem:[#allocation3 + $0x330] sm:$0xff]
    %v1522 = vld [vmem:[#allocation3 + $0x338] sm:$0xff]
    %v1523 = vld [vmem:[#allocation3 + $0x340] sm:$0xff]
    %v1524 = vld [vmem:[#allocation3 + $0x348] sm:$0xff]
    %v1525 = vld [vmem:[#allocation3 + $0x350] sm:$0xff]
    %v1526 = vld [vmem:[#allocation3 + $0x358] sm:$0xff]
    %v1527 = vld [vmem:[#allocation3 + $0x360] sm:$0xff]
    %v1528 = vld [vmem:[#allocation3 + $0x368] sm:$0xff]
    %v1529 = vld [vmem:[#allocation3 + $0x370] sm:$0xff]
    %v1530 = vld [vmem:[#allocation3 + $0x378] sm:$0xff]
    %v1531 = vld [vmem:[#allocation3 + $0x380] sm:$0xff]
    %v1532 = vld [vmem:[#allocation3 + $0x388] sm:$0xff]
    %v1533 = vld [vmem:[#allocation3 + $0x390] sm:$0xff]
    %v1534 = vld [vmem:[#allocation3 + $0x398] sm:$0xff]
    %v1535 = vld [vmem:[#allocation3 + $0x3a0] sm:$0xff]
    %v1536 = vld [vmem:[#allocation3 + $0x3a8] sm:$0xff]
    %v1537 = vld [vmem:[#allocation3 + $0x3b0] sm:$0xff]
    %v1538 = vld [vmem:[#allocation3 + $0x3b8] sm:$0xff]
    %v1539 = vld [vmem:[#allocation3 + $0x3c0] sm:$0xff]
    %v1540 = vld [vmem:[#allocation3 + $0x3c8] sm:$0xff]
    %v1541 = vld [vmem:[#allocation3 + $0x3d0] sm:$0xff]
    %v1542 = vld [vmem:[#allocation3 + $0x3d8] sm:$0xff]
    %v1543 = vld [vmem:[#allocation3 + $0x3e0] sm:$0xff]
    %v1544 = vld [vmem:[#allocation3 + $0x3e8] sm:$0xff]
    %v1545 = vld [vmem:[#allocation3 + $0x3f0] sm:$0xff]
    %v1546 = vld [vmem:[#allocation3 + $0x3f8] sm:$0xff]
    %v1547 = vld [vmem:[#allocation3 + $0x400] sm:$0xff]
    %v1548 = vld [vmem:[#allocation3 + $0x408] sm:$0xff]
    %v1549 = vld [vmem:[#allocation3 + $0x410] sm:$0xff]
    %v1550 = vmul.f32 %v1521, %v1216
    %v1551 = vmul.f32 %v1522, %v1217
    %v1552 = vmul.f32 %v1523, %v1218
    %v1553 = vmul.f32 %v1524, %v1219
    %v1554 = vmul.f32 %v1525, %v1220
    %v1555 = vmul.f32 %v1526, %v1221
    %v1556 = vmul.f32 %v1527, %v1222
    %v1557 = vmul.f32 %v1528, %v1223
    %v1558 = vmul.f32 %v1529, %v1224
    %v1559 = vmul.f32 %v1530, %v1225
    %v1560 = vmul.f32 %v1531, %v1226
    %v1561 = vmul.f32 %v1532, %v1227
    %v1562 = vmul.f32 %v1533, %v1228
    %v1563 = vmul.f32 %v1534, %v1229
    %v1564 = vmul.f32 %v1535, %v1230
    %v1565 = vmul.f32 %v1536, %v1231
    %v1566 = vmul.f32 %v1537, %v1232
    %v1567 = vmul.f32 %v1538, %v1233
    %v1568 = vmul.f32 %v1539, %v1234
    %v1569 = vmul.f32 %v1540, %v1235
    %v1570 = vmul.f32 %v1541, %v1236
    %v1571 = vmul.f32 %v1542, %v1237
    %v1572 = vmul.f32 %v1543, %v1238
    %v1573 = vmul.f32 %v1544, %v1239
    %v1574 = vmul.f32 %v1545, %v1240
    %v1575 = vmul.f32 %v1546, %v1241
    %v1576 = vmul.f32 %v1547, %v1242
    %v1577 = vmul.f32 %v1548, %v1243
    %v1578 = vmul.f32 %v1549, %v1244
    %v1579 = vadd.f32 %v1550, %v1551
    %v1580 = vadd.f32 %v1579, %v1552
    %v1581 = vadd.f32 %v1580, %v1553
    %v1582 = vadd.f32 %v1581, %v1554
    %v1583 = vadd.f32 %v1582, %v1555
    %v1584 = vadd.f32 %v1583, %v1556
    %v1585 = vadd.f32 %v1584, %v1557
    %v1586 = vadd.f32 %v1585, %v1558
    %v1587 = vadd.f32 %v1586, %v1559
    %v1588 = vadd.f32 %v1587, %v1560
    %v1589 = vadd.f32 %v1588, %v1561
    %v1590 = vadd.f32 %v1589, %v1562
    %v1591 = vadd.f32 %v1590, %v1563
    %v1592 = vadd.f32 %v1591, %v1564
    %v1593 = vadd.f32 %v1592, %v1565
    %v1594 = vadd.f32 %v1593, %v1566
    %v1595 = vadd.f32 %v1594, %v1567
    %v1596 = vadd.f32 %v1595, %v1568
    %v1597 = vadd.f32 %v1596, %v1569
    %v1598 = vadd.f32 %v1597, %v1570
    %v1599 = vadd.f32 %v1598, %v1571
    %v1600 = vadd.f32 %v1599, %v1572
    %v1601 = vadd.f32 %v1600, %v1573
    %v1602 = vadd.f32 %v1601, %v1574
    %v1603 = vadd.f32 %v1602, %v1575
    %v1604 = vadd.f32 %v1603, %v1576
    %v1605 = vadd.f32 %v1604, %v1577
    %v1606 = vadd.f32 %v1605, %v1578
    %v1607 = vrot.slane %v1606, 4
    %v1608 = vadd.f32 %v1606, %v1607
    %v1609 = vrot.slane %v1608, 2
    %v1610 = vadd.f32 %v1608, %v1609
    %v1611 = vrot.slane %v1610, 1
    %v1612 = vadd.f32 %v1610, %v1611
    %v1613 = vld [vmem:[#allocation3 + $0x440] sm:$0xff]
    %v1614 = vld [vmem:[#allocation3 + $0x448] sm:$0xff]
    %v1615 = vld [vmem:[#allocation3 + $0x450] sm:$0xff]
    %v1616 = vld [vmem:[#allocation3 + $0x458] sm:$0xff]
    %v1617 = vld [vmem:[#allocation3 + $0x460] sm:$0xff]
    %v1618 = vld [vmem:[#allocation3 + $0x468] sm:$0xff]
    %v1619 = vld [vmem:[#allocation3 + $0x470] sm:$0xff]
    %v1620 = vld [vmem:[#allocation3 + $0x478] sm:$0xff]
    %v1621 = vld [vmem:[#allocation3 + $0x480] sm:$0xff]
    %v1622 = vld [vmem:[#allocation3 + $0x488] sm:$0xff]
    %v1623 = vld [vmem:[#allocation3 + $0x490] sm:$0xff]
    %v1624 = vld [vmem:[#allocation3 + $0x498] sm:$0xff]
    %v1625 = vld [vmem:[#allocation3 + $0x4a0] sm:$0xff]
    %v1626 = vld [vmem:[#allocation3 + $0x4a8] sm:$0xff]
    %v1627 = vld [vmem:[#allocation3 + $0x4b0] sm:$0xff]
    %v1628 = vld [vmem:[#allocation3 + $0x4b8] sm:$0xff]
    %v1629 = vld [vmem:[#allocation3 + $0x4c0] sm:$0xff]
    %v1630 = vld [vmem:[#allocation3 + $0x4c8] sm:$0xff]
    %v1631 = vld [vmem:[#allocation3 + $0x4d0] sm:$0xff]
    %v1632 = vld [vmem:[#allocation3 + $0x4d8] sm:$0xff]
    %v1633 = vld [vmem:[#allocation3 + $0x4e0] sm:$0xff]
    %v1634 = vld [vmem:[#allocation3 + $0x4e8] sm:$0xff]
    %v1635 = vld [vmem:[#allocation3 + $0x4f0] sm:$0xff]
    %v1636 = vld [vmem:[#allocation3 + $0x4f8] sm:$0xff]
    %v1637 = vld [vmem:[#allocation3 + $0x500] sm:$0xff]
    %v1638 = vld [vmem:[#allocation3 + $0x508] sm:$0xff]
    %v1639 = vld [vmem:[#allocation3 + $0x510] sm:$0xff]
    %v1640 = vld [vmem:[#allocation3 + $0x518] sm:$0xff]
    %v1641 = vld [vmem:[#allocation3 + $0x520] sm:$0xff]
    %v1642 = vmul.f32 %v1613, %v1216
    %v1643 = vmul.f32 %v1614, %v1217
    %v1644 = vmul.f32 %v1615, %v1218
    %v1645 = vmul.f32 %v1616, %v1219
    %v1646 = vmul.f32 %v1617, %v1220
    %v1647 = vmul.f32 %v1618, %v1221
    %v1648 = vmul.f32 %v1619, %v1222
    %v1649 = vmul.f32 %v1620, %v1223
    %v1650 = vmul.f32 %v1621, %v1224
    %v1651 = vmul.f32 %v1622, %v1225
    %v1652 = vmul.f32 %v1623, %v1226
    %v1653 = vmul.f32 %v1624, %v1227
    %v1654 = vmul.f32 %v1625, %v1228
    %v1655 = vmul.f32 %v1626, %v1229
    %v1656 = vmul.f32 %v1627, %v1230
    %v1657 = vmul.f32 %v1628, %v1231
    %v1658 = vmul.f32 %v1629, %v1232
    %v1659 = vmul.f32 %v1630, %v1233
    %v1660 = vmul.f32 %v1631, %v1234
    %v1661 = vmul.f32 %v1632, %v1235
    %v1662 = vmul.f32 %v1633, %v1236
    %v1663 = vmul.f32 %v1634, %v1237
    %v1664 = vmul.f32 %v1635, %v1238
    %v1665 = vmul.f32 %v1636, %v1239
    %v1666 = vmul.f32 %v1637, %v1240
    %v1667 = vmul.f32 %v1638, %v1241
    %v1668 = vmul.f32 %v1639, %v1242
    %v1669 = vmul.f32 %v1640, %v1243
    %v1670 = vmul.f32 %v1641, %v1244
    %v1671 = vadd.f32 %v1642, %v1643
    %v1672 = vadd.f32 %v1671, %v1644
    %v1673 = vadd.f32 %v1672, %v1645
    %v1674 = vadd.f32 %v1673, %v1646
    %v1675 = vadd.f32 %v1674, %v1647
    %v1676 = vadd.f32 %v1675, %v1648
    %v1677 = vadd.f32 %v1676, %v1649
    %v1678 = vadd.f32 %v1677, %v1650
    %v1679 = vadd.f32 %v1678, %v1651
    %v1680 = vadd.f32 %v1679, %v1652
    %v1681 = vadd.f32 %v1680, %v1653
    %v1682 = vadd.f32 %v1681, %v1654
    %v1683 = vadd.f32 %v1682, %v1655
    %v1684 = vadd.f32 %v1683, %v1656
    %v1685 = vadd.f32 %v1684, %v1657
    %v1686 = vadd.f32 %v1685, %v1658
    %v1687 = vadd.f32 %v1686, %v1659
    %v1688 = vadd.f32 %v1687, %v1660
    %v1689 = vadd.f32 %v1688, %v1661
    %v1690 = vadd.f32 %v1689, %v1662
    %v1691 = vadd.f32 %v1690, %v1663
    %v1692 = vadd.f32 %v1691, %v1664
    %v1693 = vadd.f32 %v1692, %v1665
    %v1694 = vadd.f32 %v1693, %v1666
    %v1695 = vadd.f32 %v1694, %v1667
    %v1696 = vadd.f32 %v1695, %v1668
    %v1697 = vadd.f32 %v1696, %v1669
    %v1698 = vadd.f32 %v1697, %v1670
    %v1699 = vrot.slane %v1698, 4
    %v1700 = vadd.f32 %v1698, %v1699
    %v1701 = vrot.slane %v1700, 2
    %v1702 = vadd.f32 %v1700, %v1701
    %v1703 = vrot.slane %v1702, 1
    %v1704 = vadd.f32 %v1702, %v1703
    %v1705 = vld [vmem:[#allocation3 + $0x550] sm:$0xff]
    %v1706 = vld [vmem:[#allocation3 + $0x558] sm:$0xff]
    %v1707 = vld [vmem:[#allocation3 + $0x560] sm:$0xff]
    %v1708 = vld [vmem:[#allocation3 + $0x568] sm:$0xff]
    %v1709 = vld [vmem:[#allocation3 + $0x570] sm:$0xff]
    %v1710 = vld [vmem:[#allocation3 + $0x578] sm:$0xff]
    %v1711 = vld [vmem:[#allocation3 + $0x580] sm:$0xff]
    %v1712 = vld [vmem:[#allocation3 + $0x588] sm:$0xff]
    %v1713 = vld [vmem:[#allocation3 + $0x590] sm:$0xff]
    %v1714 = vld [vmem:[#allocation3 + $0x598] sm:$0xff]
    %v1715 = vld [vmem:[#allocation3 + $0x5a0] sm:$0xff]
    %v1716 = vld [vmem:[#allocation3 + $0x5a8] sm:$0xff]
    %v1717 = vld [vmem:[#allocation3 + $0x5b0] sm:$0xff]
    %v1718 = vld [vmem:[#allocation3 + $0x5b8] sm:$0xff]
    %v1719 = vld [vmem:[#allocation3 + $0x5c0] sm:$0xff]
    %v1720 = vld [vmem:[#allocation3 + $0x5c8] sm:$0xff]
    %v1721 = vld [vmem:[#allocation3 + $0x5d0] sm:$0xff]
    %v1722 = vld [vmem:[#allocation3 + $0x5d8] sm:$0xff]
    %v1723 = vld [vmem:[#allocation3 + $0x5e0] sm:$0xff]
    %v1724 = vld [vmem:[#allocation3 + $0x5e8] sm:$0xff]
    %v1725 = vld [vmem:[#allocation3 + $0x5f0] sm:$0xff]
    %v1726 = vld [vmem:[#allocation3 + $0x5f8] sm:$0xff]
    %v1727 = vld [vmem:[#allocation3 + $0x600] sm:$0xff]
    %v1728 = vld [vmem:[#allocation3 + $0x608] sm:$0xff]
    %v1729 = vld [vmem:[#allocation3 + $0x610] sm:$0xff]
    %v1730 = vld [vmem:[#allocation3 + $0x618] sm:$0xff]
    %v1731 = vld [vmem:[#allocation3 + $0x620] sm:$0xff]
    %v1732 = vld [vmem:[#allocation3 + $0x628] sm:$0xff]
    %v1733 = vld [vmem:[#allocation3 + $0x630] sm:$0xff]
    %v1734 = vmul.f32 %v1705, %v1216
    %v1735 = vmul.f32 %v1706, %v1217
    %v1736 = vmul.f32 %v1707, %v1218
    %v1737 = vmul.f32 %v1708, %v1219
    %v1738 = vmul.f32 %v1709, %v1220
    %v1739 = vmul.f32 %v1710, %v1221
    %v1740 = vmul.f32 %v1711, %v1222
    %v1741 = vmul.f32 %v1712, %v1223
    %v1742 = vmul.f32 %v1713, %v1224
    %v1743 = vmul.f32 %v1714, %v1225
    %v1744 = vmul.f32 %v1715, %v1226
    %v1745 = vmul.f32 %v1716, %v1227
    %v1746 = vmul.f32 %v1717, %v1228
    %v1747 = vmul.f32 %v1718, %v1229
    %v1748 = vmul.f32 %v1719, %v1230
    %v1749 = vmul.f32 %v1720, %v1231
    %v1750 = vmul.f32 %v1721, %v1232
    %v1751 = vmul.f32 %v1722, %v1233
    %v1752 = vmul.f32 %v1723, %v1234
    %v1753 = vmul.f32 %v1724, %v1235
    %v1754 = vmul.f32 %v1725, %v1236
    %v1755 = vmul.f32 %v1726, %v1237
    %v1756 = vmul.f32 %v1727, %v1238
    %v1757 = vmul.f32 %v1728, %v1239
    %v1758 = vmul.f32 %v1729, %v1240
    %v1759 = vmul.f32 %v1730, %v1241
    %v1760 = vmul.f32 %v1731, %v1242
    %v1761 = vmul.f32 %v1732, %v1243
    %v1762 = vmul.f32 %v1733, %v1244
    %v1763 = vadd.f32 %v1734, %v1735
    %v1764 = vadd.f32 %v1763, %v1736
    %v1765 = vadd.f32 %v1764, %v1737
    %v1766 = vadd.f32 %v1765, %v1738
    %v1767 = vadd.f32 %v1766, %v1739
    %v1768 = vadd.f32 %v1767, %v1740
    %v1769 = vadd.f32 %v1768, %v1741
    %v1770 = vadd.f32 %v1769, %v1742
    %v1771 = vadd.f32 %v1770, %v1743
    %v1772 = vadd.f32 %v1771, %v1744
    %v1773 = vadd.f32 %v1772, %v1745
    %v1774 = vadd.f32 %v1773, %v1746
    %v1775 = vadd.f32 %v1774, %v1747
    %v1776 = vadd.f32 %v1775, %v1748
    %v1777 = vadd.f32 %v1776, %v1749
    %v1778 = vadd.f32 %v1777, %v1750
    %v1779 = vadd.f32 %v1778, %v1751
    %v1780 = vadd.f32 %v1779, %v1752
    %v1781 = vadd.f32 %v1780, %v1753
    %v1782 = vadd.f32 %v1781, %v1754
    %v1783 = vadd.f32 %v1782, %v1755
    %v1784 = vadd.f32 %v1783, %v1756
    %v1785 = vadd.f32 %v1784, %v1757
    %v1786 = vadd.f32 %v1785, %v1758
    %v1787 = vadd.f32 %v1786, %v1759
    %v1788 = vadd.f32 %v1787, %v1760
    %v1789 = vadd.f32 %v1788, %v1761
    %v1790 = vadd.f32 %v1789, %v1762
    %v1791 = vrot.slane %v1790, 4
    %v1792 = vadd.f32 %v1790, %v1791
    %v1793 = vrot.slane %v1792, 2
    %v1794 = vadd.f32 %v1792, %v1793
    %v1795 = vrot.slane %v1794, 1
    %v1796 = vadd.f32 %v1794, %v1795
    %v1797 = vld [vmem:[#allocation3 + $0x660] sm:$0xff]
    %v1798 = vld [vmem:[#allocation3 + $0x668] sm:$0xff]
    %v1799 = vld [vmem:[#allocation3 + $0x670] sm:$0xff]
    %v1800 = vld [vmem:[#allocation3 + $0x678] sm:$0xff]
    %v1801 = vld [vmem:[#allocation3 + $0x680] sm:$0xff]
    %v1802 = vld [vmem:[#allocation3 + $0x688] sm:$0xff]
    %v1803 = vld [vmem:[#allocation3 + $0x690] sm:$0xff]
    %v1804 = vld [vmem:[#allocation3 + $0x698] sm:$0xff]
    %v1805 = vld [vmem:[#allocation3 + $0x6a0] sm:$0xff]
    %v1806 = vld [vmem:[#allocation3 + $0x6a8] sm:$0xff]
    %v1807 = vld [vmem:[#allocation3 + $0x6b0] sm:$0xff]
    %v1808 = vld [vmem:[#allocation3 + $0x6b8] sm:$0xff]
    %v1809 = vld [vmem:[#allocation3 + $0x6c0] sm:$0xff]
    %v1810 = vld [vmem:[#allocation3 + $0x6c8] sm:$0xff]
    %v1811 = vld [vmem:[#allocation3 + $0x6d0] sm:$0xff]
    %v1812 = vld [vmem:[#allocation3 + $0x6d8] sm:$0xff]
    %v1813 = vld [vmem:[#allocation3 + $0x6e0] sm:$0xff]
    %v1814 = vld [vmem:[#allocation3 + $0x6e8] sm:$0xff]
    %v1815 = vld [vmem:[#allocation3 + $0x6f0] sm:$0xff]
    %v1816 = vld [vmem:[#allocation3 + $0x6f8] sm:$0xff]
    %v1817 = vld [vmem:[#allocation3 + $0x700] sm:$0xff]
    %v1818 = vld [vmem:[#allocation3 + $0x708] sm:$0xff]
    %v1819 = vld [vmem:[#allocation3 + $0x710] sm:$0xff]
    %v1820 = vld [vmem:[#allocation3 + $0x718] sm:$0xff]
    %v1821 = vld [vmem:[#allocation3 + $0x720] sm:$0xff]
    %v1822 = vld [vmem:[#allocation3 + $0x728] sm:$0xff]
    %v1823 = vld [vmem:[#allocation3 + $0x730] sm:$0xff]
    %v1824 = vld [vmem:[#allocation3 + $0x738] sm:$0xff]
    %v1825 = vld [vmem:[#allocation3 + $0x740] sm:$0xff]
    %v1826 = vmul.f32 %v1797, %v1216
    %v1827 = vmul.f32 %v1798, %v1217
    %v1828 = vmul.f32 %v1799, %v1218
    %v1829 = vmul.f32 %v1800, %v1219
    %v1830 = vmul.f32 %v1801, %v1220
    %v1831 = vmul.f32 %v1802, %v1221
    %v1832 = vmul.f32 %v1803, %v1222
    %v1833 = vmul.f32 %v1804, %v1223
    %v1834 = vmul.f32 %v1805, %v1224
    %v1835 = vmul.f32 %v1806, %v1225
    %v1836 = vmul.f32 %v1807, %v1226
    %v1837 = vmul.f32 %v1808, %v1227
    %v1838 = vmul.f32 %v1809, %v1228
    %v1839 = vmul.f32 %v1810, %v1229
    %v1840 = vmul.f32 %v1811, %v1230
    %v1841 = vmul.f32 %v1812, %v1231
    %v1842 = vmul.f32 %v1813, %v1232
    %v1843 = vmul.f32 %v1814, %v1233
    %v1844 = vmul.f32 %v1815, %v1234
    %v1845 = vmul.f32 %v1816, %v1235
    %v1846 = vmul.f32 %v1817, %v1236
    %v1847 = vmul.f32 %v1818, %v1237
    %v1848 = vmul.f32 %v1819, %v1238
    %v1849 = vmul.f32 %v1820, %v1239
    %v1850 = vmul.f32 %v1821, %v1240
    %v1851 = vmul.f32 %v1822, %v1241
    %v1852 = vmul.f32 %v1823, %v1242
    %v1853 = vmul.f32 %v1824, %v1243
    %v1854 = vmul.f32 %v1825, %v1244
    %v1855 = vadd.f32 %v1826, %v1827
    %v1856 = vadd.f32 %v1855, %v1828
    %v1857 = vadd.f32 %v1856, %v1829
    %v1858 = vadd.f32 %v1857, %v1830
    %v1859 = vadd.f32 %v1858, %v1831
    %v1860 = vadd.f32 %v1859, %v1832
    %v1861 = vadd.f32 %v1860, %v1833
    %v1862 = vadd.f32 %v1861, %v1834
    %v1863 = vadd.f32 %v1862, %v1835
    %v1864 = vadd.f32 %v1863, %v1836
    %v1865 = vadd.f32 %v1864, %v1837
    %v1866 = vadd.f32 %v1865, %v1838
    %v1867 = vadd.f32 %v1866, %v1839
    %v1868 = vadd.f32 %v1867, %v1840
    %v1869 = vadd.f32 %v1868, %v1841
    %v1870 = vadd.f32 %v1869, %v1842
    %v1871 = vadd.f32 %v1870, %v1843
    %v1872 = vadd.f32 %v1871, %v1844
    %v1873 = vadd.f32 %v1872, %v1845
    %v1874 = vadd.f32 %v1873, %v1846
    %v1875 = vadd.f32 %v1874, %v1847
    %v1876 = vadd.f32 %v1875, %v1848
    %v1877 = vadd.f32 %v1876, %v1849
    %v1878 = vadd.f32 %v1877, %v1850
    %v1879 = vadd.f32 %v1878, %v1851
    %v1880 = vadd.f32 %v1879, %v1852
    %v1881 = vadd.f32 %v1880, %v1853
    %v1882 = vadd.f32 %v1881, %v1854
    %v1883 = vrot.slane %v1882, 4
    %v1884 = vadd.f32 %v1882, %v1883
    %v1885 = vrot.slane %v1884, 2
    %v1886 = vadd.f32 %v1884, %v1885
    %v1887 = vrot.slane %v1886, 1
    %v1888 = vadd.f32 %v1886, %v1887
    %v1889 = vld [vmem:[#allocation3 + $0x770] sm:$0xff]
    %v1890 = vld [vmem:[#allocation3 + $0x778] sm:$0xff]
    %v1891 = vld [vmem:[#allocation3 + $0x780] sm:$0xff]
    %v1892 = vld [vmem:[#allocation3 + $0x788] sm:$0xff]
    %v1893 = vld [vmem:[#allocation3 + $0x790] sm:$0xff]
    %v1894 = vld [vmem:[#allocation3 + $0x798] sm:$0xff]
    %v1895 = vld [vmem:[#allocation3 + $0x7a0] sm:$0xff]
    %v1896 = vld [vmem:[#allocation3 + $0x7a8] sm:$0xff]
    %v1897 = vld [vmem:[#allocation3 + $0x7b0] sm:$0xff]
    %v1898 = vld [vmem:[#allocation3 + $0x7b8] sm:$0xff]
    %v1899 = vld [vmem:[#allocation3 + $0x7c0] sm:$0xff]
    %v1900 = vld [vmem:[#allocation3 + $0x7c8] sm:$0xff]
    %v1901 = vld [vmem:[#allocation3 + $0x7d0] sm:$0xff]
    %v1902 = vld [vmem:[#allocation3 + $0x7d8] sm:$0xff]
    %v1903 = vld [vmem:[#allocation3 + $0x7e0] sm:$0xff]
    %v1904 = vld [vmem:[#allocation3 + $0x7e8] sm:$0xff]
    %v1905 = vld [vmem:[#allocation3 + $0x7f0] sm:$0xff]
    %v1906 = vld [vmem:[#allocation3 + $0x7f8] sm:$0xff]
    %v1907 = vld [vmem:[#allocation3 + $0x800] sm:$0xff]
    %v1908 = vld [vmem:[#allocation3 + $0x808] sm:$0xff]
    %v1909 = vld [vmem:[#allocation3 + $0x810] sm:$0xff]
    %v1910 = vld [vmem:[#allocation3 + $0x818] sm:$0xff]
    %v1911 = vld [vmem:[#allocation3 + $0x820] sm:$0xff]
    %v1912 = vld [vmem:[#allocation3 + $0x828] sm:$0xff]
    %v1913 = vld [vmem:[#allocation3 + $0x830] sm:$0xff]
    %v1914 = vld [vmem:[#allocation3 + $0x838] sm:$0xff]
    %v1915 = vld [vmem:[#allocation3 + $0x840] sm:$0xff]
    %v1916 = vld [vmem:[#allocation3 + $0x848] sm:$0xff]
    %v1917 = vld [vmem:[#allocation3 + $0x850] sm:$0xff]
    %v1918 = vmul.f32 %v1889, %v1216
    %v1919 = vmul.f32 %v1890, %v1217
    %v1920 = vmul.f32 %v1891, %v1218
    %v1921 = vmul.f32 %v1892, %v1219
    %v1922 = vmul.f32 %v1893, %v1220
    %v1923 = vmul.f32 %v1894, %v1221
    %v1924 = vmul.f32 %v1895, %v1222
    %v1925 = vmul.f32 %v1896, %v1223
    %v1926 = vmul.f32 %v1897, %v1224
    %v1927 = vmul.f32 %v1898, %v1225
    %v1928 = vmul.f32 %v1899, %v1226
    %v1929 = vmul.f32 %v1900, %v1227
    %v1930 = vmul.f32 %v1901, %v1228
    %v1931 = vmul.f32 %v1902, %v1229
    %v1932 = vmul.f32 %v1903, %v1230
    %v1933 = vmul.f32 %v1904, %v1231
    %v1934 = vmul.f32 %v1905, %v1232
    %v1935 = vmul.f32 %v1906, %v1233
    %v1936 = vmul.f32 %v1907, %v1234
    %v1937 = vmul.f32 %v1908, %v1235
    %v1938 = vmul.f32 %v1909, %v1236
    %v1939 = vmul.f32 %v1910, %v1237
    %v1940 = vmul.f32 %v1911, %v1238
    %v1941 = vmul.f32 %v1912, %v1239
    %v1942 = vmul.f32 %v1913, %v1240
    %v1943 = vmul.f32 %v1914, %v1241
    %v1944 = vmul.f32 %v1915, %v1242
    %v1945 = vmul.f32 %v1916, %v1243
    %v1946 = vmul.f32 %v1917, %v1244
    %v1947 = vadd.f32 %v1918, %v1919
    %v1948 = vadd.f32 %v1947, %v1920
    %v1949 = vadd.f32 %v1948, %v1921
    %v1950 = vadd.f32 %v1949, %v1922
    %v1951 = vadd.f32 %v1950, %v1923
    %v1952 = vadd.f32 %v1951, %v1924
    %v1953 = vadd.f32 %v1952, %v1925
    %v1954 = vadd.f32 %v1953, %v1926
    %v1955 = vadd.f32 %v1954, %v1927
    %v1956 = vadd.f32 %v1955, %v1928
    %v1957 = vadd.f32 %v1956, %v1929
    %v1958 = vadd.f32 %v1957, %v1930
    %v1959 = vadd.f32 %v1958, %v1931
    %v1960 = vadd.f32 %v1959, %v1932
    %v1961 = vadd.f32 %v1960, %v1933
    %v1962 = vadd.f32 %v1961, %v1934
    %v1963 = vadd.f32 %v1962, %v1935
    %v1964 = vadd.f32 %v1963, %v1936
    %v1965 = vadd.f32 %v1964, %v1937
    %v1966 = vadd.f32 %v1965, %v1938
    %v1967 = vadd.f32 %v1966, %v1939
    %v1968 = vadd.f32 %v1967, %v1940
    %v1969 = vadd.f32 %v1968, %v1941
    %v1970 = vadd.f32 %v1969, %v1942
    %v1971 = vadd.f32 %v1970, %v1943
    %v1972 = vadd.f32 %v1971, %v1944
    %v1973 = vadd.f32 %v1972, %v1945
    %v1974 = vadd.f32 %v1973, %v1946
    %v1975 = vrot.slane %v1974, 4
    %v1976 = vadd.f32 %v1974, %v1975
    %v1977 = vrot.slane %v1976, 2
    %v1978 = vadd.f32 %v1976, %v1977
    %v1979 = vrot.slane %v1978, 1
    %v1980 = vadd.f32 %v1978, %v1979
    %vm1981 = vcmask 1040384
    %v1982 = vsel %vm1981, %v1336, %v1428
    %vm1983 = vcmask 1041408
    %v1984 = vsel %vm1983, %v1982, %v1520
    %vm1985 = vcmask 1042432
    %v1986 = vsel %vm1985, %v1984, %v1612
    %vm1987 = vcmask 1043456
    %v1988 = vsel %vm1987, %v1986, %v1704
    %vm1989 = vcmask 1044480
    %v1990 = vsel %vm1989, %v1988, %v1796
    %vm1991 = vcmask 1045504
    %v1992 = vsel %vm1991, %v1990, %v1888
    %vm1993 = vcmask 1046528
    %v1994 = vsel %vm1993, %v1992, %v1980
    %s1995 = scalar_lea.vmem [#allocation2], %s1214
    %1996 = vst [vmem:[%s1995] sm:$0xff] %v1994
  $region25: #{yin_pitch.1} parent=0 // loop_footer
    %s1212 = sadd.s32 1, %s1208
  $region26: #{yin_pitch.1} parent=0 // loop_footer_branch
    %1207 = sbr.rel target = $region22
  $region27: #{yin_pitch.1} parent=0 // loop_exit
    _
  loop: start=0, step=1, limit=4
  $region28: #{yin_pitch.1} parent=0 // loop_pre_header
    _
  $region29: #{yin_pitch.1} parent=0 // loop_header
    %s1998 = sphi 0, %s2002
    %p1999 = scmp.ge.s32.totalorder %s1998, 4
  $region30: #{yin_pitch.1} parent=0 // loop_header_branch
    %2001 = sbr.rel (%p1999) target = $region34
  $region31: #{yin_pitch.1} parent=0 // loop_body
    %s2003 = sadd.s32 %s1998, 8
    %s2004 = smul.u32 %s2003, 8
    %s2005 = scalar_lea.vmem %s0, %s2004
    %v2006 = vld [vmem:[%s2005] sm:$0xff]
    %v2007 = vld [vmem:[%s2005 + $0x8] sm:$0xff]
    %v2008 = vld [vmem:[%s2005 + $0x10] sm:$0xff]
    %v2009 = vld [vmem:[%s2005 + $0x18] sm:$0xff]
    %v2010 = vld [vmem:[%s2005 + $0x20] sm:$0xff]
    %v2011 = vld [vmem:[%s2005 + $0x28] sm:$0xff]
    %v2012 = vld [vmem:[%s2005 + $0x30] sm:$0xff]
    %v2013 = vld [vmem:[%s2005 + $0x38] sm:$0xff]
    %v2014 = vld [vmem:[%s2005 + $0x40] sm:$0xff]
    %v2015 = vld [vmem:[%s2005 + $0x48] sm:$0xff]
    %v2016 = vld [vmem:[%s2005 + $0x50] sm:$0xff]
    %v2017 = vld [vmem:[%s2005 + $0x58] sm:$0xff]
    %v2018 = vld [vmem:[%s2005 + $0x60] sm:$0xff]
    %v2019 = vld [vmem:[%s2005 + $0x68] sm:$0xff]
    %v2020 = vld [vmem:[%s2005 + $0x70] sm:$0xff]
    %v2021 = vld [vmem:[%s2005 + $0x78] sm:$0xff]
    %v2022 = vld [vmem:[%s2005 + $0x80] sm:$0xff]
    %v2023 = vld [vmem:[%s2005 + $0x88] sm:$0xff]
    %v2024 = vld [vmem:[%s2005 + $0x90] sm:$0xff]
    %v2025 = vld [vmem:[%s2005 + $0x98] sm:$0xff]
    %v2026 = vld [vmem:[%s2005 + $0xa0] sm:$0xff]
    %v2027 = vld [vmem:[%s2005 + $0xa8] sm:$0xff]
    %v2028 = vld [vmem:[%s2005 + $0xb0] sm:$0xff]
    %v2029 = vld [vmem:[%s2005 + $0xb8] sm:$0xff]
    %v2030 = vld [vmem:[%s2005 + $0xc0] sm:$0xff]
    %v2031 = vld [vmem:[#allocation3] sm:$0xff]
    %v2032 = vld [vmem:[#allocation3 + $0x8] sm:$0xff]
    %v2033 = vld [vmem:[#allocation3 + $0x10] sm:$0xff]
    %v2034 = vld [vmem:[#allocation3 + $0x18] sm:$0xff]
    %v2035 = vld [vmem:[#allocation3 + $0x20] sm:$0xff]
    %v2036 = vld [vmem:[#allocation3 + $0x28] sm:$0xff]
    %v2037 = vld [vmem:[#allocation3 + $0x30] sm:$0xff]
    %v2038 = vld [vmem:[#allocation3 + $0x38] sm:$0xff]
    %v2039 = vld [vmem:[#allocation3 + $0x40] sm:$0xff]
    %v2040 = vld [vmem:[#allocation3 + $0x48] sm:$0xff]
    %v2041 = vld [vmem:[#allocation3 + $0x50] sm:$0xff]
    %v2042 = vld [vmem:[#allocation3 + $0x58] sm:$0xff]
    %v2043 = vld [vmem:[#allocation3 + $0x60] sm:$0xff]
    %v2044 = vld [vmem:[#allocation3 + $0x68] sm:$0xff]
    %v2045 = vld [vmem:[#allocation3 + $0x70] sm:$0xff]
    %v2046 = vld [vmem:[#allocation3 + $0x78] sm:$0xff]
    %v2047 = vld [vmem:[#allocation3 + $0x80] sm:$0xff]
    %v2048 = vld [vmem:[#allocation3 + $0x88] sm:$0xff]
    %v2049 = vld [vmem:[#allocation3 + $0x90] sm:$0xff]
    %v2050 = vld [vmem:[#allocation3 + $0x98] sm:$0xff]
    %v2051 = vld [vmem:[#allocation3 + $0xa0] sm:$0xff]
    %v2052 = vld [vmem:[#allocation3 + $0xa8] sm:$0xff]
    %v2053 = vld [vmem:[#allocation3 + $0xb0] sm:$0xff]
    %v2054 = vld [vmem:[#allocation3 + $0xb8] sm:$0xff]
    %v2055 = vld [vmem:[#allocation3 + $0xc0] sm:$0xff]
    %v2056 = vmul.f32 %v2031, %v2006
    %v2057 = vmul.f32 %v2032, %v2007
    %v2058 = vmul.f32 %v2033, %v2008
    %v2059 = vmul.f32 %v2034, %v2009
    %v2060 = vmul.f32 %v2035, %v2010
    %v2061 = vmul.f32 %v2036, %v2011
    %v2062 = vmul.f32 %v2037, %v2012
    %v2063 = vmul.f32 %v2038, %v2013
    %v2064 = vmul.f32 %v2039, %v2014
    %v2065 = vmul.f32 %v2040, %v2015
    %v2066 = vmul.f32 %v2041, %v2016
    %v2067 = vmul.f32 %v2042, %v2017
    %v2068 = vmul.f32 %v2043, %v2018
    %v2069 = vmul.f32 %v2044, %v2019
    %v2070 = vmul.f32 %v2045, %v2020
    %v2071 = vmul.f32 %v2046, %v2021
    %v2072 = vmul.f32 %v2047, %v2022
    %v2073 = vmul.f32 %v2048, %v2023
    %v2074 = vmul.f32 %v2049, %v2024
    %v2075 = vmul.f32 %v2050, %v2025
    %v2076 = vmul.f32 %v2051, %v2026
    %v2077 = vmul.f32 %v2052, %v2027
    %v2078 = vmul.f32 %v2053, %v2028
    %v2079 = vmul.f32 %v2054, %v2029
    %v2080 = vmul.f32 %v2055, %v2030
    %v2081 = vadd.f32 %v2056, %v2057
    %v2082 = vadd.f32 %v2081, %v2058
    %v2083 = vadd.f32 %v2082, %v2059
    %v2084 = vadd.f32 %v2083, %v2060
    %v2085 = vadd.f32 %v2084, %v2061
    %v2086 = vadd.f32 %v2085, %v2062
    %v2087 = vadd.f32 %v2086, %v2063
    %v2088 = vadd.f32 %v2087, %v2064
    %v2089 = vadd.f32 %v2088, %v2065
    %v2090 = vadd.f32 %v2089, %v2066
    %v2091 = vadd.f32 %v2090, %v2067
    %v2092 = vadd.f32 %v2091, %v2068
    %v2093 = vadd.f32 %v2092, %v2069
    %v2094 = vadd.f32 %v2093, %v2070
    %v2095 = vadd.f32 %v2094, %v2071
    %v2096 = vadd.f32 %v2095, %v2072
    %v2097 = vadd.f32 %v2096, %v2073
    %v2098 = vadd.f32 %v2097, %v2074
    %v2099 = vadd.f32 %v2098, %v2075
    %v2100 = vadd.f32 %v2099, %v2076
    %v2101 = vadd.f32 %v2100, %v2077
    %v2102 = vadd.f32 %v2101, %v2078
    %v2103 = vadd.f32 %v2102, %v2079
    %v2104 = vadd.f32 %v2103, %v2080
    %v2105 = vrot.slane %v2104, 4
    %v2106 = vadd.f32 %v2104, %v2105
    %v2107 = vrot.slane %v2106, 2
    %v2108 = vadd.f32 %v2106, %v2107
    %v2109 = vrot.slane %v2108, 1
    %v2110 = vadd.f32 %v2108, %v2109
    %v2111 = vld [vmem:[#allocation3 + $0x110] sm:$0xff]
    %v2112 = vld [vmem:[#allocation3 + $0x118] sm:$0xff]
    %v2113 = vld [vmem:[#allocation3 + $0x120] sm:$0xff]
    %v2114 = vld [vmem:[#allocation3 + $0x128] sm:$0xff]
    %v2115 = vld [vmem:[#allocation3 + $0x130] sm:$0xff]
    %v2116 = vld [vmem:[#allocation3 + $0x138] sm:$0xff]
    %v2117 = vld [vmem:[#allocation3 + $0x140] sm:$0xff]
    %v2118 = vld [vmem:[#allocation3 + $0x148] sm:$0xff]
    %v2119 = vld [vmem:[#allocation3 + $0x150] sm:$0xff]
    %v2120 = vld [vmem:[#allocation3 + $0x158] sm:$0xff]
    %v2121 = vld [vmem:[#allocation3 + $0x160] sm:$0xff]
    %v2122 = vld [vmem:[#allocation3 + $0x168] sm:$0xff]
    %v2123 = vld [vmem:[#allocation3 + $0x170] sm:$0xff]
    %v2124 = vld [vmem:[#allocation3 + $0x178] sm:$0xff]
    %v2125 = vld [vmem:[#allocation3 + $0x180] sm:$0xff]
    %v2126 = vld [vmem:[#allocation3 + $0x188] sm:$0xff]
    %v2127 = vld [vmem:[#allocation3 + $0x190] sm:$0xff]
    %v2128 = vld [vmem:[#allocation3 + $0x198] sm:$0xff]
    %v2129 = vld [vmem:[#allocation3 + $0x1a0] sm:$0xff]
    %v2130 = vld [vmem:[#allocation3 + $0x1a8] sm:$0xff]
    %v2131 = vld [vmem:[#allocation3 + $0x1b0] sm:$0xff]
    %v2132 = vld [vmem:[#allocation3 + $0x1b8] sm:$0xff]
    %v2133 = vld [vmem:[#allocation3 + $0x1c0] sm:$0xff]
    %v2134 = vld [vmem:[#allocation3 + $0x1c8] sm:$0xff]
    %v2135 = vld [vmem:[#allocation3 + $0x1d0] sm:$0xff]
    %v2136 = vmul.f32 %v2111, %v2006
    %v2137 = vmul.f32 %v2112, %v2007
    %v2138 = vmul.f32 %v2113, %v2008
    %v2139 = vmul.f32 %v2114, %v2009
    %v2140 = vmul.f32 %v2115, %v2010
    %v2141 = vmul.f32 %v2116, %v2011
    %v2142 = vmul.f32 %v2117, %v2012
    %v2143 = vmul.f32 %v2118, %v2013
    %v2144 = vmul.f32 %v2119, %v2014
    %v2145 = vmul.f32 %v2120, %v2015
    %v2146 = vmul.f32 %v2121, %v2016
    %v2147 = vmul.f32 %v2122, %v2017
    %v2148 = vmul.f32 %v2123, %v2018
    %v2149 = vmul.f32 %v2124, %v2019
    %v2150 = vmul.f32 %v2125, %v2020
    %v2151 = vmul.f32 %v2126, %v2021
    %v2152 = vmul.f32 %v2127, %v2022
    %v2153 = vmul.f32 %v2128, %v2023
    %v2154 = vmul.f32 %v2129, %v2024
    %v2155 = vmul.f32 %v2130, %v2025
    %v2156 = vmul.f32 %v2131, %v2026
    %v2157 = vmul.f32 %v2132, %v2027
    %v2158 = vmul.f32 %v2133, %v2028
    %v2159 = vmul.f32 %v2134, %v2029
    %v2160 = vmul.f32 %v2135, %v2030
    %v2161 = vadd.f32 %v2136, %v2137
    %v2162 = vadd.f32 %v2161, %v2138
    %v2163 = vadd.f32 %v2162, %v2139
    %v2164 = vadd.f32 %v2163, %v2140
    %v2165 = vadd.f32 %v2164, %v2141
    %v2166 = vadd.f32 %v2165, %v2142
    %v2167 = vadd.f32 %v2166, %v2143
    %v2168 = vadd.f32 %v2167, %v2144
    %v2169 = vadd.f32 %v2168, %v2145
    %v2170 = vadd.f32 %v2169, %v2146
    %v2171 = vadd.f32 %v2170, %v2147
    %v2172 = vadd.f32 %v2171, %v2148
    %v2173 = vadd.f32 %v2172, %v2149
    %v2174 = vadd.f32 %v2173, %v2150
    %v2175 = vadd.f32 %v2174, %v2151
    %v2176 = vadd.f32 %v2175, %v2152
    %v2177 = vadd.f32 %v2176, %v2153
    %v2178 = vadd.f32 %v2177, %v2154
    %v2179 = vadd.f32 %v2178, %v2155
    %v2180 = vadd.f32 %v2179, %v2156
    %v2181 = vadd.f32 %v2180, %v2157
    %v2182 = vadd.f32 %v2181, %v2158
    %v2183 = vadd.f32 %v2182, %v2159
    %v2184 = vadd.f32 %v2183, %v2160
    %v2185 = vrot.slane %v2184, 4
    %v2186 = vadd.f32 %v2184, %v2185
    %v2187 = vrot.slane %v2186, 2
    %v2188 = vadd.f32 %v2186, %v2187
    %v2189 = vrot.slane %v2188, 1
    %v2190 = vadd.f32 %v2188, %v2189
    %v2191 = vld [vmem:[#allocation3 + $0x220] sm:$0xff]
    %v2192 = vld [vmem:[#allocation3 + $0x228] sm:$0xff]
    %v2193 = vld [vmem:[#allocation3 + $0x230] sm:$0xff]
    %v2194 = vld [vmem:[#allocation3 + $0x238] sm:$0xff]
    %v2195 = vld [vmem:[#allocation3 + $0x240] sm:$0xff]
    %v2196 = vld [vmem:[#allocation3 + $0x248] sm:$0xff]
    %v2197 = vld [vmem:[#allocation3 + $0x250] sm:$0xff]
    %v2198 = vld [vmem:[#allocation3 + $0x258] sm:$0xff]
    %v2199 = vld [vmem:[#allocation3 + $0x260] sm:$0xff]
    %v2200 = vld [vmem:[#allocation3 + $0x268] sm:$0xff]
    %v2201 = vld [vmem:[#allocation3 + $0x270] sm:$0xff]
    %v2202 = vld [vmem:[#allocation3 + $0x278] sm:$0xff]
    %v2203 = vld [vmem:[#allocation3 + $0x280] sm:$0xff]
    %v2204 = vld [vmem:[#allocation3 + $0x288] sm:$0xff]
    %v2205 = vld [vmem:[#allocation3 + $0x290] sm:$0xff]
    %v2206 = vld [vmem:[#allocation3 + $0x298] sm:$0xff]
    %v2207 = vld [vmem:[#allocation3 + $0x2a0] sm:$0xff]
    %v2208 = vld [vmem:[#allocation3 + $0x2a8] sm:$0xff]
    %v2209 = vld [vmem:[#allocation3 + $0x2b0] sm:$0xff]
    %v2210 = vld [vmem:[#allocation3 + $0x2b8] sm:$0xff]
    %v2211 = vld [vmem:[#allocation3 + $0x2c0] sm:$0xff]
    %v2212 = vld [vmem:[#allocation3 + $0x2c8] sm:$0xff]
    %v2213 = vld [vmem:[#allocation3 + $0x2d0] sm:$0xff]
    %v2214 = vld [vmem:[#allocation3 + $0x2d8] sm:$0xff]
    %v2215 = vld [vmem:[#allocation3 + $0x2e0] sm:$0xff]
    %v2216 = vmul.f32 %v2191, %v2006
    %v2217 = vmul.f32 %v2192, %v2007
    %v2218 = vmul.f32 %v2193, %v2008
    %v2219 = vmul.f32 %v2194, %v2009
    %v2220 = vmul.f32 %v2195, %v2010
    %v2221 = vmul.f32 %v2196, %v2011
    %v2222 = vmul.f32 %v2197, %v2012
    %v2223 = vmul.f32 %v2198, %v2013
    %v2224 = vmul.f32 %v2199, %v2014
    %v2225 = vmul.f32 %v2200, %v2015
    %v2226 = vmul.f32 %v2201, %v2016
    %v2227 = vmul.f32 %v2202, %v2017
    %v2228 = vmul.f32 %v2203, %v2018
    %v2229 = vmul.f32 %v2204, %v2019
    %v2230 = vmul.f32 %v2205, %v2020
    %v2231 = vmul.f32 %v2206, %v2021
    %v2232 = vmul.f32 %v2207, %v2022
    %v2233 = vmul.f32 %v2208, %v2023
    %v2234 = vmul.f32 %v2209, %v2024
    %v2235 = vmul.f32 %v2210, %v2025
    %v2236 = vmul.f32 %v2211, %v2026
    %v2237 = vmul.f32 %v2212, %v2027
    %v2238 = vmul.f32 %v2213, %v2028
    %v2239 = vmul.f32 %v2214, %v2029
    %v2240 = vmul.f32 %v2215, %v2030
    %v2241 = vadd.f32 %v2216, %v2217
    %v2242 = vadd.f32 %v2241, %v2218
    %v2243 = vadd.f32 %v2242, %v2219
    %v2244 = vadd.f32 %v2243, %v2220
    %v2245 = vadd.f32 %v2244, %v2221
    %v2246 = vadd.f32 %v2245, %v2222
    %v2247 = vadd.f32 %v2246, %v2223
    %v2248 = vadd.f32 %v2247, %v2224
    %v2249 = vadd.f32 %v2248, %v2225
    %v2250 = vadd.f32 %v2249, %v2226
    %v2251 = vadd.f32 %v2250, %v2227
    %v2252 = vadd.f32 %v2251, %v2228
    %v2253 = vadd.f32 %v2252, %v2229
    %v2254 = vadd.f32 %v2253, %v2230
    %v2255 = vadd.f32 %v2254, %v2231
    %v2256 = vadd.f32 %v2255, %v2232
    %v2257 = vadd.f32 %v2256, %v2233
    %v2258 = vadd.f32 %v2257, %v2234
    %v2259 = vadd.f32 %v2258, %v2235
    %v2260 = vadd.f32 %v2259, %v2236
    %v2261 = vadd.f32 %v2260, %v2237
    %v2262 = vadd.f32 %v2261, %v2238
    %v2263 = vadd.f32 %v2262, %v2239
    %v2264 = vadd.f32 %v2263, %v2240
    %v2265 = vrot.slane %v2264, 4
    %v2266 = vadd.f32 %v2264, %v2265
    %v2267 = vrot.slane %v2266, 2
    %v2268 = vadd.f32 %v2266, %v2267
    %v2269 = vrot.slane %v2268, 1
    %v2270 = vadd.f32 %v2268, %v2269
    %v2271 = vld [vmem:[#allocation3 + $0x330] sm:$0xff]
    %v2272 = vld [vmem:[#allocation3 + $0x338] sm:$0xff]
    %v2273 = vld [vmem:[#allocation3 + $0x340] sm:$0xff]
    %v2274 = vld [vmem:[#allocation3 + $0x348] sm:$0xff]
    %v2275 = vld [vmem:[#allocation3 + $0x350] sm:$0xff]
    %v2276 = vld [vmem:[#allocation3 + $0x358] sm:$0xff]
    %v2277 = vld [vmem:[#allocation3 + $0x360] sm:$0xff]
    %v2278 = vld [vmem:[#allocation3 + $0x368] sm:$0xff]
    %v2279 = vld [vmem:[#allocation3 + $0x370] sm:$0xff]
    %v2280 = vld [vmem:[#allocation3 + $0x378] sm:$0xff]
    %v2281 = vld [vmem:[#allocation3 + $0x380] sm:$0xff]
    %v2282 = vld [vmem:[#allocation3 + $0x388] sm:$0xff]
    %v2283 = vld [vmem:[#allocation3 + $0x390] sm:$0xff]
    %v2284 = vld [vmem:[#allocation3 + $0x398] sm:$0xff]
    %v2285 = vld [vmem:[#allocation3 + $0x3a0] sm:$0xff]
    %v2286 = vld [vmem:[#allocation3 + $0x3a8] sm:$0xff]
    %v2287 = vld [vmem:[#allocation3 + $0x3b0] sm:$0xff]
    %v2288 = vld [vmem:[#allocation3 + $0x3b8] sm:$0xff]
    %v2289 = vld [vmem:[#allocation3 + $0x3c0] sm:$0xff]
    %v2290 = vld [vmem:[#allocation3 + $0x3c8] sm:$0xff]
    %v2291 = vld [vmem:[#allocation3 + $0x3d0] sm:$0xff]
    %v2292 = vld [vmem:[#allocation3 + $0x3d8] sm:$0xff]
    %v2293 = vld [vmem:[#allocation3 + $0x3e0] sm:$0xff]
    %v2294 = vld [vmem:[#allocation3 + $0x3e8] sm:$0xff]
    %v2295 = vld [vmem:[#allocation3 + $0x3f0] sm:$0xff]
    %v2296 = vmul.f32 %v2271, %v2006
    %v2297 = vmul.f32 %v2272, %v2007
    %v2298 = vmul.f32 %v2273, %v2008
    %v2299 = vmul.f32 %v2274, %v2009
    %v2300 = vmul.f32 %v2275, %v2010
    %v2301 = vmul.f32 %v2276, %v2011
    %v2302 = vmul.f32 %v2277, %v2012
    %v2303 = vmul.f32 %v2278, %v2013
    %v2304 = vmul.f32 %v2279, %v2014
    %v2305 = vmul.f32 %v2280, %v2015
    %v2306 = vmul.f32 %v2281, %v2016
    %v2307 = vmul.f32 %v2282, %v2017
    %v2308 = vmul.f32 %v2283, %v2018
    %v2309 = vmul.f32 %v2284, %v2019
    %v2310 = vmul.f32 %v2285, %v2020
    %v2311 = vmul.f32 %v2286, %v2021
    %v2312 = vmul.f32 %v2287, %v2022
    %v2313 = vmul.f32 %v2288, %v2023
    %v2314 = vmul.f32 %v2289, %v2024
    %v2315 = vmul.f32 %v2290, %v2025
    %v2316 = vmul.f32 %v2291, %v2026
    %v2317 = vmul.f32 %v2292, %v2027
    %v2318 = vmul.f32 %v2293, %v2028
    %v2319 = vmul.f32 %v2294, %v2029
    %v2320 = vmul.f32 %v2295, %v2030
    %v2321 = vadd.f32 %v2296, %v2297
    %v2322 = vadd.f32 %v2321, %v2298
    %v2323 = vadd.f32 %v2322, %v2299
    %v2324 = vadd.f32 %v2323, %v2300
    %v2325 = vadd.f32 %v2324, %v2301
    %v2326 = vadd.f32 %v2325, %v2302
    %v2327 = vadd.f32 %v2326, %v2303
    %v2328 = vadd.f32 %v2327, %v2304
    %v2329 = vadd.f32 %v2328, %v2305
    %v2330 = vadd.f32 %v2329, %v2306
    %v2331 = vadd.f32 %v2330, %v2307
    %v2332 = vadd.f32 %v2331, %v2308
    %v2333 = vadd.f32 %v2332, %v2309
    %v2334 = vadd.f32 %v2333, %v2310
    %v2335 = vadd.f32 %v2334, %v2311
    %v2336 = vadd.f32 %v2335, %v2312
    %v2337 = vadd.f32 %v2336, %v2313
    %v2338 = vadd.f32 %v2337, %v2314
    %v2339 = vadd.f32 %v2338, %v2315
    %v2340 = vadd.f32 %v2339, %v2316
    %v2341 = vadd.f32 %v2340, %v2317
    %v2342 = vadd.f32 %v2341, %v2318
    %v2343 = vadd.f32 %v2342, %v2319
    %v2344 = vadd.f32 %v2343, %v2320
    %v2345 = vrot.slane %v2344, 4
    %v2346 = vadd.f32 %v2344, %v2345
    %v2347 = vrot.slane %v2346, 2
    %v2348 = vadd.f32 %v2346, %v2347
    %v2349 = vrot.slane %v2348, 1
    %v2350 = vadd.f32 %v2348, %v2349
    %v2351 = vld [vmem:[#allocation3 + $0x440] sm:$0xff]
    %v2352 = vld [vmem:[#allocation3 + $0x448] sm:$0xff]
    %v2353 = vld [vmem:[#allocation3 + $0x450] sm:$0xff]
    %v2354 = vld [vmem:[#allocation3 + $0x458] sm:$0xff]
    %v2355 = vld [vmem:[#allocation3 + $0x460] sm:$0xff]
    %v2356 = vld [vmem:[#allocation3 + $0x468] sm:$0xff]
    %v2357 = vld [vmem:[#allocation3 + $0x470] sm:$0xff]
    %v2358 = vld [vmem:[#allocation3 + $0x478] sm:$0xff]
    %v2359 = vld [vmem:[#allocation3 + $0x480] sm:$0xff]
    %v2360 = vld [vmem:[#allocation3 + $0x488] sm:$0xff]
    %v2361 = vld [vmem:[#allocation3 + $0x490] sm:$0xff]
    %v2362 = vld [vmem:[#allocation3 + $0x498] sm:$0xff]
    %v2363 = vld [vmem:[#allocation3 + $0x4a0] sm:$0xff]
    %v2364 = vld [vmem:[#allocation3 + $0x4a8] sm:$0xff]
    %v2365 = vld [vmem:[#allocation3 + $0x4b0] sm:$0xff]
    %v2366 = vld [vmem:[#allocation3 + $0x4b8] sm:$0xff]
    %v2367 = vld [vmem:[#allocation3 + $0x4c0] sm:$0xff]
    %v2368 = vld [vmem:[#allocation3 + $0x4c8] sm:$0xff]
    %v2369 = vld [vmem:[#allocation3 + $0x4d0] sm:$0xff]
    %v2370 = vld [vmem:[#allocation3 + $0x4d8] sm:$0xff]
    %v2371 = vld [vmem:[#allocation3 + $0x4e0] sm:$0xff]
    %v2372 = vld [vmem:[#allocation3 + $0x4e8] sm:$0xff]
    %v2373 = vld [vmem:[#allocation3 + $0x4f0] sm:$0xff]
    %v2374 = vld [vmem:[#allocation3 + $0x4f8] sm:$0xff]
    %v2375 = vld [vmem:[#allocation3 + $0x500] sm:$0xff]
    %v2376 = vmul.f32 %v2351, %v2006
    %v2377 = vmul.f32 %v2352, %v2007
    %v2378 = vmul.f32 %v2353, %v2008
    %v2379 = vmul.f32 %v2354, %v2009
    %v2380 = vmul.f32 %v2355, %v2010
    %v2381 = vmul.f32 %v2356, %v2011
    %v2382 = vmul.f32 %v2357, %v2012
    %v2383 = vmul.f32 %v2358, %v2013
    %v2384 = vmul.f32 %v2359, %v2014
    %v2385 = vmul.f32 %v2360, %v2015
    %v2386 = vmul.f32 %v2361, %v2016
    %v2387 = vmul.f32 %v2362, %v2017
    %v2388 = vmul.f32 %v2363, %v2018
    %v2389 = vmul.f32 %v2364, %v2019
    %v2390 = vmul.f32 %v2365, %v2020
    %v2391 = vmul.f32 %v2366, %v2021
    %v2392 = vmul.f32 %v2367, %v2022
    %v2393 = vmul.f32 %v2368, %v2023
    %v2394 = vmul.f32 %v2369, %v2024
    %v2395 = vmul.f32 %v2370, %v2025
    %v2396 = vmul.f32 %v2371, %v2026
    %v2397 = vmul.f32 %v2372, %v2027
    %v2398 = vmul.f32 %v2373, %v2028
    %v2399 = vmul.f32 %v2374, %v2029
    %v2400 = vmul.f32 %v2375, %v2030
    %v2401 = vadd.f32 %v2376, %v2377
    %v2402 = vadd.f32 %v2401, %v2378
    %v2403 = vadd.f32 %v2402, %v2379
    %v2404 = vadd.f32 %v2403, %v2380
    %v2405 = vadd.f32 %v2404, %v2381
    %v2406 = vadd.f32 %v2405, %v2382
    %v2407 = vadd.f32 %v2406, %v2383
    %v2408 = vadd.f32 %v2407, %v2384
    %v2409 = vadd.f32 %v2408, %v2385
    %v2410 = vadd.f32 %v2409, %v2386
    %v2411 = vadd.f32 %v2410, %v2387
    %v2412 = vadd.f32 %v2411, %v2388
    %v2413 = vadd.f32 %v2412, %v2389
    %v2414 = vadd.f32 %v2413, %v2390
    %v2415 = vadd.f32 %v2414, %v2391
    %v2416 = vadd.f32 %v2415, %v2392
    %v2417 = vadd.f32 %v2416, %v2393
    %v2418 = vadd.f32 %v2417, %v2394
    %v2419 = vadd.f32 %v2418, %v2395
    %v2420 = vadd.f32 %v2419, %v2396
    %v2421 = vadd.f32 %v2420, %v2397
    %v2422 = vadd.f32 %v2421, %v2398
    %v2423 = vadd.f32 %v2422, %v2399
    %v2424 = vadd.f32 %v2423, %v2400
    %v2425 = vrot.slane %v2424, 4
    %v2426 = vadd.f32 %v2424, %v2425
    %v2427 = vrot.slane %v2426, 2
    %v2428 = vadd.f32 %v2426, %v2427
    %v2429 = vrot.slane %v2428, 1
    %v2430 = vadd.f32 %v2428, %v2429
    %v2431 = vld [vmem:[#allocation3 + $0x550] sm:$0xff]
    %v2432 = vld [vmem:[#allocation3 + $0x558] sm:$0xff]
    %v2433 = vld [vmem:[#allocation3 + $0x560] sm:$0xff]
    %v2434 = vld [vmem:[#allocation3 + $0x568] sm:$0xff]
    %v2435 = vld [vmem:[#allocation3 + $0x570] sm:$0xff]
    %v2436 = vld [vmem:[#allocation3 + $0x578] sm:$0xff]
    %v2437 = vld [vmem:[#allocation3 + $0x580] sm:$0xff]
    %v2438 = vld [vmem:[#allocation3 + $0x588] sm:$0xff]
    %v2439 = vld [vmem:[#allocation3 + $0x590] sm:$0xff]
    %v2440 = vld [vmem:[#allocation3 + $0x598] sm:$0xff]
    %v2441 = vld [vmem:[#allocation3 + $0x5a0] sm:$0xff]
    %v2442 = vld [vmem:[#allocation3 + $0x5a8] sm:$0xff]
    %v2443 = vld [vmem:[#allocation3 + $0x5b0] sm:$0xff]
    %v2444 = vld [vmem:[#allocation3 + $0x5b8] sm:$0xff]
    %v2445 = vld [vmem:[#allocation3 + $0x5c0] sm:$0xff]
    %v2446 = vld [vmem:[#allocation3 + $0x5c8] sm:$0xff]
    %v2447 = vld [vmem:[#allocation3 + $0x5d0] sm:$0xff]
    %v2448 = vld [vmem:[#allocation3 + $0x5d8] sm:$0xff]
    %v2449 = vld [vmem:[#allocation3 + $0x5e0] sm:$0xff]
    %v2450 = vld [vmem:[#allocation3 + $0x5e8] sm:$0xff]
    %v2451 = vld [vmem:[#allocation3 + $0x5f0] sm:$0xff]
    %v2452 = vld [vmem:[#allocation3 + $0x5f8] sm:$0xff]
    %v2453 = vld [vmem:[#allocation3 + $0x600] sm:$0xff]
    %v2454 = vld [vmem:[#allocation3 + $0x608] sm:$0xff]
    %v2455 = vld [vmem:[#allocation3 + $0x610] sm:$0xff]
    %v2456 = vmul.f32 %v2431, %v2006
    %v2457 = vmul.f32 %v2432, %v2007
    %v2458 = vmul.f32 %v2433, %v2008
    %v2459 = vmul.f32 %v2434, %v2009
    %v2460 = vmul.f32 %v2435, %v2010
    %v2461 = vmul.f32 %v2436, %v2011
    %v2462 = vmul.f32 %v2437, %v2012
    %v2463 = vmul.f32 %v2438, %v2013
    %v2464 = vmul.f32 %v2439, %v2014
    %v2465 = vmul.f32 %v2440, %v2015
    %v2466 = vmul.f32 %v2441, %v2016
    %v2467 = vmul.f32 %v2442, %v2017
    %v2468 = vmul.f32 %v2443, %v2018
    %v2469 = vmul.f32 %v2444, %v2019
    %v2470 = vmul.f32 %v2445, %v2020
    %v2471 = vmul.f32 %v2446, %v2021
    %v2472 = vmul.f32 %v2447, %v2022
    %v2473 = vmul.f32 %v2448, %v2023
    %v2474 = vmul.f32 %v2449, %v2024
    %v2475 = vmul.f32 %v2450, %v2025
    %v2476 = vmul.f32 %v2451, %v2026
    %v2477 = vmul.f32 %v2452, %v2027
    %v2478 = vmul.f32 %v2453, %v2028
    %v2479 = vmul.f32 %v2454, %v2029
    %v2480 = vmul.f32 %v2455, %v2030
    %v2481 = vadd.f32 %v2456, %v2457
    %v2482 = vadd.f32 %v2481, %v2458
    %v2483 = vadd.f32 %v2482, %v2459
    %v2484 = vadd.f32 %v2483, %v2460
    %v2485 = vadd.f32 %v2484, %v2461
    %v2486 = vadd.f32 %v2485, %v2462
    %v2487 = vadd.f32 %v2486, %v2463
    %v2488 = vadd.f32 %v2487, %v2464
    %v2489 = vadd.f32 %v2488, %v2465
    %v2490 = vadd.f32 %v2489, %v2466
    %v2491 = vadd.f32 %v2490, %v2467
    %v2492 = vadd.f32 %v2491, %v2468
    %v2493 = vadd.f32 %v2492, %v2469
    %v2494 = vadd.f32 %v2493, %v2470
    %v2495 = vadd.f32 %v2494, %v2471
    %v2496 = vadd.f32 %v2495, %v2472
    %v2497 = vadd.f32 %v2496, %v2473
    %v2498 = vadd.f32 %v2497, %v2474
    %v2499 = vadd.f32 %v2498, %v2475
    %v2500 = vadd.f32 %v2499, %v2476
    %v2501 = vadd.f32 %v2500, %v2477
    %v2502 = vadd.f32 %v2501, %v2478
    %v2503 = vadd.f32 %v2502, %v2479
    %v2504 = vadd.f32 %v2503, %v2480
    %v2505 = vrot.slane %v2504, 4
    %v2506 = vadd.f32 %v2504, %v2505
    %v2507 = vrot.slane %v2506, 2
    %v2508 = vadd.f32 %v2506, %v2507
    %v2509 = vrot.slane %v2508, 1
    %v2510 = vadd.f32 %v2508, %v2509
    %v2511 = vld [vmem:[#allocation3 + $0x660] sm:$0xff]
    %v2512 = vld [vmem:[#allocation3 + $0x668] sm:$0xff]
    %v2513 = vld [vmem:[#allocation3 + $0x670] sm:$0xff]
    %v2514 = vld [vmem:[#allocation3 + $0x678] sm:$0xff]
    %v2515 = vld [vmem:[#allocation3 + $0x680] sm:$0xff]
    %v2516 = vld [vmem:[#allocation3 + $0x688] sm:$0xff]
    %v2517 = vld [vmem:[#allocation3 + $0x690] sm:$0xff]
    %v2518 = vld [vmem:[#allocation3 + $0x698] sm:$0xff]
    %v2519 = vld [vmem:[#allocation3 + $0x6a0] sm:$0xff]
    %v2520 = vld [vmem:[#allocation3 + $0x6a8] sm:$0xff]
    %v2521 = vld [vmem:[#allocation3 + $0x6b0] sm:$0xff]
    %v2522 = vld [vmem:[#allocation3 + $0x6b8] sm:$0xff]
    %v2523 = vld [vmem:[#allocation3 + $0x6c0] sm:$0xff]
    %v2524 = vld [vmem:[#allocation3 + $0x6c8] sm:$0xff]
    %v2525 = vld [vmem:[#allocation3 + $0x6d0] sm:$0xff]
    %v2526 = vld [vmem:[#allocation3 + $0x6d8] sm:$0xff]
    %v2527 = vld [vmem:[#allocation3 + $0x6e0] sm:$0xff]
    %v2528 = vld [vmem:[#allocation3 + $0x6e8] sm:$0xff]
    %v2529 = vld [vmem:[#allocation3 + $0x6f0] sm:$0xff]
    %v2530 = vld [vmem:[#allocation3 + $0x6f8] sm:$0xff]
    %v2531 = vld [vmem:[#allocation3 + $0x700] sm:$0xff]
    %v2532 = vld [vmem:[#allocation3 + $0x708] sm:$0xff]
    %v2533 = vld [vmem:[#allocation3 + $0x710] sm:$0xff]
    %v2534 = vld [vmem:[#allocation3 + $0x718] sm:$0xff]
    %v2535 = vld [vmem:[#allocation3 + $0x720] sm:$0xff]
    %v2536 = vmul.f32 %v2511, %v2006
    %v2537 = vmul.f32 %v2512, %v2007
    %v2538 = vmul.f32 %v2513, %v2008
    %v2539 = vmul.f32 %v2514, %v2009
    %v2540 = vmul.f32 %v2515, %v2010
    %v2541 = vmul.f32 %v2516, %v2011
    %v2542 = vmul.f32 %v2517, %v2012
    %v2543 = vmul.f32 %v2518, %v2013
    %v2544 = vmul.f32 %v2519, %v2014
    %v2545 = vmul.f32 %v2520, %v2015
    %v2546 = vmul.f32 %v2521, %v2016
    %v2547 = vmul.f32 %v2522, %v2017
    %v2548 = vmul.f32 %v2523, %v2018
    %v2549 = vmul.f32 %v2524, %v2019
    %v2550 = vmul.f32 %v2525, %v2020
    %v2551 = vmul.f32 %v2526, %v2021
    %v2552 = vmul.f32 %v2527, %v2022
    %v2553 = vmul.f32 %v2528, %v2023
    %v2554 = vmul.f32 %v2529, %v2024
    %v2555 = vmul.f32 %v2530, %v2025
    %v2556 = vmul.f32 %v2531, %v2026
    %v2557 = vmul.f32 %v2532, %v2027
    %v2558 = vmul.f32 %v2533, %v2028
    %v2559 = vmul.f32 %v2534, %v2029
    %v2560 = vmul.f32 %v2535, %v2030
    %v2561 = vadd.f32 %v2536, %v2537
    %v2562 = vadd.f32 %v2561, %v2538
    %v2563 = vadd.f32 %v2562, %v2539
    %v2564 = vadd.f32 %v2563, %v2540
    %v2565 = vadd.f32 %v2564, %v2541
    %v2566 = vadd.f32 %v2565, %v2542
    %v2567 = vadd.f32 %v2566, %v2543
    %v2568 = vadd.f32 %v2567, %v2544
    %v2569 = vadd.f32 %v2568, %v2545
    %v2570 = vadd.f32 %v2569, %v2546
    %v2571 = vadd.f32 %v2570, %v2547
    %v2572 = vadd.f32 %v2571, %v2548
    %v2573 = vadd.f32 %v2572, %v2549
    %v2574 = vadd.f32 %v2573, %v2550
    %v2575 = vadd.f32 %v2574, %v2551
    %v2576 = vadd.f32 %v2575, %v2552
    %v2577 = vadd.f32 %v2576, %v2553
    %v2578 = vadd.f32 %v2577, %v2554
    %v2579 = vadd.f32 %v2578, %v2555
    %v2580 = vadd.f32 %v2579, %v2556
    %v2581 = vadd.f32 %v2580, %v2557
    %v2582 = vadd.f32 %v2581, %v2558
    %v2583 = vadd.f32 %v2582, %v2559
    %v2584 = vadd.f32 %v2583, %v2560
    %v2585 = vrot.slane %v2584, 4
    %v2586 = vadd.f32 %v2584, %v2585
    %v2587 = vrot.slane %v2586, 2
    %v2588 = vadd.f32 %v2586, %v2587
    %v2589 = vrot.slane %v2588, 1
    %v2590 = vadd.f32 %v2588, %v2589
    %v2591 = vld [vmem:[#allocation3 + $0x770] sm:$0xff]
    %v2592 = vld [vmem:[#allocation3 + $0x778] sm:$0xff]
    %v2593 = vld [vmem:[#allocation3 + $0x780] sm:$0xff]
    %v2594 = vld [vmem:[#allocation3 + $0x788] sm:$0xff]
    %v2595 = vld [vmem:[#allocation3 + $0x790] sm:$0xff]
    %v2596 = vld [vmem:[#allocation3 + $0x798] sm:$0xff]
    %v2597 = vld [vmem:[#allocation3 + $0x7a0] sm:$0xff]
    %v2598 = vld [vmem:[#allocation3 + $0x7a8] sm:$0xff]
    %v2599 = vld [vmem:[#allocation3 + $0x7b0] sm:$0xff]
    %v2600 = vld [vmem:[#allocation3 + $0x7b8] sm:$0xff]
    %v2601 = vld [vmem:[#allocation3 + $0x7c0] sm:$0xff]
    %v2602 = vld [vmem:[#allocation3 + $0x7c8] sm:$0xff]
    %v2603 = vld [vmem:[#allocation3 + $0x7d0] sm:$0xff]
    %v2604 = vld [vmem:[#allocation3 + $0x7d8] sm:$0xff]
    %v2605 = vld [vmem:[#allocation3 + $0x7e0] sm:$0xff]
    %v2606 = vld [vmem:[#allocation3 + $0x7e8] sm:$0xff]
    %v2607 = vld [vmem:[#allocation3 + $0x7f0] sm:$0xff]
    %v2608 = vld [vmem:[#allocation3 + $0x7f8] sm:$0xff]
    %v2609 = vld [vmem:[#allocation3 + $0x800] sm:$0xff]
    %v2610 = vld [vmem:[#allocation3 + $0x808] sm:$0xff]
    %v2611 = vld [vmem:[#allocation3 + $0x810] sm:$0xff]
    %v2612 = vld [vmem:[#allocation3 + $0x818] sm:$0xff]
    %v2613 = vld [vmem:[#allocation3 + $0x820] sm:$0xff]
    %v2614 = vld [vmem:[#allocation3 + $0x828] sm:$0xff]
    %v2615 = vld [vmem:[#allocation3 + $0x830] sm:$0xff]
    %v2616 = vmul.f32 %v2591, %v2006
    %v2617 = vmul.f32 %v2592, %v2007
    %v2618 = vmul.f32 %v2593, %v2008
    %v2619 = vmul.f32 %v2594, %v2009
    %v2620 = vmul.f32 %v2595, %v2010
    %v2621 = vmul.f32 %v2596, %v2011
    %v2622 = vmul.f32 %v2597, %v2012
    %v2623 = vmul.f32 %v2598, %v2013
    %v2624 = vmul.f32 %v2599, %v2014
    %v2625 = vmul.f32 %v2600, %v2015
    %v2626 = vmul.f32 %v2601, %v2016
    %v2627 = vmul.f32 %v2602, %v2017
    %v2628 = vmul.f32 %v2603, %v2018
    %v2629 = vmul.f32 %v2604, %v2019
    %v2630 = vmul.f32 %v2605, %v2020
    %v2631 = vmul.f32 %v2606, %v2021
    %v2632 = vmul.f32 %v2607, %v2022
    %v2633 = vmul.f32 %v2608, %v2023
    %v2634 = vmul.f32 %v2609, %v2024
    %v2635 = vmul.f32 %v2610, %v2025
    %v2636 = vmul.f32 %v2611, %v2026
    %v2637 = vmul.f32 %v2612, %v2027
    %v2638 = vmul.f32 %v2613, %v2028
    %v2639 = vmul.f32 %v2614, %v2029
    %v2640 = vmul.f32 %v2615, %v2030
    %v2641 = vadd.f32 %v2616, %v2617
    %v2642 = vadd.f32 %v2641, %v2618
    %v2643 = vadd.f32 %v2642, %v2619
    %v2644 = vadd.f32 %v2643, %v2620
    %v2645 = vadd.f32 %v2644, %v2621
    %v2646 = vadd.f32 %v2645, %v2622
    %v2647 = vadd.f32 %v2646, %v2623
    %v2648 = vadd.f32 %v2647, %v2624
    %v2649 = vadd.f32 %v2648, %v2625
    %v2650 = vadd.f32 %v2649, %v2626
    %v2651 = vadd.f32 %v2650, %v2627
    %v2652 = vadd.f32 %v2651, %v2628
    %v2653 = vadd.f32 %v2652, %v2629
    %v2654 = vadd.f32 %v2653, %v2630
    %v2655 = vadd.f32 %v2654, %v2631
    %v2656 = vadd.f32 %v2655, %v2632
    %v2657 = vadd.f32 %v2656, %v2633
    %v2658 = vadd.f32 %v2657, %v2634
    %v2659 = vadd.f32 %v2658, %v2635
    %v2660 = vadd.f32 %v2659, %v2636
    %v2661 = vadd.f32 %v2660, %v2637
    %v2662 = vadd.f32 %v2661, %v2638
    %v2663 = vadd.f32 %v2662, %v2639
    %v2664 = vadd.f32 %v2663, %v2640
    %v2665 = vrot.slane %v2664, 4
    %v2666 = vadd.f32 %v2664, %v2665
    %v2667 = vrot.slane %v2666, 2
    %v2668 = vadd.f32 %v2666, %v2667
    %v2669 = vrot.slane %v2668, 1
    %v2670 = vadd.f32 %v2668, %v2669
    %vm2671 = vcmask 1040384
    %v2672 = vsel %vm2671, %v2110, %v2190
    %vm2673 = vcmask 1041408
    %v2674 = vsel %vm2673, %v2672, %v2270
    %vm2675 = vcmask 1042432
    %v2676 = vsel %vm2675, %v2674, %v2350
    %vm2677 = vcmask 1043456
    %v2678 = vsel %vm2677, %v2676, %v2430
    %vm2679 = vcmask 1044480
    %v2680 = vsel %vm2679, %v2678, %v2510
    %vm2681 = vcmask 1045504
    %v2682 = vsel %vm2681, %v2680, %v2590
    %vm2683 = vcmask 1046528
    %v2684 = vsel %vm2683, %v2682, %v2670
    %s2685 = scalar_lea.vmem [#allocation2], %s2004
    %2686 = vst [vmem:[%s2685] sm:$0xff] %v2684
  $region32: #{yin_pitch.1} parent=0 // loop_footer
    %s2002 = sadd.s32 1, %s1998
  $region33: #{yin_pitch.1} parent=0 // loop_footer_branch
    %1997 = sbr.rel target = $region29
  $region34: #{yin_pitch.1} parent=0 // loop_exit
    _
  loop: start=0, step=1, limit=4
  $region35: #{yin_pitch.1} parent=0 // loop_pre_header
    _
  $region36: #{yin_pitch.1} parent=0 // loop_header
    %s2688 = sphi 0, %s2692
    %p2689 = scmp.ge.s32.totalorder %s2688, 4
  $region37: #{yin_pitch.1} parent=0 // loop_header_branch
    %2691 = sbr.rel (%p2689) target = $region41
  $region38: #{yin_pitch.1} parent=0 // loop_body
    %s2693 = sadd.s32 %s2688, 12
    %s2694 = smul.u32 %s2693, 8
    %s2695 = scalar_lea.vmem %s0, %s2694
    %v2696 = vld [vmem:[%s2695] sm:$0xff]
    %v2697 = vld [vmem:[%s2695 + $0x8] sm:$0xff]
    %v2698 = vld [vmem:[%s2695 + $0x10] sm:$0xff]
    %v2699 = vld [vmem:[%s2695 + $0x18] sm:$0xff]
    %v2700 = vld [vmem:[%s2695 + $0x20] sm:$0xff]
    %v2701 = vld [vmem:[%s2695 + $0x28] sm:$0xff]
    %v2702 = vld [vmem:[%s2695 + $0x30] sm:$0xff]
    %v2703 = vld [vmem:[%s2695 + $0x38] sm:$0xff]
    %v2704 = vld [vmem:[%s2695 + $0x40] sm:$0xff]
    %v2705 = vld [vmem:[%s2695 + $0x48] sm:$0xff]
    %v2706 = vld [vmem:[%s2695 + $0x50] sm:$0xff]
    %v2707 = vld [vmem:[%s2695 + $0x58] sm:$0xff]
    %v2708 = vld [vmem:[%s2695 + $0x60] sm:$0xff]
    %v2709 = vld [vmem:[%s2695 + $0x68] sm:$0xff]
    %v2710 = vld [vmem:[%s2695 + $0x70] sm:$0xff]
    %v2711 = vld [vmem:[%s2695 + $0x78] sm:$0xff]
    %v2712 = vld [vmem:[%s2695 + $0x80] sm:$0xff]
    %v2713 = vld [vmem:[%s2695 + $0x88] sm:$0xff]
    %v2714 = vld [vmem:[%s2695 + $0x90] sm:$0xff]
    %v2715 = vld [vmem:[%s2695 + $0x98] sm:$0xff]
    %v2716 = vld [vmem:[%s2695 + $0xa0] sm:$0xff]
    %v2717 = vld [vmem:[#allocation3] sm:$0xff]
    %v2718 = vld [vmem:[#allocation3 + $0x8] sm:$0xff]
    %v2719 = vld [vmem:[#allocation3 + $0x10] sm:$0xff]
    %v2720 = vld [vmem:[#allocation3 + $0x18] sm:$0xff]
    %v2721 = vld [vmem:[#allocation3 + $0x20] sm:$0xff]
    %v2722 = vld [vmem:[#allocation3 + $0x28] sm:$0xff]
    %v2723 = vld [vmem:[#allocation3 + $0x30] sm:$0xff]
    %v2724 = vld [vmem:[#allocation3 + $0x38] sm:$0xff]
    %v2725 = vld [vmem:[#allocation3 + $0x40] sm:$0xff]
    %v2726 = vld [vmem:[#allocation3 + $0x48] sm:$0xff]
    %v2727 = vld [vmem:[#allocation3 + $0x50] sm:$0xff]
    %v2728 = vld [vmem:[#allocation3 + $0x58] sm:$0xff]
    %v2729 = vld [vmem:[#allocation3 + $0x60] sm:$0xff]
    %v2730 = vld [vmem:[#allocation3 + $0x68] sm:$0xff]
    %v2731 = vld [vmem:[#allocation3 + $0x70] sm:$0xff]
    %v2732 = vld [vmem:[#allocation3 + $0x78] sm:$0xff]
    %v2733 = vld [vmem:[#allocation3 + $0x80] sm:$0xff]
    %v2734 = vld [vmem:[#allocation3 + $0x88] sm:$0xff]
    %v2735 = vld [vmem:[#allocation3 + $0x90] sm:$0xff]
    %v2736 = vld [vmem:[#allocation3 + $0x98] sm:$0xff]
    %v2737 = vld [vmem:[#allocation3 + $0xa0] sm:$0xff]
    %v2738 = vmul.f32 %v2717, %v2696
    %v2739 = vmul.f32 %v2718, %v2697
    %v2740 = vmul.f32 %v2719, %v2698
    %v2741 = vmul.f32 %v2720, %v2699
    %v2742 = vmul.f32 %v2721, %v2700
    %v2743 = vmul.f32 %v2722, %v2701
    %v2744 = vmul.f32 %v2723, %v2702
    %v2745 = vmul.f32 %v2724, %v2703
    %v2746 = vmul.f32 %v2725, %v2704
    %v2747 = vmul.f32 %v2726, %v2705
    %v2748 = vmul.f32 %v2727, %v2706
    %v2749 = vmul.f32 %v2728, %v2707
    %v2750 = vmul.f32 %v2729, %v2708
    %v2751 = vmul.f32 %v2730, %v2709
    %v2752 = vmul.f32 %v2731, %v2710
    %v2753 = vmul.f32 %v2732, %v2711
    %v2754 = vmul.f32 %v2733, %v2712
    %v2755 = vmul.f32 %v2734, %v2713
    %v2756 = vmul.f32 %v2735, %v2714
    %v2757 = vmul.f32 %v2736, %v2715
    %v2758 = vmul.f32 %v2737, %v2716
    %v2759 = vadd.f32 %v2738, %v2739
    %v2760 = vadd.f32 %v2759, %v2740
    %v2761 = vadd.f32 %v2760, %v2741
    %v2762 = vadd.f32 %v2761, %v2742
    %v2763 = vadd.f32 %v2762, %v2743
    %v2764 = vadd.f32 %v2763, %v2744
    %v2765 = vadd.f32 %v2764, %v2745
    %v2766 = vadd.f32 %v2765, %v2746
    %v2767 = vadd.f32 %v2766, %v2747
    %v2768 = vadd.f32 %v2767, %v2748
    %v2769 = vadd.f32 %v2768, %v2749
    %v2770 = vadd.f32 %v2769, %v2750
    %v2771 = vadd.f32 %v2770, %v2751
    %v2772 = vadd.f32 %v2771, %v2752
    %v2773 = vadd.f32 %v2772, %v2753
    %v2774 = vadd.f32 %v2773, %v2754
    %v2775 = vadd.f32 %v2774, %v2755
    %v2776 = vadd.f32 %v2775, %v2756
    %v2777 = vadd.f32 %v2776, %v2757
    %v2778 = vadd.f32 %v2777, %v2758
    %v2779 = vrot.slane %v2778, 4
    %v2780 = vadd.f32 %v2778, %v2779
    %v2781 = vrot.slane %v2780, 2
    %v2782 = vadd.f32 %v2780, %v2781
    %v2783 = vrot.slane %v2782, 1
    %v2784 = vadd.f32 %v2782, %v2783
    %v2785 = vld [vmem:[#allocation3 + $0x110] sm:$0xff]
    %v2786 = vld [vmem:[#allocation3 + $0x118] sm:$0xff]
    %v2787 = vld [vmem:[#allocation3 + $0x120] sm:$0xff]
    %v2788 = vld [vmem:[#allocation3 + $0x128] sm:$0xff]
    %v2789 = vld [vmem:[#allocation3 + $0x130] sm:$0xff]
    %v2790 = vld [vmem:[#allocation3 + $0x138] sm:$0xff]
    %v2791 = vld [vmem:[#allocation3 + $0x140] sm:$0xff]
    %v2792 = vld [vmem:[#allocation3 + $0x148] sm:$0xff]
    %v2793 = vld [vmem:[#allocation3 + $0x150] sm:$0xff]
    %v2794 = vld [vmem:[#allocation3 + $0x158] sm:$0xff]
    %v2795 = vld [vmem:[#allocation3 + $0x160] sm:$0xff]
    %v2796 = vld [vmem:[#allocation3 + $0x168] sm:$0xff]
    %v2797 = vld [vmem:[#allocation3 + $0x170] sm:$0xff]
    %v2798 = vld [vmem:[#allocation3 + $0x178] sm:$0xff]
    %v2799 = vld [vmem:[#allocation3 + $0x180] sm:$0xff]
    %v2800 = vld [vmem:[#allocation3 + $0x188] sm:$0xff]
    %v2801 = vld [vmem:[#allocation3 + $0x190] sm:$0xff]
    %v2802 = vld [vmem:[#allocation3 + $0x198] sm:$0xff]
    %v2803 = vld [vmem:[#allocation3 + $0x1a0] sm:$0xff]
    %v2804 = vld [vmem:[#allocation3 + $0x1a8] sm:$0xff]
    %v2805 = vld [vmem:[#allocation3 + $0x1b0] sm:$0xff]
    %v2806 = vmul.f32 %v2785, %v2696
    %v2807 = vmul.f32 %v2786, %v2697
    %v2808 = vmul.f32 %v2787, %v2698
    %v2809 = vmul.f32 %v2788, %v2699
    %v2810 = vmul.f32 %v2789, %v2700
    %v2811 = vmul.f32 %v2790, %v2701
    %v2812 = vmul.f32 %v2791, %v2702
    %v2813 = vmul.f32 %v2792, %v2703
    %v2814 = vmul.f32 %v2793, %v2704
    %v2815 = vmul.f32 %v2794, %v2705
    %v2816 = vmul.f32 %v2795, %v2706
    %v2817 = vmul.f32 %v2796, %v2707
    %v2818 = vmul.f32 %v2797, %v2708
    %v2819 = vmul.f32 %v2798, %v2709
    %v2820 = vmul.f32 %v2799, %v2710
    %v2821 = vmul.f32 %v2800, %v2711
    %v2822 = vmul.f32 %v2801, %v2712
    %v2823 = vmul.f32 %v2802, %v2713
    %v2824 = vmul.f32 %v2803, %v2714
    %v2825 = vmul.f32 %v2804, %v2715
    %v2826 = vmul.f32 %v2805, %v2716
    %v2827 = vadd.f32 %v2806, %v2807
    %v2828 = vadd.f32 %v2827, %v2808
    %v2829 = vadd.f32 %v2828, %v2809
    %v2830 = vadd.f32 %v2829, %v2810
    %v2831 = vadd.f32 %v2830, %v2811
    %v2832 = vadd.f32 %v2831, %v2812
    %v2833 = vadd.f32 %v2832, %v2813
    %v2834 = vadd.f32 %v2833, %v2814
    %v2835 = vadd.f32 %v2834, %v2815
    %v2836 = vadd.f32 %v2835, %v2816
    %v2837 = vadd.f32 %v2836, %v2817
    %v2838 = vadd.f32 %v2837, %v2818
    %v2839 = vadd.f32 %v2838, %v2819
    %v2840 = vadd.f32 %v2839, %v2820
    %v2841 = vadd.f32 %v2840, %v2821
    %v2842 = vadd.f32 %v2841, %v2822
    %v2843 = vadd.f32 %v2842, %v2823
    %v2844 = vadd.f32 %v2843, %v2824
    %v2845 = vadd.f32 %v2844, %v2825
    %v2846 = vadd.f32 %v2845, %v2826
    %v2847 = vrot.slane %v2846, 4
    %v2848 = vadd.f32 %v2846, %v2847
    %v2849 = vrot.slane %v2848, 2
    %v2850 = vadd.f32 %v2848, %v2849
    %v2851 = vrot.slane %v2850, 1
    %v2852 = vadd.f32 %v2850, %v2851
    %v2853 = vld [vmem:[#allocation3 + $0x220] sm:$0xff]
    %v2854 = vld [vmem:[#allocation3 + $0x228] sm:$0xff]
    %v2855 = vld [vmem:[#allocation3 + $0x230] sm:$0xff]
    %v2856 = vld [vmem:[#allocation3 + $0x238] sm:$0xff]
    %v2857 = vld [vmem:[#allocation3 + $0x240] sm:$0xff]
    %v2858 = vld [vmem:[#allocation3 + $0x248] sm:$0xff]
    %v2859 = vld [vmem:[#allocation3 + $0x250] sm:$0xff]
    %v2860 = vld [vmem:[#allocation3 + $0x258] sm:$0xff]
    %v2861 = vld [vmem:[#allocation3 + $0x260] sm:$0xff]
    %v2862 = vld [vmem:[#allocation3 + $0x268] sm:$0xff]
    %v2863 = vld [vmem:[#allocation3 + $0x270] sm:$0xff]
    %v2864 = vld [vmem:[#allocation3 + $0x278] sm:$0xff]
    %v2865 = vld [vmem:[#allocation3 + $0x280] sm:$0xff]
    %v2866 = vld [vmem:[#allocation3 + $0x288] sm:$0xff]
    %v2867 = vld [vmem:[#allocation3 + $0x290] sm:$0xff]
    %v2868 = vld [vmem:[#allocation3 + $0x298] sm:$0xff]
    %v2869 = vld [vmem:[#allocation3 + $0x2a0] sm:$0xff]
    %v2870 = vld [vmem:[#allocation3 + $0x2a8] sm:$0xff]
    %v2871 = vld [vmem:[#allocation3 + $0x2b0] sm:$0xff]
    %v2872 = vld [vmem:[#allocation3 + $0x2b8] sm:$0xff]
    %v2873 = vld [vmem:[#allocation3 + $0x2c0] sm:$0xff]
    %v2874 = vmul.f32 %v2853, %v2696
    %v2875 = vmul.f32 %v2854, %v2697
    %v2876 = vmul.f32 %v2855, %v2698
    %v2877 = vmul.f32 %v2856, %v2699
    %v2878 = vmul.f32 %v2857, %v2700
    %v2879 = vmul.f32 %v2858, %v2701
    %v2880 = vmul.f32 %v2859, %v2702
    %v2881 = vmul.f32 %v2860, %v2703
    %v2882 = vmul.f32 %v2861, %v2704
    %v2883 = vmul.f32 %v2862, %v2705
    %v2884 = vmul.f32 %v2863, %v2706
    %v2885 = vmul.f32 %v2864, %v2707
    %v2886 = vmul.f32 %v2865, %v2708
    %v2887 = vmul.f32 %v2866, %v2709
    %v2888 = vmul.f32 %v2867, %v2710
    %v2889 = vmul.f32 %v2868, %v2711
    %v2890 = vmul.f32 %v2869, %v2712
    %v2891 = vmul.f32 %v2870, %v2713
    %v2892 = vmul.f32 %v2871, %v2714
    %v2893 = vmul.f32 %v2872, %v2715
    %v2894 = vmul.f32 %v2873, %v2716
    %v2895 = vadd.f32 %v2874, %v2875
    %v2896 = vadd.f32 %v2895, %v2876
    %v2897 = vadd.f32 %v2896, %v2877
    %v2898 = vadd.f32 %v2897, %v2878
    %v2899 = vadd.f32 %v2898, %v2879
    %v2900 = vadd.f32 %v2899, %v2880
    %v2901 = vadd.f32 %v2900, %v2881
    %v2902 = vadd.f32 %v2901, %v2882
    %v2903 = vadd.f32 %v2902, %v2883
    %v2904 = vadd.f32 %v2903, %v2884
    %v2905 = vadd.f32 %v2904, %v2885
    %v2906 = vadd.f32 %v2905, %v2886
    %v2907 = vadd.f32 %v2906, %v2887
    %v2908 = vadd.f32 %v2907, %v2888
    %v2909 = vadd.f32 %v2908, %v2889
    %v2910 = vadd.f32 %v2909, %v2890
    %v2911 = vadd.f32 %v2910, %v2891
    %v2912 = vadd.f32 %v2911, %v2892
    %v2913 = vadd.f32 %v2912, %v2893
    %v2914 = vadd.f32 %v2913, %v2894
    %v2915 = vrot.slane %v2914, 4
    %v2916 = vadd.f32 %v2914, %v2915
    %v2917 = vrot.slane %v2916, 2
    %v2918 = vadd.f32 %v2916, %v2917
    %v2919 = vrot.slane %v2918, 1
    %v2920 = vadd.f32 %v2918, %v2919
    %v2921 = vld [vmem:[#allocation3 + $0x330] sm:$0xff]
    %v2922 = vld [vmem:[#allocation3 + $0x338] sm:$0xff]
    %v2923 = vld [vmem:[#allocation3 + $0x340] sm:$0xff]
    %v2924 = vld [vmem:[#allocation3 + $0x348] sm:$0xff]
    %v2925 = vld [vmem:[#allocation3 + $0x350] sm:$0xff]
    %v2926 = vld [vmem:[#allocation3 + $0x358] sm:$0xff]
    %v2927 = vld [vmem:[#allocation3 + $0x360] sm:$0xff]
    %v2928 = vld [vmem:[#allocation3 + $0x368] sm:$0xff]
    %v2929 = vld [vmem:[#allocation3 + $0x370] sm:$0xff]
    %v2930 = vld [vmem:[#allocation3 + $0x378] sm:$0xff]
    %v2931 = vld [vmem:[#allocation3 + $0x380] sm:$0xff]
    %v2932 = vld [vmem:[#allocation3 + $0x388] sm:$0xff]
    %v2933 = vld [vmem:[#allocation3 + $0x390] sm:$0xff]
    %v2934 = vld [vmem:[#allocation3 + $0x398] sm:$0xff]
    %v2935 = vld [vmem:[#allocation3 + $0x3a0] sm:$0xff]
    %v2936 = vld [vmem:[#allocation3 + $0x3a8] sm:$0xff]
    %v2937 = vld [vmem:[#allocation3 + $0x3b0] sm:$0xff]
    %v2938 = vld [vmem:[#allocation3 + $0x3b8] sm:$0xff]
    %v2939 = vld [vmem:[#allocation3 + $0x3c0] sm:$0xff]
    %v2940 = vld [vmem:[#allocation3 + $0x3c8] sm:$0xff]
    %v2941 = vld [vmem:[#allocation3 + $0x3d0] sm:$0xff]
    %v2942 = vmul.f32 %v2921, %v2696
    %v2943 = vmul.f32 %v2922, %v2697
    %v2944 = vmul.f32 %v2923, %v2698
    %v2945 = vmul.f32 %v2924, %v2699
    %v2946 = vmul.f32 %v2925, %v2700
    %v2947 = vmul.f32 %v2926, %v2701
    %v2948 = vmul.f32 %v2927, %v2702
    %v2949 = vmul.f32 %v2928, %v2703
    %v2950 = vmul.f32 %v2929, %v2704
    %v2951 = vmul.f32 %v2930, %v2705
    %v2952 = vmul.f32 %v2931, %v2706
    %v2953 = vmul.f32 %v2932, %v2707
    %v2954 = vmul.f32 %v2933, %v2708
    %v2955 = vmul.f32 %v2934, %v2709
    %v2956 = vmul.f32 %v2935, %v2710
    %v2957 = vmul.f32 %v2936, %v2711
    %v2958 = vmul.f32 %v2937, %v2712
    %v2959 = vmul.f32 %v2938, %v2713
    %v2960 = vmul.f32 %v2939, %v2714
    %v2961 = vmul.f32 %v2940, %v2715
    %v2962 = vmul.f32 %v2941, %v2716
    %v2963 = vadd.f32 %v2942, %v2943
    %v2964 = vadd.f32 %v2963, %v2944
    %v2965 = vadd.f32 %v2964, %v2945
    %v2966 = vadd.f32 %v2965, %v2946
    %v2967 = vadd.f32 %v2966, %v2947
    %v2968 = vadd.f32 %v2967, %v2948
    %v2969 = vadd.f32 %v2968, %v2949
    %v2970 = vadd.f32 %v2969, %v2950
    %v2971 = vadd.f32 %v2970, %v2951
    %v2972 = vadd.f32 %v2971, %v2952
    %v2973 = vadd.f32 %v2972, %v2953
    %v2974 = vadd.f32 %v2973, %v2954
    %v2975 = vadd.f32 %v2974, %v2955
    %v2976 = vadd.f32 %v2975, %v2956
    %v2977 = vadd.f32 %v2976, %v2957
    %v2978 = vadd.f32 %v2977, %v2958
    %v2979 = vadd.f32 %v2978, %v2959
    %v2980 = vadd.f32 %v2979, %v2960
    %v2981 = vadd.f32 %v2980, %v2961
    %v2982 = vadd.f32 %v2981, %v2962
    %v2983 = vrot.slane %v2982, 4
    %v2984 = vadd.f32 %v2982, %v2983
    %v2985 = vrot.slane %v2984, 2
    %v2986 = vadd.f32 %v2984, %v2985
    %v2987 = vrot.slane %v2986, 1
    %v2988 = vadd.f32 %v2986, %v2987
    %v2989 = vld [vmem:[#allocation3 + $0x440] sm:$0xff]
    %v2990 = vld [vmem:[#allocation3 + $0x448] sm:$0xff]
    %v2991 = vld [vmem:[#allocation3 + $0x450] sm:$0xff]
    %v2992 = vld [vmem:[#allocation3 + $0x458] sm:$0xff]
    %v2993 = vld [vmem:[#allocation3 + $0x460] sm:$0xff]
    %v2994 = vld [vmem:[#allocation3 + $0x468] sm:$0xff]
    %v2995 = vld [vmem:[#allocation3 + $0x470] sm:$0xff]
    %v2996 = vld [vmem:[#allocation3 + $0x478] sm:$0xff]
    %v2997 = vld [vmem:[#allocation3 + $0x480] sm:$0xff]
    %v2998 = vld [vmem:[#allocation3 + $0x488] sm:$0xff]
    %v2999 = vld [vmem:[#allocation3 + $0x490] sm:$0xff]
    %v3000 = vld [vmem:[#allocation3 + $0x498] sm:$0xff]
    %v3001 = vld [vmem:[#allocation3 + $0x4a0] sm:$0xff]
    %v3002 = vld [vmem:[#allocation3 + $0x4a8] sm:$0xff]
    %v3003 = vld [vmem:[#allocation3 + $0x4b0] sm:$0xff]
    %v3004 = vld [vmem:[#allocation3 + $0x4b8] sm:$0xff]
    %v3005 = vld [vmem:[#allocation3 + $0x4c0] sm:$0xff]
    %v3006 = vld [vmem:[#allocation3 + $0x4c8] sm:$0xff]
    %v3007 = vld [vmem:[#allocation3 + $0x4d0] sm:$0xff]
    %v3008 = vld [vmem:[#allocation3 + $0x4d8] sm:$0xff]
    %v3009 = vld [vmem:[#allocation3 + $0x4e0] sm:$0xff]
    %v3010 = vmul.f32 %v2989, %v2696
    %v3011 = vmul.f32 %v2990, %v2697
    %v3012 = vmul.f32 %v2991, %v2698
    %v3013 = vmul.f32 %v2992, %v2699
    %v3014 = vmul.f32 %v2993, %v2700
    %v3015 = vmul.f32 %v2994, %v2701
    %v3016 = vmul.f32 %v2995, %v2702
    %v3017 = vmul.f32 %v2996, %v2703
    %v3018 = vmul.f32 %v2997, %v2704
    %v3019 = vmul.f32 %v2998, %v2705
    %v3020 = vmul.f32 %v2999, %v2706
    %v3021 = vmul.f32 %v3000, %v2707
    %v3022 = vmul.f32 %v3001, %v2708
    %v3023 = vmul.f32 %v3002, %v2709
    %v3024 = vmul.f32 %v3003, %v2710
    %v3025 = vmul.f32 %v3004, %v2711
    %v3026 = vmul.f32 %v3005, %v2712
    %v3027 = vmul.f32 %v3006, %v2713
    %v3028 = vmul.f32 %v3007, %v2714
    %v3029 = vmul.f32 %v3008, %v2715
    %v3030 = vmul.f32 %v3009, %v2716
    %v3031 = vadd.f32 %v3010, %v3011
    %v3032 = vadd.f32 %v3031, %v3012
    %v3033 = vadd.f32 %v3032, %v3013
    %v3034 = vadd.f32 %v3033, %v3014
    %v3035 = vadd.f32 %v3034, %v3015
    %v3036 = vadd.f32 %v3035, %v3016
    %v3037 = vadd.f32 %v3036, %v3017
    %v3038 = vadd.f32 %v3037, %v3018
    %v3039 = vadd.f32 %v3038, %v3019
    %v3040 = vadd.f32 %v3039, %v3020
    %v3041 = vadd.f32 %v3040, %v3021
    %v3042 = vadd.f32 %v3041, %v3022
    %v3043 = vadd.f32 %v3042, %v3023
    %v3044 = vadd.f32 %v3043, %v3024
    %v3045 = vadd.f32 %v3044, %v3025
    %v3046 = vadd.f32 %v3045, %v3026
    %v3047 = vadd.f32 %v3046, %v3027
    %v3048 = vadd.f32 %v3047, %v3028
    %v3049 = vadd.f32 %v3048, %v3029
    %v3050 = vadd.f32 %v3049, %v3030
    %v3051 = vrot.slane %v3050, 4
    %v3052 = vadd.f32 %v3050, %v3051
    %v3053 = vrot.slane %v3052, 2
    %v3054 = vadd.f32 %v3052, %v3053
    %v3055 = vrot.slane %v3054, 1
    %v3056 = vadd.f32 %v3054, %v3055
    %v3057 = vld [vmem:[#allocation3 + $0x550] sm:$0xff]
    %v3058 = vld [vmem:[#allocation3 + $0x558] sm:$0xff]
    %v3059 = vld [vmem:[#allocation3 + $0x560] sm:$0xff]
    %v3060 = vld [vmem:[#allocation3 + $0x568] sm:$0xff]
    %v3061 = vld [vmem:[#allocation3 + $0x570] sm:$0xff]
    %v3062 = vld [vmem:[#allocation3 + $0x578] sm:$0xff]
    %v3063 = vld [vmem:[#allocation3 + $0x580] sm:$0xff]
    %v3064 = vld [vmem:[#allocation3 + $0x588] sm:$0xff]
    %v3065 = vld [vmem:[#allocation3 + $0x590] sm:$0xff]
    %v3066 = vld [vmem:[#allocation3 + $0x598] sm:$0xff]
    %v3067 = vld [vmem:[#allocation3 + $0x5a0] sm:$0xff]
    %v3068 = vld [vmem:[#allocation3 + $0x5a8] sm:$0xff]
    %v3069 = vld [vmem:[#allocation3 + $0x5b0] sm:$0xff]
    %v3070 = vld [vmem:[#allocation3 + $0x5b8] sm:$0xff]
    %v3071 = vld [vmem:[#allocation3 + $0x5c0] sm:$0xff]
    %v3072 = vld [vmem:[#allocation3 + $0x5c8] sm:$0xff]
    %v3073 = vld [vmem:[#allocation3 + $0x5d0] sm:$0xff]
    %v3074 = vld [vmem:[#allocation3 + $0x5d8] sm:$0xff]
    %v3075 = vld [vmem:[#allocation3 + $0x5e0] sm:$0xff]
    %v3076 = vld [vmem:[#allocation3 + $0x5e8] sm:$0xff]
    %v3077 = vld [vmem:[#allocation3 + $0x5f0] sm:$0xff]
    %v3078 = vmul.f32 %v3057, %v2696
    %v3079 = vmul.f32 %v3058, %v2697
    %v3080 = vmul.f32 %v3059, %v2698
    %v3081 = vmul.f32 %v3060, %v2699
    %v3082 = vmul.f32 %v3061, %v2700
    %v3083 = vmul.f32 %v3062, %v2701
    %v3084 = vmul.f32 %v3063, %v2702
    %v3085 = vmul.f32 %v3064, %v2703
    %v3086 = vmul.f32 %v3065, %v2704
    %v3087 = vmul.f32 %v3066, %v2705
    %v3088 = vmul.f32 %v3067, %v2706
    %v3089 = vmul.f32 %v3068, %v2707
    %v3090 = vmul.f32 %v3069, %v2708
    %v3091 = vmul.f32 %v3070, %v2709
    %v3092 = vmul.f32 %v3071, %v2710
    %v3093 = vmul.f32 %v3072, %v2711
    %v3094 = vmul.f32 %v3073, %v2712
    %v3095 = vmul.f32 %v3074, %v2713
    %v3096 = vmul.f32 %v3075, %v2714
    %v3097 = vmul.f32 %v3076, %v2715
    %v3098 = vmul.f32 %v3077, %v2716
    %v3099 = vadd.f32 %v3078, %v3079
    %v3100 = vadd.f32 %v3099, %v3080
    %v3101 = vadd.f32 %v3100, %v3081
    %v3102 = vadd.f32 %v3101, %v3082
    %v3103 = vadd.f32 %v3102, %v3083
    %v3104 = vadd.f32 %v3103, %v3084
    %v3105 = vadd.f32 %v3104, %v3085
    %v3106 = vadd.f32 %v3105, %v3086
    %v3107 = vadd.f32 %v3106, %v3087
    %v3108 = vadd.f32 %v3107, %v3088
    %v3109 = vadd.f32 %v3108, %v3089
    %v3110 = vadd.f32 %v3109, %v3090
    %v3111 = vadd.f32 %v3110, %v3091
    %v3112 = vadd.f32 %v3111, %v3092
    %v3113 = vadd.f32 %v3112, %v3093
    %v3114 = vadd.f32 %v3113, %v3094
    %v3115 = vadd.f32 %v3114, %v3095
    %v3116 = vadd.f32 %v3115, %v3096
    %v3117 = vadd.f32 %v3116, %v3097
    %v3118 = vadd.f32 %v3117, %v3098
    %v3119 = vrot.slane %v3118, 4
    %v3120 = vadd.f32 %v3118, %v3119
    %v3121 = vrot.slane %v3120, 2
    %v3122 = vadd.f32 %v3120, %v3121
    %v3123 = vrot.slane %v3122, 1
    %v3124 = vadd.f32 %v3122, %v3123
    %v3125 = vld [vmem:[#allocation3 + $0x660] sm:$0xff]
    %v3126 = vld [vmem:[#allocation3 + $0x668] sm:$0xff]
    %v3127 = vld [vmem:[#allocation3 + $0x670] sm:$0xff]
    %v3128 = vld [vmem:[#allocation3 + $0x678] sm:$0xff]
    %v3129 = vld [vmem:[#allocation3 + $0x680] sm:$0xff]
    %v3130 = vld [vmem:[#allocation3 + $0x688] sm:$0xff]
    %v3131 = vld [vmem:[#allocation3 + $0x690] sm:$0xff]
    %v3132 = vld [vmem:[#allocation3 + $0x698] sm:$0xff]
    %v3133 = vld [vmem:[#allocation3 + $0x6a0] sm:$0xff]
    %v3134 = vld [vmem:[#allocation3 + $0x6a8] sm:$0xff]
    %v3135 = vld [vmem:[#allocation3 + $0x6b0] sm:$0xff]
    %v3136 = vld [vmem:[#allocation3 + $0x6b8] sm:$0xff]
    %v3137 = vld [vmem:[#allocation3 + $0x6c0] sm:$0xff]
    %v3138 = vld [vmem:[#allocation3 + $0x6c8] sm:$0xff]
    %v3139 = vld [vmem:[#allocation3 + $0x6d0] sm:$0xff]
    %v3140 = vld [vmem:[#allocation3 + $0x6d8] sm:$0xff]
    %v3141 = vld [vmem:[#allocation3 + $0x6e0] sm:$0xff]
    %v3142 = vld [vmem:[#allocation3 + $0x6e8] sm:$0xff]
    %v3143 = vld [vmem:[#allocation3 + $0x6f0] sm:$0xff]
    %v3144 = vld [vmem:[#allocation3 + $0x6f8] sm:$0xff]
    %v3145 = vld [vmem:[#allocation3 + $0x700] sm:$0xff]
    %v3146 = vmul.f32 %v3125, %v2696
    %v3147 = vmul.f32 %v3126, %v2697
    %v3148 = vmul.f32 %v3127, %v2698
    %v3149 = vmul.f32 %v3128, %v2699
    %v3150 = vmul.f32 %v3129, %v2700
    %v3151 = vmul.f32 %v3130, %v2701
    %v3152 = vmul.f32 %v3131, %v2702
    %v3153 = vmul.f32 %v3132, %v2703
    %v3154 = vmul.f32 %v3133, %v2704
    %v3155 = vmul.f32 %v3134, %v2705
    %v3156 = vmul.f32 %v3135, %v2706
    %v3157 = vmul.f32 %v3136, %v2707
    %v3158 = vmul.f32 %v3137, %v2708
    %v3159 = vmul.f32 %v3138, %v2709
    %v3160 = vmul.f32 %v3139, %v2710
    %v3161 = vmul.f32 %v3140, %v2711
    %v3162 = vmul.f32 %v3141, %v2712
    %v3163 = vmul.f32 %v3142, %v2713
    %v3164 = vmul.f32 %v3143, %v2714
    %v3165 = vmul.f32 %v3144, %v2715
    %v3166 = vmul.f32 %v3145, %v2716
    %v3167 = vadd.f32 %v3146, %v3147
    %v3168 = vadd.f32 %v3167, %v3148
    %v3169 = vadd.f32 %v3168, %v3149
    %v3170 = vadd.f32 %v3169, %v3150
    %v3171 = vadd.f32 %v3170, %v3151
    %v3172 = vadd.f32 %v3171, %v3152
    %v3173 = vadd.f32 %v3172, %v3153
    %v3174 = vadd.f32 %v3173, %v3154
    %v3175 = vadd.f32 %v3174, %v3155
    %v3176 = vadd.f32 %v3175, %v3156
    %v3177 = vadd.f32 %v3176, %v3157
    %v3178 = vadd.f32 %v3177, %v3158
    %v3179 = vadd.f32 %v3178, %v3159
    %v3180 = vadd.f32 %v3179, %v3160
    %v3181 = vadd.f32 %v3180, %v3161
    %v3182 = vadd.f32 %v3181, %v3162
    %v3183 = vadd.f32 %v3182, %v3163
    %v3184 = vadd.f32 %v3183, %v3164
    %v3185 = vadd.f32 %v3184, %v3165
    %v3186 = vadd.f32 %v3185, %v3166
    %v3187 = vrot.slane %v3186, 4
    %v3188 = vadd.f32 %v3186, %v3187
    %v3189 = vrot.slane %v3188, 2
    %v3190 = vadd.f32 %v3188, %v3189
    %v3191 = vrot.slane %v3190, 1
    %v3192 = vadd.f32 %v3190, %v3191
    %v3193 = vld [vmem:[#allocation3 + $0x770] sm:$0xff]
    %v3194 = vld [vmem:[#allocation3 + $0x778] sm:$0xff]
    %v3195 = vld [vmem:[#allocation3 + $0x780] sm:$0xff]
    %v3196 = vld [vmem:[#allocation3 + $0x788] sm:$0xff]
    %v3197 = vld [vmem:[#allocation3 + $0x790] sm:$0xff]
    %v3198 = vld [vmem:[#allocation3 + $0x798] sm:$0xff]
    %v3199 = vld [vmem:[#allocation3 + $0x7a0] sm:$0xff]
    %v3200 = vld [vmem:[#allocation3 + $0x7a8] sm:$0xff]
    %v3201 = vld [vmem:[#allocation3 + $0x7b0] sm:$0xff]
    %v3202 = vld [vmem:[#allocation3 + $0x7b8] sm:$0xff]
    %v3203 = vld [vmem:[#allocation3 + $0x7c0] sm:$0xff]
    %v3204 = vld [vmem:[#allocation3 + $0x7c8] sm:$0xff]
    %v3205 = vld [vmem:[#allocation3 + $0x7d0] sm:$0xff]
    %v3206 = vld [vmem:[#allocation3 + $0x7d8] sm:$0xff]
    %v3207 = vld [vmem:[#allocation3 + $0x7e0] sm:$0xff]
    %v3208 = vld [vmem:[#allocation3 + $0x7e8] sm:$0xff]
    %v3209 = vld [vmem:[#allocation3 + $0x7f0] sm:$0xff]
    %v3210 = vld [vmem:[#allocation3 + $0x7f8] sm:$0xff]
    %v3211 = vld [vmem:[#allocation3 + $0x800] sm:$0xff]
    %v3212 = vld [vmem:[#allocation3 + $0x808] sm:$0xff]
    %v3213 = vld [vmem:[#allocation3 + $0x810] sm:$0xff]
    %v3214 = vmul.f32 %v3193, %v2696
    %v3215 = vmul.f32 %v3194, %v2697
    %v3216 = vmul.f32 %v3195, %v2698
    %v3217 = vmul.f32 %v3196, %v2699
    %v3218 = vmul.f32 %v3197, %v2700
    %v3219 = vmul.f32 %v3198, %v2701
    %v3220 = vmul.f32 %v3199, %v2702
    %v3221 = vmul.f32 %v3200, %v2703
    %v3222 = vmul.f32 %v3201, %v2704
    %v3223 = vmul.f32 %v3202, %v2705
    %v3224 = vmul.f32 %v3203, %v2706
    %v3225 = vmul.f32 %v3204, %v2707
    %v3226 = vmul.f32 %v3205, %v2708
    %v3227 = vmul.f32 %v3206, %v2709
    %v3228 = vmul.f32 %v3207, %v2710
    %v3229 = vmul.f32 %v3208, %v2711
    %v3230 = vmul.f32 %v3209, %v2712
    %v3231 = vmul.f32 %v3210, %v2713
    %v3232 = vmul.f32 %v3211, %v2714
    %v3233 = vmul.f32 %v3212, %v2715
    %v3234 = vmul.f32 %v3213, %v2716
    %v3235 = vadd.f32 %v3214, %v3215
    %v3236 = vadd.f32 %v3235, %v3216
    %v3237 = vadd.f32 %v3236, %v3217
    %v3238 = vadd.f32 %v3237, %v3218
    %v3239 = vadd.f32 %v3238, %v3219
    %v3240 = vadd.f32 %v3239, %v3220
    %v3241 = vadd.f32 %v3240, %v3221
    %v3242 = vadd.f32 %v3241, %v3222
    %v3243 = vadd.f32 %v3242, %v3223
    %v3244 = vadd.f32 %v3243, %v3224
    %v3245 = vadd.f32 %v3244, %v3225
    %v3246 = vadd.f32 %v3245, %v3226
    %v3247 = vadd.f32 %v3246, %v3227
    %v3248 = vadd.f32 %v3247, %v3228
    %v3249 = vadd.f32 %v3248, %v3229
    %v3250 = vadd.f32 %v3249, %v3230
    %v3251 = vadd.f32 %v3250, %v3231
    %v3252 = vadd.f32 %v3251, %v3232
    %v3253 = vadd.f32 %v3252, %v3233
    %v3254 = vadd.f32 %v3253, %v3234
    %v3255 = vrot.slane %v3254, 4
    %v3256 = vadd.f32 %v3254, %v3255
    %v3257 = vrot.slane %v3256, 2
    %v3258 = vadd.f32 %v3256, %v3257
    %v3259 = vrot.slane %v3258, 1
    %v3260 = vadd.f32 %v3258, %v3259
    %vm3261 = vcmask 1040384
    %v3262 = vsel %vm3261, %v2784, %v2852
    %vm3263 = vcmask 1041408
    %v3264 = vsel %vm3263, %v3262, %v2920
    %vm3265 = vcmask 1042432
    %v3266 = vsel %vm3265, %v3264, %v2988
    %vm3267 = vcmask 1043456
    %v3268 = vsel %vm3267, %v3266, %v3056
    %vm3269 = vcmask 1044480
    %v3270 = vsel %vm3269, %v3268, %v3124
    %vm3271 = vcmask 1045504
    %v3272 = vsel %vm3271, %v3270, %v3192
    %vm3273 = vcmask 1046528
    %v3274 = vsel %vm3273, %v3272, %v3260
    %s3275 = scalar_lea.vmem [#allocation2], %s2694
    %3276 = vst [vmem:[%s3275] sm:$0xff] %v3274
  $region39: #{yin_pitch.1} parent=0 // loop_footer
    %s2692 = sadd.s32 1, %s2688
  $region40: #{yin_pitch.1} parent=0 // loop_footer_branch
    %2687 = sbr.rel target = $region36
  $region41: #{yin_pitch.1} parent=0 // loop_exit
    _
  loop: start=0, step=1, limit=4
  $region42: #{yin_pitch.1} parent=0 // loop_pre_header
    _
  $region43: #{yin_pitch.1} parent=0 // loop_header
    %s3278 = sphi 0, %s3282
    %p3279 = scmp.ge.s32.totalorder %s3278, 4
  $region44: #{yin_pitch.1} parent=0 // loop_header_branch
    %3281 = sbr.rel (%p3279) target = $region48
  $region45: #{yin_pitch.1} parent=0 // loop_body
    %s3283 = sadd.s32 %s3278, 16
    %s3284 = smul.u32 %s3283, 8
    %s3285 = scalar_lea.vmem %s0, %s3284
    %v3286 = vld [vmem:[%s3285] sm:$0xff]
    %v3287 = vld [vmem:[%s3285 + $0x8] sm:$0xff]
    %v3288 = vld [vmem:[%s3285 + $0x10] sm:$0xff]
    %v3289 = vld [vmem:[%s3285 + $0x18] sm:$0xff]
    %v3290 = vld [vmem:[%s3285 + $0x20] sm:$0xff]
    %v3291 = vld [vmem:[%s3285 + $0x28] sm:$0xff]
    %v3292 = vld [vmem:[%s3285 + $0x30] sm:$0xff]
    %v3293 = vld [vmem:[%s3285 + $0x38] sm:$0xff]
    %v3294 = vld [vmem:[%s3285 + $0x40] sm:$0xff]
    %v3295 = vld [vmem:[%s3285 + $0x48] sm:$0xff]
    %v3296 = vld [vmem:[%s3285 + $0x50] sm:$0xff]
    %v3297 = vld [vmem:[%s3285 + $0x58] sm:$0xff]
    %v3298 = vld [vmem:[%s3285 + $0x60] sm:$0xff]
    %v3299 = vld [vmem:[%s3285 + $0x68] sm:$0xff]
    %v3300 = vld [vmem:[%s3285 + $0x70] sm:$0xff]
    %v3301 = vld [vmem:[%s3285 + $0x78] sm:$0xff]
    %v3302 = vld [vmem:[%s3285 + $0x80] sm:$0xff]
    %v3303 = vld [vmem:[#allocation3] sm:$0xff]
    %v3304 = vld [vmem:[#allocation3 + $0x8] sm:$0xff]
    %v3305 = vld [vmem:[#allocation3 + $0x10] sm:$0xff]
    %v3306 = vld [vmem:[#allocation3 + $0x18] sm:$0xff]
    %v3307 = vld [vmem:[#allocation3 + $0x20] sm:$0xff]
    %v3308 = vld [vmem:[#allocation3 + $0x28] sm:$0xff]
    %v3309 = vld [vmem:[#allocation3 + $0x30] sm:$0xff]
    %v3310 = vld [vmem:[#allocation3 + $0x38] sm:$0xff]
    %v3311 = vld [vmem:[#allocation3 + $0x40] sm:$0xff]
    %v3312 = vld [vmem:[#allocation3 + $0x48] sm:$0xff]
    %v3313 = vld [vmem:[#allocation3 + $0x50] sm:$0xff]
    %v3314 = vld [vmem:[#allocation3 + $0x58] sm:$0xff]
    %v3315 = vld [vmem:[#allocation3 + $0x60] sm:$0xff]
    %v3316 = vld [vmem:[#allocation3 + $0x68] sm:$0xff]
    %v3317 = vld [vmem:[#allocation3 + $0x70] sm:$0xff]
    %v3318 = vld [vmem:[#allocation3 + $0x78] sm:$0xff]
    %v3319 = vld [vmem:[#allocation3 + $0x80] sm:$0xff]
    %v3320 = vmul.f32 %v3303, %v3286
    %v3321 = vmul.f32 %v3304, %v3287
    %v3322 = vmul.f32 %v3305, %v3288
    %v3323 = vmul.f32 %v3306, %v3289
    %v3324 = vmul.f32 %v3307, %v3290
    %v3325 = vmul.f32 %v3308, %v3291
    %v3326 = vmul.f32 %v3309, %v3292
    %v3327 = vmul.f32 %v3310, %v3293
    %v3328 = vmul.f32 %v3311, %v3294
    %v3329 = vmul.f32 %v3312, %v3295
    %v3330 = vmul.f32 %v3313, %v3296
    %v3331 = vmul.f32 %v3314, %v3297
    %v3332 = vmul.f32 %v3315, %v3298
    %v3333 = vmul.f32 %v3316, %v3299
    %v3334 = vmul.f32 %v3317, %v3300
    %v3335 = vmul.f32 %v3318, %v3301
    %v3336 = vmul.f32 %v3319, %v3302
    %v3337 = vadd.f32 %v3320, %v3321
    %v3338 = vadd.f32 %v3337, %v3322
    %v3339 = vadd.f32 %v3338, %v3323
    %v3340 = vadd.f32 %v3339, %v3324
    %v3341 = vadd.f32 %v3340, %v3325
    %v3342 = vadd.f32 %v3341, %v3326
    %v3343 = vadd.f32 %v3342, %v3327
    %v3344 = vadd.f32 %v3343, %v3328
    %v3345 = vadd.f32 %v3344, %v3329
    %v3346 = vadd.f32 %v3345, %v3330
    %v3347 = vadd.f32 %v3346, %v3331
    %v3348 = vadd.f32 %v3347, %v3332
    %v3349 = vadd.f32 %v3348, %v3333
    %v3350 = vadd.f32 %v3349, %v3334
    %v3351 = vadd.f32 %v3350, %v3335
    %v3352 = vadd.f32 %v3351, %v3336
    %v3353 = vrot.slane %v3352, 4
    %v3354 = vadd.f32 %v3352, %v3353
    %v3355 = vrot.slane %v3354, 2
    %v3356 = vadd.f32 %v3354, %v3355
    %v3357 = vrot.slane %v3356, 1
    %v3358 = vadd.f32 %v3356, %v3357
    %v3359 = vld [vmem:[#allocation3 + $0x110] sm:$0xff]
    %v3360 = vld [vmem:[#allocation3 + $0x118] sm:$0xff]
    %v3361 = vld [vmem:[#allocation3 + $0x120] sm:$0xff]
    %v3362 = vld [vmem:[#allocation3 + $0x128] sm:$0xff]
    %v3363 = vld [vmem:[#allocation3 + $0x130] sm:$0xff]
    %v3364 = vld [vmem:[#allocation3 + $0x138] sm:$0xff]
    %v3365 = vld [vmem:[#allocation3 + $0x140] sm:$0xff]
    %v3366 = vld [vmem:[#allocation3 + $0x148] sm:$0xff]
    %v3367 = vld [vmem:[#allocation3 + $0x150] sm:$0xff]
    %v3368 = vld [vmem:[#allocation3 + $0x158] sm:$0xff]
    %v3369 = vld [vmem:[#allocation3 + $0x160] sm:$0xff]
    %v3370 = vld [vmem:[#allocation3 + $0x168] sm:$0xff]
    %v3371 = vld [vmem:[#allocation3 + $0x170] sm:$0xff]
    %v3372 = vld [vmem:[#allocation3 + $0x178] sm:$0xff]
    %v3373 = vld [vmem:[#allocation3 + $0x180] sm:$0xff]
    %v3374 = vld [vmem:[#allocation3 + $0x188] sm:$0xff]
    %v3375 = vld [vmem:[#allocation3 + $0x190] sm:$0xff]
    %v3376 = vmul.f32 %v3359, %v3286
    %v3377 = vmul.f32 %v3360, %v3287
    %v3378 = vmul.f32 %v3361, %v3288
    %v3379 = vmul.f32 %v3362, %v3289
    %v3380 = vmul.f32 %v3363, %v3290
    %v3381 = vmul.f32 %v3364, %v3291
    %v3382 = vmul.f32 %v3365, %v3292
    %v3383 = vmul.f32 %v3366, %v3293
    %v3384 = vmul.f32 %v3367, %v3294
    %v3385 = vmul.f32 %v3368, %v3295
    %v3386 = vmul.f32 %v3369, %v3296
    %v3387 = vmul.f32 %v3370, %v3297
    %v3388 = vmul.f32 %v3371, %v3298
    %v3389 = vmul.f32 %v3372, %v3299
    %v3390 = vmul.f32 %v3373, %v3300
    %v3391 = vmul.f32 %v3374, %v3301
    %v3392 = vmul.f32 %v3375, %v3302
    %v3393 = vadd.f32 %v3376, %v3377
    %v3394 = vadd.f32 %v3393, %v3378
    %v3395 = vadd.f32 %v3394, %v3379
    %v3396 = vadd.f32 %v3395, %v3380
    %v3397 = vadd.f32 %v3396, %v3381
    %v3398 = vadd.f32 %v3397, %v3382
    %v3399 = vadd.f32 %v3398, %v3383
    %v3400 = vadd.f32 %v3399, %v3384
    %v3401 = vadd.f32 %v3400, %v3385
    %v3402 = vadd.f32 %v3401, %v3386
    %v3403 = vadd.f32 %v3402, %v3387
    %v3404 = vadd.f32 %v3403, %v3388
    %v3405 = vadd.f32 %v3404, %v3389
    %v3406 = vadd.f32 %v3405, %v3390
    %v3407 = vadd.f32 %v3406, %v3391
    %v3408 = vadd.f32 %v3407, %v3392
    %v3409 = vrot.slane %v3408, 4
    %v3410 = vadd.f32 %v3408, %v3409
    %v3411 = vrot.slane %v3410, 2
    %v3412 = vadd.f32 %v3410, %v3411
    %v3413 = vrot.slane %v3412, 1
    %v3414 = vadd.f32 %v3412, %v3413
    %v3415 = vld [vmem:[#allocation3 + $0x220] sm:$0xff]
    %v3416 = vld [vmem:[#allocation3 + $0x228] sm:$0xff]
    %v3417 = vld [vmem:[#allocation3 + $0x230] sm:$0xff]
    %v3418 = vld [vmem:[#allocation3 + $0x238] sm:$0xff]
    %v3419 = vld [vmem:[#allocation3 + $0x240] sm:$0xff]
    %v3420 = vld [vmem:[#allocation3 + $0x248] sm:$0xff]
    %v3421 = vld [vmem:[#allocation3 + $0x250] sm:$0xff]
    %v3422 = vld [vmem:[#allocation3 + $0x258] sm:$0xff]
    %v3423 = vld [vmem:[#allocation3 + $0x260] sm:$0xff]
    %v3424 = vld [vmem:[#allocation3 + $0x268] sm:$0xff]
    %v3425 = vld [vmem:[#allocation3 + $0x270] sm:$0xff]
    %v3426 = vld [vmem:[#allocation3 + $0x278] sm:$0xff]
    %v3427 = vld [vmem:[#allocation3 + $0x280] sm:$0xff]
    %v3428 = vld [vmem:[#allocation3 + $0x288] sm:$0xff]
    %v3429 = vld [vmem:[#allocation3 + $0x290] sm:$0xff]
    %v3430 = vld [vmem:[#allocation3 + $0x298] sm:$0xff]
    %v3431 = vld [vmem:[#allocation3 + $0x2a0] sm:$0xff]
    %v3432 = vmul.f32 %v3415, %v3286
    %v3433 = vmul.f32 %v3416, %v3287
    %v3434 = vmul.f32 %v3417, %v3288
    %v3435 = vmul.f32 %v3418, %v3289
    %v3436 = vmul.f32 %v3419, %v3290
    %v3437 = vmul.f32 %v3420, %v3291
    %v3438 = vmul.f32 %v3421, %v3292
    %v3439 = vmul.f32 %v3422, %v3293
    %v3440 = vmul.f32 %v3423, %v3294
    %v3441 = vmul.f32 %v3424, %v3295
    %v3442 = vmul.f32 %v3425, %v3296
    %v3443 = vmul.f32 %v3426, %v3297
    %v3444 = vmul.f32 %v3427, %v3298
    %v3445 = vmul.f32 %v3428, %v3299
    %v3446 = vmul.f32 %v3429, %v3300
    %v3447 = vmul.f32 %v3430, %v3301
    %v3448 = vmul.f32 %v3431, %v3302
    %v3449 = vadd.f32 %v3432, %v3433
    %v3450 = vadd.f32 %v3449, %v3434
    %v3451 = vadd.f32 %v3450, %v3435
    %v3452 = vadd.f32 %v3451, %v3436
    %v3453 = vadd.f32 %v3452, %v3437
    %v3454 = vadd.f32 %v3453, %v3438
    %v3455 = vadd.f32 %v3454, %v3439
    %v3456 = vadd.f32 %v3455, %v3440
    %v3457 = vadd.f32 %v3456, %v3441
    %v3458 = vadd.f32 %v3457, %v3442
    %v3459 = vadd.f32 %v3458, %v3443
    %v3460 = vadd.f32 %v3459, %v3444
    %v3461 = vadd.f32 %v3460, %v3445
    %v3462 = vadd.f32 %v3461, %v3446
    %v3463 = vadd.f32 %v3462, %v3447
    %v3464 = vadd.f32 %v3463, %v3448
    %v3465 = vrot.slane %v3464, 4
    %v3466 = vadd.f32 %v3464, %v3465
    %v3467 = vrot.slane %v3466, 2
    %v3468 = vadd.f32 %v3466, %v3467
    %v3469 = vrot.slane %v3468, 1
    %v3470 = vadd.f32 %v3468, %v3469
    %v3471 = vld [vmem:[#allocation3 + $0x330] sm:$0xff]
    %v3472 = vld [vmem:[#allocation3 + $0x338] sm:$0xff]
    %v3473 = vld [vmem:[#allocation3 + $0x340] sm:$0xff]
    %v3474 = vld [vmem:[#allocation3 + $0x348] sm:$0xff]
    %v3475 = vld [vmem:[#allocation3 + $0x350] sm:$0xff]
    %v3476 = vld [vmem:[#allocation3 + $0x358] sm:$0xff]
    %v3477 = vld [vmem:[#allocation3 + $0x360] sm:$0xff]
    %v3478 = vld [vmem:[#allocation3 + $0x368] sm:$0xff]
    %v3479 = vld [vmem:[#allocation3 + $0x370] sm:$0xff]
    %v3480 = vld [vmem:[#allocation3 + $0x378] sm:$0xff]
    %v3481 = vld [vmem:[#allocation3 + $0x380] sm:$0xff]
    %v3482 = vld [vmem:[#allocation3 + $0x388] sm:$0xff]
    %v3483 = vld [vmem:[#allocation3 + $0x390] sm:$0xff]
    %v3484 = vld [vmem:[#allocation3 + $0x398] sm:$0xff]
    %v3485 = vld [vmem:[#allocation3 + $0x3a0] sm:$0xff]
    %v3486 = vld [vmem:[#allocation3 + $0x3a8] sm:$0xff]
    %v3487 = vld [vmem:[#allocation3 + $0x3b0] sm:$0xff]
    %v3488 = vmul.f32 %v3471, %v3286
    %v3489 = vmul.f32 %v3472, %v3287
    %v3490 = vmul.f32 %v3473, %v3288
    %v3491 = vmul.f32 %v3474, %v3289
    %v3492 = vmul.f32 %v3475, %v3290
    %v3493 = vmul.f32 %v3476, %v3291
    %v3494 = vmul.f32 %v3477, %v3292
    %v3495 = vmul.f32 %v3478, %v3293
    %v3496 = vmul.f32 %v3479, %v3294
    %v3497 = vmul.f32 %v3480, %v3295
    %v3498 = vmul.f32 %v3481, %v3296
    %v3499 = vmul.f32 %v3482, %v3297
    %v3500 = vmul.f32 %v3483, %v3298
    %v3501 = vmul.f32 %v3484, %v3299
    %v3502 = vmul.f32 %v3485, %v3300
    %v3503 = vmul.f32 %v3486, %v3301
    %v3504 = vmul.f32 %v3487, %v3302
    %v3505 = vadd.f32 %v3488, %v3489
    %v3506 = vadd.f32 %v3505, %v3490
    %v3507 = vadd.f32 %v3506, %v3491
    %v3508 = vadd.f32 %v3507, %v3492
    %v3509 = vadd.f32 %v3508, %v3493
    %v3510 = vadd.f32 %v3509, %v3494
    %v3511 = vadd.f32 %v3510, %v3495
    %v3512 = vadd.f32 %v3511, %v3496
    %v3513 = vadd.f32 %v3512, %v3497
    %v3514 = vadd.f32 %v3513, %v3498
    %v3515 = vadd.f32 %v3514, %v3499
    %v3516 = vadd.f32 %v3515, %v3500
    %v3517 = vadd.f32 %v3516, %v3501
    %v3518 = vadd.f32 %v3517, %v3502
    %v3519 = vadd.f32 %v3518, %v3503
    %v3520 = vadd.f32 %v3519, %v3504
    %v3521 = vrot.slane %v3520, 4
    %v3522 = vadd.f32 %v3520, %v3521
    %v3523 = vrot.slane %v3522, 2
    %v3524 = vadd.f32 %v3522, %v3523
    %v3525 = vrot.slane %v3524, 1
    %v3526 = vadd.f32 %v3524, %v3525
    %v3527 = vld [vmem:[#allocation3 + $0x440] sm:$0xff]
    %v3528 = vld [vmem:[#allocation3 + $0x448] sm:$0xff]
    %v3529 = vld [vmem:[#allocation3 + $0x450] sm:$0xff]
    %v3530 = vld [vmem:[#allocation3 + $0x458] sm:$0xff]
    %v3531 = vld [vmem:[#allocation3 + $0x460] sm:$0xff]
    %v3532 = vld [vmem:[#allocation3 + $0x468] sm:$0xff]
    %v3533 = vld [vmem:[#allocation3 + $0x470] sm:$0xff]
    %v3534 = vld [vmem:[#allocation3 + $0x478] sm:$0xff]
    %v3535 = vld [vmem:[#allocation3 + $0x480] sm:$0xff]
    %v3536 = vld [vmem:[#allocation3 + $0x488] sm:$0xff]
    %v3537 = vld [vmem:[#allocation3 + $0x490] sm:$0xff]
    %v3538 = vld [vmem:[#allocation3 + $0x498] sm:$0xff]
    %v3539 = vld [vmem:[#allocation3 + $0x4a0] sm:$0xff]
    %v3540 = vld [vmem:[#allocation3 + $0x4a8] sm:$0xff]
    %v3541 = vld [vmem:[#allocation3 + $0x4b0] sm:$0xff]
    %v3542 = vld [vmem:[#allocation3 + $0x4b8] sm:$0xff]
    %v3543 = vld [vmem:[#allocation3 + $0x4c0] sm:$0xff]
    %v3544 = vmul.f32 %v3527, %v3286
    %v3545 = vmul.f32 %v3528, %v3287
    %v3546 = vmul.f32 %v3529, %v3288
    %v3547 = vmul.f32 %v3530, %v3289
    %v3548 = vmul.f32 %v3531, %v3290
    %v3549 = vmul.f32 %v3532, %v3291
    %v3550 = vmul.f32 %v3533, %v3292
    %v3551 = vmul.f32 %v3534, %v3293
    %v3552 = vmul.f32 %v3535, %v3294
    %v3553 = vmul.f32 %v3536, %v3295
    %v3554 = vmul.f32 %v3537, %v3296
    %v3555 = vmul.f32 %v3538, %v3297
    %v3556 = vmul.f32 %v3539, %v3298
    %v3557 = vmul.f32 %v3540, %v3299
    %v3558 = vmul.f32 %v3541, %v3300
    %v3559 = vmul.f32 %v3542, %v3301
    %v3560 = vmul.f32 %v3543, %v3302
    %v3561 = vadd.f32 %v3544, %v3545
    %v3562 = vadd.f32 %v3561, %v3546
    %v3563 = vadd.f32 %v3562, %v3547
    %v3564 = vadd.f32 %v3563, %v3548
    %v3565 = vadd.f32 %v3564, %v3549
    %v3566 = vadd.f32 %v3565, %v3550
    %v3567 = vadd.f32 %v3566, %v3551
    %v3568 = vadd.f32 %v3567, %v3552
    %v3569 = vadd.f32 %v3568, %v3553
    %v3570 = vadd.f32 %v3569, %v3554
    %v3571 = vadd.f32 %v3570, %v3555
    %v3572 = vadd.f32 %v3571, %v3556
    %v3573 = vadd.f32 %v3572, %v3557
    %v3574 = vadd.f32 %v3573, %v3558
    %v3575 = vadd.f32 %v3574, %v3559
    %v3576 = vadd.f32 %v3575, %v3560
    %v3577 = vrot.slane %v3576, 4
    %v3578 = vadd.f32 %v3576, %v3577
    %v3579 = vrot.slane %v3578, 2
    %v3580 = vadd.f32 %v3578, %v3579
    %v3581 = vrot.slane %v3580, 1
    %v3582 = vadd.f32 %v3580, %v3581
    %v3583 = vld [vmem:[#allocation3 + $0x550] sm:$0xff]
    %v3584 = vld [vmem:[#allocation3 + $0x558] sm:$0xff]
    %v3585 = vld [vmem:[#allocation3 + $0x560] sm:$0xff]
    %v3586 = vld [vmem:[#allocation3 + $0x568] sm:$0xff]
    %v3587 = vld [vmem:[#allocation3 + $0x570] sm:$0xff]
    %v3588 = vld [vmem:[#allocation3 + $0x578] sm:$0xff]
    %v3589 = vld [vmem:[#allocation3 + $0x580] sm:$0xff]
    %v3590 = vld [vmem:[#allocation3 + $0x588] sm:$0xff]
    %v3591 = vld [vmem:[#allocation3 + $0x590] sm:$0xff]
    %v3592 = vld [vmem:[#allocation3 + $0x598] sm:$0xff]
    %v3593 = vld [vmem:[#allocation3 + $0x5a0] sm:$0xff]
    %v3594 = vld [vmem:[#allocation3 + $0x5a8] sm:$0xff]
    %v3595 = vld [vmem:[#allocation3 + $0x5b0] sm:$0xff]
    %v3596 = vld [vmem:[#allocation3 + $0x5b8] sm:$0xff]
    %v3597 = vld [vmem:[#allocation3 + $0x5c0] sm:$0xff]
    %v3598 = vld [vmem:[#allocation3 + $0x5c8] sm:$0xff]
    %v3599 = vld [vmem:[#allocation3 + $0x5d0] sm:$0xff]
    %v3600 = vmul.f32 %v3583, %v3286
    %v3601 = vmul.f32 %v3584, %v3287
    %v3602 = vmul.f32 %v3585, %v3288
    %v3603 = vmul.f32 %v3586, %v3289
    %v3604 = vmul.f32 %v3587, %v3290
    %v3605 = vmul.f32 %v3588, %v3291
    %v3606 = vmul.f32 %v3589, %v3292
    %v3607 = vmul.f32 %v3590, %v3293
    %v3608 = vmul.f32 %v3591, %v3294
    %v3609 = vmul.f32 %v3592, %v3295
    %v3610 = vmul.f32 %v3593, %v3296
    %v3611 = vmul.f32 %v3594, %v3297
    %v3612 = vmul.f32 %v3595, %v3298
    %v3613 = vmul.f32 %v3596, %v3299
    %v3614 = vmul.f32 %v3597, %v3300
    %v3615 = vmul.f32 %v3598, %v3301
    %v3616 = vmul.f32 %v3599, %v3302
    %v3617 = vadd.f32 %v3600, %v3601
    %v3618 = vadd.f32 %v3617, %v3602
    %v3619 = vadd.f32 %v3618, %v3603
    %v3620 = vadd.f32 %v3619, %v3604
    %v3621 = vadd.f32 %v3620, %v3605
    %v3622 = vadd.f32 %v3621, %v3606
    %v3623 = vadd.f32 %v3622, %v3607
    %v3624 = vadd.f32 %v3623, %v3608
    %v3625 = vadd.f32 %v3624, %v3609
    %v3626 = vadd.f32 %v3625, %v3610
    %v3627 = vadd.f32 %v3626, %v3611
    %v3628 = vadd.f32 %v3627, %v3612
    %v3629 = vadd.f32 %v3628, %v3613
    %v3630 = vadd.f32 %v3629, %v3614
    %v3631 = vadd.f32 %v3630, %v3615
    %v3632 = vadd.f32 %v3631, %v3616
    %v3633 = vrot.slane %v3632, 4
    %v3634 = vadd.f32 %v3632, %v3633
    %v3635 = vrot.slane %v3634, 2
    %v3636 = vadd.f32 %v3634, %v3635
    %v3637 = vrot.slane %v3636, 1
    %v3638 = vadd.f32 %v3636, %v3637
    %v3639 = vld [vmem:[#allocation3 + $0x660] sm:$0xff]
    %v3640 = vld [vmem:[#allocation3 + $0x668] sm:$0xff]
    %v3641 = vld [vmem:[#allocation3 + $0x670] sm:$0xff]
    %v3642 = vld [vmem:[#allocation3 + $0x678] sm:$0xff]
    %v3643 = vld [vmem:[#allocation3 + $0x680] sm:$0xff]
    %v3644 = vld [vmem:[#allocation3 + $0x688] sm:$0xff]
    %v3645 = vld [vmem:[#allocation3 + $0x690] sm:$0xff]
    %v3646 = vld [vmem:[#allocation3 + $0x698] sm:$0xff]
    %v3647 = vld [vmem:[#allocation3 + $0x6a0] sm:$0xff]
    %v3648 = vld [vmem:[#allocation3 + $0x6a8] sm:$0xff]
    %v3649 = vld [vmem:[#allocation3 + $0x6b0] sm:$0xff]
    %v3650 = vld [vmem:[#allocation3 + $0x6b8] sm:$0xff]
    %v3651 = vld [vmem:[#allocation3 + $0x6c0] sm:$0xff]
    %v3652 = vld [vmem:[#allocation3 + $0x6c8] sm:$0xff]
    %v3653 = vld [vmem:[#allocation3 + $0x6d0] sm:$0xff]
    %v3654 = vld [vmem:[#allocation3 + $0x6d8] sm:$0xff]
    %v3655 = vld [vmem:[#allocation3 + $0x6e0] sm:$0xff]
    %v3656 = vmul.f32 %v3639, %v3286
    %v3657 = vmul.f32 %v3640, %v3287
    %v3658 = vmul.f32 %v3641, %v3288
    %v3659 = vmul.f32 %v3642, %v3289
    %v3660 = vmul.f32 %v3643, %v3290
    %v3661 = vmul.f32 %v3644, %v3291
    %v3662 = vmul.f32 %v3645, %v3292
    %v3663 = vmul.f32 %v3646, %v3293
    %v3664 = vmul.f32 %v3647, %v3294
    %v3665 = vmul.f32 %v3648, %v3295
    %v3666 = vmul.f32 %v3649, %v3296
    %v3667 = vmul.f32 %v3650, %v3297
    %v3668 = vmul.f32 %v3651, %v3298
    %v3669 = vmul.f32 %v3652, %v3299
    %v3670 = vmul.f32 %v3653, %v3300
    %v3671 = vmul.f32 %v3654, %v3301
    %v3672 = vmul.f32 %v3655, %v3302
    %v3673 = vadd.f32 %v3656, %v3657
    %v3674 = vadd.f32 %v3673, %v3658
    %v3675 = vadd.f32 %v3674, %v3659
    %v3676 = vadd.f32 %v3675, %v3660
    %v3677 = vadd.f32 %v3676, %v3661
    %v3678 = vadd.f32 %v3677, %v3662
    %v3679 = vadd.f32 %v3678, %v3663
    %v3680 = vadd.f32 %v3679, %v3664
    %v3681 = vadd.f32 %v3680, %v3665
    %v3682 = vadd.f32 %v3681, %v3666
    %v3683 = vadd.f32 %v3682, %v3667
    %v3684 = vadd.f32 %v3683, %v3668
    %v3685 = vadd.f32 %v3684, %v3669
    %v3686 = vadd.f32 %v3685, %v3670
    %v3687 = vadd.f32 %v3686, %v3671
    %v3688 = vadd.f32 %v3687, %v3672
    %v3689 = vrot.slane %v3688, 4
    %v3690 = vadd.f32 %v3688, %v3689
    %v3691 = vrot.slane %v3690, 2
    %v3692 = vadd.f32 %v3690, %v3691
    %v3693 = vrot.slane %v3692, 1
    %v3694 = vadd.f32 %v3692, %v3693
    %v3695 = vld [vmem:[#allocation3 + $0x770] sm:$0xff]
    %v3696 = vld [vmem:[#allocation3 + $0x778] sm:$0xff]
    %v3697 = vld [vmem:[#allocation3 + $0x780] sm:$0xff]
    %v3698 = vld [vmem:[#allocation3 + $0x788] sm:$0xff]
    %v3699 = vld [vmem:[#allocation3 + $0x790] sm:$0xff]
    %v3700 = vld [vmem:[#allocation3 + $0x798] sm:$0xff]
    %v3701 = vld [vmem:[#allocation3 + $0x7a0] sm:$0xff]
    %v3702 = vld [vmem:[#allocation3 + $0x7a8] sm:$0xff]
    %v3703 = vld [vmem:[#allocation3 + $0x7b0] sm:$0xff]
    %v3704 = vld [vmem:[#allocation3 + $0x7b8] sm:$0xff]
    %v3705 = vld [vmem:[#allocation3 + $0x7c0] sm:$0xff]
    %v3706 = vld [vmem:[#allocation3 + $0x7c8] sm:$0xff]
    %v3707 = vld [vmem:[#allocation3 + $0x7d0] sm:$0xff]
    %v3708 = vld [vmem:[#allocation3 + $0x7d8] sm:$0xff]
    %v3709 = vld [vmem:[#allocation3 + $0x7e0] sm:$0xff]
    %v3710 = vld [vmem:[#allocation3 + $0x7e8] sm:$0xff]
    %v3711 = vld [vmem:[#allocation3 + $0x7f0] sm:$0xff]
    %v3712 = vmul.f32 %v3695, %v3286
    %v3713 = vmul.f32 %v3696, %v3287
    %v3714 = vmul.f32 %v3697, %v3288
    %v3715 = vmul.f32 %v3698, %v3289
    %v3716 = vmul.f32 %v3699, %v3290
    %v3717 = vmul.f32 %v3700, %v3291
    %v3718 = vmul.f32 %v3701, %v3292
    %v3719 = vmul.f32 %v3702, %v3293
    %v3720 = vmul.f32 %v3703, %v3294
    %v3721 = vmul.f32 %v3704, %v3295
    %v3722 = vmul.f32 %v3705, %v3296
    %v3723 = vmul.f32 %v3706, %v3297
    %v3724 = vmul.f32 %v3707, %v3298
    %v3725 = vmul.f32 %v3708, %v3299
    %v3726 = vmul.f32 %v3709, %v3300
    %v3727 = vmul.f32 %v3710, %v3301
    %v3728 = vmul.f32 %v3711, %v3302
    %v3729 = vadd.f32 %v3712, %v3713
    %v3730 = vadd.f32 %v3729, %v3714
    %v3731 = vadd.f32 %v3730, %v3715
    %v3732 = vadd.f32 %v3731, %v3716
    %v3733 = vadd.f32 %v3732, %v3717
    %v3734 = vadd.f32 %v3733, %v3718
    %v3735 = vadd.f32 %v3734, %v3719
    %v3736 = vadd.f32 %v3735, %v3720
    %v3737 = vadd.f32 %v3736, %v3721
    %v3738 = vadd.f32 %v3737, %v3722
    %v3739 = vadd.f32 %v3738, %v3723
    %v3740 = vadd.f32 %v3739, %v3724
    %v3741 = vadd.f32 %v3740, %v3725
    %v3742 = vadd.f32 %v3741, %v3726
    %v3743 = vadd.f32 %v3742, %v3727
    %v3744 = vadd.f32 %v3743, %v3728
    %v3745 = vrot.slane %v3744, 4
    %v3746 = vadd.f32 %v3744, %v3745
    %v3747 = vrot.slane %v3746, 2
    %v3748 = vadd.f32 %v3746, %v3747
    %v3749 = vrot.slane %v3748, 1
    %v3750 = vadd.f32 %v3748, %v3749
    %vm3751 = vcmask 1040384
    %v3752 = vsel %vm3751, %v3358, %v3414
    %vm3753 = vcmask 1041408
    %v3754 = vsel %vm3753, %v3752, %v3470
    %vm3755 = vcmask 1042432
    %v3756 = vsel %vm3755, %v3754, %v3526
    %vm3757 = vcmask 1043456
    %v3758 = vsel %vm3757, %v3756, %v3582
    %vm3759 = vcmask 1044480
    %v3760 = vsel %vm3759, %v3758, %v3638
    %vm3761 = vcmask 1045504
    %v3762 = vsel %vm3761, %v3760, %v3694
    %vm3763 = vcmask 1046528
    %v3764 = vsel %vm3763, %v3762, %v3750
    %s3765 = scalar_lea.vmem [#allocation2], %s3284
    %3766 = vst [vmem:[%s3765] sm:$0xff] %v3764
  $region46: #{yin_pitch.1} parent=0 // loop_footer
    %s3282 = sadd.s32 1, %s3278
  $region47: #{yin_pitch.1} parent=0 // loop_footer_branch
    %3277 = sbr.rel target = $region43
  $region48: #{yin_pitch.1} parent=0 // loop_exit
    _
  loop: start=0, step=1, limit=4
  $region49: #{yin_pitch.1} parent=0 // loop_pre_header
    _
  $region50: #{yin_pitch.1} parent=0 // loop_header
    %s3768 = sphi 0, %s3772
    %p3769 = scmp.ge.s32.totalorder %s3768, 4
  $region51: #{yin_pitch.1} parent=0 // loop_header_branch
    %3771 = sbr.rel (%p3769) target = $region55
  $region52: #{yin_pitch.1} parent=0 // loop_body
    %s3773 = sadd.s32 %s3768, 20
    %s3774 = smul.u32 %s3773, 8
    %s3775 = scalar_lea.vmem %s0, %s3774
    %v3776 = vld [vmem:[%s3775] sm:$0xff]
    %v3777 = vld [vmem:[%s3775 + $0x8] sm:$0xff]
    %v3778 = vld [vmem:[%s3775 + $0x10] sm:$0xff]
    %v3779 = vld [vmem:[%s3775 + $0x18] sm:$0xff]
    %v3780 = vld [vmem:[%s3775 + $0x20] sm:$0xff]
    %v3781 = vld [vmem:[%s3775 + $0x28] sm:$0xff]
    %v3782 = vld [vmem:[%s3775 + $0x30] sm:$0xff]
    %v3783 = vld [vmem:[%s3775 + $0x38] sm:$0xff]
    %v3784 = vld [vmem:[%s3775 + $0x40] sm:$0xff]
    %v3785 = vld [vmem:[%s3775 + $0x48] sm:$0xff]
    %v3786 = vld [vmem:[%s3775 + $0x50] sm:$0xff]
    %v3787 = vld [vmem:[%s3775 + $0x58] sm:$0xff]
    %v3788 = vld [vmem:[%s3775 + $0x60] sm:$0xff]
    %v3789 = vld [vmem:[#allocation3] sm:$0xff]
    %v3790 = vld [vmem:[#allocation3 + $0x8] sm:$0xff]
    %v3791 = vld [vmem:[#allocation3 + $0x10] sm:$0xff]
    %v3792 = vld [vmem:[#allocation3 + $0x18] sm:$0xff]
    %v3793 = vld [vmem:[#allocation3 + $0x20] sm:$0xff]
    %v3794 = vld [vmem:[#allocation3 + $0x28] sm:$0xff]
    %v3795 = vld [vmem:[#allocation3 + $0x30] sm:$0xff]
    %v3796 = vld [vmem:[#allocation3 + $0x38] sm:$0xff]
    %v3797 = vld [vmem:[#allocation3 + $0x40] sm:$0xff]
    %v3798 = vld [vmem:[#allocation3 + $0x48] sm:$0xff]
    %v3799 = vld [vmem:[#allocation3 + $0x50] sm:$0xff]
    %v3800 = vld [vmem:[#allocation3 + $0x58] sm:$0xff]
    %v3801 = vld [vmem:[#allocation3 + $0x60] sm:$0xff]
    %v3802 = vmul.f32 %v3789, %v3776
    %v3803 = vmul.f32 %v3790, %v3777
    %v3804 = vmul.f32 %v3791, %v3778
    %v3805 = vmul.f32 %v3792, %v3779
    %v3806 = vmul.f32 %v3793, %v3780
    %v3807 = vmul.f32 %v3794, %v3781
    %v3808 = vmul.f32 %v3795, %v3782
    %v3809 = vmul.f32 %v3796, %v3783
    %v3810 = vmul.f32 %v3797, %v3784
    %v3811 = vmul.f32 %v3798, %v3785
    %v3812 = vmul.f32 %v3799, %v3786
    %v3813 = vmul.f32 %v3800, %v3787
    %v3814 = vmul.f32 %v3801, %v3788
    %v3815 = vadd.f32 %v3802, %v3803
    %v3816 = vadd.f32 %v3815, %v3804
    %v3817 = vadd.f32 %v3816, %v3805
    %v3818 = vadd.f32 %v3817, %v3806
    %v3819 = vadd.f32 %v3818, %v3807
    %v3820 = vadd.f32 %v3819, %v3808
    %v3821 = vadd.f32 %v3820, %v3809
    %v3822 = vadd.f32 %v3821, %v3810
    %v3823 = vadd.f32 %v3822, %v3811
    %v3824 = vadd.f32 %v3823, %v3812
    %v3825 = vadd.f32 %v3824, %v3813
    %v3826 = vadd.f32 %v3825, %v3814
    %v3827 = vrot.slane %v3826, 4
    %v3828 = vadd.f32 %v3826, %v3827
    %v3829 = vrot.slane %v3828, 2
    %v3830 = vadd.f32 %v3828, %v3829
    %v3831 = vrot.slane %v3830, 1
    %v3832 = vadd.f32 %v3830, %v3831
    %v3833 = vld [vmem:[#allocation3 + $0x110] sm:$0xff]
    %v3834 = vld [vmem:[#allocation3 + $0x118] sm:$0xff]
    %v3835 = vld [vmem:[#allocation3 + $0x120] sm:$0xff]
    %v3836 = vld [vmem:[#allocation3 + $0x128] sm:$0xff]
    %v3837 = vld [vmem:[#allocation3 + $0x130] sm:$0xff]
    %v3838 = vld [vmem:[#allocation3 + $0x138] sm:$0xff]
    %v3839 = vld [vmem:[#allocation3 + $0x140] sm:$0xff]
    %v3840 = vld [vmem:[#allocation3 + $0x148] sm:$0xff]
    %v3841 = vld [vmem:[#allocation3 + $0x150] sm:$0xff]
    %v3842 = vld [vmem:[#allocation3 + $0x158] sm:$0xff]
    %v3843 = vld [vmem:[#allocation3 + $0x160] sm:$0xff]
    %v3844 = vld [vmem:[#allocation3 + $0x168] sm:$0xff]
    %v3845 = vld [vmem:[#allocation3 + $0x170] sm:$0xff]
    %v3846 = vmul.f32 %v3833, %v3776
    %v3847 = vmul.f32 %v3834, %v3777
    %v3848 = vmul.f32 %v3835, %v3778
    %v3849 = vmul.f32 %v3836, %v3779
    %v3850 = vmul.f32 %v3837, %v3780
    %v3851 = vmul.f32 %v3838, %v3781
    %v3852 = vmul.f32 %v3839, %v3782
    %v3853 = vmul.f32 %v3840, %v3783
    %v3854 = vmul.f32 %v3841, %v3784
    %v3855 = vmul.f32 %v3842, %v3785
    %v3856 = vmul.f32 %v3843, %v3786
    %v3857 = vmul.f32 %v3844, %v3787
    %v3858 = vmul.f32 %v3845, %v3788
    %v3859 = vadd.f32 %v3846, %v3847
    %v3860 = vadd.f32 %v3859, %v3848
    %v3861 = vadd.f32 %v3860, %v3849
    %v3862 = vadd.f32 %v3861, %v3850
    %v3863 = vadd.f32 %v3862, %v3851
    %v3864 = vadd.f32 %v3863, %v3852
    %v3865 = vadd.f32 %v3864, %v3853
    %v3866 = vadd.f32 %v3865, %v3854
    %v3867 = vadd.f32 %v3866, %v3855
    %v3868 = vadd.f32 %v3867, %v3856
    %v3869 = vadd.f32 %v3868, %v3857
    %v3870 = vadd.f32 %v3869, %v3858
    %v3871 = vrot.slane %v3870, 4
    %v3872 = vadd.f32 %v3870, %v3871
    %v3873 = vrot.slane %v3872, 2
    %v3874 = vadd.f32 %v3872, %v3873
    %v3875 = vrot.slane %v3874, 1
    %v3876 = vadd.f32 %v3874, %v3875
    %v3877 = vld [vmem:[#allocation3 + $0x220] sm:$0xff]
    %v3878 = vld [vmem:[#allocation3 + $0x228] sm:$0xff]
    %v3879 = vld [vmem:[#allocation3 + $0x230] sm:$0xff]
    %v3880 = vld [vmem:[#allocation3 + $0x238] sm:$0xff]
    %v3881 = vld [vmem:[#allocation3 + $0x240] sm:$0xff]
    %v3882 = vld [vmem:[#allocation3 + $0x248] sm:$0xff]
    %v3883 = vld [vmem:[#allocation3 + $0x250] sm:$0xff]
    %v3884 = vld [vmem:[#allocation3 + $0x258] sm:$0xff]
    %v3885 = vld [vmem:[#allocation3 + $0x260] sm:$0xff]
    %v3886 = vld [vmem:[#allocation3 + $0x268] sm:$0xff]
    %v3887 = vld [vmem:[#allocation3 + $0x270] sm:$0xff]
    %v3888 = vld [vmem:[#allocation3 + $0x278] sm:$0xff]
    %v3889 = vld [vmem:[#allocation3 + $0x280] sm:$0xff]
    %v3890 = vmul.f32 %v3877, %v3776
    %v3891 = vmul.f32 %v3878, %v3777
    %v3892 = vmul.f32 %v3879, %v3778
    %v3893 = vmul.f32 %v3880, %v3779
    %v3894 = vmul.f32 %v3881, %v3780
    %v3895 = vmul.f32 %v3882, %v3781
    %v3896 = vmul.f32 %v3883, %v3782
    %v3897 = vmul.f32 %v3884, %v3783
    %v3898 = vmul.f32 %v3885, %v3784
    %v3899 = vmul.f32 %v3886, %v3785
    %v3900 = vmul.f32 %v3887, %v3786
    %v3901 = vmul.f32 %v3888, %v3787
    %v3902 = vmul.f32 %v3889, %v3788
    %v3903 = vadd.f32 %v3890, %v3891
    %v3904 = vadd.f32 %v3903, %v3892
    %v3905 = vadd.f32 %v3904, %v3893
    %v3906 = vadd.f32 %v3905, %v3894
    %v3907 = vadd.f32 %v3906, %v3895
    %v3908 = vadd.f32 %v3907, %v3896
    %v3909 = vadd.f32 %v3908, %v3897
    %v3910 = vadd.f32 %v3909, %v3898
    %v3911 = vadd.f32 %v3910, %v3899
    %v3912 = vadd.f32 %v3911, %v3900
    %v3913 = vadd.f32 %v3912, %v3901
    %v3914 = vadd.f32 %v3913, %v3902
    %v3915 = vrot.slane %v3914, 4
    %v3916 = vadd.f32 %v3914, %v3915
    %v3917 = vrot.slane %v3916, 2
    %v3918 = vadd.f32 %v3916, %v3917
    %v3919 = vrot.slane %v3918, 1
    %v3920 = vadd.f32 %v3918, %v3919
    %v3921 = vld [vmem:[#allocation3 + $0x330] sm:$0xff]
    %v3922 = vld [vmem:[#allocation3 + $0x338] sm:$0xff]
    %v3923 = vld [vmem:[#allocation3 + $0x340] sm:$0xff]
    %v3924 = vld [vmem:[#allocation3 + $0x348] sm:$0xff]
    %v3925 = vld [vmem:[#allocation3 + $0x350] sm:$0xff]
    %v3926 = vld [vmem:[#allocation3 + $0x358] sm:$0xff]
    %v3927 = vld [vmem:[#allocation3 + $0x360] sm:$0xff]
    %v3928 = vld [vmem:[#allocation3 + $0x368] sm:$0xff]
    %v3929 = vld [vmem:[#allocation3 + $0x370] sm:$0xff]
    %v3930 = vld [vmem:[#allocation3 + $0x378] sm:$0xff]
    %v3931 = vld [vmem:[#allocation3 + $0x380] sm:$0xff]
    %v3932 = vld [vmem:[#allocation3 + $0x388] sm:$0xff]
    %v3933 = vld [vmem:[#allocation3 + $0x390] sm:$0xff]
    %v3934 = vmul.f32 %v3921, %v3776
    %v3935 = vmul.f32 %v3922, %v3777
    %v3936 = vmul.f32 %v3923, %v3778
    %v3937 = vmul.f32 %v3924, %v3779
    %v3938 = vmul.f32 %v3925, %v3780
    %v3939 = vmul.f32 %v3926, %v3781
    %v3940 = vmul.f32 %v3927, %v3782
    %v3941 = vmul.f32 %v3928, %v3783
    %v3942 = vmul.f32 %v3929, %v3784
    %v3943 = vmul.f32 %v3930, %v3785
    %v3944 = vmul.f32 %v3931, %v3786
    %v3945 = vmul.f32 %v3932, %v3787
    %v3946 = vmul.f32 %v3933, %v3788
    %v3947 = vadd.f32 %v3934, %v3935
    %v3948 = vadd.f32 %v3947, %v3936
    %v3949 = vadd.f32 %v3948, %v3937
    %v3950 = vadd.f32 %v3949, %v3938
    %v3951 = vadd.f32 %v3950, %v3939
    %v3952 = vadd.f32 %v3951, %v3940
    %v3953 = vadd.f32 %v3952, %v3941
    %v3954 = vadd.f32 %v3953, %v3942
    %v3955 = vadd.f32 %v3954, %v3943
    %v3956 = vadd.f32 %v3955, %v3944
    %v3957 = vadd.f32 %v3956, %v3945
    %v3958 = vadd.f32 %v3957, %v3946
    %v3959 = vrot.slane %v3958, 4
    %v3960 = vadd.f32 %v3958, %v3959
    %v3961 = vrot.slane %v3960, 2
    %v3962 = vadd.f32 %v3960, %v3961
    %v3963 = vrot.slane %v3962, 1
    %v3964 = vadd.f32 %v3962, %v3963
    %v3965 = vld [vmem:[#allocation3 + $0x440] sm:$0xff]
    %v3966 = vld [vmem:[#allocation3 + $0x448] sm:$0xff]
    %v3967 = vld [vmem:[#allocation3 + $0x450] sm:$0xff]
    %v3968 = vld [vmem:[#allocation3 + $0x458] sm:$0xff]
    %v3969 = vld [vmem:[#allocation3 + $0x460] sm:$0xff]
    %v3970 = vld [vmem:[#allocation3 + $0x468] sm:$0xff]
    %v3971 = vld [vmem:[#allocation3 + $0x470] sm:$0xff]
    %v3972 = vld [vmem:[#allocation3 + $0x478] sm:$0xff]
    %v3973 = vld [vmem:[#allocation3 + $0x480] sm:$0xff]
    %v3974 = vld [vmem:[#allocation3 + $0x488] sm:$0xff]
    %v3975 = vld [vmem:[#allocation3 + $0x490] sm:$0xff]
    %v3976 = vld [vmem:[#allocation3 + $0x498] sm:$0xff]
    %v3977 = vld [vmem:[#allocation3 + $0x4a0] sm:$0xff]
    %v3978 = vmul.f32 %v3965, %v3776
    %v3979 = vmul.f32 %v3966, %v3777
    %v3980 = vmul.f32 %v3967, %v3778
    %v3981 = vmul.f32 %v3968, %v3779
    %v3982 = vmul.f32 %v3969, %v3780
    %v3983 = vmul.f32 %v3970, %v3781
    %v3984 = vmul.f32 %v3971, %v3782
    %v3985 = vmul.f32 %v3972, %v3783
    %v3986 = vmul.f32 %v3973, %v3784
    %v3987 = vmul.f32 %v3974, %v3785
    %v3988 = vmul.f32 %v3975, %v3786
    %v3989 = vmul.f32 %v3976, %v3787
    %v3990 = vmul.f32 %v3977, %v3788
    %v3991 = vadd.f32 %v3978, %v3979
    %v3992 = vadd.f32 %v3991, %v3980
    %v3993 = vadd.f32 %v3992, %v3981
    %v3994 = vadd.f32 %v3993, %v3982
    %v3995 = vadd.f32 %v3994, %v3983
    %v3996 = vadd.f32 %v3995, %v3984
    %v3997 = vadd.f32 %v3996, %v3985
    %v3998 = vadd.f32 %v3997, %v3986
    %v3999 = vadd.f32 %v3998, %v3987
    %v4000 = vadd.f32 %v3999, %v3988
    %v4001 = vadd.f32 %v4000, %v3989
    %v4002 = vadd.f32 %v4001, %v3990
    %v4003 = vrot.slane %v4002, 4
    %v4004 = vadd.f32 %v4002, %v4003
    %v4005 = vrot.slane %v4004, 2
    %v4006 = vadd.f32 %v4004, %v4005
    %v4007 = vrot.slane %v4006, 1
    %v4008 = vadd.f32 %v4006, %v4007
    %v4009 = vld [vmem:[#allocation3 + $0x550] sm:$0xff]
    %v4010 = vld [vmem:[#allocation3 + $0x558] sm:$0xff]
    %v4011 = vld [vmem:[#allocation3 + $0x560] sm:$0xff]
    %v4012 = vld [vmem:[#allocation3 + $0x568] sm:$0xff]
    %v4013 = vld [vmem:[#allocation3 + $0x570] sm:$0xff]
    %v4014 = vld [vmem:[#allocation3 + $0x578] sm:$0xff]
    %v4015 = vld [vmem:[#allocation3 + $0x580] sm:$0xff]
    %v4016 = vld [vmem:[#allocation3 + $0x588] sm:$0xff]
    %v4017 = vld [vmem:[#allocation3 + $0x590] sm:$0xff]
    %v4018 = vld [vmem:[#allocation3 + $0x598] sm:$0xff]
    %v4019 = vld [vmem:[#allocation3 + $0x5a0] sm:$0xff]
    %v4020 = vld [vmem:[#allocation3 + $0x5a8] sm:$0xff]
    %v4021 = vld [vmem:[#allocation3 + $0x5b0] sm:$0xff]
    %v4022 = vmul.f32 %v4009, %v3776
    %v4023 = vmul.f32 %v4010, %v3777
    %v4024 = vmul.f32 %v4011, %v3778
    %v4025 = vmul.f32 %v4012, %v3779
    %v4026 = vmul.f32 %v4013, %v3780
    %v4027 = vmul.f32 %v4014, %v3781
    %v4028 = vmul.f32 %v4015, %v3782
    %v4029 = vmul.f32 %v4016, %v3783
    %v4030 = vmul.f32 %v4017, %v3784
    %v4031 = vmul.f32 %v4018, %v3785
    %v4032 = vmul.f32 %v4019, %v3786
    %v4033 = vmul.f32 %v4020, %v3787
    %v4034 = vmul.f32 %v4021, %v3788
    %v4035 = vadd.f32 %v4022, %v4023
    %v4036 = vadd.f32 %v4035, %v4024
    %v4037 = vadd.f32 %v4036, %v4025
    %v4038 = vadd.f32 %v4037, %v4026
    %v4039 = vadd.f32 %v4038, %v4027
    %v4040 = vadd.f32 %v4039, %v4028
    %v4041 = vadd.f32 %v4040, %v4029
    %v4042 = vadd.f32 %v4041, %v4030
    %v4043 = vadd.f32 %v4042, %v4031
    %v4044 = vadd.f32 %v4043, %v4032
    %v4045 = vadd.f32 %v4044, %v4033
    %v4046 = vadd.f32 %v4045, %v4034
    %v4047 = vrot.slane %v4046, 4
    %v4048 = vadd.f32 %v4046, %v4047
    %v4049 = vrot.slane %v4048, 2
    %v4050 = vadd.f32 %v4048, %v4049
    %v4051 = vrot.slane %v4050, 1
    %v4052 = vadd.f32 %v4050, %v4051
    %v4053 = vld [vmem:[#allocation3 + $0x660] sm:$0xff]
    %v4054 = vld [vmem:[#allocation3 + $0x668] sm:$0xff]
    %v4055 = vld [vmem:[#allocation3 + $0x670] sm:$0xff]
    %v4056 = vld [vmem:[#allocation3 + $0x678] sm:$0xff]
    %v4057 = vld [vmem:[#allocation3 + $0x680] sm:$0xff]
    %v4058 = vld [vmem:[#allocation3 + $0x688] sm:$0xff]
    %v4059 = vld [vmem:[#allocation3 + $0x690] sm:$0xff]
    %v4060 = vld [vmem:[#allocation3 + $0x698] sm:$0xff]
    %v4061 = vld [vmem:[#allocation3 + $0x6a0] sm:$0xff]
    %v4062 = vld [vmem:[#allocation3 + $0x6a8] sm:$0xff]
    %v4063 = vld [vmem:[#allocation3 + $0x6b0] sm:$0xff]
    %v4064 = vld [vmem:[#allocation3 + $0x6b8] sm:$0xff]
    %v4065 = vld [vmem:[#allocation3 + $0x6c0] sm:$0xff]
    %v4066 = vmul.f32 %v4053, %v3776
    %v4067 = vmul.f32 %v4054, %v3777
    %v4068 = vmul.f32 %v4055, %v3778
    %v4069 = vmul.f32 %v4056, %v3779
    %v4070 = vmul.f32 %v4057, %v3780
    %v4071 = vmul.f32 %v4058, %v3781
    %v4072 = vmul.f32 %v4059, %v3782
    %v4073 = vmul.f32 %v4060, %v3783
    %v4074 = vmul.f32 %v4061, %v3784
    %v4075 = vmul.f32 %v4062, %v3785
    %v4076 = vmul.f32 %v4063, %v3786
    %v4077 = vmul.f32 %v4064, %v3787
    %v4078 = vmul.f32 %v4065, %v3788
    %v4079 = vadd.f32 %v4066, %v4067
    %v4080 = vadd.f32 %v4079, %v4068
    %v4081 = vadd.f32 %v4080, %v4069
    %v4082 = vadd.f32 %v4081, %v4070
    %v4083 = vadd.f32 %v4082, %v4071
    %v4084 = vadd.f32 %v4083, %v4072
    %v4085 = vadd.f32 %v4084, %v4073
    %v4086 = vadd.f32 %v4085, %v4074
    %v4087 = vadd.f32 %v4086, %v4075
    %v4088 = vadd.f32 %v4087, %v4076
    %v4089 = vadd.f32 %v4088, %v4077
    %v4090 = vadd.f32 %v4089, %v4078
    %v4091 = vrot.slane %v4090, 4
    %v4092 = vadd.f32 %v4090, %v4091
    %v4093 = vrot.slane %v4092, 2
    %v4094 = vadd.f32 %v4092, %v4093
    %v4095 = vrot.slane %v4094, 1
    %v4096 = vadd.f32 %v4094, %v4095
    %v4097 = vld [vmem:[#allocation3 + $0x770] sm:$0xff]
    %v4098 = vld [vmem:[#allocation3 + $0x778] sm:$0xff]
    %v4099 = vld [vmem:[#allocation3 + $0x780] sm:$0xff]
    %v4100 = vld [vmem:[#allocation3 + $0x788] sm:$0xff]
    %v4101 = vld [vmem:[#allocation3 + $0x790] sm:$0xff]
    %v4102 = vld [vmem:[#allocation3 + $0x798] sm:$0xff]
    %v4103 = vld [vmem:[#allocation3 + $0x7a0] sm:$0xff]
    %v4104 = vld [vmem:[#allocation3 + $0x7a8] sm:$0xff]
    %v4105 = vld [vmem:[#allocation3 + $0x7b0] sm:$0xff]
    %v4106 = vld [vmem:[#allocation3 + $0x7b8] sm:$0xff]
    %v4107 = vld [vmem:[#allocation3 + $0x7c0] sm:$0xff]
    %v4108 = vld [vmem:[#allocation3 + $0x7c8] sm:$0xff]
    %v4109 = vld [vmem:[#allocation3 + $0x7d0] sm:$0xff]
    %v4110 = vmul.f32 %v4097, %v3776
    %v4111 = vmul.f32 %v4098, %v3777
    %v4112 = vmul.f32 %v4099, %v3778
    %v4113 = vmul.f32 %v4100, %v3779
    %v4114 = vmul.f32 %v4101, %v3780
    %v4115 = vmul.f32 %v4102, %v3781
    %v4116 = vmul.f32 %v4103, %v3782
    %v4117 = vmul.f32 %v4104, %v3783
    %v4118 = vmul.f32 %v4105, %v3784
    %v4119 = vmul.f32 %v4106, %v3785
    %v4120 = vmul.f32 %v4107, %v3786
    %v4121 = vmul.f32 %v4108, %v3787
    %v4122 = vmul.f32 %v4109, %v3788
    %v4123 = vadd.f32 %v4110, %v4111
    %v4124 = vadd.f32 %v4123, %v4112
    %v4125 = vadd.f32 %v4124, %v4113
    %v4126 = vadd.f32 %v4125, %v4114
    %v4127 = vadd.f32 %v4126, %v4115
    %v4128 = vadd.f32 %v4127, %v4116
    %v4129 = vadd.f32 %v4128, %v4117
    %v4130 = vadd.f32 %v4129, %v4118
    %v4131 = vadd.f32 %v4130, %v4119
    %v4132 = vadd.f32 %v4131, %v4120
    %v4133 = vadd.f32 %v4132, %v4121
    %v4134 = vadd.f32 %v4133, %v4122
    %v4135 = vrot.slane %v4134, 4
    %v4136 = vadd.f32 %v4134, %v4135
    %v4137 = vrot.slane %v4136, 2
    %v4138 = vadd.f32 %v4136, %v4137
    %v4139 = vrot.slane %v4138, 1
    %v4140 = vadd.f32 %v4138, %v4139
    %vm4141 = vcmask 1040384
    %v4142 = vsel %vm4141, %v3832, %v3876
    %vm4143 = vcmask 1041408
    %v4144 = vsel %vm4143, %v4142, %v3920
    %vm4145 = vcmask 1042432
    %v4146 = vsel %vm4145, %v4144, %v3964
    %vm4147 = vcmask 1043456
    %v4148 = vsel %vm4147, %v4146, %v4008
    %vm4149 = vcmask 1044480
    %v4150 = vsel %vm4149, %v4148, %v4052
    %vm4151 = vcmask 1045504
    %v4152 = vsel %vm4151, %v4150, %v4096
    %vm4153 = vcmask 1046528
    %v4154 = vsel %vm4153, %v4152, %v4140
    %s4155 = scalar_lea.vmem [#allocation2], %s3774
    %4156 = vst [vmem:[%s4155] sm:$0xff] %v4154
  $region53: #{yin_pitch.1} parent=0 // loop_footer
    %s3772 = sadd.s32 1, %s3768
  $region54: #{yin_pitch.1} parent=0 // loop_footer_branch
    %3767 = sbr.rel target = $region50
  $region55: #{yin_pitch.1} parent=0 // loop_exit
    _
  loop: start=0, step=1, limit=3
  $region56: #{yin_pitch.1} parent=0 // loop_pre_header
    _
  $region57: #{yin_pitch.1} parent=0 // loop_header
    %s4158 = sphi 0, %s4162
    %p4159 = scmp.ge.s32.totalorder %s4158, 3
  $region58: #{yin_pitch.1} parent=0 // loop_header_branch
    %4161 = sbr.rel (%p4159) target = $region62
  $region59: #{yin_pitch.1} parent=0 // loop_body
    %s4163 = sadd.s32 %s4158, 24
    %s4164 = smul.u32 %s4163, 8
    %s4165 = scalar_lea.vmem %s0, %s4164
    %v4166 = vld [vmem:[%s4165] sm:$0xff]
    %v4167 = vld [vmem:[%s4165 + $0x8] sm:$0xff]
    %v4168 = vld [vmem:[%s4165 + $0x10] sm:$0xff]
    %v4169 = vld [vmem:[%s4165 + $0x18] sm:$0xff]
    %v4170 = vld [vmem:[%s4165 + $0x20] sm:$0xff]
    %v4171 = vld [vmem:[%s4165 + $0x28] sm:$0xff]
    %v4172 = vld [vmem:[%s4165 + $0x30] sm:$0xff]
    %v4173 = vld [vmem:[%s4165 + $0x38] sm:$0xff]
    %v4174 = vld [vmem:[%s4165 + $0x40] sm:$0xff]
    %v4175 = vld [vmem:[#allocation3] sm:$0xff]
    %v4176 = vld [vmem:[#allocation3 + $0x8] sm:$0xff]
    %v4177 = vld [vmem:[#allocation3 + $0x10] sm:$0xff]
    %v4178 = vld [vmem:[#allocation3 + $0x18] sm:$0xff]
    %v4179 = vld [vmem:[#allocation3 + $0x20] sm:$0xff]
    %v4180 = vld [vmem:[#allocation3 + $0x28] sm:$0xff]
    %v4181 = vld [vmem:[#allocation3 + $0x30] sm:$0xff]
    %v4182 = vld [vmem:[#allocation3 + $0x38] sm:$0xff]
    %v4183 = vld [vmem:[#allocation3 + $0x40] sm:$0xff]
    %v4184 = vmul.f32 %v4175, %v4166
    %v4185 = vmul.f32 %v4176, %v4167
    %v4186 = vmul.f32 %v4177, %v4168
    %v4187 = vmul.f32 %v4178, %v4169
    %v4188 = vmul.f32 %v4179, %v4170
    %v4189 = vmul.f32 %v4180, %v4171
    %v4190 = vmul.f32 %v4181, %v4172
    %v4191 = vmul.f32 %v4182, %v4173
    %v4192 = vmul.f32 %v4183, %v4174
    %v4193 = vadd.f32 %v4184, %v4185
    %v4194 = vadd.f32 %v4193, %v4186
    %v4195 = vadd.f32 %v4194, %v4187
    %v4196 = vadd.f32 %v4195, %v4188
    %v4197 = vadd.f32 %v4196, %v4189
    %v4198 = vadd.f32 %v4197, %v4190
    %v4199 = vadd.f32 %v4198, %v4191
    %v4200 = vadd.f32 %v4199, %v4192
    %v4201 = vrot.slane %v4200, 4
    %v4202 = vadd.f32 %v4200, %v4201
    %v4203 = vrot.slane %v4202, 2
    %v4204 = vadd.f32 %v4202, %v4203
    %v4205 = vrot.slane %v4204, 1
    %v4206 = vadd.f32 %v4204, %v4205
    %v4207 = vld [vmem:[#allocation3 + $0x110] sm:$0xff]
    %v4208 = vld [vmem:[#allocation3 + $0x118] sm:$0xff]
    %v4209 = vld [vmem:[#allocation3 + $0x120] sm:$0xff]
    %v4210 = vld [vmem:[#allocation3 + $0x128] sm:$0xff]
    %v4211 = vld [vmem:[#allocation3 + $0x130] sm:$0xff]
    %v4212 = vld [vmem:[#allocation3 + $0x138] sm:$0xff]
    %v4213 = vld [vmem:[#allocation3 + $0x140] sm:$0xff]
    %v4214 = vld [vmem:[#allocation3 + $0x148] sm:$0xff]
    %v4215 = vld [vmem:[#allocation3 + $0x150] sm:$0xff]
    %v4216 = vmul.f32 %v4207, %v4166
    %v4217 = vmul.f32 %v4208, %v4167
    %v4218 = vmul.f32 %v4209, %v4168
    %v4219 = vmul.f32 %v4210, %v4169
    %v4220 = vmul.f32 %v4211, %v4170
    %v4221 = vmul.f32 %v4212, %v4171
    %v4222 = vmul.f32 %v4213, %v4172
    %v4223 = vmul.f32 %v4214, %v4173
    %v4224 = vmul.f32 %v4215, %v4174
    %v4225 = vadd.f32 %v4216, %v4217
    %v4226 = vadd.f32 %v4225, %v4218
    %v4227 = vadd.f32 %v4226, %v4219
    %v4228 = vadd.f32 %v4227, %v4220
    %v4229 = vadd.f32 %v4228, %v4221
    %v4230 = vadd.f32 %v4229, %v4222
    %v4231 = vadd.f32 %v4230, %v4223
    %v4232 = vadd.f32 %v4231, %v4224
    %v4233 = vrot.slane %v4232, 4
    %v4234 = vadd.f32 %v4232, %v4233
    %v4235 = vrot.slane %v4234, 2
    %v4236 = vadd.f32 %v4234, %v4235
    %v4237 = vrot.slane %v4236, 1
    %v4238 = vadd.f32 %v4236, %v4237
    %v4239 = vld [vmem:[#allocation3 + $0x220] sm:$0xff]
    %v4240 = vld [vmem:[#allocation3 + $0x228] sm:$0xff]
    %v4241 = vld [vmem:[#allocation3 + $0x230] sm:$0xff]
    %v4242 = vld [vmem:[#allocation3 + $0x238] sm:$0xff]
    %v4243 = vld [vmem:[#allocation3 + $0x240] sm:$0xff]
    %v4244 = vld [vmem:[#allocation3 + $0x248] sm:$0xff]
    %v4245 = vld [vmem:[#allocation3 + $0x250] sm:$0xff]
    %v4246 = vld [vmem:[#allocation3 + $0x258] sm:$0xff]
    %v4247 = vld [vmem:[#allocation3 + $0x260] sm:$0xff]
    %v4248 = vmul.f32 %v4239, %v4166
    %v4249 = vmul.f32 %v4240, %v4167
    %v4250 = vmul.f32 %v4241, %v4168
    %v4251 = vmul.f32 %v4242, %v4169
    %v4252 = vmul.f32 %v4243, %v4170
    %v4253 = vmul.f32 %v4244, %v4171
    %v4254 = vmul.f32 %v4245, %v4172
    %v4255 = vmul.f32 %v4246, %v4173
    %v4256 = vmul.f32 %v4247, %v4174
    %v4257 = vadd.f32 %v4248, %v4249
    %v4258 = vadd.f32 %v4257, %v4250
    %v4259 = vadd.f32 %v4258, %v4251
    %v4260 = vadd.f32 %v4259, %v4252
    %v4261 = vadd.f32 %v4260, %v4253
    %v4262 = vadd.f32 %v4261, %v4254
    %v4263 = vadd.f32 %v4262, %v4255
    %v4264 = vadd.f32 %v4263, %v4256
    %v4265 = vrot.slane %v4264, 4
    %v4266 = vadd.f32 %v4264, %v4265
    %v4267 = vrot.slane %v4266, 2
    %v4268 = vadd.f32 %v4266, %v4267
    %v4269 = vrot.slane %v4268, 1
    %v4270 = vadd.f32 %v4268, %v4269
    %v4271 = vld [vmem:[#allocation3 + $0x330] sm:$0xff]
    %v4272 = vld [vmem:[#allocation3 + $0x338] sm:$0xff]
    %v4273 = vld [vmem:[#allocation3 + $0x340] sm:$0xff]
    %v4274 = vld [vmem:[#allocation3 + $0x348] sm:$0xff]
    %v4275 = vld [vmem:[#allocation3 + $0x350] sm:$0xff]
    %v4276 = vld [vmem:[#allocation3 + $0x358] sm:$0xff]
    %v4277 = vld [vmem:[#allocation3 + $0x360] sm:$0xff]
    %v4278 = vld [vmem:[#allocation3 + $0x368] sm:$0xff]
    %v4279 = vld [vmem:[#allocation3 + $0x370] sm:$0xff]
    %v4280 = vmul.f32 %v4271, %v4166
    %v4281 = vmul.f32 %v4272, %v4167
    %v4282 = vmul.f32 %v4273, %v4168
    %v4283 = vmul.f32 %v4274, %v4169
    %v4284 = vmul.f32 %v4275, %v4170
    %v4285 = vmul.f32 %v4276, %v4171
    %v4286 = vmul.f32 %v4277, %v4172
    %v4287 = vmul.f32 %v4278, %v4173
    %v4288 = vmul.f32 %v4279, %v4174
    %v4289 = vadd.f32 %v4280, %v4281
    %v4290 = vadd.f32 %v4289, %v4282
    %v4291 = vadd.f32 %v4290, %v4283
    %v4292 = vadd.f32 %v4291, %v4284
    %v4293 = vadd.f32 %v4292, %v4285
    %v4294 = vadd.f32 %v4293, %v4286
    %v4295 = vadd.f32 %v4294, %v4287
    %v4296 = vadd.f32 %v4295, %v4288
    %v4297 = vrot.slane %v4296, 4
    %v4298 = vadd.f32 %v4296, %v4297
    %v4299 = vrot.slane %v4298, 2
    %v4300 = vadd.f32 %v4298, %v4299
    %v4301 = vrot.slane %v4300, 1
    %v4302 = vadd.f32 %v4300, %v4301
    %v4303 = vld [vmem:[#allocation3 + $0x440] sm:$0xff]
    %v4304 = vld [vmem:[#allocation3 + $0x448] sm:$0xff]
    %v4305 = vld [vmem:[#allocation3 + $0x450] sm:$0xff]
    %v4306 = vld [vmem:[#allocation3 + $0x458] sm:$0xff]
    %v4307 = vld [vmem:[#allocation3 + $0x460] sm:$0xff]
    %v4308 = vld [vmem:[#allocation3 + $0x468] sm:$0xff]
    %v4309 = vld [vmem:[#allocation3 + $0x470] sm:$0xff]
    %v4310 = vld [vmem:[#allocation3 + $0x478] sm:$0xff]
    %v4311 = vld [vmem:[#allocation3 + $0x480] sm:$0xff]
    %v4312 = vmul.f32 %v4303, %v4166
    %v4313 = vmul.f32 %v4304, %v4167
    %v4314 = vmul.f32 %v4305, %v4168
    %v4315 = vmul.f32 %v4306, %v4169
    %v4316 = vmul.f32 %v4307, %v4170
    %v4317 = vmul.f32 %v4308, %v4171
    %v4318 = vmul.f32 %v4309, %v4172
    %v4319 = vmul.f32 %v4310, %v4173
    %v4320 = vmul.f32 %v4311, %v4174
    %v4321 = vadd.f32 %v4312, %v4313
    %v4322 = vadd.f32 %v4321, %v4314
    %v4323 = vadd.f32 %v4322, %v4315
    %v4324 = vadd.f32 %v4323, %v4316
    %v4325 = vadd.f32 %v4324, %v4317
    %v4326 = vadd.f32 %v4325, %v4318
    %v4327 = vadd.f32 %v4326, %v4319
    %v4328 = vadd.f32 %v4327, %v4320
    %v4329 = vrot.slane %v4328, 4
    %v4330 = vadd.f32 %v4328, %v4329
    %v4331 = vrot.slane %v4330, 2
    %v4332 = vadd.f32 %v4330, %v4331
    %v4333 = vrot.slane %v4332, 1
    %v4334 = vadd.f32 %v4332, %v4333
    %v4335 = vld [vmem:[#allocation3 + $0x550] sm:$0xff]
    %v4336 = vld [vmem:[#allocation3 + $0x558] sm:$0xff]
    %v4337 = vld [vmem:[#allocation3 + $0x560] sm:$0xff]
    %v4338 = vld [vmem:[#allocation3 + $0x568] sm:$0xff]
    %v4339 = vld [vmem:[#allocation3 + $0x570] sm:$0xff]
    %v4340 = vld [vmem:[#allocation3 + $0x578] sm:$0xff]
    %v4341 = vld [vmem:[#allocation3 + $0x580] sm:$0xff]
    %v4342 = vld [vmem:[#allocation3 + $0x588] sm:$0xff]
    %v4343 = vld [vmem:[#allocation3 + $0x590] sm:$0xff]
    %v4344 = vmul.f32 %v4335, %v4166
    %v4345 = vmul.f32 %v4336, %v4167
    %v4346 = vmul.f32 %v4337, %v4168
    %v4347 = vmul.f32 %v4338, %v4169
    %v4348 = vmul.f32 %v4339, %v4170
    %v4349 = vmul.f32 %v4340, %v4171
    %v4350 = vmul.f32 %v4341, %v4172
    %v4351 = vmul.f32 %v4342, %v4173
    %v4352 = vmul.f32 %v4343, %v4174
    %v4353 = vadd.f32 %v4344, %v4345
    %v4354 = vadd.f32 %v4353, %v4346
    %v4355 = vadd.f32 %v4354, %v4347
    %v4356 = vadd.f32 %v4355, %v4348
    %v4357 = vadd.f32 %v4356, %v4349
    %v4358 = vadd.f32 %v4357, %v4350
    %v4359 = vadd.f32 %v4358, %v4351
    %v4360 = vadd.f32 %v4359, %v4352
    %v4361 = vrot.slane %v4360, 4
    %v4362 = vadd.f32 %v4360, %v4361
    %v4363 = vrot.slane %v4362, 2
    %v4364 = vadd.f32 %v4362, %v4363
    %v4365 = vrot.slane %v4364, 1
    %v4366 = vadd.f32 %v4364, %v4365
    %v4367 = vld [vmem:[#allocation3 + $0x660] sm:$0xff]
    %v4368 = vld [vmem:[#allocation3 + $0x668] sm:$0xff]
    %v4369 = vld [vmem:[#allocation3 + $0x670] sm:$0xff]
    %v4370 = vld [vmem:[#allocation3 + $0x678] sm:$0xff]
    %v4371 = vld [vmem:[#allocation3 + $0x680] sm:$0xff]
    %v4372 = vld [vmem:[#allocation3 + $0x688] sm:$0xff]
    %v4373 = vld [vmem:[#allocation3 + $0x690] sm:$0xff]
    %v4374 = vld [vmem:[#allocation3 + $0x698] sm:$0xff]
    %v4375 = vld [vmem:[#allocation3 + $0x6a0] sm:$0xff]
    %v4376 = vmul.f32 %v4367, %v4166
    %v4377 = vmul.f32 %v4368, %v4167
    %v4378 = vmul.f32 %v4369, %v4168
    %v4379 = vmul.f32 %v4370, %v4169
    %v4380 = vmul.f32 %v4371, %v4170
    %v4381 = vmul.f32 %v4372, %v4171
    %v4382 = vmul.f32 %v4373, %v4172
    %v4383 = vmul.f32 %v4374, %v4173
    %v4384 = vmul.f32 %v4375, %v4174
    %v4385 = vadd.f32 %v4376, %v4377
    %v4386 = vadd.f32 %v4385, %v4378
    %v4387 = vadd.f32 %v4386, %v4379
    %v4388 = vadd.f32 %v4387, %v4380
    %v4389 = vadd.f32 %v4388, %v4381
    %v4390 = vadd.f32 %v4389, %v4382
    %v4391 = vadd.f32 %v4390, %v4383
    %v4392 = vadd.f32 %v4391, %v4384
    %v4393 = vrot.slane %v4392, 4
    %v4394 = vadd.f32 %v4392, %v4393
    %v4395 = vrot.slane %v4394, 2
    %v4396 = vadd.f32 %v4394, %v4395
    %v4397 = vrot.slane %v4396, 1
    %v4398 = vadd.f32 %v4396, %v4397
    %v4399 = vld [vmem:[#allocation3 + $0x770] sm:$0xff]
    %v4400 = vld [vmem:[#allocation3 + $0x778] sm:$0xff]
    %v4401 = vld [vmem:[#allocation3 + $0x780] sm:$0xff]
    %v4402 = vld [vmem:[#allocation3 + $0x788] sm:$0xff]
    %v4403 = vld [vmem:[#allocation3 + $0x790] sm:$0xff]
    %v4404 = vld [vmem:[#allocation3 + $0x798] sm:$0xff]
    %v4405 = vld [vmem:[#allocation3 + $0x7a0] sm:$0xff]
    %v4406 = vld [vmem:[#allocation3 + $0x7a8] sm:$0xff]
    %v4407 = vld [vmem:[#allocation3 + $0x7b0] sm:$0xff]
    %v4408 = vmul.f32 %v4399, %v4166
    %v4409 = vmul.f32 %v4400, %v4167
    %v4410 = vmul.f32 %v4401, %v4168
    %v4411 = vmul.f32 %v4402, %v4169
    %v4412 = vmul.f32 %v4403, %v4170
    %v4413 = vmul.f32 %v4404, %v4171
    %v4414 = vmul.f32 %v4405, %v4172
    %v4415 = vmul.f32 %v4406, %v4173
    %v4416 = vmul.f32 %v4407, %v4174
    %v4417 = vadd.f32 %v4408, %v4409
    %v4418 = vadd.f32 %v4417, %v4410
    %v4419 = vadd.f32 %v4418, %v4411
    %v4420 = vadd.f32 %v4419, %v4412
    %v4421 = vadd.f32 %v4420, %v4413
    %v4422 = vadd.f32 %v4421, %v4414
    %v4423 = vadd.f32 %v4422, %v4415
    %v4424 = vadd.f32 %v4423, %v4416
    %v4425 = vrot.slane %v4424, 4
    %v4426 = vadd.f32 %v4424, %v4425
    %v4427 = vrot.slane %v4426, 2
    %v4428 = vadd.f32 %v4426, %v4427
    %v4429 = vrot.slane %v4428, 1
    %v4430 = vadd.f32 %v4428, %v4429
    %vm4431 = vcmask 1040384
    %v4432 = vsel %vm4431, %v4206, %v4238
    %vm4433 = vcmask 1041408
    %v4434 = vsel %vm4433, %v4432, %v4270
    %vm4435 = vcmask 1042432
    %v4436 = vsel %vm4435, %v4434, %v4302
    %vm4437 = vcmask 1043456
    %v4438 = vsel %vm4437, %v4436, %v4334
    %vm4439 = vcmask 1044480
    %v4440 = vsel %vm4439, %v4438, %v4366
    %vm4441 = vcmask 1045504
    %v4442 = vsel %vm4441, %v4440, %v4398
    %vm4443 = vcmask 1046528
    %v4444 = vsel %vm4443, %v4442, %v4430
    %s4445 = scalar_lea.vmem [#allocation2], %s4164
    %4446 = vst [vmem:[%s4445] sm:$0xff] %v4444
  $region60: #{yin_pitch.1} parent=0 // loop_footer
    %s4162 = sadd.s32 1, %s4158
  $region61: #{yin_pitch.1} parent=0 // loop_footer_branch
    %4157 = sbr.rel target = $region57
  $region62: #{yin_pitch.1} parent=0 // loop_exit
    _
  %v4447 = vld [vmem:[%s0] sm:$0xff]
  %v4448 = vld [vmem:[%s0 + $0x8] sm:$0xff]
  %v4449 = vld [vmem:[%s0 + $0x10] sm:$0xff]
  %v4450 = vld [vmem:[%s0 + $0x18] sm:$0xff]
  %v4451 = vld [vmem:[%s0 + $0x20] sm:$0xff]
  %v4452 = vld [vmem:[%s0 + $0x28] sm:$0xff]
  %v4453 = vld [vmem:[%s0 + $0x30] sm:$0xff]
  %v4454 = vld [vmem:[%s0 + $0x38] sm:$0xff]
  %v4455 = vld [vmem:[%s0 + $0x40] sm:$0xff]
  %v4456 = vld [vmem:[%s0 + $0x48] sm:$0xff]
  %v4457 = vld [vmem:[%s0 + $0x50] sm:$0xff]
  %v4458 = vld [vmem:[%s0 + $0x58] sm:$0xff]
  %v4459 = vld [vmem:[%s0 + $0x60] sm:$0xff]
  %v4460 = vld [vmem:[%s0 + $0x68] sm:$0xff]
  %v4461 = vld [vmem:[%s0 + $0x70] sm:$0xff]
  %v4462 = vld [vmem:[%s0 + $0x78] sm:$0xff]
  %v4463 = vld [vmem:[%s0 + $0x80] sm:$0xff]
  %v4464 = vld [vmem:[%s0 + $0x88] sm:$0xff]
  %v4465 = vld [vmem:[%s0 + $0x90] sm:$0xff]
  %v4466 = vld [vmem:[%s0 + $0x98] sm:$0xff]
  %v4467 = vld [vmem:[%s0 + $0xa0] sm:$0xff]
  %v4468 = vld [vmem:[%s0 + $0xa8] sm:$0xff]
  %v4469 = vld [vmem:[%s0 + $0xb0] sm:$0xff]
  %v4470 = vld [vmem:[%s0 + $0xb8] sm:$0xff]
  %v4471 = vld [vmem:[%s0 + $0xc0] sm:$0xff]
  %v4472 = vld [vmem:[%s0 + $0xc8] sm:$0xff]
  %v4473 = vld [vmem:[%s0 + $0xd0] sm:$0xff]
  %v4474 = vld [vmem:[%s0 + $0xd8] sm:$0xff]
  %v4475 = vld [vmem:[%s0 + $0xe0] sm:$0xff]
  %v4476 = vld [vmem:[%s0 + $0xe8] sm:$0xff]
  %v4477 = vld [vmem:[%s0 + $0xf0] sm:$0xff]
  %v4478 = vld [vmem:[%s0 + $0xf8] sm:$0xff]
  %v4479 = vld [vmem:[%s0 + $0x100] sm:$0xff]
  %v4480 = vmul.f32 %v4447, %v4447
  %v4481 = vmul.f32 %v4448, %v4448
  %v4482 = vmul.f32 %v4449, %v4449
  %v4483 = vmul.f32 %v4450, %v4450
  %v4484 = vmul.f32 %v4451, %v4451
  %v4485 = vmul.f32 %v4452, %v4452
  %v4486 = vmul.f32 %v4453, %v4453
  %v4487 = vmul.f32 %v4454, %v4454
  %v4488 = vmul.f32 %v4455, %v4455
  %v4489 = vmul.f32 %v4456, %v4456
  %v4490 = vmul.f32 %v4457, %v4457
  %v4491 = vmul.f32 %v4458, %v4458
  %v4492 = vmul.f32 %v4459, %v4459
  %v4493 = vmul.f32 %v4460, %v4460
  %v4494 = vmul.f32 %v4461, %v4461
  %v4495 = vmul.f32 %v4462, %v4462
  %v4496 = vmul.f32 %v4463, %v4463
  %v4497 = vmul.f32 %v4464, %v4464
  %v4498 = vmul.f32 %v4465, %v4465
  %v4499 = vmul.f32 %v4466, %v4466
  %v4500 = vmul.f32 %v4467, %v4467
  %v4501 = vmul.f32 %v4468, %v4468
  %v4502 = vmul.f32 %v4469, %v4469
  %v4503 = vmul.f32 %v4470, %v4470
  %v4504 = vmul.f32 %v4471, %v4471
  %v4505 = vmul.f32 %v4472, %v4472
  %v4506 = vmul.f32 %v4473, %v4473
  %v4507 = vmul.f32 %v4474, %v4474
  %v4508 = vmul.f32 %v4475, %v4475
  %v4509 = vmul.f32 %v4476, %v4476
  %v4510 = vmul.f32 %v4477, %v4477
  %v4511 = vmul.f32 %v4478, %v4478
  %v4512 = vmul.f32 %v4479, %v4479
  %v4513 = vld [vmem:[#allocation2] sm:$0xff]
  %v4514 = vld [vmem:[#allocation2 + $0x8] sm:$0xff]
  %v4515 = vld [vmem:[#allocation2 + $0x10] sm:$0xff]
  %v4516 = vld [vmem:[#allocation2 + $0x18] sm:$0xff]
  %v4517 = vld [vmem:[#allocation2 + $0x20] sm:$0xff]
  %v4518 = vld [vmem:[#allocation2 + $0x28] sm:$0xff]
  %v4519 = vld [vmem:[#allocation2 + $0x30] sm:$0xff]
  %v4520 = vld [vmem:[#allocation2 + $0x38] sm:$0xff]
  %v4521 = vld [vmem:[#allocation2 + $0x40] sm:$0xff]
  %v4522 = vld [vmem:[#allocation2 + $0x48] sm:$0xff]
  %v4523 = vld [vmem:[#allocation2 + $0x50] sm:$0xff]
  %v4524 = vld [vmem:[#allocation2 + $0x58] sm:$0xff]
  %v4525 = vld [vmem:[#allocation2 + $0x60] sm:$0xff]
  %v4526 = vld [vmem:[#allocation2 + $0x68] sm:$0xff]
  %v4527 = vld [vmem:[#allocation2 + $0x70] sm:$0xff]
  %v4528 = vld [vmem:[#allocation2 + $0x78] sm:$0xff]
  %v4529 = vld [vmem:[#allocation2 + $0x80] sm:$0xff]
  %v4530 = vld [vmem:[#allocation2 + $0x88] sm:$0xff]
  %v4531 = vld [vmem:[#allocation2 + $0x90] sm:$0xff]
  %v4532 = vld [vmem:[#allocation2 + $0x98] sm:$0xff]
  %v4533 = vld [vmem:[#allocation2 + $0xa0] sm:$0xff]
  %v4534 = vld [vmem:[#allocation2 + $0xa8] sm:$0xff]
  %v4535 = vld [vmem:[#allocation2 + $0xb0] sm:$0xff]
  %v4536 = vld [vmem:[#allocation2 + $0xb8] sm:$0xff]
  %v4537 = vld [vmem:[#allocation2 + $0xc0] sm:$0xff]
  %v4538 = vld [vmem:[#allocation2 + $0xc8] sm:$0xff]
  %v4539 = vld [vmem:[#allocation2 + $0xd0] sm:$0x1f]
  %v4540 = vld [vmem:[%s1] sm:$0xff]
  %v4541 = vld [vmem:[%s1 + $0x8] sm:$0xff]
  %v4542 = vld [vmem:[%s1 + $0x10] sm:$0xff]
  %v4543 = vld [vmem:[%s1 + $0x18] sm:$0xff]
  %v4544 = vld [vmem:[%s1 + $0x20] sm:$0xff]
  %v4545 = vld [vmem:[%s1 + $0x28] sm:$0xff]
  %v4546 = vld [vmem:[%s1 + $0x30] sm:$0xff]
  %v4547 = vld [vmem:[%s1 + $0x38] sm:$0xff]
  %v4548 = vld [vmem:[%s1 + $0x40] sm:$0xff]
  %v4549 = vld [vmem:[%s1 + $0x48] sm:$0xff]
  %v4550 = vld [vmem:[%s1 + $0x50] sm:$0xff]
  %v4551 = vld [vmem:[%s1 + $0x58] sm:$0xff]
  %v4552 = vld [vmem:[%s1 + $0x60] sm:$0xff]
  %v4553 = vld [vmem:[%s1 + $0x68] sm:$0xff]
  %v4554 = vld [vmem:[%s1 + $0x70] sm:$0xff]
  %v4555 = vld [vmem:[%s1 + $0x78] sm:$0xff]
  %v4556 = vld [vmem:[%s1 + $0x80] sm:$0xff]
  %v4557 = vld [vmem:[%s1 + $0x88] sm:$0xff]
  %v4558 = vld [vmem:[%s1 + $0x90] sm:$0xff]
  %v4559 = vld [vmem:[%s1 + $0x98] sm:$0xff]
  %v4560 = vld [vmem:[%s1 + $0xa0] sm:$0xff]
  %v4561 = vld [vmem:[%s1 + $0xa8] sm:$0xff]
  %v4562 = vld [vmem:[%s1 + $0xb0] sm:$0xff]
  %v4563 = vld [vmem:[%s1 + $0xb8] sm:$0xff]
  %v4564 = vld [vmem:[%s1 + $0xc0] sm:$0xff]
  %v4565 = vld [vmem:[%s1 + $0xc8] sm:$0xff]
  %v4566 = vld [vmem:[%s1 + $0xd0] sm:$0xff]
  %v4567 = vld [vmem:[%s1 + $0xd8] sm:$0xff]
  %v4568 = vld [vmem:[%s1 + $0xe0] sm:$0xff]
  %v4569 = vld [vmem:[%s1 + $0xe8] sm:$0xff]
  %v4570 = vld [vmem:[%s1 + $0xf0] sm:$0xff]
  %v4571 = vld [vmem:[%s1 + $0xf8] sm:$0xff]
  %v4572 = vld [vmem:[%s1 + $0x100] sm:$0xff]
  %v4573 = vld [vmem:[%s1 + $0x108] sm:$0xff]
  %v4574 = vld [vmem:[%s1 + $0x110] sm:$0xff]
  %v4575 = vld [vmem:[%s1 + $0x118] sm:$0xff]
  %v4576 = vld [vmem:[%s1 + $0x120] sm:$0xff]
  %v4577 = vld [vmem:[%s1 + $0x128] sm:$0xff]
  %v4578 = vld [vmem:[%s1 + $0x130] sm:$0xff]
  %v4579 = vld [vmem:[%s1 + $0x138] sm:$0xff]
  %v4580 = vld [vmem:[%s1 + $0x140] sm:$0xff]
  %v4581 = vld [vmem:[%s1 + $0x148] sm:$0xff]
  %v4582 = vld [vmem:[%s1 + $0x150] sm:$0xff]
  %v4583 = vld [vmem:[%s1 + $0x158] sm:$0xff]
  %v4584 = vld [vmem:[%s1 + $0x160] sm:$0xff]
  %v4585 = vld [vmem:[%s1 + $0x168] sm:$0xff]
  %v4586 = vld [vmem:[%s1 + $0x170] sm:$0xff]
  %v4587 = vld [vmem:[%s1 + $0x178] sm:$0xff]
  %v4588 = vld [vmem:[%s1 + $0x180] sm:$0xff]
  %v4589 = vld [vmem:[%s1 + $0x188] sm:$0xff]
  %v4590 = vld [vmem:[%s1 + $0x190] sm:$0xff]
  %v4591 = vld [vmem:[%s1 + $0x198] sm:$0xff]
  %v4592 = vld [vmem:[%s1 + $0x1a0] sm:$0xff]
  %v4593 = vld [vmem:[%s1 + $0x1a8] sm:$0xff]
  %v4594 = vld [vmem:[%s1 + $0x1b0] sm:$0xff]
  %v4595 = vld [vmem:[%s1 + $0x1b8] sm:$0xff]
  %v4596 = vld [vmem:[%s1 + $0x1c0] sm:$0xff]
  %v4597 = vld [vmem:[%s1 + $0x1c8] sm:$0xff]
  %v4598 = vld [vmem:[%s1 + $0x1d0] sm:$0xff]
  %v4599 = vld [vmem:[%s1 + $0x1d8] sm:$0xff]
  %v4600 = vld [vmem:[%s1 + $0x1e0] sm:$0xff]
  %v4601 = vld [vmem:[%s1 + $0x1e8] sm:$0xff]
  %v4602 = vld [vmem:[%s1 + $0x1f0] sm:$0xff]
  %v4603 = vld [vmem:[%s1 + $0x1f8] sm:$0xff]
  %v4604 = vld [vmem:[%s1 + $0x200] sm:$0xff]
  %v4605 = vld [vmem:[%s1 + $0x208] sm:$0xff]
  %v4606 = vld [vmem:[%s1 + $0x210] sm:$0xff]
  %v4607 = vld [vmem:[%s1 + $0x218] sm:$0xff]
  %v4608 = vld [vmem:[%s1 + $0x220] sm:$0xff]
  %v4609 = vld [vmem:[%s1 + $0x228] sm:$0xff]
  %v4610 = vld [vmem:[%s1 + $0x230] sm:$0xff]
  %v4611 = vld [vmem:[%s1 + $0x238] sm:$0xff]
  %v4612 = vld [vmem:[%s1 + $0x240] sm:$0xff]
  %v4613 = vld [vmem:[%s1 + $0x248] sm:$0xff]
  %v4614 = vld [vmem:[%s1 + $0x250] sm:$0xff]
  %v4615 = vld [vmem:[%s1 + $0x258] sm:$0xff]
  %v4616 = vld [vmem:[%s1 + $0x260] sm:$0xff]
  %v4617 = vld [vmem:[%s1 + $0x268] sm:$0xff]
  %v4618 = vld [vmem:[%s1 + $0x270] sm:$0x1f]
  %v4619 = vld [vmem:[%s1 + $0x278] sm:$0x1f]
  %v4620 = vld [vmem:[%s1 + $0x280] sm:$0x1f]
  %vm4621 = vcmask 64512
  %v4623 = vsel %vm4621, %v4542, 0
  %v4626 = vsel %vm4621, %v4545, 0
  %v4629 = vsel %vm4621, %v4548, 0
  %v4632 = vsel %vm4621, %v4551, 0
  %v4635 = vsel %vm4621, %v4554, 0
  %v4638 = vsel %vm4621, %v4557, 0
  %v4641 = vsel %vm4621, %v4560, 0
  %v4644 = vsel %vm4621, %v4563, 0
  %v4647 = vsel %vm4621, %v4566, 0
  %v4650 = vsel %vm4621, %v4569, 0
  %v4653 = vsel %vm4621, %v4572, 0
  %v4656 = vsel %vm4621, %v4575, 0
  %v4659 = vsel %vm4621, %v4578, 0
  %v4662 = vsel %vm4621, %v4581, 0
  %v4665 = vsel %vm4621, %v4584, 0
  %v4668 = vsel %vm4621, %v4587, 0
  %v4671 = vsel %vm4621, %v4590, 0
  %v4674 = vsel %vm4621, %v4593, 0
  %v4677 = vsel %vm4621, %v4596, 0
  %v4680 = vsel %vm4621, %v4599, 0
  %v4683 = vsel %vm4621, %v4602, 0
  %v4686 = vsel %vm4621, %v4605, 0
  %v4689 = vsel %vm4621, %v4608, 0
  %v4692 = vsel %vm4621, %v4611, 0
  %v4695 = vsel %vm4621, %v4614, 0
  %v4698 = vsel %vm4621, %v4617, 0
  %v4701 = vsel %vm4621, %v4620, 0
  %4703 = vmatpush.msra.mxu0 %v4495
  %4704 = vmatpush.msra.mxu0 %v4494
  %4705 = vmatpush.msra.mxu0 %v4493
  %4706 = vmatpush.msra.mxu0 %v4492
  %4707 = vmatpush.msra.mxu0 %v4491
  %4708 = vmatpush.msra.mxu0 %v4490
  %4709 = vmatpush.msra.mxu0 %v4489
  %4710 = vmatpush.msra.mxu0 %v4488
  %4711 = vmatpush.msra.mxu0 %v4487
  %4712 = vmatpush.msra.mxu0 %v4486
  %4713 = vmatpush.msra.mxu0 %v4485
  %4714 = vmatpush.msra.mxu0 %v4484
  %4715 = vmatpush.msra.mxu0 %v4483
  %4716 = vmatpush.msra.mxu0 %v4482
  %4717 = vmatpush.msra.mxu0 %v4481
  %4718 = vmatpush.msra.mxu0 %v4480
  %4719 = vmatmul.f32.gmra.mxu0 %v4540
  %v4720 = vpop.f32.mrf.mxu0
  %v4721 = vadd.f32 0.0, %v4720
  %4722 = vmatmul.f32.gmra.mxu0 %v4543
  %v4723 = vpop.f32.mrf.mxu0
  %v4724 = vadd.f32 0.0, %v4723
  %4725 = vmatmul.f32.gmra.mxu0 %v4546
  %v4726 = vpop.f32.mrf.mxu0
  %v4727 = vadd.f32 0.0, %v4726
  %4728 = vmatmul.f32.gmra.mxu0 %v4549
  %v4729 = vpop.f32.mrf.mxu0
  %v4730 = vadd.f32 0.0, %v4729
  %4731 = vmatmul.f32.gmra.mxu0 %v4552
  %v4732 = vpop.f32.mrf.mxu0
  %v4733 = vadd.f32 0.0, %v4732
  %4734 = vmatmul.f32.gmra.mxu0 %v4555
  %v4735 = vpop.f32.mrf.mxu0
  %v4736 = vadd.f32 0.0, %v4735
  %4737 = vmatmul.f32.gmra.mxu0 %v4558
  %v4738 = vpop.f32.mrf.mxu0
  %v4739 = vadd.f32 0.0, %v4738
  %4740 = vmatmul.f32.gmra.mxu0 %v4561
  %v4741 = vpop.f32.mrf.mxu0
  %v4742 = vadd.f32 0.0, %v4741
  %4743 = vmatmul.f32.gmra.mxu0 %v4564
  %v4744 = vpop.f32.mrf.mxu0
  %v4745 = vadd.f32 0.0, %v4744
  %4746 = vmatmul.f32.gmra.mxu0 %v4567
  %v4747 = vpop.f32.mrf.mxu0
  %v4748 = vadd.f32 0.0, %v4747
  %4749 = vmatmul.f32.gmra.mxu0 %v4570
  %v4750 = vpop.f32.mrf.mxu0
  %v4751 = vadd.f32 0.0, %v4750
  %4752 = vmatmul.f32.gmra.mxu0 %v4573
  %v4753 = vpop.f32.mrf.mxu0
  %v4754 = vadd.f32 0.0, %v4753
  %4755 = vmatmul.f32.gmra.mxu0 %v4576
  %v4756 = vpop.f32.mrf.mxu0
  %v4757 = vadd.f32 0.0, %v4756
  %4758 = vmatmul.f32.gmra.mxu0 %v4579
  %v4759 = vpop.f32.mrf.mxu0
  %v4760 = vadd.f32 0.0, %v4759
  %4761 = vmatmul.f32.gmra.mxu0 %v4582
  %v4762 = vpop.f32.mrf.mxu0
  %v4763 = vadd.f32 0.0, %v4762
  %4764 = vmatmul.f32.gmra.mxu0 %v4585
  %v4765 = vpop.f32.mrf.mxu0
  %v4766 = vadd.f32 0.0, %v4765
  %4767 = vmatmul.f32.gmra.mxu0 %v4588
  %v4768 = vpop.f32.mrf.mxu0
  %v4769 = vadd.f32 0.0, %v4768
  %4770 = vmatmul.f32.gmra.mxu0 %v4591
  %v4771 = vpop.f32.mrf.mxu0
  %v4772 = vadd.f32 0.0, %v4771
  %4773 = vmatmul.f32.gmra.mxu0 %v4594
  %v4774 = vpop.f32.mrf.mxu0
  %v4775 = vadd.f32 0.0, %v4774
  %4776 = vmatmul.f32.gmra.mxu0 %v4597
  %v4777 = vpop.f32.mrf.mxu0
  %v4778 = vadd.f32 0.0, %v4777
  %4779 = vmatmul.f32.gmra.mxu0 %v4600
  %v4780 = vpop.f32.mrf.mxu0
  %v4781 = vadd.f32 0.0, %v4780
  %4782 = vmatmul.f32.gmra.mxu0 %v4603
  %v4783 = vpop.f32.mrf.mxu0
  %v4784 = vadd.f32 0.0, %v4783
  %4785 = vmatmul.f32.gmra.mxu0 %v4606
  %v4786 = vpop.f32.mrf.mxu0
  %v4787 = vadd.f32 0.0, %v4786
  %4788 = vmatmul.f32.gmra.mxu0 %v4609
  %v4789 = vpop.f32.mrf.mxu0
  %v4790 = vadd.f32 0.0, %v4789
  %4791 = vmatmul.f32.gmra.mxu0 %v4612
  %v4792 = vpop.f32.mrf.mxu0
  %v4793 = vadd.f32 0.0, %v4792
  %4794 = vmatmul.f32.gmra.mxu0 %v4615
  %v4795 = vpop.f32.mrf.mxu0
  %v4796 = vadd.f32 0.0, %v4795
  %4797 = vmatmul.f32.gmra.mxu0 %v4618
  %v4798 = vpop.f32.mrf.mxu0
  %v4799 = vadd.f32 0.0, %v4798
  %4800 = vdwg.mxu0
  %4801 = vmatpush.msra.mxu0 %v4511
  %4802 = vmatpush.msra.mxu0 %v4510
  %4803 = vmatpush.msra.mxu0 %v4509
  %4804 = vmatpush.msra.mxu0 %v4508
  %4805 = vmatpush.msra.mxu0 %v4507
  %4806 = vmatpush.msra.mxu0 %v4506
  %4807 = vmatpush.msra.mxu0 %v4505
  %4808 = vmatpush.msra.mxu0 %v4504
  %4809 = vmatpush.msra.mxu0 %v4503
  %4810 = vmatpush.msra.mxu0 %v4502
  %4811 = vmatpush.msra.mxu0 %v4501
  %4812 = vmatpush.msra.mxu0 %v4500
  %4813 = vmatpush.msra.mxu0 %v4499
  %4814 = vmatpush.msra.mxu0 %v4498
  %4815 = vmatpush.msra.mxu0 %v4497
  %4816 = vmatpush.msra.mxu0 %v4496
  %4817 = vmatmul.f32.gmra.mxu0 %v4541
  %v4818 = vpop.f32.mrf.mxu0
  %v4819 = vadd.f32 %v4721, %v4818
  %4820 = vmatmul.f32.gmra.mxu0 %v4544
  %v4821 = vpop.f32.mrf.mxu0
  %v4822 = vadd.f32 %v4724, %v4821
  %4823 = vmatmul.f32.gmra.mxu0 %v4547
  %v4824 = vpop.f32.mrf.mxu0
  %v4825 = vadd.f32 %v4727, %v4824
  %4826 = vmatmul.f32.gmra.mxu0 %v4550
  %v4827 = vpop.f32.mrf.mxu0
  %v4828 = vadd.f32 %v4730, %v4827
  %4829 = vmatmul.f32.gmra.mxu0 %v4553
  %v4830 = vpop.f32.mrf.mxu0
  %v4831 = vadd.f32 %v4733, %v4830
  %4832 = vmatmul.f32.gmra.mxu0 %v4556
  %v4833 = vpop.f32.mrf.mxu0
  %v4834 = vadd.f32 %v4736, %v4833
  %4835 = vmatmul.f32.gmra.mxu0 %v4559
  %v4836 = vpop.f32.mrf.mxu0
  %v4837 = vadd.f32 %v4739, %v4836
  %4838 = vmatmul.f32.gmra.mxu0 %v4562
  %v4839 = vpop.f32.mrf.mxu0
  %v4840 = vadd.f32 %v4742, %v4839
  %4841 = vmatmul.f32.gmra.mxu0 %v4565
  %v4842 = vpop.f32.mrf.mxu0
  %v4843 = vadd.f32 %v4745, %v4842
  %4844 = vmatmul.f32.gmra.mxu0 %v4568
  %v4845 = vpop.f32.mrf.mxu0
  %v4846 = vadd.f32 %v4748, %v4845
  %4847 = vmatmul.f32.gmra.mxu0 %v4571
  %v4848 = vpop.f32.mrf.mxu0
  %v4849 = vadd.f32 %v4751, %v4848
  %4850 = vmatmul.f32.gmra.mxu0 %v4574
  %v4851 = vpop.f32.mrf.mxu0
  %v4852 = vadd.f32 %v4754, %v4851
  %4853 = vmatmul.f32.gmra.mxu0 %v4577
  %v4854 = vpop.f32.mrf.mxu0
  %v4855 = vadd.f32 %v4757, %v4854
  %4856 = vmatmul.f32.gmra.mxu0 %v4580
  %v4857 = vpop.f32.mrf.mxu0
  %v4858 = vadd.f32 %v4760, %v4857
  %4859 = vmatmul.f32.gmra.mxu0 %v4583
  %v4860 = vpop.f32.mrf.mxu0
  %v4861 = vadd.f32 %v4763, %v4860
  %4862 = vmatmul.f32.gmra.mxu0 %v4586
  %v4863 = vpop.f32.mrf.mxu0
  %v4864 = vadd.f32 %v4766, %v4863
  %4865 = vmatmul.f32.gmra.mxu0 %v4589
  %v4866 = vpop.f32.mrf.mxu0
  %v4867 = vadd.f32 %v4769, %v4866
  %4868 = vmatmul.f32.gmra.mxu0 %v4592
  %v4869 = vpop.f32.mrf.mxu0
  %v4870 = vadd.f32 %v4772, %v4869
  %4871 = vmatmul.f32.gmra.mxu0 %v4595
  %v4872 = vpop.f32.mrf.mxu0
  %v4873 = vadd.f32 %v4775, %v4872
  %4874 = vmatmul.f32.gmra.mxu0 %v4598
  %v4875 = vpop.f32.mrf.mxu0
  %v4876 = vadd.f32 %v4778, %v4875
  %4877 = vmatmul.f32.gmra.mxu0 %v4601
  %v4878 = vpop.f32.mrf.mxu0
  %v4879 = vadd.f32 %v4781, %v4878
  %4880 = vmatmul.f32.gmra.mxu0 %v4604
  %v4881 = vpop.f32.mrf.mxu0
  %v4882 = vadd.f32 %v4784, %v4881
  %4883 = vmatmul.f32.gmra.mxu0 %v4607
  %v4884 = vpop.f32.mrf.mxu0
  %v4885 = vadd.f32 %v4787, %v4884
  %4886 = vmatmul.f32.gmra.mxu0 %v4610
  %v4887 = vpop.f32.mrf.mxu0
  %v4888 = vadd.f32 %v4790, %v4887
  %4889 = vmatmul.f32.gmra.mxu0 %v4613
  %v4890 = vpop.f32.mrf.mxu0
  %v4891 = vadd.f32 %v4793, %v4890
  %4892 = vmatmul.f32.gmra.mxu0 %v4616
  %v4893 = vpop.f32.mrf.mxu0
  %v4894 = vadd.f32 %v4796, %v4893
  %4895 = vmatmul.f32.gmra.mxu0 %v4619
  %v4896 = vpop.f32.mrf.mxu0
  %v4897 = vadd.f32 %v4799, %v4896
  %4898 = vdwg.mxu0
  %4899 = vmatpush.msra.mxu0 0.0
  %4900 = vmatpush.msra.mxu0 0.0
  %4901 = vmatpush.msra.mxu0 0.0
  %4902 = vmatpush.msra.mxu0 0.0
  %4903 = vmatpush.msra.mxu0 0.0
  %4904 = vmatpush.msra.mxu0 0.0
  %4905 = vmatpush.msra.mxu0 0.0
  %4906 = vmatpush.msra.mxu0 0.0
  %4907 = vmatpush.msra.mxu0 0.0
  %4908 = vmatpush.msra.mxu0 0.0
  %4909 = vmatpush.msra.mxu0 0.0
  %4910 = vmatpush.msra.mxu0 0.0
  %4911 = vmatpush.msra.mxu0 0.0
  %4912 = vmatpush.msra.mxu0 0.0
  %4913 = vmatpush.msra.mxu0 0.0
  %4914 = vmatpush.msra.mxu0 %v4512
  %4915 = vmatmul.f32.gmra.mxu0 %v4623
  %v4916 = vpop.f32.mrf.mxu0
  %v4917 = vadd.f32 %v4819, %v4916
  %4918 = vmatmul.f32.gmra.mxu0 %v4626
  %v4919 = vpop.f32.mrf.mxu0
  %v4920 = vadd.f32 %v4822, %v4919
  %4921 = vmatmul.f32.gmra.mxu0 %v4629
  %v4922 = vpop.f32.mrf.mxu0
  %v4923 = vadd.f32 %v4825, %v4922
  %4924 = vmatmul.f32.gmra.mxu0 %v4632
  %v4925 = vpop.f32.mrf.mxu0
  %v4926 = vadd.f32 %v4828, %v4925
  %4927 = vmatmul.f32.gmra.mxu0 %v4635
  %v4928 = vpop.f32.mrf.mxu0
  %v4929 = vadd.f32 %v4831, %v4928
  %4930 = vmatmul.f32.gmra.mxu0 %v4638
  %v4931 = vpop.f32.mrf.mxu0
  %v4932 = vadd.f32 %v4834, %v4931
  %4933 = vmatmul.f32.gmra.mxu0 %v4641
  %v4934 = vpop.f32.mrf.mxu0
  %v4935 = vadd.f32 %v4837, %v4934
  %4936 = vmatmul.f32.gmra.mxu0 %v4644
  %v4937 = vpop.f32.mrf.mxu0
  %v4938 = vadd.f32 %v4840, %v4937
  %4939 = vmatmul.f32.gmra.mxu0 %v4647
  %v4940 = vpop.f32.mrf.mxu0
  %v4941 = vadd.f32 %v4843, %v4940
  %4942 = vmatmul.f32.gmra.mxu0 %v4650
  %v4943 = vpop.f32.mrf.mxu0
  %v4944 = vadd.f32 %v4846, %v4943
  %4945 = vmatmul.f32.gmra.mxu0 %v4653
  %v4946 = vpop.f32.mrf.mxu0
  %v4947 = vadd.f32 %v4849, %v4946
  %4948 = vmatmul.f32.gmra.mxu0 %v4656
  %v4949 = vpop.f32.mrf.mxu0
  %v4950 = vadd.f32 %v4852, %v4949
  %4951 = vmatmul.f32.gmra.mxu0 %v4659
  %v4952 = vpop.f32.mrf.mxu0
  %v4953 = vadd.f32 %v4855, %v4952
  %4954 = vmatmul.f32.gmra.mxu0 %v4662
  %v4955 = vpop.f32.mrf.mxu0
  %v4956 = vadd.f32 %v4858, %v4955
  %4957 = vmatmul.f32.gmra.mxu0 %v4665
  %v4958 = vpop.f32.mrf.mxu0
  %v4959 = vadd.f32 %v4861, %v4958
  %4960 = vmatmul.f32.gmra.mxu0 %v4668
  %v4961 = vpop.f32.mrf.mxu0
  %v4962 = vadd.f32 %v4864, %v4961
  %4963 = vmatmul.f32.gmra.mxu0 %v4671
  %v4964 = vpop.f32.mrf.mxu0
  %v4965 = vadd.f32 %v4867, %v4964
  %4966 = vmatmul.f32.gmra.mxu0 %v4674
  %v4967 = vpop.f32.mrf.mxu0
  %v4968 = vadd.f32 %v4870, %v4967
  %4969 = vmatmul.f32.gmra.mxu0 %v4677
  %v4970 = vpop.f32.mrf.mxu0
  %v4971 = vadd.f32 %v4873, %v4970
  %4972 = vmatmul.f32.gmra.mxu0 %v4680
  %v4973 = vpop.f32.mrf.mxu0
  %v4974 = vadd.f32 %v4876, %v4973
  %4975 = vmatmul.f32.gmra.mxu0 %v4683
  %v4976 = vpop.f32.mrf.mxu0
  %v4977 = vadd.f32 %v4879, %v4976
  %4978 = vmatmul.f32.gmra.mxu0 %v4686
  %v4979 = vpop.f32.mrf.mxu0
  %v4980 = vadd.f32 %v4882, %v4979
  %4981 = vmatmul.f32.gmra.mxu0 %v4689
  %v4982 = vpop.f32.mrf.mxu0
  %v4983 = vadd.f32 %v4885, %v4982
  %4984 = vmatmul.f32.gmra.mxu0 %v4692
  %v4985 = vpop.f32.mrf.mxu0
  %v4986 = vadd.f32 %v4888, %v4985
  %4987 = vmatmul.f32.gmra.mxu0 %v4695
  %v4988 = vpop.f32.mrf.mxu0
  %v4989 = vadd.f32 %v4891, %v4988
  %4990 = vmatmul.f32.gmra.mxu0 %v4698
  %v4991 = vpop.f32.mrf.mxu0
  %v4992 = vadd.f32 %v4894, %v4991
  %4993 = vmatmul.f32.gmra.mxu0 %v4701
  %v4994 = vpop.f32.mrf.mxu0
  %v4995 = vadd.f32 %v4897, %v4994
  %4996 = vdwg.mxu0
  %v4997 = vmul.f32 %v4513, 2.0
  %v4998 = vmul.f32 %v4514, 2.0
  %v4999 = vmul.f32 %v4515, 2.0
  %v5000 = vmul.f32 %v4516, 2.0
  %v5001 = vmul.f32 %v4517, 2.0
  %v5002 = vmul.f32 %v4518, 2.0
  %v5003 = vmul.f32 %v4519, 2.0
  %v5004 = vmul.f32 %v4520, 2.0
  %v5005 = vmul.f32 %v4521, 2.0
  %v5006 = vmul.f32 %v4522, 2.0
  %v5007 = vmul.f32 %v4523, 2.0
  %v5008 = vmul.f32 %v4524, 2.0
  %v5009 = vmul.f32 %v4525, 2.0
  %v5010 = vmul.f32 %v4526, 2.0
  %v5011 = vmul.f32 %v4527, 2.0
  %v5012 = vmul.f32 %v4528, 2.0
  %v5013 = vmul.f32 %v4529, 2.0
  %v5014 = vmul.f32 %v4530, 2.0
  %v5015 = vmul.f32 %v4531, 2.0
  %v5016 = vmul.f32 %v4532, 2.0
  %v5017 = vmul.f32 %v4533, 2.0
  %v5018 = vmul.f32 %v4534, 2.0
  %v5019 = vmul.f32 %v4535, 2.0
  %v5020 = vmul.f32 %v4536, 2.0
  %v5021 = vmul.f32 %v4537, 2.0
  %v5022 = vmul.f32 %v4538, 2.0
  %v5023 = vmul.f32 %v4539, 2.0
  %v5024 = vsub.f32 %v4917, %v4997
  %v5025 = vsub.f32 %v4920, %v4998
  %v5026 = vsub.f32 %v4923, %v4999
  %v5027 = vsub.f32 %v4926, %v5000
  %v5028 = vsub.f32 %v4929, %v5001
  %v5029 = vsub.f32 %v4932, %v5002
  %v5030 = vsub.f32 %v4935, %v5003
  %v5031 = vsub.f32 %v4938, %v5004
  %v5032 = vsub.f32 %v4941, %v5005
  %v5033 = vsub.f32 %v4944, %v5006
  %v5034 = vsub.f32 %v4947, %v5007
  %v5035 = vsub.f32 %v4950, %v5008
  %v5036 = vsub.f32 %v4953, %v5009
  %v5037 = vsub.f32 %v4956, %v5010
  %v5038 = vsub.f32 %v4959, %v5011
  %v5039 = vsub.f32 %v4962, %v5012
  %v5040 = vsub.f32 %v4965, %v5013
  %v5041 = vsub.f32 %v4968, %v5014
  %v5042 = vsub.f32 %v4971, %v5015
  %v5043 = vsub.f32 %v4974, %v5016
  %v5044 = vsub.f32 %v4977, %v5017
  %v5045 = vsub.f32 %v4980, %v5018
  %v5046 = vsub.f32 %v4983, %v5019
  %v5047 = vsub.f32 %v4986, %v5020
  %v5048 = vsub.f32 %v4989, %v5021
  %v5049 = vsub.f32 %v4992, %v5022
  %v5050 = vsub.f32 %v4995, %v5023
  %v5051 = vld [vmem:[%s2] sm:$0xff]
  %v5052 = vld [vmem:[%s2 + $0x8] sm:$0xff]
  %v5053 = vld [vmem:[%s2 + $0x10] sm:$0xff]
  %v5054 = vld [vmem:[%s2 + $0x18] sm:$0xff]
  %v5055 = vld [vmem:[%s2 + $0x20] sm:$0xff]
  %v5056 = vld [vmem:[%s2 + $0x28] sm:$0xff]
  %v5057 = vld [vmem:[%s2 + $0x30] sm:$0xff]
  %v5058 = vld [vmem:[%s2 + $0x38] sm:$0xff]
  %v5059 = vld [vmem:[%s2 + $0x40] sm:$0xff]
  %v5060 = vld [vmem:[%s2 + $0x48] sm:$0xff]
  %v5061 = vld [vmem:[%s2 + $0x50] sm:$0xff]
  %v5062 = vld [vmem:[%s2 + $0x58] sm:$0xff]
  %v5063 = vld [vmem:[%s2 + $0x60] sm:$0xff]
  %v5064 = vld [vmem:[%s2 + $0x68] sm:$0xff]
  %v5065 = vld [vmem:[%s2 + $0x70] sm:$0xff]
  %v5066 = vld [vmem:[%s2 + $0x78] sm:$0xff]
  %v5067 = vld [vmem:[%s2 + $0x80] sm:$0xff]
  %v5068 = vld [vmem:[%s2 + $0x88] sm:$0xff]
  %v5069 = vld [vmem:[%s2 + $0x90] sm:$0xff]
  %v5070 = vld [vmem:[%s2 + $0x98] sm:$0xff]
  %v5071 = vld [vmem:[%s2 + $0xa0] sm:$0xff]
  %v5072 = vld [vmem:[%s2 + $0xa8] sm:$0xff]
  %v5073 = vld [vmem:[%s2 + $0xb0] sm:$0xff]
  %v5074 = vld [vmem:[%s2 + $0xb8] sm:$0xff]
  %v5075 = vld [vmem:[%s2 + $0xc0] sm:$0xff]
  %v5076 = vld [vmem:[%s2 + $0xc8] sm:$0xff]
  %v5077 = vld [vmem:[%s2 + $0xd0] sm:$0xff]
  %v5078 = vld [vmem:[%s2 + $0xd8] sm:$0xff]
  %v5079 = vld [vmem:[%s2 + $0xe0] sm:$0xff]
  %v5080 = vld [vmem:[%s2 + $0xe8] sm:$0xff]
  %v5081 = vld [vmem:[%s2 + $0xf0] sm:$0xff]
  %v5082 = vld [vmem:[%s2 + $0xf8] sm:$0xff]
  %v5083 = vld [vmem:[%s2 + $0x100] sm:$0xff]
  %v5084 = vld [vmem:[%s2 + $0x108] sm:$0xff]
  %v5085 = vld [vmem:[%s2 + $0x110] sm:$0xff]
  %v5086 = vld [vmem:[%s2 + $0x118] sm:$0xff]
  %v5087 = vld [vmem:[%s2 + $0x120] sm:$0xff]
  %v5088 = vld [vmem:[%s2 + $0x128] sm:$0xff]
  %v5089 = vld [vmem:[%s2 + $0x130] sm:$0xff]
  %v5090 = vld [vmem:[%s2 + $0x138] sm:$0xff]
  %v5091 = vld [vmem:[%s2 + $0x140] sm:$0xff]
  %v5092 = vld [vmem:[%s2 + $0x148] sm:$0xff]
  %v5093 = vld [vmem:[%s2 + $0x150] sm:$0xff]
  %v5094 = vld [vmem:[%s2 + $0x158] sm:$0xff]
  %v5095 = vld [vmem:[%s2 + $0x160] sm:$0xff]
  %v5096 = vld [vmem:[%s2 + $0x168] sm:$0xff]
  %v5097 = vld [vmem:[%s2 + $0x170] sm:$0xff]
  %v5098 = vld [vmem:[%s2 + $0x178] sm:$0xff]
  %v5099 = vld [vmem:[%s2 + $0x180] sm:$0xff]
  %v5100 = vld [vmem:[%s2 + $0x188] sm:$0xff]
  %v5101 = vld [vmem:[%s2 + $0x190] sm:$0xff]
  %v5102 = vld [vmem:[%s2 + $0x198] sm:$0xff]
  %v5103 = vld [vmem:[%s2 + $0x1a0] sm:$0xf]
  %v5104 = vld [vmem:[%s2 + $0x1a8] sm:$0xf]
  %v5105 = vlaneseq
  %v5106 = vshrl.u32 %v5105, 7
  %v5107 = vadd.s32 %v5106, 16
  %v5108 = vadd.s32 %v5106, 24
  %v5109 = vadd.s32 %v5106, 32
  %v5110 = vadd.s32 %v5106, 40
  %v5111 = vadd.s32 %v5106, 48
  %v5112 = vadd.s32 %v5106, 56
  %v5113 = vadd.s32 %v5106, 64
  %v5114 = vadd.s32 %v5106, 72
  %v5115 = vadd.s32 %v5106, 80
  %v5116 = vadd.s32 %v5106, 88
  %v5117 = vadd.s32 %v5106, 96
  %v5118 = vadd.s32 %v5106, 104
  %v5119 = vadd.s32 %v5106, 112
  %v5120 = vadd.s32 %v5106, 120
  %v5121 = vadd.s32 %v5106, 128
  %v5122 = vadd.s32 %v5106, 136
  %v5123 = vadd.s32 %v5106, 144
  %v5124 = vadd.s32 %v5106, 152
  %v5125 = vadd.s32 %v5106, 160
  %v5126 = vadd.s32 %v5106, 168
  %v5127 = vadd.s32 %v5106, 176
  %v5128 = vadd.s32 %v5106, 184
  %v5129 = vadd.s32 %v5106, 192
  %v5130 = vadd.s32 %v5106, 200
  %v5131 = vadd.s32 %v5106, 208
  %v5132 = vadd.s32 %v5107, 1
  %v5133 = vadd.s32 %v5108, 1
  %v5134 = vadd.s32 %v5109, 1
  %v5135 = vadd.s32 %v5110, 1
  %v5136 = vadd.s32 %v5111, 1
  %v5137 = vadd.s32 %v5112, 1
  %v5138 = vadd.s32 %v5113, 1
  %v5139 = vadd.s32 %v5114, 1
  %v5140 = vadd.s32 %v5115, 1
  %v5141 = vadd.s32 %v5116, 1
  %v5142 = vadd.s32 %v5117, 1
  %v5143 = vadd.s32 %v5118, 1
  %v5144 = vadd.s32 %v5119, 1
  %v5145 = vadd.s32 %v5120, 1
  %v5146 = vadd.s32 %v5121, 1
  %v5147 = vadd.s32 %v5122, 1
  %v5148 = vadd.s32 %v5123, 1
  %v5149 = vadd.s32 %v5124, 1
  %v5150 = vadd.s32 %v5125, 1
  %v5151 = vadd.s32 %v5126, 1
  %v5152 = vadd.s32 %v5127, 1
  %v5153 = vadd.s32 %v5128, 1
  %v5154 = vadd.s32 %v5129, 1
  %v5155 = vadd.s32 %v5130, 1
  %v5156 = vadd.s32 %v5131, 1
  %v5157 = vcvt.s32.f32 %v5132
  %v5158 = vcvt.s32.f32 %v5133
  %v5159 = vcvt.s32.f32 %v5134
  %v5160 = vcvt.s32.f32 %v5135
  %v5161 = vcvt.s32.f32 %v5136
  %v5162 = vcvt.s32.f32 %v5137
  %v5163 = vcvt.s32.f32 %v5138
  %v5164 = vcvt.s32.f32 %v5139
  %v5165 = vcvt.s32.f32 %v5140
  %v5166 = vcvt.s32.f32 %v5141
  %v5167 = vcvt.s32.f32 %v5142
  %v5168 = vcvt.s32.f32 %v5143
  %v5169 = vcvt.s32.f32 %v5144
  %v5170 = vcvt.s32.f32 %v5145
  %v5171 = vcvt.s32.f32 %v5146
  %v5172 = vcvt.s32.f32 %v5147
  %v5173 = vcvt.s32.f32 %v5148
  %v5174 = vcvt.s32.f32 %v5149
  %v5175 = vcvt.s32.f32 %v5150
  %v5176 = vcvt.s32.f32 %v5151
  %v5177 = vcvt.s32.f32 %v5152
  %v5178 = vcvt.s32.f32 %v5153
  %v5179 = vcvt.s32.f32 %v5154
  %v5180 = vcvt.s32.f32 %v5155
  %v5181 = vcvt.s32.f32 %v5156
  %vm5209 = vcmask 1046528
  %v5210 = vrot.slane %v5024, 1
  %v5211 = vrot.slane %v5025, 1
  %v5212 = vsel %vm5209, %v5210, %v5211
  %v5213 = vrot.slane %v5026, 1
  %v5214 = vsel %vm5209, %v5211, %v5213
  %v5215 = vrot.slane %v5027, 1
  %v5216 = vsel %vm5209, %v5213, %v5215
  %v5217 = vrot.slane %v5028, 1
  %v5218 = vsel %vm5209, %v5215, %v5217
  %v5219 = vrot.slane %v5029, 1
  %v5220 = vsel %vm5209, %v5217, %v5219
  %v5221 = vrot.slane %v5030, 1
  %v5222 = vsel %vm5209, %v5219, %v5221
  %v5223 = vrot.slane %v5031, 1
  %v5224 = vsel %vm5209, %v5221, %v5223
  %v5225 = vrot.slane %v5032, 1
  %v5226 = vsel %vm5209, %v5223, %v5225
  %v5227 = vrot.slane %v5033, 1
  %v5228 = vsel %vm5209, %v5225, %v5227
  %v5229 = vrot.slane %v5034, 1
  %v5230 = vsel %vm5209, %v5227, %v5229
  %v5231 = vrot.slane %v5035, 1
  %v5232 = vsel %vm5209, %v5229, %v5231
  %v5233 = vrot.slane %v5036, 1
  %v5234 = vsel %vm5209, %v5231, %v5233
  %v5235 = vrot.slane %v5037, 1
  %v5236 = vsel %vm5209, %v5233, %v5235
  %v5237 = vrot.slane %v5038, 1
  %v5238 = vsel %vm5209, %v5235, %v5237
  %v5239 = vrot.slane %v5039, 1
  %v5240 = vsel %vm5209, %v5237, %v5239
  %v5241 = vrot.slane %v5040, 1
  %v5242 = vsel %vm5209, %v5239, %v5241
  %v5243 = vrot.slane %v5041, 1
  %v5244 = vsel %vm5209, %v5241, %v5243
  %v5245 = vrot.slane %v5042, 1
  %v5246 = vsel %vm5209, %v5243, %v5245
  %v5247 = vrot.slane %v5043, 1
  %v5248 = vsel %vm5209, %v5245, %v5247
  %v5249 = vrot.slane %v5044, 1
  %v5250 = vsel %vm5209, %v5247, %v5249
  %v5251 = vrot.slane %v5045, 1
  %v5252 = vsel %vm5209, %v5249, %v5251
  %v5253 = vrot.slane %v5046, 1
  %v5254 = vsel %vm5209, %v5251, %v5253
  %v5255 = vrot.slane %v5047, 1
  %v5256 = vsel %vm5209, %v5253, %v5255
  %v5257 = vrot.slane %v5048, 1
  %v5258 = vsel %vm5209, %v5255, %v5257
  %v5259 = vrot.slane %v5049, 1
  %v5260 = vsel %vm5209, %v5257, %v5259
  %v5261 = vrot.slane %v5050, 1
  %v5262 = vsel %vm5209, %v5259, %v5261
  %vm5289 = vcmask 687104
  %v5291 = vsel %vm5289, %v5052, 0
  %v5294 = vsel %vm5289, %v5054, 0
  %v5297 = vsel %vm5289, %v5056, 0
  %v5300 = vsel %vm5289, %v5058, 0
  %v5303 = vsel %vm5289, %v5060, 0
  %v5306 = vsel %vm5289, %v5062, 0
  %v5309 = vsel %vm5289, %v5064, 0
  %v5312 = vsel %vm5289, %v5066, 0
  %v5315 = vsel %vm5289, %v5068, 0
  %v5318 = vsel %vm5289, %v5070, 0
  %v5321 = vsel %vm5289, %v5072, 0
  %v5324 = vsel %vm5289, %v5074, 0
  %v5327 = vsel %vm5289, %v5076, 0
  %v5330 = vsel %vm5289, %v5078, 0
  %v5333 = vsel %vm5289, %v5080, 0
  %v5336 = vsel %vm5289, %v5082, 0
  %v5339 = vsel %vm5289, %v5084, 0
  %v5342 = vsel %vm5289, %v5086, 0
  %v5345 = vsel %vm5289, %v5088, 0
  %v5348 = vsel %vm5289, %v5090, 0
  %v5351 = vsel %vm5289, %v5092, 0
  %v5354 = vsel %vm5289, %v5094, 0
  %v5357 = vsel %vm5289, %v5096, 0
  %v5360 = vsel %vm5289, %v5098, 0
  %v5363 = vsel %vm5289, %v5100, 0
  %v5366 = vsel %vm5289, %v5102, 0
  %v5369 = vsel %vm5289, %v5104, 0
  %vm5371 = vcmask 1043456
  %v5372 = vsel %vm5371, %v5261, 0
  %5374 = vmatpush.msra.mxu0 %v5242
  %5375 = vmatpush.msra.mxu0 %v5240
  %5376 = vmatpush.msra.mxu0 %v5238
  %5377 = vmatpush.msra.mxu0 %v5236
  %5378 = vmatpush.msra.mxu0 %v5234
  %5379 = vmatpush.msra.mxu0 %v5232
  %5380 = vmatpush.msra.mxu0 %v5230
  %5381 = vmatpush.msra.mxu0 %v5228
  %5382 = vmatpush.msra.mxu0 %v5226
  %5383 = vmatpush.msra.mxu0 %v5224
  %5384 = vmatpush.msra.mxu0 %v5222
  %5385 = vmatpush.msra.mxu0 %v5220
  %5386 = vmatpush.msra.mxu0 %v5218
  %5387 = vmatpush.msra.mxu0 %v5216
  %5388 = vmatpush.msra.mxu0 %v5214
  %5389 = vmatpush.msra.mxu0 %v5212
  %5390 = vmatmul.f32.gmra.mxu0 %v5051
  %v5391 = vpop.f32.mrf.mxu0
  %5392 = vmatmul.f32.gmra.mxu0 %v5053
  %v5393 = vpop.f32.mrf.mxu0
  %5394 = vmatmul.f32.gmra.mxu0 %v5055
  %v5395 = vpop.f32.mrf.mxu0
  %v5396 = vadd.f32 1e-07, %v5395
  %5397 = vmatmul.f32.gmra.mxu0 %v5057
  %v5398 = vpop.f32.mrf.mxu0
  %v5399 = vadd.f32 1e-07, %v5398
  %5400 = vmatmul.f32.gmra.mxu0 %v5059
  %v5401 = vpop.f32.mrf.mxu0
  %v5402 = vadd.f32 1e-07, %v5401
  %5403 = vmatmul.f32.gmra.mxu0 %v5061
  %v5404 = vpop.f32.mrf.mxu0
  %v5405 = vadd.f32 1e-07, %v5404
  %5406 = vmatmul.f32.gmra.mxu0 %v5063
  %v5407 = vpop.f32.mrf.mxu0
  %v5408 = vadd.f32 1e-07, %v5407
  %5409 = vmatmul.f32.gmra.mxu0 %v5065
  %v5410 = vpop.f32.mrf.mxu0
  %v5411 = vadd.f32 1e-07, %v5410
  %5412 = vmatmul.f32.gmra.mxu0 %v5067
  %v5413 = vpop.f32.mrf.mxu0
  %v5414 = vadd.f32 1e-07, %v5413
  %5415 = vmatmul.f32.gmra.mxu0 %v5069
  %v5416 = vpop.f32.mrf.mxu0
  %v5417 = vadd.f32 1e-07, %v5416
  %5418 = vmatmul.f32.gmra.mxu0 %v5071
  %v5419 = vpop.f32.mrf.mxu0
  %v5420 = vadd.f32 1e-07, %v5419
  %5421 = vmatmul.f32.gmra.mxu0 %v5073
  %v5422 = vpop.f32.mrf.mxu0
  %v5423 = vadd.f32 1e-07, %v5422
  %5424 = vmatmul.f32.gmra.mxu0 %v5075
  %v5425 = vpop.f32.mrf.mxu0
  %v5426 = vadd.f32 1e-07, %v5425
  %5427 = vmatmul.f32.gmra.mxu0 %v5077
  %v5428 = vpop.f32.mrf.mxu0
  %v5429 = vadd.f32 1e-07, %v5428
  %5430 = vmatmul.f32.gmra.mxu0 %v5079
  %v5431 = vpop.f32.mrf.mxu0
  %v5432 = vadd.f32 1e-07, %v5431
  %5433 = vmatmul.f32.gmra.mxu0 %v5081
  %v5434 = vpop.f32.mrf.mxu0
  %v5435 = vadd.f32 1e-07, %v5434
  %5436 = vmatmul.f32.gmra.mxu0 %v5083
  %v5437 = vpop.f32.mrf.mxu0
  %v5438 = vadd.f32 1e-07, %v5437
  %5439 = vmatmul.f32.gmra.mxu0 %v5085
  %v5440 = vpop.f32.mrf.mxu0
  %v5441 = vadd.f32 1e-07, %v5440
  %5442 = vmatmul.f32.gmra.mxu0 %v5087
  %v5443 = vpop.f32.mrf.mxu0
  %v5444 = vadd.f32 1e-07, %v5443
  %5445 = vmatmul.f32.gmra.mxu0 %v5089
  %v5446 = vpop.f32.mrf.mxu0
  %v5447 = vadd.f32 1e-07, %v5446
  %5448 = vmatmul.f32.gmra.mxu0 %v5091
  %v5449 = vpop.f32.mrf.mxu0
  %v5450 = vadd.f32 1e-07, %v5449
  %5451 = vmatmul.f32.gmra.mxu0 %v5093
  %v5452 = vpop.f32.mrf.mxu0
  %v5453 = vadd.f32 1e-07, %v5452
  %5454 = vmatmul.f32.gmra.mxu0 %v5095
  %v5455 = vpop.f32.mrf.mxu0
  %v5456 = vadd.f32 1e-07, %v5455
  %5457 = vmatmul.f32.gmra.mxu0 %v5097
  %v5458 = vpop.f32.mrf.mxu0
  %v5459 = vadd.f32 1e-07, %v5458
  %5460 = vmatmul.f32.gmra.mxu0 %v5099
  %v5461 = vpop.f32.mrf.mxu0
  %v5462 = vadd.f32 1e-07, %v5461
  %5463 = vmatmul.f32.gmra.mxu0 %v5101
  %v5464 = vpop.f32.mrf.mxu0
  %v5465 = vadd.f32 1e-07, %v5464
  %5466 = vmatmul.f32.gmra.mxu0 %v5103
  %v5467 = vpop.f32.mrf.mxu0
  %v5468 = vadd.f32 1e-07, %v5467
  %5469 = vdwg.mxu0
  %5470 = vmatpush.msra.mxu0 0.0
  %5471 = vmatpush.msra.mxu0 0.0
  %5472 = vmatpush.msra.mxu0 0.0
  %5473 = vmatpush.msra.mxu0 0.0
  %5474 = vmatpush.msra.mxu0 0.0
  %5475 = vmatpush.msra.mxu0 %v5372
  %5476 = vmatpush.msra.mxu0 %v5262
  %5477 = vmatpush.msra.mxu0 %v5260
  %5478 = vmatpush.msra.mxu0 %v5258
  %5479 = vmatpush.msra.mxu0 %v5256
  %5480 = vmatpush.msra.mxu0 %v5254
  %5481 = vmatpush.msra.mxu0 %v5252
  %5482 = vmatpush.msra.mxu0 %v5250
  %5483 = vmatpush.msra.mxu0 %v5248
  %5484 = vmatpush.msra.mxu0 %v5246
  %5485 = vmatpush.msra.mxu0 %v5244
  %5486 = vmatmul.f32.gmra.mxu0 %v5291
  %v5487 = vpop.f32.mrf.mxu0
  %5488 = vmatmul.f32.gmra.mxu0 %v5294
  %v5489 = vpop.f32.mrf.mxu0
  %5490 = vmatmul.f32.gmra.mxu0 %v5297
  %v5491 = vpop.f32.mrf.mxu0
  %v5492 = vadd.f32 %v5396, %v5491
  %5493 = vmatmul.f32.gmra.mxu0 %v5300
  %v5494 = vpop.f32.mrf.mxu0
  %v5495 = vadd.f32 %v5399, %v5494
  %5496 = vmatmul.f32.gmra.mxu0 %v5303
  %v5497 = vpop.f32.mrf.mxu0
  %v5498 = vadd.f32 %v5402, %v5497
  %5499 = vmatmul.f32.gmra.mxu0 %v5306
  %v5500 = vpop.f32.mrf.mxu0
  %v5501 = vadd.f32 %v5405, %v5500
  %5502 = vmatmul.f32.gmra.mxu0 %v5309
  %v5503 = vpop.f32.mrf.mxu0
  %v5504 = vadd.f32 %v5408, %v5503
  %5505 = vmatmul.f32.gmra.mxu0 %v5312
  %v5506 = vpop.f32.mrf.mxu0
  %v5507 = vadd.f32 %v5411, %v5506
  %5508 = vmatmul.f32.gmra.mxu0 %v5315
  %v5509 = vpop.f32.mrf.mxu0
  %v5510 = vadd.f32 %v5414, %v5509
  %5511 = vmatmul.f32.gmra.mxu0 %v5318
  %v5512 = vpop.f32.mrf.mxu0
  %v5513 = vadd.f32 %v5417, %v5512
  %5514 = vmatmul.f32.gmra.mxu0 %v5321
  %v5515 = vpop.f32.mrf.mxu0
  %v5516 = vadd.f32 %v5420, %v5515
  %5517 = vmatmul.f32.gmra.mxu0 %v5324
  %v5518 = vpop.f32.mrf.mxu0
  %v5519 = vadd.f32 %v5423, %v5518
  %5520 = vmatmul.f32.gmra.mxu0 %v5327
  %v5521 = vpop.f32.mrf.mxu0
  %v5522 = vadd.f32 %v5426, %v5521
  %5523 = vmatmul.f32.gmra.mxu0 %v5330
  %v5524 = vpop.f32.mrf.mxu0
  %v5525 = vadd.f32 %v5429, %v5524
  %5526 = vmatmul.f32.gmra.mxu0 %v5333
  %v5527 = vpop.f32.mrf.mxu0
  %v5528 = vadd.f32 %v5432, %v5527
  %5529 = vmatmul.f32.gmra.mxu0 %v5336
  %v5530 = vpop.f32.mrf.mxu0
  %v5531 = vadd.f32 %v5435, %v5530
  %5532 = vmatmul.f32.gmra.mxu0 %v5339
  %v5533 = vpop.f32.mrf.mxu0
  %v5534 = vadd.f32 %v5438, %v5533
  %5535 = vmatmul.f32.gmra.mxu0 %v5342
  %v5536 = vpop.f32.mrf.mxu0
  %v5537 = vadd.f32 %v5441, %v5536
  %5538 = vmatmul.f32.gmra.mxu0 %v5345
  %v5539 = vpop.f32.mrf.mxu0
  %v5540 = vadd.f32 %v5444, %v5539
  %5541 = vmatmul.f32.gmra.mxu0 %v5348
  %v5542 = vpop.f32.mrf.mxu0
  %v5543 = vadd.f32 %v5447, %v5542
  %5544 = vmatmul.f32.gmra.mxu0 %v5351
  %v5545 = vpop.f32.mrf.mxu0
  %v5546 = vadd.f32 %v5450, %v5545
  %5547 = vmatmul.f32.gmra.mxu0 %v5354
  %v5548 = vpop.f32.mrf.mxu0
  %v5549 = vadd.f32 %v5453, %v5548
  %5550 = vmatmul.f32.gmra.mxu0 %v5357
  %v5551 = vpop.f32.mrf.mxu0
  %v5552 = vadd.f32 %v5456, %v5551
  %5553 = vmatmul.f32.gmra.mxu0 %v5360
  %v5554 = vpop.f32.mrf.mxu0
  %v5555 = vadd.f32 %v5459, %v5554
  %5556 = vmatmul.f32.gmra.mxu0 %v5363
  %v5557 = vpop.f32.mrf.mxu0
  %v5558 = vadd.f32 %v5462, %v5557
  %5559 = vmatmul.f32.gmra.mxu0 %v5366
  %v5560 = vpop.f32.mrf.mxu0
  %v5561 = vadd.f32 %v5465, %v5560
  %5562 = vmatmul.f32.gmra.mxu0 %v5369
  %v5563 = vpop.f32.mrf.mxu0
  %v5564 = vadd.f32 %v5468, %v5563
  %5565 = vdwg.mxu0
  %vm5591 = vcmask 1040384
  %v5592 = vrot.slane %v5492, 7
  %v5593 = vrot.slane %v5495, 7
  %v5594 = vsel %vm5591, %v5592, %v5593
  %v5595 = vrot.slane %v5498, 7
  %v5596 = vsel %vm5591, %v5593, %v5595
  %v5597 = vrot.slane %v5501, 7
  %v5598 = vsel %vm5591, %v5595, %v5597
  %v5599 = vrot.slane %v5504, 7
  %v5600 = vsel %vm5591, %v5597, %v5599
  %v5601 = vrot.slane %v5507, 7
  %v5602 = vsel %vm5591, %v5599, %v5601
  %v5603 = vrot.slane %v5510, 7
  %v5604 = vsel %vm5591, %v5601, %v5603
  %v5605 = vrot.slane %v5513, 7
  %v5606 = vsel %vm5591, %v5603, %v5605
  %v5607 = vrot.slane %v5516, 7
  %v5608 = vsel %vm5591, %v5605, %v5607
  %v5609 = vrot.slane %v5519, 7
  %v5610 = vsel %vm5591, %v5607, %v5609
  %v5611 = vrot.slane %v5522, 7
  %v5612 = vsel %vm5591, %v5609, %v5611
  %v5613 = vrot.slane %v5525, 7
  %v5614 = vsel %vm5591, %v5611, %v5613
  %v5615 = vrot.slane %v5528, 7
  %v5616 = vsel %vm5591, %v5613, %v5615
  %v5617 = vrot.slane %v5531, 7
  %v5618 = vsel %vm5591, %v5615, %v5617
  %v5619 = vrot.slane %v5534, 7
  %v5620 = vsel %vm5591, %v5617, %v5619
  %v5621 = vrot.slane %v5537, 7
  %v5622 = vsel %vm5591, %v5619, %v5621
  %v5623 = vrot.slane %v5540, 7
  %v5624 = vsel %vm5591, %v5621, %v5623
  %v5625 = vrot.slane %v5543, 7
  %v5626 = vsel %vm5591, %v5623, %v5625
  %v5627 = vrot.slane %v5546, 7
  %v5628 = vsel %vm5591, %v5625, %v5627
  %v5629 = vrot.slane %v5549, 7
  %v5630 = vsel %vm5591, %v5627, %v5629
  %v5631 = vrot.slane %v5552, 7
  %v5632 = vsel %vm5591, %v5629, %v5631
  %v5633 = vrot.slane %v5555, 7
  %v5634 = vsel %vm5591, %v5631, %v5633
  %v5635 = vrot.slane %v5558, 7
  %v5636 = vsel %vm5591, %v5633, %v5635
  %v5637 = vrot.slane %v5561, 7
  %v5638 = vsel %vm5591, %v5635, %v5637
  %v5639 = vrot.slane %v5564, 7
  %v5640 = vsel %vm5591, %v5637, %v5639
  %v5665 = vrcp.pop %v5594
  %v5666 = vmul.f32 %v5594, %v5665
  %v5667 = vsub.f32 1.0, %v5666
  %v5668 = vmul.f32 %v5665, %v5667
  %v5669 = vadd.f32 %v5665, %v5668
  %vm5670 = vweird.f32 %v5594
  %vm5671 = vweird.f32 %v5665
  %vm5672 = vmor %vm5670, %vm5671
  %v5673 = vsel %vm5672, %v5665, %v5669
  %v5674 = vand.u32 2147483647, %v5594
  %vm5675 = vcmp.eq.f32.partialorder %v5674, 8.507059e+37
  %v5676 = vand.u32 %v5594, 2147483648
  %v5677 = vor.u32 1.1754944e-38, %v5676
  %v5678 = vsel %vm5675, %v5677, %v5673
  %v5679 = vmul.f32 %v5027, %v5678
  %v5680 = vrcp.pop %v5596
  %v5681 = vmul.f32 %v5596, %v5680
  %v5682 = vsub.f32 1.0, %v5681
  %v5683 = vmul.f32 %v5680, %v5682
  %v5684 = vadd.f32 %v5680, %v5683
  %vm5685 = vweird.f32 %v5596
  %vm5686 = vweird.f32 %v5680
  %vm5687 = vmor %vm5685, %vm5686
  %v5688 = vsel %vm5687, %v5680, %v5684
  %v5689 = vand.u32 2147483647, %v5596
  %vm5690 = vcmp.eq.f32.partialorder %v5689, 8.507059e+37
  %v5691 = vand.u32 %v5596, 2147483648
  %v5692 = vor.u32 1.1754944e-38, %v5691
  %v5693 = vsel %vm5690, %v5692, %v5688
  %v5694 = vmul.f32 %v5028, %v5693
  %v5695 = vrcp.pop %v5598
  %v5696 = vmul.f32 %v5598, %v5695
  %v5697 = vsub.f32 1.0, %v5696
  %v5698 = vmul.f32 %v5695, %v5697
  %v5699 = vadd.f32 %v5695, %v5698
  %vm5700 = vweird.f32 %v5598
  %vm5701 = vweird.f32 %v5695
  %vm5702 = vmor %vm5700, %vm5701
  %v5703 = vsel %vm5702, %v5695, %v5699
  %v5704 = vand.u32 2147483647, %v5598
  %vm5705 = vcmp.eq.f32.partialorder %v5704, 8.507059e+37
  %v5706 = vand.u32 %v5598, 2147483648
  %v5707 = vor.u32 1.1754944e-38, %v5706
  %v5708 = vsel %vm5705, %v5707, %v5703
  %v5709 = vmul.f32 %v5029, %v5708
  %v5710 = vrcp.pop %v5600
  %v5711 = vmul.f32 %v5600, %v5710
  %v5712 = vsub.f32 1.0, %v5711
  %v5713 = vmul.f32 %v5710, %v5712
  %v5714 = vadd.f32 %v5710, %v5713
  %vm5715 = vweird.f32 %v5600
  %vm5716 = vweird.f32 %v5710
  %vm5717 = vmor %vm5715, %vm5716
  %v5718 = vsel %vm5717, %v5710, %v5714
  %v5719 = vand.u32 2147483647, %v5600
  %vm5720 = vcmp.eq.f32.partialorder %v5719, 8.507059e+37
  %v5721 = vand.u32 %v5600, 2147483648
  %v5722 = vor.u32 1.1754944e-38, %v5721
  %v5723 = vsel %vm5720, %v5722, %v5718
  %v5724 = vmul.f32 %v5030, %v5723
  %v5725 = vrcp.pop %v5602
  %v5726 = vmul.f32 %v5602, %v5725
  %v5727 = vsub.f32 1.0, %v5726
  %v5728 = vmul.f32 %v5725, %v5727
  %v5729 = vadd.f32 %v5725, %v5728
  %vm5730 = vweird.f32 %v5602
  %vm5731 = vweird.f32 %v5725
  %vm5732 = vmor %vm5730, %vm5731
  %v5733 = vsel %vm5732, %v5725, %v5729
  %v5734 = vand.u32 2147483647, %v5602
  %vm5735 = vcmp.eq.f32.partialorder %v5734, 8.507059e+37
  %v5736 = vand.u32 %v5602, 2147483648
  %v5737 = vor.u32 1.1754944e-38, %v5736
  %v5738 = vsel %vm5735, %v5737, %v5733
  %v5739 = vmul.f32 %v5031, %v5738
  %v5740 = vrcp.pop %v5604
  %v5741 = vmul.f32 %v5604, %v5740
  %v5742 = vsub.f32 1.0, %v5741
  %v5743 = vmul.f32 %v5740, %v5742
  %v5744 = vadd.f32 %v5740, %v5743
  %vm5745 = vweird.f32 %v5604
  %vm5746 = vweird.f32 %v5740
  %vm5747 = vmor %vm5745, %vm5746
  %v5748 = vsel %vm5747, %v5740, %v5744
  %v5749 = vand.u32 2147483647, %v5604
  %vm5750 = vcmp.eq.f32.partialorder %v5749, 8.507059e+37
  %v5751 = vand.u32 %v5604, 2147483648
  %v5752 = vor.u32 1.1754944e-38, %v5751
  %v5753 = vsel %vm5750, %v5752, %v5748
  %v5754 = vmul.f32 %v5032, %v5753
  %v5755 = vrcp.pop %v5606
  %v5756 = vmul.f32 %v5606, %v5755
  %v5757 = vsub.f32 1.0, %v5756
  %v5758 = vmul.f32 %v5755, %v5757
  %v5759 = vadd.f32 %v5755, %v5758
  %vm5760 = vweird.f32 %v5606
  %vm5761 = vweird.f32 %v5755
  %vm5762 = vmor %vm5760, %vm5761
  %v5763 = vsel %vm5762, %v5755, %v5759
  %v5764 = vand.u32 2147483647, %v5606
  %vm5765 = vcmp.eq.f32.partialorder %v5764, 8.507059e+37
  %v5766 = vand.u32 %v5606, 2147483648
  %v5767 = vor.u32 1.1754944e-38, %v5766
  %v5768 = vsel %vm5765, %v5767, %v5763
  %v5769 = vmul.f32 %v5033, %v5768
  %v5770 = vrcp.pop %v5608
  %v5771 = vmul.f32 %v5608, %v5770
  %v5772 = vsub.f32 1.0, %v5771
  %v5773 = vmul.f32 %v5770, %v5772
  %v5774 = vadd.f32 %v5770, %v5773
  %vm5775 = vweird.f32 %v5608
  %vm5776 = vweird.f32 %v5770
  %vm5777 = vmor %vm5775, %vm5776
  %v5778 = vsel %vm5777, %v5770, %v5774
  %v5779 = vand.u32 2147483647, %v5608
  %vm5780 = vcmp.eq.f32.partialorder %v5779, 8.507059e+37
  %v5781 = vand.u32 %v5608, 2147483648
  %v5782 = vor.u32 1.1754944e-38, %v5781
  %v5783 = vsel %vm5780, %v5782, %v5778
  %v5784 = vmul.f32 %v5034, %v5783
  %v5785 = vrcp.pop %v5610
  %v5786 = vmul.f32 %v5610, %v5785
  %v5787 = vsub.f32 1.0, %v5786
  %v5788 = vmul.f32 %v5785, %v5787
  %v5789 = vadd.f32 %v5785, %v5788
  %vm5790 = vweird.f32 %v5610
  %vm5791 = vweird.f32 %v5785
  %vm5792 = vmor %vm5790, %vm5791
  %v5793 = vsel %vm5792, %v5785, %v5789
  %v5794 = vand.u32 2147483647, %v5610
  %vm5795 = vcmp.eq.f32.partialorder %v5794, 8.507059e+37
  %v5796 = vand.u32 %v5610, 2147483648
  %v5797 = vor.u32 1.1754944e-38, %v5796
  %v5798 = vsel %vm5795, %v5797, %v5793
  %v5799 = vmul.f32 %v5035, %v5798
  %v5800 = vrcp.pop %v5612
  %v5801 = vmul.f32 %v5612, %v5800
  %v5802 = vsub.f32 1.0, %v5801
  %v5803 = vmul.f32 %v5800, %v5802
  %v5804 = vadd.f32 %v5800, %v5803
  %vm5805 = vweird.f32 %v5612
  %vm5806 = vweird.f32 %v5800
  %vm5807 = vmor %vm5805, %vm5806
  %v5808 = vsel %vm5807, %v5800, %v5804
  %v5809 = vand.u32 2147483647, %v5612
  %vm5810 = vcmp.eq.f32.partialorder %v5809, 8.507059e+37
  %v5811 = vand.u32 %v5612, 2147483648
  %v5812 = vor.u32 1.1754944e-38, %v5811
  %v5813 = vsel %vm5810, %v5812, %v5808
  %v5814 = vmul.f32 %v5036, %v5813
  %v5815 = vrcp.pop %v5614
  %v5816 = vmul.f32 %v5614, %v5815
  %v5817 = vsub.f32 1.0, %v5816
  %v5818 = vmul.f32 %v5815, %v5817
  %v5819 = vadd.f32 %v5815, %v5818
  %vm5820 = vweird.f32 %v5614
  %vm5821 = vweird.f32 %v5815
  %vm5822 = vmor %vm5820, %vm5821
  %v5823 = vsel %vm5822, %v5815, %v5819
  %v5824 = vand.u32 2147483647, %v5614
  %vm5825 = vcmp.eq.f32.partialorder %v5824, 8.507059e+37
  %v5826 = vand.u32 %v5614, 2147483648
  %v5827 = vor.u32 1.1754944e-38, %v5826
  %v5828 = vsel %vm5825, %v5827, %v5823
  %v5829 = vmul.f32 %v5037, %v5828
  %v5830 = vrcp.pop %v5616
  %v5831 = vmul.f32 %v5616, %v5830
  %v5832 = vsub.f32 1.0, %v5831
  %v5833 = vmul.f32 %v5830, %v5832
  %v5834 = vadd.f32 %v5830, %v5833
  %vm5835 = vweird.f32 %v5616
  %vm5836 = vweird.f32 %v5830
  %vm5837 = vmor %vm5835, %vm5836
  %v5838 = vsel %vm5837, %v5830, %v5834
  %v5839 = vand.u32 2147483647, %v5616
  %vm5840 = vcmp.eq.f32.partialorder %v5839, 8.507059e+37
  %v5841 = vand.u32 %v5616, 2147483648
  %v5842 = vor.u32 1.1754944e-38, %v5841
  %v5843 = vsel %vm5840, %v5842, %v5838
  %v5844 = vmul.f32 %v5038, %v5843
  %v5845 = vrcp.pop %v5618
  %v5846 = vmul.f32 %v5618, %v5845
  %v5847 = vsub.f32 1.0, %v5846
  %v5848 = vmul.f32 %v5845, %v5847
  %v5849 = vadd.f32 %v5845, %v5848
  %vm5850 = vweird.f32 %v5618
  %vm5851 = vweird.f32 %v5845
  %vm5852 = vmor %vm5850, %vm5851
  %v5853 = vsel %vm5852, %v5845, %v5849
  %v5854 = vand.u32 2147483647, %v5618
  %vm5855 = vcmp.eq.f32.partialorder %v5854, 8.507059e+37
  %v5856 = vand.u32 %v5618, 2147483648
  %v5857 = vor.u32 1.1754944e-38, %v5856
  %v5858 = vsel %vm5855, %v5857, %v5853
  %v5859 = vmul.f32 %v5039, %v5858
  %v5860 = vrcp.pop %v5620
  %v5861 = vmul.f32 %v5620, %v5860
  %v5862 = vsub.f32 1.0, %v5861
  %v5863 = vmul.f32 %v5860, %v5862
  %v5864 = vadd.f32 %v5860, %v5863
  %vm5865 = vweird.f32 %v5620
  %vm5866 = vweird.f32 %v5860
  %vm5867 = vmor %vm5865, %vm5866
  %v5868 = vsel %vm5867, %v5860, %v5864
  %v5869 = vand.u32 2147483647, %v5620
  %vm5870 = vcmp.eq.f32.partialorder %v5869, 8.507059e+37
  %v5871 = vand.u32 %v5620, 2147483648
  %v5872 = vor.u32 1.1754944e-38, %v5871
  %v5873 = vsel %vm5870, %v5872, %v5868
  %v5874 = vmul.f32 %v5040, %v5873
  %v5875 = vrcp.pop %v5622
  %v5876 = vmul.f32 %v5622, %v5875
  %v5877 = vsub.f32 1.0, %v5876
  %v5878 = vmul.f32 %v5875, %v5877
  %v5879 = vadd.f32 %v5875, %v5878
  %vm5880 = vweird.f32 %v5622
  %vm5881 = vweird.f32 %v5875
  %vm5882 = vmor %vm5880, %vm5881
  %v5883 = vsel %vm5882, %v5875, %v5879
  %v5884 = vand.u32 2147483647, %v5622
  %vm5885 = vcmp.eq.f32.partialorder %v5884, 8.507059e+37
  %v5886 = vand.u32 %v5622, 2147483648
  %v5887 = vor.u32 1.1754944e-38, %v5886
  %v5888 = vsel %vm5885, %v5887, %v5883
  %v5889 = vmul.f32 %v5041, %v5888
  %v5890 = vrcp.pop %v5624
  %v5891 = vmul.f32 %v5624, %v5890
  %v5892 = vsub.f32 1.0, %v5891
  %v5893 = vmul.f32 %v5890, %v5892
  %v5894 = vadd.f32 %v5890, %v5893
  %vm5895 = vweird.f32 %v5624
  %vm5896 = vweird.f32 %v5890
  %vm5897 = vmor %vm5895, %vm5896
  %v5898 = vsel %vm5897, %v5890, %v5894
  %v5899 = vand.u32 2147483647, %v5624
  %vm5900 = vcmp.eq.f32.partialorder %v5899, 8.507059e+37
  %v5901 = vand.u32 %v5624, 2147483648
  %v5902 = vor.u32 1.1754944e-38, %v5901
  %v5903 = vsel %vm5900, %v5902, %v5898
  %v5904 = vmul.f32 %v5042, %v5903
  %v5905 = vrcp.pop %v5626
  %v5906 = vmul.f32 %v5626, %v5905
  %v5907 = vsub.f32 1.0, %v5906
  %v5908 = vmul.f32 %v5905, %v5907
  %v5909 = vadd.f32 %v5905, %v5908
  %vm5910 = vweird.f32 %v5626
  %vm5911 = vweird.f32 %v5905
  %vm5912 = vmor %vm5910, %vm5911
  %v5913 = vsel %vm5912, %v5905, %v5909
  %v5914 = vand.u32 2147483647, %v5626
  %vm5915 = vcmp.eq.f32.partialorder %v5914, 8.507059e+37
  %v5916 = vand.u32 %v5626, 2147483648
  %v5917 = vor.u32 1.1754944e-38, %v5916
  %v5918 = vsel %vm5915, %v5917, %v5913
  %v5919 = vmul.f32 %v5043, %v5918
  %v5920 = vrcp.pop %v5628
  %v5921 = vmul.f32 %v5628, %v5920
  %v5922 = vsub.f32 1.0, %v5921
  %v5923 = vmul.f32 %v5920, %v5922
  %v5924 = vadd.f32 %v5920, %v5923
  %vm5925 = vweird.f32 %v5628
  %vm5926 = vweird.f32 %v5920
  %vm5927 = vmor %vm5925, %vm5926
  %v5928 = vsel %vm5927, %v5920, %v5924
  %v5929 = vand.u32 2147483647, %v5628
  %vm5930 = vcmp.eq.f32.partialorder %v5929, 8.507059e+37
  %v5931 = vand.u32 %v5628, 2147483648
  %v5932 = vor.u32 1.1754944e-38, %v5931
  %v5933 = vsel %vm5930, %v5932, %v5928
  %v5934 = vmul.f32 %v5044, %v5933
  %v5935 = vrcp.pop %v5630
  %v5936 = vmul.f32 %v5630, %v5935
  %v5937 = vsub.f32 1.0, %v5936
  %v5938 = vmul.f32 %v5935, %v5937
  %v5939 = vadd.f32 %v5935, %v5938
  %vm5940 = vweird.f32 %v5630
  %vm5941 = vweird.f32 %v5935
  %vm5942 = vmor %vm5940, %vm5941
  %v5943 = vsel %vm5942, %v5935, %v5939
  %v5944 = vand.u32 2147483647, %v5630
  %vm5945 = vcmp.eq.f32.partialorder %v5944, 8.507059e+37
  %v5946 = vand.u32 %v5630, 2147483648
  %v5947 = vor.u32 1.1754944e-38, %v5946
  %v5948 = vsel %vm5945, %v5947, %v5943
  %v5949 = vmul.f32 %v5045, %v5948
  %v5950 = vrcp.pop %v5632
  %v5951 = vmul.f32 %v5632, %v5950
  %v5952 = vsub.f32 1.0, %v5951
  %v5953 = vmul.f32 %v5950, %v5952
  %v5954 = vadd.f32 %v5950, %v5953
  %vm5955 = vweird.f32 %v5632
  %vm5956 = vweird.f32 %v5950
  %vm5957 = vmor %vm5955, %vm5956
  %v5958 = vsel %vm5957, %v5950, %v5954
  %v5959 = vand.u32 2147483647, %v5632
  %vm5960 = vcmp.eq.f32.partialorder %v5959, 8.507059e+37
  %v5961 = vand.u32 %v5632, 2147483648
  %v5962 = vor.u32 1.1754944e-38, %v5961
  %v5963 = vsel %vm5960, %v5962, %v5958
  %v5964 = vmul.f32 %v5046, %v5963
  %v5965 = vrcp.pop %v5634
  %v5966 = vmul.f32 %v5634, %v5965
  %v5967 = vsub.f32 1.0, %v5966
  %v5968 = vmul.f32 %v5965, %v5967
  %v5969 = vadd.f32 %v5965, %v5968
  %vm5970 = vweird.f32 %v5634
  %vm5971 = vweird.f32 %v5965
  %vm5972 = vmor %vm5970, %vm5971
  %v5973 = vsel %vm5972, %v5965, %v5969
  %v5974 = vand.u32 2147483647, %v5634
  %vm5975 = vcmp.eq.f32.partialorder %v5974, 8.507059e+37
  %v5976 = vand.u32 %v5634, 2147483648
  %v5977 = vor.u32 1.1754944e-38, %v5976
  %v5978 = vsel %vm5975, %v5977, %v5973
  %v5979 = vmul.f32 %v5047, %v5978
  %v5980 = vrcp.pop %v5636
  %v5981 = vmul.f32 %v5636, %v5980
  %v5982 = vsub.f32 1.0, %v5981
  %v5983 = vmul.f32 %v5980, %v5982
  %v5984 = vadd.f32 %v5980, %v5983
  %vm5985 = vweird.f32 %v5636
  %vm5986 = vweird.f32 %v5980
  %vm5987 = vmor %vm5985, %vm5986
  %v5988 = vsel %vm5987, %v5980, %v5984
  %v5989 = vand.u32 2147483647, %v5636
  %vm5990 = vcmp.eq.f32.partialorder %v5989, 8.507059e+37
  %v5991 = vand.u32 %v5636, 2147483648
  %v5992 = vor.u32 1.1754944e-38, %v5991
  %v5993 = vsel %vm5990, %v5992, %v5988
  %v5994 = vmul.f32 %v5048, %v5993
  %v5995 = vrcp.pop %v5638
  %v5996 = vmul.f32 %v5638, %v5995
  %v5997 = vsub.f32 1.0, %v5996
  %v5998 = vmul.f32 %v5995, %v5997
  %v5999 = vadd.f32 %v5995, %v5998
  %vm6000 = vweird.f32 %v5638
  %vm6001 = vweird.f32 %v5995
  %vm6002 = vmor %vm6000, %vm6001
  %v6003 = vsel %vm6002, %v5995, %v5999
  %v6004 = vand.u32 2147483647, %v5638
  %vm6005 = vcmp.eq.f32.partialorder %v6004, 8.507059e+37
  %v6006 = vand.u32 %v5638, 2147483648
  %v6007 = vor.u32 1.1754944e-38, %v6006
  %v6008 = vsel %vm6005, %v6007, %v6003
  %v6009 = vmul.f32 %v5049, %v6008
  %v6010 = vrcp.pop %v5640
  %v6011 = vmul.f32 %v5640, %v6010
  %v6012 = vsub.f32 1.0, %v6011
  %v6013 = vmul.f32 %v6010, %v6012
  %v6014 = vadd.f32 %v6010, %v6013
  %vm6015 = vweird.f32 %v5640
  %vm6016 = vweird.f32 %v6010
  %vm6017 = vmor %vm6015, %vm6016
  %v6018 = vsel %vm6017, %v6010, %v6014
  %v6019 = vand.u32 2147483647, %v5640
  %vm6020 = vcmp.eq.f32.partialorder %v6019, 8.507059e+37
  %v6021 = vand.u32 %v5640, 2147483648
  %v6022 = vor.u32 1.1754944e-38, %v6021
  %v6023 = vsel %vm6020, %v6022, %v6018
  %v6024 = vmul.f32 %v5050, %v6023
  %v6050 = vrot.slane %v5157, 7
  %v6051 = vrot.slane %v5158, 7
  %v6052 = vsel %vm5591, %v6050, %v6051
  %v6053 = vrot.slane %v5159, 7
  %v6054 = vsel %vm5591, %v6051, %v6053
  %v6055 = vrot.slane %v5160, 7
  %v6056 = vsel %vm5591, %v6053, %v6055
  %v6057 = vrot.slane %v5161, 7
  %v6058 = vsel %vm5591, %v6055, %v6057
  %v6059 = vrot.slane %v5162, 7
  %v6060 = vsel %vm5591, %v6057, %v6059
  %v6061 = vrot.slane %v5163, 7
  %v6062 = vsel %vm5591, %v6059, %v6061
  %v6063 = vrot.slane %v5164, 7
  %v6064 = vsel %vm5591, %v6061, %v6063
  %v6065 = vrot.slane %v5165, 7
  %v6066 = vsel %vm5591, %v6063, %v6065
  %v6067 = vrot.slane %v5166, 7
  %v6068 = vsel %vm5591, %v6065, %v6067
  %v6069 = vrot.slane %v5167, 7
  %v6070 = vsel %vm5591, %v6067, %v6069
  %v6071 = vrot.slane %v5168, 7
  %v6072 = vsel %vm5591, %v6069, %v6071
  %v6073 = vrot.slane %v5169, 7
  %v6074 = vsel %vm5591, %v6071, %v6073
  %v6075 = vrot.slane %v5170, 7
  %v6076 = vsel %vm5591, %v6073, %v6075
  %v6077 = vrot.slane %v5171, 7
  %v6078 = vsel %vm5591, %v6075, %v6077
  %v6079 = vrot.slane %v5172, 7
  %v6080 = vsel %vm5591, %v6077, %v6079
  %v6081 = vrot.slane %v5173, 7
  %v6082 = vsel %vm5591, %v6079, %v6081
  %v6083 = vrot.slane %v5174, 7
  %v6084 = vsel %vm5591, %v6081, %v6083
  %v6085 = vrot.slane %v5175, 7
  %v6086 = vsel %vm5591, %v6083, %v6085
  %v6087 = vrot.slane %v5176, 7
  %v6088 = vsel %vm5591, %v6085, %v6087
  %v6089 = vrot.slane %v5177, 7
  %v6090 = vsel %vm5591, %v6087, %v6089
  %v6091 = vrot.slane %v5178, 7
  %v6092 = vsel %vm5591, %v6089, %v6091
  %v6093 = vrot.slane %v5179, 7
  %v6094 = vsel %vm5591, %v6091, %v6093
  %v6095 = vrot.slane %v5180, 7
  %v6096 = vsel %vm5591, %v6093, %v6095
  %v6097 = vrot.slane %v5181, 7
  %v6098 = vsel %vm5591, %v6095, %v6097
  %v6123 = vmul.f32 %v5679, %v6052
  %v6124 = vmul.f32 %v5694, %v6054
  %v6125 = vmul.f32 %v5709, %v6056
  %v6126 = vmul.f32 %v5724, %v6058
  %v6127 = vmul.f32 %v5739, %v6060
  %v6128 = vmul.f32 %v5754, %v6062
  %v6129 = vmul.f32 %v5769, %v6064
  %v6130 = vmul.f32 %v5784, %v6066
  %v6131 = vmul.f32 %v5799, %v6068
  %v6132 = vmul.f32 %v5814, %v6070
  %v6133 = vmul.f32 %v5829, %v6072
  %v6134 = vmul.f32 %v5844, %v6074
  %v6135 = vmul.f32 %v5859, %v6076
  %v6136 = vmul.f32 %v5874, %v6078
  %v6137 = vmul.f32 %v5889, %v6080
  %v6138 = vmul.f32 %v5904, %v6082
  %v6139 = vmul.f32 %v5919, %v6084
  %v6140 = vmul.f32 %v5934, %v6086
  %v6141 = vmul.f32 %v5949, %v6088
  %v6142 = vmul.f32 %v5964, %v6090
  %v6143 = vmul.f32 %v5979, %v6092
  %v6144 = vmul.f32 %v5994, %v6094
  %v6145 = vmul.f32 %v6009, %v6096
  %v6146 = vmul.f32 %v6024, %v6098
  %v6147 = vadd.s32 %v5106, 8
  %vm6148 = vcmp.lt.f32.partialorder %v6123, 0.2
  %vm6149 = vcmp.lt.f32.partialorder %v6124, 0.2
  %vm6150 = vcmp.lt.f32.partialorder %v6125, 0.2
  %vm6151 = vcmp.lt.f32.partialorder %v6126, 0.2
  %vm6152 = vcmp.lt.f32.partialorder %v6127, 0.2
  %vm6153 = vcmp.lt.f32.partialorder %v6128, 0.2
  %vm6154 = vcmp.lt.f32.partialorder %v6129, 0.2
  %vm6155 = vcmp.lt.f32.partialorder %v6130, 0.2
  %vm6156 = vcmp.lt.f32.partialorder %v6131, 0.2
  %vm6157 = vcmp.lt.f32.partialorder %v6132, 0.2
  %vm6158 = vcmp.lt.f32.partialorder %v6133, 0.2
  %vm6159 = vcmp.lt.f32.partialorder %v6134, 0.2
  %vm6160 = vcmp.lt.f32.partialorder %v6135, 0.2
  %vm6161 = vcmp.lt.f32.partialorder %v6136, 0.2
  %vm6162 = vcmp.lt.f32.partialorder %v6137, 0.2
  %vm6163 = vcmp.lt.f32.partialorder %v6138, 0.2
  %vm6164 = vcmp.lt.f32.partialorder %v6139, 0.2
  %vm6165 = vcmp.lt.f32.partialorder %v6140, 0.2
  %vm6166 = vcmp.lt.f32.partialorder %v6141, 0.2
  %vm6167 = vcmp.lt.f32.partialorder %v6142, 0.2
  %vm6168 = vcmp.lt.f32.partialorder %v6143, 0.2
  %vm6169 = vcmp.lt.f32.partialorder %v6144, 0.2
  %vm6170 = vcmp.lt.f32.partialorder %v6145, 0.2
  %vm6171 = vcmp.lt.f32.partialorder %v6146, 0.2
  %vm6172 = vcmask 1041408
  %v6173 = vrot.slane %v5106, 6
  %v6174 = vrot.slane %v6147, 6
  %v6175 = vsel %vm6172, %v6173, %v6174
  %v6176 = vrot.slane %v5107, 6
  %v6177 = vsel %vm6172, %v6174, %v6176
  %v6178 = vrot.slane %v5108, 6
  %v6179 = vsel %vm6172, %v6176, %v6178
  %v6180 = vrot.slane %v5109, 6
  %v6181 = vsel %vm6172, %v6178, %v6180
  %v6182 = vrot.slane %v5110, 6
  %v6183 = vsel %vm6172, %v6180, %v6182
  %v6184 = vrot.slane %v5111, 6
  %v6185 = vsel %vm6172, %v6182, %v6184
  %v6186 = vrot.slane %v5112, 6
  %v6187 = vsel %vm6172, %v6184, %v6186
  %v6188 = vrot.slane %v5113, 6
  %v6189 = vsel %vm6172, %v6186, %v6188
  %v6190 = vrot.slane %v5114, 6
  %v6191 = vsel %vm6172, %v6188, %v6190
  %v6192 = vrot.slane %v5115, 6
  %v6193 = vsel %vm6172, %v6190, %v6192
  %v6194 = vrot.slane %v5116, 6
  %v6195 = vsel %vm6172, %v6192, %v6194
  %v6196 = vrot.slane %v5117, 6
  %v6197 = vsel %vm6172, %v6194, %v6196
  %v6198 = vrot.slane %v5118, 6
  %v6199 = vsel %vm6172, %v6196, %v6198
  %v6200 = vrot.slane %v5119, 6
  %v6201 = vsel %vm6172, %v6198, %v6200
  %v6202 = vrot.slane %v5120, 6
  %v6203 = vsel %vm6172, %v6200, %v6202
  %v6204 = vrot.slane %v5121, 6
  %v6205 = vsel %vm6172, %v6202, %v6204
  %v6206 = vrot.slane %v5122, 6
  %v6207 = vsel %vm6172, %v6204, %v6206
  %v6208 = vrot.slane %v5123, 6
  %v6209 = vsel %vm6172, %v6206, %v6208
  %v6210 = vrot.slane %v5124, 6
  %v6211 = vsel %vm6172, %v6208, %v6210
  %v6212 = vrot.slane %v5125, 6
  %v6213 = vsel %vm6172, %v6210, %v6212
  %v6214 = vrot.slane %v5126, 6
  %v6215 = vsel %vm6172, %v6212, %v6214
  %v6216 = vrot.slane %v5127, 6
  %v6217 = vsel %vm6172, %v6214, %v6216
  %v6218 = vrot.slane %v5128, 6
  %v6219 = vsel %vm6172, %v6216, %v6218
  %v6220 = vsel %vm6148, %v6173, 187
  %v6221 = vsel %vm6149, %v6175, 187
  %v6222 = vsel %vm6150, %v6177, 187
  %v6223 = vsel %vm6151, %v6179, 187
  %v6224 = vsel %vm6152, %v6181, 187
  %v6225 = vsel %vm6153, %v6183, 187
  %v6226 = vsel %vm6154, %v6185, 187
  %v6227 = vsel %vm6155, %v6187, 187
  %v6228 = vsel %vm6156, %v6189, 187
  %v6229 = vsel %vm6157, %v6191, 187
  %v6230 = vsel %vm6158, %v6193, 187
  %v6231 = vsel %vm6159, %v6195, 187
  %v6232 = vsel %vm6160, %v6197, 187
  %v6233 = vsel %vm6161, %v6199, 187
  %v6234 = vsel %vm6162, %v6201, 187
  %v6235 = vsel %vm6163, %v6203, 187
  %v6236 = vsel %vm6164, %v6205, 187
  %v6237 = vsel %vm6165, %v6207, 187
  %v6238 = vsel %vm6166, %v6209, 187
  %v6239 = vsel %vm6167, %v6211, 187
  %v6240 = vsel %vm6168, %v6213, 187
  %v6241 = vsel %vm6169, %v6215, 187
  %v6242 = vsel %vm6170, %v6217, 187
  %v6243 = vsel %vm6171, %v6219, 187
  %vm6244 = vcmask 1047554
  %v6245 = vsel %vm6244, %v6220, 2147483647
  %vm6246 = vcmp.lt.s32.totalorder %v6245, %v6224
  %v6247 = vsel %vm6246, %v6245, %v6224
  %vm6248 = vcmp.lt.s32.totalorder %v6221, %v6225
  %v6249 = vsel %vm6248, %v6221, %v6225
  %vm6250 = vcmp.lt.s32.totalorder %v6222, %v6226
  %v6251 = vsel %vm6250, %v6222, %v6226
  %vm6252 = vcmp.lt.s32.totalorder %v6223, %v6227
  %v6253 = vsel %vm6252, %v6223, %v6227
  %vm6254 = vcmp.lt.s32.totalorder %v6247, %v6228
  %v6255 = vsel %vm6254, %v6247, %v6228
  %vm6256 = vcmp.lt.s32.totalorder %v6249, %v6229
  %v6257 = vsel %vm6256, %v6249, %v6229
  %vm6258 = vcmp.lt.s32.totalorder %v6251, %v6230
  %v6259 = vsel %vm6258, %v6251, %v6230
  %vm6260 = vcmp.lt.s32.totalorder %v6253, %v6231
  %v6261 = vsel %vm6260, %v6253, %v6231
  %vm6262 = vcmp.lt.s32.totalorder %v6255, %v6232
  %v6263 = vsel %vm6262, %v6255, %v6232
  %vm6264 = vcmp.lt.s32.totalorder %v6257, %v6233
  %v6265 = vsel %vm6264, %v6257, %v6233
  %vm6266 = vcmp.lt.s32.totalorder %v6259, %v6234
  %v6267 = vsel %vm6266, %v6259, %v6234
  %vm6268 = vcmp.lt.s32.totalorder %v6261, %v6235
  %v6269 = vsel %vm6268, %v6261, %v6235
  %vm6270 = vcmp.lt.s32.totalorder %v6263, %v6236
  %v6271 = vsel %vm6270, %v6263, %v6236
  %vm6272 = vcmp.lt.s32.totalorder %v6265, %v6237
  %v6273 = vsel %vm6272, %v6265, %v6237
  %vm6274 = vcmp.lt.s32.totalorder %v6267, %v6238
  %v6275 = vsel %vm6274, %v6267, %v6238
  %vm6276 = vcmp.lt.s32.totalorder %v6269, %v6239
  %v6277 = vsel %vm6276, %v6269, %v6239
  %vm6278 = vcmp.lt.s32.totalorder %v6271, %v6240
  %v6279 = vsel %vm6278, %v6271, %v6240
  %vm6280 = vcmp.lt.s32.totalorder %v6273, %v6241
  %v6281 = vsel %vm6280, %v6273, %v6241
  %vm6282 = vcmp.lt.s32.totalorder %v6275, %v6242
  %v6283 = vsel %vm6282, %v6275, %v6242
  %vm6284 = vcmask 1044480
  %v6285 = vsel %vm6284, %v6243, 2147483647
  %vm6286 = vcmp.lt.s32.totalorder %v6277, %v6285
  %v6287 = vsel %vm6286, %v6277, %v6285
  %vm6288 = vcmp.lt.s32.totalorder %v6279, %v6281
  %v6289 = vsel %vm6288, %v6279, %v6281
  %vm6290 = vcmp.lt.s32.totalorder %v6283, %v6287
  %v6291 = vsel %vm6290, %v6283, %v6287
  %vm6292 = vcmp.lt.s32.totalorder %v6289, %v6291
  %v6293 = vsel %vm6292, %v6289, %v6291
  %v6294 = vrot.slane %v6293, 4
  %vm6295 = vcmp.lt.s32.totalorder %v6293, %v6294
  %v6296 = vsel %vm6295, %v6293, %v6294
  %v6297 = vrot.slane %v6296, 2
  %vm6298 = vcmp.lt.s32.totalorder %v6296, %v6297
  %v6299 = vsel %vm6298, %v6296, %v6297
  %v6300 = vrot.slane %v6299, 1
  %vm6301 = vcmp.lt.s32.totalorder %v6299, %v6300
  %v6302 = vsel %vm6301, %v6299, %v6300
  %vm6303 = vcmp.eq.s32.totalorder %v6302, 0
  %v6304 = vsel %vm6303, 187, %v6302
  %vm6305 = vcmp.le.s32.totalorder %v6304, %v5106
  %vm6306 = vcmp.le.s32.totalorder %v6304, %v6147
  %vm6307 = vcmp.le.s32.totalorder %v6304, %v5107
  %vm6308 = vcmp.le.s32.totalorder %v6304, %v5108
  %vm6309 = vcmp.le.s32.totalorder %v6304, %v5109
  %vm6310 = vcmp.le.s32.totalorder %v6304, %v5110
  %vm6311 = vcmp.le.s32.totalorder %v6304, %v5111
  %vm6312 = vcmp.le.s32.totalorder %v6304, %v5112
  %vm6313 = vcmp.le.s32.totalorder %v6304, %v5113
  %vm6314 = vcmp.le.s32.totalorder %v6304, %v5114
  %vm6315 = vcmp.le.s32.totalorder %v6304, %v5115
  %vm6316 = vcmp.le.s32.totalorder %v6304, %v5116
  %vm6317 = vcmp.le.s32.totalorder %v6304, %v5117
  %vm6318 = vcmp.le.s32.totalorder %v6304, %v5118
  %vm6319 = vcmp.le.s32.totalorder %v6304, %v5119
  %vm6320 = vcmp.le.s32.totalorder %v6304, %v5120
  %vm6321 = vcmp.le.s32.totalorder %v6304, %v5121
  %vm6322 = vcmp.le.s32.totalorder %v6304, %v5122
  %vm6323 = vcmp.le.s32.totalorder %v6304, %v5123
  %vm6324 = vcmp.le.s32.totalorder %v6304, %v5124
  %vm6325 = vcmp.le.s32.totalorder %v6304, %v5125
  %vm6326 = vcmp.le.s32.totalorder %v6304, %v5126
  %vm6327 = vcmp.le.s32.totalorder %v6304, %v5127
  %vm6328 = vcmp.le.s32.totalorder %v6304, %v5128
  %v6353 = vrot.slane %v6123, 7
  %v6354 = vrot.slane %v6124, 7
  %v6355 = vsel %vm5591, %v6353, %v6354
  %v6356 = vrot.slane %v6125, 7
  %v6357 = vsel %vm5591, %v6354, %v6356
  %v6358 = vrot.slane %v6126, 7
  %v6359 = vsel %vm5591, %v6356, %v6358
  %v6360 = vrot.slane %v6127, 7
  %v6361 = vsel %vm5591, %v6358, %v6360
  %v6362 = vrot.slane %v6128, 7
  %v6363 = vsel %vm5591, %v6360, %v6362
  %v6364 = vrot.slane %v6129, 7
  %v6365 = vsel %vm5591, %v6362, %v6364
  %v6366 = vrot.slane %v6130, 7
  %v6367 = vsel %vm5591, %v6364, %v6366
  %v6368 = vrot.slane %v6131, 7
  %v6369 = vsel %vm5591, %v6366, %v6368
  %v6370 = vrot.slane %v6132, 7
  %v6371 = vsel %vm5591, %v6368, %v6370
  %v6372 = vrot.slane %v6133, 7
  %v6373 = vsel %vm5591, %v6370, %v6372
  %v6374 = vrot.slane %v6134, 7
  %v6375 = vsel %vm5591, %v6372, %v6374
  %v6376 = vrot.slane %v6135, 7
  %v6377 = vsel %vm5591, %v6374, %v6376
  %v6378 = vrot.slane %v6136, 7
  %v6379 = vsel %vm5591, %v6376, %v6378
  %v6380 = vrot.slane %v6137, 7
  %v6381 = vsel %vm5591, %v6378, %v6380
  %v6382 = vrot.slane %v6138, 7
  %v6383 = vsel %vm5591, %v6380, %v6382
  %v6384 = vrot.slane %v6139, 7
  %v6385 = vsel %vm5591, %v6382, %v6384
  %v6386 = vrot.slane %v6140, 7
  %v6387 = vsel %vm5591, %v6384, %v6386
  %v6388 = vrot.slane %v6141, 7
  %v6389 = vsel %vm5591, %v6386, %v6388
  %v6390 = vrot.slane %v6142, 7
  %v6391 = vsel %vm5591, %v6388, %v6390
  %v6392 = vrot.slane %v6143, 7
  %v6393 = vsel %vm5591, %v6390, %v6392
  %v6394 = vrot.slane %v6144, 7
  %v6395 = vsel %vm5591, %v6392, %v6394
  %v6396 = vrot.slane %v6145, 7
  %v6397 = vsel %vm5591, %v6394, %v6396
  %v6398 = vrot.slane %v6146, 7
  %v6399 = vsel %vm5591, %v6396, %v6398
  %v6424 = vsub.f32 %v6123, %v6353
  %v6425 = vsub.f32 %v6124, %v6355
  %v6426 = vsub.f32 %v6125, %v6357
  %v6427 = vsub.f32 %v6126, %v6359
  %v6428 = vsub.f32 %v6127, %v6361
  %v6429 = vsub.f32 %v6128, %v6363
  %v6430 = vsub.f32 %v6129, %v6365
  %v6431 = vsub.f32 %v6130, %v6367
  %v6432 = vsub.f32 %v6131, %v6369
  %v6433 = vsub.f32 %v6132, %v6371
  %v6434 = vsub.f32 %v6133, %v6373
  %v6435 = vsub.f32 %v6134, %v6375
  %v6436 = vsub.f32 %v6135, %v6377
  %v6437 = vsub.f32 %v6136, %v6379
  %v6438 = vsub.f32 %v6137, %v6381
  %v6439 = vsub.f32 %v6138, %v6383
  %v6440 = vsub.f32 %v6139, %v6385
  %v6441 = vsub.f32 %v6140, %v6387
  %v6442 = vsub.f32 %v6141, %v6389
  %v6443 = vsub.f32 %v6142, %v6391
  %v6444 = vsub.f32 %v6143, %v6393
  %v6445 = vsub.f32 %v6144, %v6395
  %v6446 = vsub.f32 %v6145, %v6397
  %v6447 = vsub.f32 %v6146, %v6399
  %vm6472 = vcmask 1045504
  %v6473 = vrot.slane %v6424, 2
  %v6474 = vrot.slane %v6425, 2
  %v6475 = vsel %vm6472, %v6473, %v6474
  %v6476 = vrot.slane %v6426, 2
  %v6477 = vsel %vm6472, %v6474, %v6476
  %v6478 = vrot.slane %v6427, 2
  %v6479 = vsel %vm6472, %v6476, %v6478
  %v6480 = vrot.slane %v6428, 2
  %v6481 = vsel %vm6472, %v6478, %v6480
  %v6482 = vrot.slane %v6429, 2
  %v6483 = vsel %vm6472, %v6480, %v6482
  %v6484 = vrot.slane %v6430, 2
  %v6485 = vsel %vm6472, %v6482, %v6484
  %v6486 = vrot.slane %v6431, 2
  %v6487 = vsel %vm6472, %v6484, %v6486
  %v6488 = vrot.slane %v6432, 2
  %v6489 = vsel %vm6472, %v6486, %v6488
  %v6490 = vrot.slane %v6433, 2
  %v6491 = vsel %vm6472, %v6488, %v6490
  %v6492 = vrot.slane %v6434, 2
  %v6493 = vsel %vm6472, %v6490, %v6492
  %v6494 = vrot.slane %v6435, 2
  %v6495 = vsel %vm6472, %v6492, %v6494
  %v6496 = vrot.slane %v6436, 2
  %v6497 = vsel %vm6472, %v6494, %v6496
  %v6498 = vrot.slane %v6437, 2
  %v6499 = vsel %vm6472, %v6496, %v6498
  %v6500 = vrot.slane %v6438, 2
  %v6501 = vsel %vm6472, %v6498, %v6500
  %v6502 = vrot.slane %v6439, 2
  %v6503 = vsel %vm6472, %v6500, %v6502
  %v6504 = vrot.slane %v6440, 2
  %v6505 = vsel %vm6472, %v6502, %v6504
  %v6506 = vrot.slane %v6441, 2
  %v6507 = vsel %vm6472, %v6504, %v6506
  %v6508 = vrot.slane %v6442, 2
  %v6509 = vsel %vm6472, %v6506, %v6508
  %v6510 = vrot.slane %v6443, 2
  %v6511 = vsel %vm6472, %v6508, %v6510
  %v6512 = vrot.slane %v6444, 2
  %v6513 = vsel %vm6472, %v6510, %v6512
  %v6514 = vrot.slane %v6445, 2
  %v6515 = vsel %vm6472, %v6512, %v6514
  %v6516 = vrot.slane %v6446, 2
  %v6517 = vsel %vm6472, %v6514, %v6516
  %v6518 = vrot.slane %v6447, 2
  %v6519 = vsel %vm6472, %v6516, %v6518
  %v6544 = vsel %vm5591, 0.0, %v6475
  %v6545 = vrot.slane %v6424, 3
  %v6546 = vrot.slane %v6425, 3
  %v6547 = vsel %vm6284, %v6545, %v6546
  %v6548 = vrot.slane %v6426, 3
  %v6549 = vsel %vm6284, %v6546, %v6548
  %v6550 = vrot.slane %v6427, 3
  %v6551 = vsel %vm6284, %v6548, %v6550
  %v6552 = vrot.slane %v6428, 3
  %v6553 = vsel %vm6284, %v6550, %v6552
  %v6554 = vrot.slane %v6429, 3
  %v6555 = vsel %vm6284, %v6552, %v6554
  %v6556 = vrot.slane %v6430, 3
  %v6557 = vsel %vm6284, %v6554, %v6556
  %v6558 = vrot.slane %v6431, 3
  %v6559 = vsel %vm6284, %v6556, %v6558
  %v6560 = vrot.slane %v6432, 3
  %v6561 = vsel %vm6284, %v6558, %v6560
  %v6562 = vrot.slane %v6433, 3
  %v6563 = vsel %vm6284, %v6560, %v6562
  %v6564 = vrot.slane %v6434, 3
  %v6565 = vsel %vm6284, %v6562, %v6564
  %v6566 = vrot.slane %v6435, 3
  %v6567 = vsel %vm6284, %v6564, %v6566
  %v6568 = vrot.slane %v6436, 3
  %v6569 = vsel %vm6284, %v6566, %v6568
  %v6570 = vrot.slane %v6437, 3
  %v6571 = vsel %vm6284, %v6568, %v6570
  %v6572 = vrot.slane %v6438, 3
  %v6573 = vsel %vm6284, %v6570, %v6572
  %v6574 = vrot.slane %v6439, 3
  %v6575 = vsel %vm6284, %v6572, %v6574
  %v6576 = vrot.slane %v6440, 3
  %v6577 = vsel %vm6284, %v6574, %v6576
  %v6578 = vrot.slane %v6441, 3
  %v6579 = vsel %vm6284, %v6576, %v6578
  %v6580 = vrot.slane %v6442, 3
  %v6581 = vsel %vm6284, %v6578, %v6580
  %v6582 = vrot.slane %v6443, 3
  %v6583 = vsel %vm6284, %v6580, %v6582
  %v6584 = vrot.slane %v6444, 3
  %v6585 = vsel %vm6284, %v6582, %v6584
  %v6586 = vrot.slane %v6445, 3
  %v6587 = vsel %vm6284, %v6584, %v6586
  %v6588 = vrot.slane %v6446, 3
  %v6589 = vsel %vm6284, %v6586, %v6588
  %v6590 = vrot.slane %v6447, 3
  %v6591 = vsel %vm6284, %v6588, %v6590
  %v6616 = vsel %vm6172, %v6590, 0.0
  %vm6617 = vcmp.le.f32.partialorder %v6544, 0.0
  %vm6618 = vcmp.le.f32.partialorder %v6477, 0.0
  %vm6619 = vcmp.le.f32.partialorder %v6479, 0.0
  %vm6620 = vcmp.le.f32.partialorder %v6481, 0.0
  %vm6621 = vcmp.le.f32.partialorder %v6483, 0.0
  %vm6622 = vcmp.le.f32.partialorder %v6485, 0.0
  %vm6623 = vcmp.le.f32.partialorder %v6487, 0.0
  %vm6624 = vcmp.le.f32.partialorder %v6489, 0.0
  %vm6625 = vcmp.le.f32.partialorder %v6491, 0.0
  %vm6626 = vcmp.le.f32.partialorder %v6493, 0.0
  %vm6627 = vcmp.le.f32.partialorder %v6495, 0.0
  %vm6628 = vcmp.le.f32.partialorder %v6497, 0.0
  %vm6629 = vcmp.le.f32.partialorder %v6499, 0.0
  %vm6630 = vcmp.le.f32.partialorder %v6501, 0.0
  %vm6631 = vcmp.le.f32.partialorder %v6503, 0.0
  %vm6632 = vcmp.le.f32.partialorder %v6505, 0.0
  %vm6633 = vcmp.le.f32.partialorder %v6507, 0.0
  %vm6634 = vcmp.le.f32.partialorder %v6509, 0.0
  %vm6635 = vcmp.le.f32.partialorder %v6511, 0.0
  %vm6636 = vcmp.le.f32.partialorder %v6513, 0.0
  %vm6637 = vcmp.le.f32.partialorder %v6515, 0.0
  %vm6638 = vcmp.le.f32.partialorder %v6517, 0.0
  %vm6639 = vcmp.le.f32.partialorder %v6519, 0.0
  %vm6640 = vcmp.le.f32.partialorder %v6518, 0.0
  %vm6641 = vcmp.ge.f32.partialorder %v6547, 0.0
  %vm6642 = vcmp.ge.f32.partialorder %v6549, 0.0
  %vm6643 = vcmp.ge.f32.partialorder %v6551, 0.0
  %vm6644 = vcmp.ge.f32.partialorder %v6553, 0.0
  %vm6645 = vcmp.ge.f32.partialorder %v6555, 0.0
  %vm6646 = vcmp.ge.f32.partialorder %v6557, 0.0
  %vm6647 = vcmp.ge.f32.partialorder %v6559, 0.0
  %vm6648 = vcmp.ge.f32.partialorder %v6561, 0.0
  %vm6649 = vcmp.ge.f32.partialorder %v6563, 0.0
  %vm6650 = vcmp.ge.f32.partialorder %v6565, 0.0
  %vm6651 = vcmp.ge.f32.partialorder %v6567, 0.0
  %vm6652 = vcmp.ge.f32.partialorder %v6569, 0.0
  %vm6653 = vcmp.ge.f32.partialorder %v6571, 0.0
  %vm6654 = vcmp.ge.f32.partialorder %v6573, 0.0
  %vm6655 = vcmp.ge.f32.partialorder %v6575, 0.0
  %vm6656 = vcmp.ge.f32.partialorder %v6577, 0.0
  %vm6657 = vcmp.ge.f32.partialorder %v6579, 0.0
  %vm6658 = vcmp.ge.f32.partialorder %v6581, 0.0
  %vm6659 = vcmp.ge.f32.partialorder %v6583, 0.0
  %vm6660 = vcmp.ge.f32.partialorder %v6585, 0.0
  %vm6661 = vcmp.ge.f32.partialorder %v6587, 0.0
  %vm6662 = vcmp.ge.f32.partialorder %v6589, 0.0
  %vm6663 = vcmp.ge.f32.partialorder %v6591, 0.0
  %vm6664 = vcmp.ge.f32.partialorder %v6616, 0.0
  %vm6665 = vmand %vm6617, %vm6641
  %vm6666 = vmand %vm6618, %vm6642
  %vm6667 = vmand %vm6619, %vm6643
  %vm6668 = vmand %vm6620, %vm6644
  %vm6669 = vmand %vm6621, %vm6645
  %vm6670 = vmand %vm6622, %vm6646
  %vm6671 = vmand %vm6623, %vm6647
  %vm6672 = vmand %vm6624, %vm6648
  %vm6673 = vmand %vm6625, %vm6649
  %vm6674 = vmand %vm6626, %vm6650
  %vm6675 = vmand %vm6627, %vm6651
  %vm6676 = vmand %vm6628, %vm6652
  %vm6677 = vmand %vm6629, %vm6653
  %vm6678 = vmand %vm6630, %vm6654
  %vm6679 = vmand %vm6631, %vm6655
  %vm6680 = vmand %vm6632, %vm6656
  %vm6681 = vmand %vm6633, %vm6657
  %vm6682 = vmand %vm6634, %vm6658
  %vm6683 = vmand %vm6635, %vm6659
  %vm6684 = vmand %vm6636, %vm6660
  %vm6685 = vmand %vm6637, %vm6661
  %vm6686 = vmand %vm6638, %vm6662
  %vm6687 = vmand %vm6639, %vm6663
  %vm6688 = vmand %vm6640, %vm6664
  %vm6689 = vmand %vm6305, %vm6665
  %vm6690 = vmand %vm6306, %vm6666
  %vm6691 = vmand %vm6307, %vm6667
  %vm6692 = vmand %vm6308, %vm6668
  %vm6693 = vmand %vm6309, %vm6669
  %vm6694 = vmand %vm6310, %vm6670
  %vm6695 = vmand %vm6311, %vm6671
  %vm6696 = vmand %vm6312, %vm6672
  %vm6697 = vmand %vm6313, %vm6673
  %vm6698 = vmand %vm6314, %vm6674
  %vm6699 = vmand %vm6315, %vm6675
  %vm6700 = vmand %vm6316, %vm6676
  %vm6701 = vmand %vm6317, %vm6677
  %vm6702 = vmand %vm6318, %vm6678
  %vm6703 = vmand %vm6319, %vm6679
  %vm6704 = vmand %vm6320, %vm6680
  %vm6705 = vmand %vm6321, %vm6681
  %vm6706 = vmand %vm6322, %vm6682
  %vm6707 = vmand %vm6323, %vm6683
  %vm6708 = vmand %vm6324, %vm6684
  %vm6709 = vmand %vm6325, %vm6685
  %vm6710 = vmand %vm6326, %vm6686
  %vm6711 = vmand %vm6327, %vm6687
  %vm6712 = vmand %vm6328, %vm6688
  %v6713 = vsel %vm6689, %v5106, 187
  %v6714 = vsel %vm6690, %v6147, 187
  %v6715 = vsel %vm6691, %v5107, 187
  %v6716 = vsel %vm6692, %v5108, 187
  %v6717 = vsel %vm6693, %v5109, 187
  %v6718 = vsel %vm6694, %v5110, 187
  %v6719 = vsel %vm6695, %v5111, 187
  %v6720 = vsel %vm6696, %v5112, 187
  %v6721 = vsel %vm6697, %v5113, 187
  %v6722 = vsel %vm6698, %v5114, 187
  %v6723 = vsel %vm6699, %v5115, 187
  %v6724 = vsel %vm6700, %v5116, 187
  %v6725 = vsel %vm6701, %v5117, 187
  %v6726 = vsel %vm6702, %v5118, 187
  %v6727 = vsel %vm6703, %v5119, 187
  %v6728 = vsel %vm6704, %v5120, 187
  %v6729 = vsel %vm6705, %v5121, 187
  %v6730 = vsel %vm6706, %v5122, 187
  %v6731 = vsel %vm6707, %v5123, 187
  %v6732 = vsel %vm6708, %v5124, 187
  %v6733 = vsel %vm6709, %v5125, 187
  %v6734 = vsel %vm6710, %v5126, 187
  %v6735 = vsel %vm6711, %v5127, 187
  %v6736 = vsel %vm6712, %v5128, 187
  %vm6737 = vcmp.lt.s32.totalorder %v6713, %v6717
  %v6738 = vsel %vm6737, %v6713, %v6717
  %vm6739 = vcmp.lt.s32.totalorder %v6714, %v6718
  %v6740 = vsel %vm6739, %v6714, %v6718
  %vm6741 = vcmp.lt.s32.totalorder %v6715, %v6719
  %v6742 = vsel %vm6741, %v6715, %v6719
  %vm6743 = vcmp.lt.s32.totalorder %v6716, %v6720
  %v6744 = vsel %vm6743, %v6716, %v6720
  %vm6745 = vcmp.lt.s32.totalorder %v6738, %v6721
  %v6746 = vsel %vm6745, %v6738, %v6721
  %vm6747 = vcmp.lt.s32.totalorder %v6740, %v6722
  %v6748 = vsel %vm6747, %v6740, %v6722
  %vm6749 = vcmp.lt.s32.totalorder %v6742, %v6723
  %v6750 = vsel %vm6749, %v6742, %v6723
  %vm6751 = vcmp.lt.s32.totalorder %v6744, %v6724
  %v6752 = vsel %vm6751, %v6744, %v6724
  %vm6753 = vcmp.lt.s32.totalorder %v6746, %v6725
  %v6754 = vsel %vm6753, %v6746, %v6725
  %vm6755 = vcmp.lt.s32.totalorder %v6748, %v6726
  %v6756 = vsel %vm6755, %v6748, %v6726
  %vm6757 = vcmp.lt.s32.totalorder %v6750, %v6727
  %v6758 = vsel %vm6757, %v6750, %v6727
  %vm6759 = vcmp.lt.s32.totalorder %v6752, %v6728
  %v6760 = vsel %vm6759, %v6752, %v6728
  %vm6761 = vcmp.lt.s32.totalorder %v6754, %v6729
  %v6762 = vsel %vm6761, %v6754, %v6729
  %vm6763 = vcmp.lt.s32.totalorder %v6756, %v6730
  %v6764 = vsel %vm6763, %v6756, %v6730
  %vm6765 = vcmp.lt.s32.totalorder %v6758, %v6731
  %v6766 = vsel %vm6765, %v6758, %v6731
  %vm6767 = vcmp.lt.s32.totalorder %v6760, %v6732
  %v6768 = vsel %vm6767, %v6760, %v6732
  %vm6769 = vcmp.lt.s32.totalorder %v6762, %v6733
  %v6770 = vsel %vm6769, %v6762, %v6733
  %vm6771 = vcmp.lt.s32.totalorder %v6764, %v6734
  %v6772 = vsel %vm6771, %v6764, %v6734
  %vm6773 = vcmp.lt.s32.totalorder %v6766, %v6735
  %v6774 = vsel %vm6773, %v6766, %v6735
  %vm6775 = vcmask 1042432
  %v6776 = vsel %vm6775, %v6736, 2147483647
  %vm6777 = vcmp.lt.s32.totalorder %v6768, %v6776
  %v6778 = vsel %vm6777, %v6768, %v6776
  %vm6779 = vcmp.lt.s32.totalorder %v6770, %v6772
  %v6780 = vsel %vm6779, %v6770, %v6772
  %vm6781 = vcmp.lt.s32.totalorder %v6774, %v6778
  %v6782 = vsel %vm6781, %v6774, %v6778
  %vm6783 = vcmp.lt.s32.totalorder %v6780, %v6782
  %v6784 = vsel %vm6783, %v6780, %v6782
  %v6785 = vrot.slane %v6784, 4
  %vm6786 = vcmp.lt.s32.totalorder %v6784, %v6785
  %v6787 = vsel %vm6786, %v6784, %v6785
  %v6788 = vrot.slane %v6787, 2
  %vm6789 = vcmp.lt.s32.totalorder %v6787, %v6788
  %v6790 = vsel %vm6789, %v6787, %v6788
  %v6791 = vrot.slane %v6790, 1
  %vm6792 = vcmp.lt.s32.totalorder %v6790, %v6791
  %v6793 = vsel %vm6792, %v6790, %v6791
  %vm6794 = vcmp.eq.s32.totalorder %v6793, 187
  %v6795 = vsel %vm6794, 0, %v6793
  %v6796 = vrot.slane %v6123, 6
  %v6797 = vrot.slane %v6124, 6
  %v6798 = vsel %vm6172, %v6796, %v6797
  %v6799 = vrot.slane %v6125, 6
  %v6800 = vsel %vm6172, %v6797, %v6799
  %v6801 = vrot.slane %v6126, 6
  %v6802 = vsel %vm6172, %v6799, %v6801
  %v6803 = vrot.slane %v6127, 6
  %v6804 = vsel %vm6172, %v6801, %v6803
  %v6805 = vrot.slane %v6128, 6
  %v6806 = vsel %vm6172, %v6803, %v6805
  %v6807 = vrot.slane %v6129, 6
  %v6808 = vsel %vm6172, %v6805, %v6807
  %v6809 = vrot.slane %v6130, 6
  %v6810 = vsel %vm6172, %v6807, %v6809
  %v6811 = vrot.slane %v6131, 6
  %v6812 = vsel %vm6172, %v6809, %v6811
  %v6813 = vrot.slane %v6132, 6
  %v6814 = vsel %vm6172, %v6811, %v6813
  %v6815 = vrot.slane %v6133, 6
  %v6816 = vsel %vm6172, %v6813, %v6815
  %v6817 = vrot.slane %v6134, 6
  %v6818 = vsel %vm6172, %v6815, %v6817
  %v6819 = vrot.slane %v6135, 6
  %v6820 = vsel %vm6172, %v6817, %v6819
  %v6821 = vrot.slane %v6136, 6
  %v6822 = vsel %vm6172, %v6819, %v6821
  %v6823 = vrot.slane %v6137, 6
  %v6824 = vsel %vm6172, %v6821, %v6823
  %v6825 = vrot.slane %v6138, 6
  %v6826 = vsel %vm6172, %v6823, %v6825
  %v6827 = vrot.slane %v6139, 6
  %v6828 = vsel %vm6172, %v6825, %v6827
  %v6829 = vrot.slane %v6140, 6
  %v6830 = vsel %vm6172, %v6827, %v6829
  %v6831 = vrot.slane %v6141, 6
  %v6832 = vsel %vm6172, %v6829, %v6831
  %v6833 = vrot.slane %v6142, 6
  %v6834 = vsel %vm6172, %v6831, %v6833
  %v6835 = vrot.slane %v6143, 6
  %v6836 = vsel %vm6172, %v6833, %v6835
  %v6837 = vrot.slane %v6144, 6
  %v6838 = vsel %vm6172, %v6835, %v6837
  %v6839 = vrot.slane %v6145, 6
  %v6840 = vsel %vm6172, %v6837, %v6839
  %v6841 = vrot.slane %v6146, 6
  %v6842 = vsel %vm6172, %v6839, %v6841
  %v6867 = vadd.f32 %v6123, %v6796
  %v6868 = vadd.f32 %v6124, %v6798
  %v6869 = vadd.f32 %v6125, %v6800
  %v6870 = vadd.f32 %v6126, %v6802
  %v6871 = vadd.f32 %v6127, %v6804
  %v6872 = vadd.f32 %v6128, %v6806
  %v6873 = vadd.f32 %v6129, %v6808
  %v6874 = vadd.f32 %v6130, %v6810
  %v6875 = vadd.f32 %v6131, %v6812
  %v6876 = vadd.f32 %v6132, %v6814
  %v6877 = vadd.f32 %v6133, %v6816
  %v6878 = vadd.f32 %v6134, %v6818
  %v6879 = vadd.f32 %v6135, %v6820
  %v6880 = vadd.f32 %v6136, %v6822
  %v6881 = vadd.f32 %v6137, %v6824
  %v6882 = vadd.f32 %v6138, %v6826
  %v6883 = vadd.f32 %v6139, %v6828
  %v6884 = vadd.f32 %v6140, %v6830
  %v6885 = vadd.f32 %v6141, %v6832
  %v6886 = vadd.f32 %v6142, %v6834
  %v6887 = vadd.f32 %v6143, %v6836
  %v6888 = vadd.f32 %v6144, %v6838
  %v6889 = vadd.f32 %v6145, %v6840
  %v6890 = vadd.f32 %v6146, %v6842
  %v6891 = vmul.f32 %v6123, 2.0
  %v6892 = vmul.f32 %v6124, 2.0
  %v6893 = vmul.f32 %v6125, 2.0
  %v6894 = vmul.f32 %v6126, 2.0
  %v6895 = vmul.f32 %v6127, 2.0
  %v6896 = vmul.f32 %v6128, 2.0
  %v6897 = vmul.f32 %v6129, 2.0
  %v6898 = vmul.f32 %v6130, 2.0
  %v6899 = vmul.f32 %v6131, 2.0
  %v6900 = vmul.f32 %v6132, 2.0
  %v6901 = vmul.f32 %v6133, 2.0
  %v6902 = vmul.f32 %v6134, 2.0
  %v6903 = vmul.f32 %v6135, 2.0
  %v6904 = vmul.f32 %v6136, 2.0
  %v6905 = vmul.f32 %v6137, 2.0
  %v6906 = vmul.f32 %v6138, 2.0
  %v6907 = vmul.f32 %v6139, 2.0
  %v6908 = vmul.f32 %v6140, 2.0
  %v6909 = vmul.f32 %v6141, 2.0
  %v6910 = vmul.f32 %v6142, 2.0
  %v6911 = vmul.f32 %v6143, 2.0
  %v6912 = vmul.f32 %v6144, 2.0
  %v6913 = vmul.f32 %v6145, 2.0
  %v6914 = vmul.f32 %v6146, 2.0
  %v6939 = vrot.slane %v6891, 7
  %v6940 = vrot.slane %v6892, 7
  %v6941 = vsel %vm5591, %v6939, %v6940
  %v6942 = vrot.slane %v6893, 7
  %v6943 = vsel %vm5591, %v6940, %v6942
  %v6944 = vrot.slane %v6894, 7
  %v6945 = vsel %vm5591, %v6942, %v6944
  %v6946 = vrot.slane %v6895, 7
  %v6947 = vsel %vm5591, %v6944, %v6946
  %v6948 = vrot.slane %v6896, 7
  %v6949 = vsel %vm5591, %v6946, %v6948
  %v6950 = vrot.slane %v6897, 7
  %v6951 = vsel %vm5591, %v6948, %v6950
  %v6952 = vrot.slane %v6898, 7
  %v6953 = vsel %vm5591, %v6950, %v6952
  %v6954 = vrot.slane %v6899, 7
  %v6955 = vsel %vm5591, %v6952, %v6954
  %v6956 = vrot.slane %v6900, 7
  %v6957 = vsel %vm5591, %v6954, %v6956
  %v6958 = vrot.slane %v6901, 7
  %v6959 = vsel %vm5591, %v6956, %v6958
  %v6960 = vrot.slane %v6902, 7
  %v6961 = vsel %vm5591, %v6958, %v6960
  %v6962 = vrot.slane %v6903, 7
  %v6963 = vsel %vm5591, %v6960, %v6962
  %v6964 = vrot.slane %v6904, 7
  %v6965 = vsel %vm5591, %v6962, %v6964
  %v6966 = vrot.slane %v6905, 7
  %v6967 = vsel %vm5591, %v6964, %v6966
  %v6968 = vrot.slane %v6906, 7
  %v6969 = vsel %vm5591, %v6966, %v6968
  %v6970 = vrot.slane %v6907, 7
  %v6971 = vsel %vm5591, %v6968, %v6970
  %v6972 = vrot.slane %v6908, 7
  %v6973 = vsel %vm5591, %v6970, %v6972
  %v6974 = vrot.slane %v6909, 7
  %v6975 = vsel %vm5591, %v6972, %v6974
  %v6976 = vrot.slane %v6910, 7
  %v6977 = vsel %vm5591, %v6974, %v6976
  %v6978 = vrot.slane %v6911, 7
  %v6979 = vsel %vm5591, %v6976, %v6978
  %v6980 = vrot.slane %v6912, 7
  %v6981 = vsel %vm5591, %v6978, %v6980
  %v6982 = vrot.slane %v6913, 7
  %v6983 = vsel %vm5591, %v6980, %v6982
  %v6984 = vrot.slane %v6914, 7
  %v6985 = vsel %vm5591, %v6982, %v6984
  %v7010 = vsub.f32 %v6867, %v6939
  %v7011 = vsub.f32 %v6868, %v6941
  %v7012 = vsub.f32 %v6869, %v6943
  %v7013 = vsub.f32 %v6870, %v6945
  %v7014 = vsub.f32 %v6871, %v6947
  %v7015 = vsub.f32 %v6872, %v6949
  %v7016 = vsub.f32 %v6873, %v6951
  %v7017 = vsub.f32 %v6874, %v6953
  %v7018 = vsub.f32 %v6875, %v6955
  %v7019 = vsub.f32 %v6876, %v6957
  %v7020 = vsub.f32 %v6877, %v6959
  %v7021 = vsub.f32 %v6878, %v6961
  %v7022 = vsub.f32 %v6879, %v6963
  %v7023 = vsub.f32 %v6880, %v6965
  %v7024 = vsub.f32 %v6881, %v6967
  %v7025 = vsub.f32 %v6882, %v6969
  %v7026 = vsub.f32 %v6883, %v6971
  %v7027 = vsub.f32 %v6884, %v6973
  %v7028 = vsub.f32 %v6885, %v6975
  %v7029 = vsub.f32 %v6886, %v6977
  %v7030 = vsub.f32 %v6887, %v6979
  %v7031 = vsub.f32 %v6888, %v6981
  %v7032 = vsub.f32 %v6889, %v6983
  %v7033 = vsub.f32 %v6890, %v6985
  %v7034 = vsub.f32 %v6123, %v6796
  %v7035 = vsub.f32 %v6124, %v6798
  %v7036 = vsub.f32 %v6125, %v6800
  %v7037 = vsub.f32 %v6126, %v6802
  %v7038 = vsub.f32 %v6127, %v6804
  %v7039 = vsub.f32 %v6128, %v6806
  %v7040 = vsub.f32 %v6129, %v6808
  %v7041 = vsub.f32 %v6130, %v6810
  %v7042 = vsub.f32 %v6131, %v6812
  %v7043 = vsub.f32 %v6132, %v6814
  %v7044 = vsub.f32 %v6133, %v6816
  %v7045 = vsub.f32 %v6134, %v6818
  %v7046 = vsub.f32 %v6135, %v6820
  %v7047 = vsub.f32 %v6136, %v6822
  %v7048 = vsub.f32 %v6137, %v6824
  %v7049 = vsub.f32 %v6138, %v6826
  %v7050 = vsub.f32 %v6139, %v6828
  %v7051 = vsub.f32 %v6140, %v6830
  %v7052 = vsub.f32 %v6141, %v6832
  %v7053 = vsub.f32 %v6142, %v6834
  %v7054 = vsub.f32 %v6143, %v6836
  %v7055 = vsub.f32 %v6144, %v6838
  %v7056 = vsub.f32 %v6145, %v6840
  %v7057 = vsub.f32 %v6146, %v6842
  %v7058 = vmul.f32 %v7034, 0.5
  %v7059 = vmul.f32 %v7035, 0.5
  %v7060 = vmul.f32 %v7036, 0.5
  %v7061 = vmul.f32 %v7037, 0.5
  %v7062 = vmul.f32 %v7038, 0.5
  %v7063 = vmul.f32 %v7039, 0.5
  %v7064 = vmul.f32 %v7040, 0.5
  %v7065 = vmul.f32 %v7041, 0.5
  %v7066 = vmul.f32 %v7042, 0.5
  %v7067 = vmul.f32 %v7043, 0.5
  %v7068 = vmul.f32 %v7044, 0.5
  %v7069 = vmul.f32 %v7045, 0.5
  %v7070 = vmul.f32 %v7046, 0.5
  %v7071 = vmul.f32 %v7047, 0.5
  %v7072 = vmul.f32 %v7048, 0.5
  %v7073 = vmul.f32 %v7049, 0.5
  %v7074 = vmul.f32 %v7050, 0.5
  %v7075 = vmul.f32 %v7051, 0.5
  %v7076 = vmul.f32 %v7052, 0.5
  %v7077 = vmul.f32 %v7053, 0.5
  %v7078 = vmul.f32 %v7054, 0.5
  %v7079 = vmul.f32 %v7055, 0.5
  %v7080 = vmul.f32 %v7056, 0.5
  %v7081 = vmul.f32 %v7057, 0.5
  %vm7082 = vcmp.eq.f32.partialorder %v7010, 0.0
  %vm7083 = vcmp.eq.f32.partialorder %v7011, 0.0
  %vm7084 = vcmp.eq.f32.partialorder %v7012, 0.0
  %vm7085 = vcmp.eq.f32.partialorder %v7013, 0.0
  %vm7086 = vcmp.eq.f32.partialorder %v7014, 0.0
  %vm7087 = vcmp.eq.f32.partialorder %v7015, 0.0
  %vm7088 = vcmp.eq.f32.partialorder %v7016, 0.0
  %vm7089 = vcmp.eq.f32.partialorder %v7017, 0.0
  %vm7090 = vcmp.eq.f32.partialorder %v7018, 0.0
  %vm7091 = vcmp.eq.f32.partialorder %v7019, 0.0
  %vm7092 = vcmp.eq.f32.partialorder %v7020, 0.0
  %vm7093 = vcmp.eq.f32.partialorder %v7021, 0.0
  %vm7094 = vcmp.eq.f32.partialorder %v7022, 0.0
  %vm7095 = vcmp.eq.f32.partialorder %v7023, 0.0
  %vm7096 = vcmp.eq.f32.partialorder %v7024, 0.0
  %vm7097 = vcmp.eq.f32.partialorder %v7025, 0.0
  %vm7098 = vcmp.eq.f32.partialorder %v7026, 0.0
  %vm7099 = vcmp.eq.f32.partialorder %v7027, 0.0
  %vm7100 = vcmp.eq.f32.partialorder %v7028, 0.0
  %vm7101 = vcmp.eq.f32.partialorder %v7029, 0.0
  %vm7102 = vcmp.eq.f32.partialorder %v7030, 0.0
  %vm7103 = vcmp.eq.f32.partialorder %v7031, 0.0
  %vm7104 = vcmp.eq.f32.partialorder %v7032, 0.0
  %vm7105 = vcmp.eq.f32.partialorder %v7033, 0.0
  %v7106 = vsel %vm7082, 1.0, %v7010
  %v7107 = vsel %vm7083, 1.0, %v7011
  %v7108 = vsel %vm7084, 1.0, %v7012
  %v7109 = vsel %vm7085, 1.0, %v7013
  %v7110 = vsel %vm7086, 1.0, %v7014
  %v7111 = vsel %vm7087, 1.0, %v7015
  %v7112 = vsel %vm7088, 1.0, %v7016
  %v7113 = vsel %vm7089, 1.0, %v7017
  %v7114 = vsel %vm7090, 1.0, %v7018
  %v7115 = vsel %vm7091, 1.0, %v7019
  %v7116 = vsel %vm7092, 1.0, %v7020
  %v7117 = vsel %vm7093, 1.0, %v7021
  %v7118 = vsel %vm7094, 1.0, %v7022
  %v7119 = vsel %vm7095, 1.0, %v7023
  %v7120 = vsel %vm7096, 1.0, %v7024
  %v7121 = vsel %vm7097, 1.0, %v7025
  %v7122 = vsel %vm7098, 1.0, %v7026
  %v7123 = vsel %vm7099, 1.0, %v7027
  %v7124 = vsel %vm7100, 1.0, %v7028
  %v7125 = vsel %vm7101, 1.0, %v7029
  %v7126 = vsel %vm7102, 1.0, %v7030
  %v7127 = vsel %vm7103, 1.0, %v7031
  %v7128 = vsel %vm7104, 1.0, %v7032
  %v7129 = vsel %vm7105, 1.0, %v7033
  %v7130 = vand.u32 2147483647, %v7058
  %v7131 = vand.u32 2147483647, %v7059
  %v7132 = vand.u32 2147483647, %v7060
  %v7133 = vand.u32 2147483647, %v7061
  %v7134 = vand.u32 2147483647, %v7062
  %v7135 = vand.u32 2147483647, %v7063
  %v7136 = vand.u32 2147483647, %v7064
  %v7137 = vand.u32 2147483647, %v7065
  %v7138 = vand.u32 2147483647, %v7066
  %v7139 = vand.u32 2147483647, %v7067
  %v7140 = vand.u32 2147483647, %v7068
  %v7141 = vand.u32 2147483647, %v7069
  %v7142 = vand.u32 2147483647, %v7070
  %v7143 = vand.u32 2147483647, %v7071
  %v7144 = vand.u32 2147483647, %v7072
  %v7145 = vand.u32 2147483647, %v7073
  %v7146 = vand.u32 2147483647, %v7074
  %v7147 = vand.u32 2147483647, %v7075
  %v7148 = vand.u32 2147483647, %v7076
  %v7149 = vand.u32 2147483647, %v7077
  %v7150 = vand.u32 2147483647, %v7078
  %v7151 = vand.u32 2147483647, %v7079
  %v7152 = vand.u32 2147483647, %v7080
  %v7153 = vand.u32 2147483647, %v7081
  %v7154 = vand.u32 2147483647, %v7010
  %v7155 = vand.u32 2147483647, %v7011
  %v7156 = vand.u32 2147483647, %v7012
  %v7157 = vand.u32 2147483647, %v7013
  %v7158 = vand.u32 2147483647, %v7014
  %v7159 = vand.u32 2147483647, %v7015
  %v7160 = vand.u32 2147483647, %v7016
  %v7161 = vand.u32 2147483647, %v7017
  %v7162 = vand.u32 2147483647, %v7018
  %v7163 = vand.u32 2147483647, %v7019
  %v7164 = vand.u32 2147483647, %v7020
  %v7165 = vand.u32 2147483647, %v7021
  %v7166 = vand.u32 2147483647, %v7022
  %v7167 = vand.u32 2147483647, %v7023
  %v7168 = vand.u32 2147483647, %v7024
  %v7169 = vand.u32 2147483647, %v7025
  %v7170 = vand.u32 2147483647, %v7026
  %v7171 = vand.u32 2147483647, %v7027
  %v7172 = vand.u32 2147483647, %v7028
  %v7173 = vand.u32 2147483647, %v7029
  %v7174 = vand.u32 2147483647, %v7030
  %v7175 = vand.u32 2147483647, %v7031
  %v7176 = vand.u32 2147483647, %v7032
  %v7177 = vand.u32 2147483647, %v7033
  %vm7178 = vcmp.ge.f32.partialorder %v7130, %v7154
  %vm7179 = vcmp.ge.f32.partialorder %v7131, %v7155
  %vm7180 = vcmp.ge.f32.partialorder %v7132, %v7156
  %vm7181 = vcmp.ge.f32.partialorder %v7133, %v7157
  %vm7182 = vcmp.ge.f32.partialorder %v7134, %v7158
  %vm7183 = vcmp.ge.f32.partialorder %v7135, %v7159
  %vm7184 = vcmp.ge.f32.partialorder %v7136, %v7160
  %vm7185 = vcmp.ge.f32.partialorder %v7137, %v7161
  %vm7186 = vcmp.ge.f32.partialorder %v7138, %v7162
  %vm7187 = vcmp.ge.f32.partialorder %v7139, %v7163
  %vm7188 = vcmp.ge.f32.partialorder %v7140, %v7164
  %vm7189 = vcmp.ge.f32.partialorder %v7141, %v7165
  %vm7190 = vcmp.ge.f32.partialorder %v7142, %v7166
  %vm7191 = vcmp.ge.f32.partialorder %v7143, %v7167
  %vm7192 = vcmp.ge.f32.partialorder %v7144, %v7168
  %vm7193 = vcmp.ge.f32.partialorder %v7145, %v7169
  %vm7194 = vcmp.ge.f32.partialorder %v7146, %v7170
  %vm7195 = vcmp.ge.f32.partialorder %v7147, %v7171
  %vm7196 = vcmp.ge.f32.partialorder %v7148, %v7172
  %vm7197 = vcmp.ge.f32.partialorder %v7149, %v7173
  %vm7198 = vcmp.ge.f32.partialorder %v7150, %v7174
  %vm7199 = vcmp.ge.f32.partialorder %v7151, %v7175
  %vm7200 = vcmp.ge.f32.partialorder %v7152, %v7176
  %vm7201 = vcmp.ge.f32.partialorder %v7153, %v7177
  %v7202 = vsub.f32 0.0, %v7058
  %v7203 = vsub.f32 0.0, %v7059
  %v7204 = vsub.f32 0.0, %v7060
  %v7205 = vsub.f32 0.0, %v7061
  %v7206 = vsub.f32 0.0, %v7062
  %v7207 = vsub.f32 0.0, %v7063
  %v7208 = vsub.f32 0.0, %v7064
  %v7209 = vsub.f32 0.0, %v7065
  %v7210 = vsub.f32 0.0, %v7066
  %v7211 = vsub.f32 0.0, %v7067
  %v7212 = vsub.f32 0.0, %v7068
  %v7213 = vsub.f32 0.0, %v7069
  %v7214 = vsub.f32 0.0, %v7070
  %v7215 = vsub.f32 0.0, %v7071
  %v7216 = vsub.f32 0.0, %v7072
  %v7217 = vsub.f32 0.0, %v7073
  %v7218 = vsub.f32 0.0, %v7074
  %v7219 = vsub.f32 0.0, %v7075
  %v7220 = vsub.f32 0.0, %v7076
  %v7221 = vsub.f32 0.0, %v7077
  %v7222 = vsub.f32 0.0, %v7078
  %v7223 = vsub.f32 0.0, %v7079
  %v7224 = vsub.f32 0.0, %v7080
  %v7225 = vsub.f32 0.0, %v7081
  %v7226 = vrcp.pop %v7106
  %v7227 = vmul.f32 %v7106, %v7226
  %v7228 = vsub.f32 1.0, %v7227
  %v7229 = vmul.f32 %v7226, %v7228
  %v7230 = vadd.f32 %v7226, %v7229
  %vm7231 = vweird.f32 %v7106
  %vm7232 = vweird.f32 %v7226
  %vm7233 = vmor %vm7231, %vm7232
  %v7234 = vsel %vm7233, %v7226, %v7230
  %v7235 = vand.u32 2147483647, %v7106
  %vm7236 = vcmp.eq.f32.partialorder %v7235, 8.507059e+37
  %v7237 = vand.u32 %v7106, 2147483648
  %v7238 = vor.u32 1.1754944e-38, %v7237
  %v7239 = vsel %vm7236, %v7238, %v7234
  %v7240 = vmul.f32 %v7202, %v7239
  %v7241 = vrcp.pop %v7107
  %v7242 = vmul.f32 %v7107, %v7241
  %v7243 = vsub.f32 1.0, %v7242
  %v7244 = vmul.f32 %v7241, %v7243
  %v7245 = vadd.f32 %v7241, %v7244
  %vm7246 = vweird.f32 %v7107
  %vm7247 = vweird.f32 %v7241
  %vm7248 = vmor %vm7246, %vm7247
  %v7249 = vsel %vm7248, %v7241, %v7245
  %v7250 = vand.u32 2147483647, %v7107
  %vm7251 = vcmp.eq.f32.partialorder %v7250, 8.507059e+37
  %v7252 = vand.u32 %v7107, 2147483648
  %v7253 = vor.u32 1.1754944e-38, %v7252
  %v7254 = vsel %vm7251, %v7253, %v7249
  %v7255 = vmul.f32 %v7203, %v7254
  %v7256 = vrcp.pop %v7108
  %v7257 = vmul.f32 %v7108, %v7256
  %v7258 = vsub.f32 1.0, %v7257
  %v7259 = vmul.f32 %v7256, %v7258
  %v7260 = vadd.f32 %v7256, %v7259
  %vm7261 = vweird.f32 %v7108
  %vm7262 = vweird.f32 %v7256
  %vm7263 = vmor %vm7261, %vm7262
  %v7264 = vsel %vm7263, %v7256, %v7260
  %v7265 = vand.u32 2147483647, %v7108
  %vm7266 = vcmp.eq.f32.partialorder %v7265, 8.507059e+37
  %v7267 = vand.u32 %v7108, 2147483648
  %v7268 = vor.u32 1.1754944e-38, %v7267
  %v7269 = vsel %vm7266, %v7268, %v7264
  %v7270 = vmul.f32 %v7204, %v7269
  %v7271 = vrcp.pop %v7109
  %v7272 = vmul.f32 %v7109, %v7271
  %v7273 = vsub.f32 1.0, %v7272
  %v7274 = vmul.f32 %v7271, %v7273
  %v7275 = vadd.f32 %v7271, %v7274
  %vm7276 = vweird.f32 %v7109
  %vm7277 = vweird.f32 %v7271
  %vm7278 = vmor %vm7276, %vm7277
  %v7279 = vsel %vm7278, %v7271, %v7275
  %v7280 = vand.u32 2147483647, %v7109
  %vm7281 = vcmp.eq.f32.partialorder %v7280, 8.507059e+37
  %v7282 = vand.u32 %v7109, 2147483648
  %v7283 = vor.u32 1.1754944e-38, %v7282
  %v7284 = vsel %vm7281, %v7283, %v7279
  %v7285 = vmul.f32 %v7205, %v7284
  %v7286 = vrcp.pop %v7110
  %v7287 = vmul.f32 %v7110, %v7286
  %v7288 = vsub.f32 1.0, %v7287
  %v7289 = vmul.f32 %v7286, %v7288
  %v7290 = vadd.f32 %v7286, %v7289
  %vm7291 = vweird.f32 %v7110
  %vm7292 = vweird.f32 %v7286
  %vm7293 = vmor %vm7291, %vm7292
  %v7294 = vsel %vm7293, %v7286, %v7290
  %v7295 = vand.u32 2147483647, %v7110
  %vm7296 = vcmp.eq.f32.partialorder %v7295, 8.507059e+37
  %v7297 = vand.u32 %v7110, 2147483648
  %v7298 = vor.u32 1.1754944e-38, %v7297
  %v7299 = vsel %vm7296, %v7298, %v7294
  %v7300 = vmul.f32 %v7206, %v7299
  %v7301 = vrcp.pop %v7111
  %v7302 = vmul.f32 %v7111, %v7301
  %v7303 = vsub.f32 1.0, %v7302
  %v7304 = vmul.f32 %v7301, %v7303
  %v7305 = vadd.f32 %v7301, %v7304
  %vm7306 = vweird.f32 %v7111
  %vm7307 = vweird.f32 %v7301
  %vm7308 = vmor %vm7306, %vm7307
  %v7309 = vsel %vm7308, %v7301, %v7305
  %v7310 = vand.u32 2147483647, %v7111
  %vm7311 = vcmp.eq.f32.partialorder %v7310, 8.507059e+37
  %v7312 = vand.u32 %v7111, 2147483648
  %v7313 = vor.u32 1.1754944e-38, %v7312
  %v7314 = vsel %vm7311, %v7313, %v7309
  %v7315 = vmul.f32 %v7207, %v7314
  %v7316 = vrcp.pop %v7112
  %v7317 = vmul.f32 %v7112, %v7316
  %v7318 = vsub.f32 1.0, %v7317
  %v7319 = vmul.f32 %v7316, %v7318
  %v7320 = vadd.f32 %v7316, %v7319
  %vm7321 = vweird.f32 %v7112
  %vm7322 = vweird.f32 %v7316
  %vm7323 = vmor %vm7321, %vm7322
  %v7324 = vsel %vm7323, %v7316, %v7320
  %v7325 = vand.u32 2147483647, %v7112
  %vm7326 = vcmp.eq.f32.partialorder %v7325, 8.507059e+37
  %v7327 = vand.u32 %v7112, 2147483648
  %v7328 = vor.u32 1.1754944e-38, %v7327
  %v7329 = vsel %vm7326, %v7328, %v7324
  %v7330 = vmul.f32 %v7208, %v7329
  %v7331 = vrcp.pop %v7113
  %v7332 = vmul.f32 %v7113, %v7331
  %v7333 = vsub.f32 1.0, %v7332
  %v7334 = vmul.f32 %v7331, %v7333
  %v7335 = vadd.f32 %v7331, %v7334
  %vm7336 = vweird.f32 %v7113
  %vm7337 = vweird.f32 %v7331
  %vm7338 = vmor %vm7336, %vm7337
  %v7339 = vsel %vm7338, %v7331, %v7335
  %v7340 = vand.u32 2147483647, %v7113
  %vm7341 = vcmp.eq.f32.partialorder %v7340, 8.507059e+37
  %v7342 = vand.u32 %v7113, 2147483648
  %v7343 = vor.u32 1.1754944e-38, %v7342
  %v7344 = vsel %vm7341, %v7343, %v7339
  %v7345 = vmul.f32 %v7209, %v7344
  %v7346 = vrcp.pop %v7114
  %v7347 = vmul.f32 %v7114, %v7346
  %v7348 = vsub.f32 1.0, %v7347
  %v7349 = vmul.f32 %v7346, %v7348
  %v7350 = vadd.f32 %v7346, %v7349
  %vm7351 = vweird.f32 %v7114
  %vm7352 = vweird.f32 %v7346
  %vm7353 = vmor %vm7351, %vm7352
  %v7354 = vsel %vm7353, %v7346, %v7350
  %v7355 = vand.u32 2147483647, %v7114
  %vm7356 = vcmp.eq.f32.partialorder %v7355, 8.507059e+37
  %v7357 = vand.u32 %v7114, 2147483648
  %v7358 = vor.u32 1.1754944e-38, %v7357
  %v7359 = vsel %vm7356, %v7358, %v7354
  %v7360 = vmul.f32 %v7210, %v7359
  %v7361 = vrcp.pop %v7115
  %v7362 = vmul.f32 %v7115, %v7361
  %v7363 = vsub.f32 1.0, %v7362
  %v7364 = vmul.f32 %v7361, %v7363
  %v7365 = vadd.f32 %v7361, %v7364
  %vm7366 = vweird.f32 %v7115
  %vm7367 = vweird.f32 %v7361
  %vm7368 = vmor %vm7366, %vm7367
  %v7369 = vsel %vm7368, %v7361, %v7365
  %v7370 = vand.u32 2147483647, %v7115
  %vm7371 = vcmp.eq.f32.partialorder %v7370, 8.507059e+37
  %v7372 = vand.u32 %v7115, 2147483648
  %v7373 = vor.u32 1.1754944e-38, %v7372
  %v7374 = vsel %vm7371, %v7373, %v7369
  %v7375 = vmul.f32 %v7211, %v7374
  %v7376 = vrcp.pop %v7116
  %v7377 = vmul.f32 %v7116, %v7376
  %v7378 = vsub.f32 1.0, %v7377
  %v7379 = vmul.f32 %v7376, %v7378
  %v7380 = vadd.f32 %v7376, %v7379
  %vm7381 = vweird.f32 %v7116
  %vm7382 = vweird.f32 %v7376
  %vm7383 = vmor %vm7381, %vm7382
  %v7384 = vsel %vm7383, %v7376, %v7380
  %v7385 = vand.u32 2147483647, %v7116
  %vm7386 = vcmp.eq.f32.partialorder %v7385, 8.507059e+37
  %v7387 = vand.u32 %v7116, 2147483648
  %v7388 = vor.u32 1.1754944e-38, %v7387
  %v7389 = vsel %vm7386, %v7388, %v7384
  %v7390 = vmul.f32 %v7212, %v7389
  %v7391 = vrcp.pop %v7117
  %v7392 = vmul.f32 %v7117, %v7391
  %v7393 = vsub.f32 1.0, %v7392
  %v7394 = vmul.f32 %v7391, %v7393
  %v7395 = vadd.f32 %v7391, %v7394
  %vm7396 = vweird.f32 %v7117
  %vm7397 = vweird.f32 %v7391
  %vm7398 = vmor %vm7396, %vm7397
  %v7399 = vsel %vm7398, %v7391, %v7395
  %v7400 = vand.u32 2147483647, %v7117
  %vm7401 = vcmp.eq.f32.partialorder %v7400, 8.507059e+37
  %v7402 = vand.u32 %v7117, 2147483648
  %v7403 = vor.u32 1.1754944e-38, %v7402
  %v7404 = vsel %vm7401, %v7403, %v7399
  %v7405 = vmul.f32 %v7213, %v7404
  %v7406 = vrcp.pop %v7118
  %v7407 = vmul.f32 %v7118, %v7406
  %v7408 = vsub.f32 1.0, %v7407
  %v7409 = vmul.f32 %v7406, %v7408
  %v7410 = vadd.f32 %v7406, %v7409
  %vm7411 = vweird.f32 %v7118
  %vm7412 = vweird.f32 %v7406
  %vm7413 = vmor %vm7411, %vm7412
  %v7414 = vsel %vm7413, %v7406, %v7410
  %v7415 = vand.u32 2147483647, %v7118
  %vm7416 = vcmp.eq.f32.partialorder %v7415, 8.507059e+37
  %v7417 = vand.u32 %v7118, 2147483648
  %v7418 = vor.u32 1.1754944e-38, %v7417
  %v7419 = vsel %vm7416, %v7418, %v7414
  %v7420 = vmul.f32 %v7214, %v7419
  %v7421 = vrcp.pop %v7119
  %v7422 = vmul.f32 %v7119, %v7421
  %v7423 = vsub.f32 1.0, %v7422
  %v7424 = vmul.f32 %v7421, %v7423
  %v7425 = vadd.f32 %v7421, %v7424
  %vm7426 = vweird.f32 %v7119
  %vm7427 = vweird.f32 %v7421
  %vm7428 = vmor %vm7426, %vm7427
  %v7429 = vsel %vm7428, %v7421, %v7425
  %v7430 = vand.u32 2147483647, %v7119
  %vm7431 = vcmp.eq.f32.partialorder %v7430, 8.507059e+37
  %v7432 = vand.u32 %v7119, 2147483648
  %v7433 = vor.u32 1.1754944e-38, %v7432
  %v7434 = vsel %vm7431, %v7433, %v7429
  %v7435 = vmul.f32 %v7215, %v7434
  %v7436 = vrcp.pop %v7120
  %v7437 = vmul.f32 %v7120, %v7436
  %v7438 = vsub.f32 1.0, %v7437
  %v7439 = vmul.f32 %v7436, %v7438
  %v7440 = vadd.f32 %v7436, %v7439
  %vm7441 = vweird.f32 %v7120
  %vm7442 = vweird.f32 %v7436
  %vm7443 = vmor %vm7441, %vm7442
  %v7444 = vsel %vm7443, %v7436, %v7440
  %v7445 = vand.u32 2147483647, %v7120
  %vm7446 = vcmp.eq.f32.partialorder %v7445, 8.507059e+37
  %v7447 = vand.u32 %v7120, 2147483648
  %v7448 = vor.u32 1.1754944e-38, %v7447
  %v7449 = vsel %vm7446, %v7448, %v7444
  %v7450 = vmul.f32 %v7216, %v7449
  %v7451 = vrcp.pop %v7121
  %v7452 = vmul.f32 %v7121, %v7451
  %v7453 = vsub.f32 1.0, %v7452
  %v7454 = vmul.f32 %v7451, %v7453
  %v7455 = vadd.f32 %v7451, %v7454
  %vm7456 = vweird.f32 %v7121
  %vm7457 = vweird.f32 %v7451
  %vm7458 = vmor %vm7456, %vm7457
  %v7459 = vsel %vm7458, %v7451, %v7455
  %v7460 = vand.u32 2147483647, %v7121
  %vm7461 = vcmp.eq.f32.partialorder %v7460, 8.507059e+37
  %v7462 = vand.u32 %v7121, 2147483648
  %v7463 = vor.u32 1.1754944e-38, %v7462
  %v7464 = vsel %vm7461, %v7463, %v7459
  %v7465 = vmul.f32 %v7217, %v7464
  %v7466 = vrcp.pop %v7122
  %v7467 = vmul.f32 %v7122, %v7466
  %v7468 = vsub.f32 1.0, %v7467
  %v7469 = vmul.f32 %v7466, %v7468
  %v7470 = vadd.f32 %v7466, %v7469
  %vm7471 = vweird.f32 %v7122
  %vm7472 = vweird.f32 %v7466
  %vm7473 = vmor %vm7471, %vm7472
  %v7474 = vsel %vm7473, %v7466, %v7470
  %v7475 = vand.u32 2147483647, %v7122
  %vm7476 = vcmp.eq.f32.partialorder %v7475, 8.507059e+37
  %v7477 = vand.u32 %v7122, 2147483648
  %v7478 = vor.u32 1.1754944e-38, %v7477
  %v7479 = vsel %vm7476, %v7478, %v7474
  %v7480 = vmul.f32 %v7218, %v7479
  %v7481 = vrcp.pop %v7123
  %v7482 = vmul.f32 %v7123, %v7481
  %v7483 = vsub.f32 1.0, %v7482
  %v7484 = vmul.f32 %v7481, %v7483
  %v7485 = vadd.f32 %v7481, %v7484
  %vm7486 = vweird.f32 %v7123
  %vm7487 = vweird.f32 %v7481
  %vm7488 = vmor %vm7486, %vm7487
  %v7489 = vsel %vm7488, %v7481, %v7485
  %v7490 = vand.u32 2147483647, %v7123
  %vm7491 = vcmp.eq.f32.partialorder %v7490, 8.507059e+37
  %v7492 = vand.u32 %v7123, 2147483648
  %v7493 = vor.u32 1.1754944e-38, %v7492
  %v7494 = vsel %vm7491, %v7493, %v7489
  %v7495 = vmul.f32 %v7219, %v7494
  %v7496 = vrcp.pop %v7124
  %v7497 = vmul.f32 %v7124, %v7496
  %v7498 = vsub.f32 1.0, %v7497
  %v7499 = vmul.f32 %v7496, %v7498
  %v7500 = vadd.f32 %v7496, %v7499
  %vm7501 = vweird.f32 %v7124
  %vm7502 = vweird.f32 %v7496
  %vm7503 = vmor %vm7501, %vm7502
  %v7504 = vsel %vm7503, %v7496, %v7500
  %v7505 = vand.u32 2147483647, %v7124
  %vm7506 = vcmp.eq.f32.partialorder %v7505, 8.507059e+37
  %v7507 = vand.u32 %v7124, 2147483648
  %v7508 = vor.u32 1.1754944e-38, %v7507
  %v7509 = vsel %vm7506, %v7508, %v7504
  %v7510 = vmul.f32 %v7220, %v7509
  %v7511 = vrcp.pop %v7125
  %v7512 = vmul.f32 %v7125, %v7511
  %v7513 = vsub.f32 1.0, %v7512
  %v7514 = vmul.f32 %v7511, %v7513
  %v7515 = vadd.f32 %v7511, %v7514
  %vm7516 = vweird.f32 %v7125
  %vm7517 = vweird.f32 %v7511
  %vm7518 = vmor %vm7516, %vm7517
  %v7519 = vsel %vm7518, %v7511, %v7515
  %v7520 = vand.u32 2147483647, %v7125
  %vm7521 = vcmp.eq.f32.partialorder %v7520, 8.507059e+37
  %v7522 = vand.u32 %v7125, 2147483648
  %v7523 = vor.u32 1.1754944e-38, %v7522
  %v7524 = vsel %vm7521, %v7523, %v7519
  %v7525 = vmul.f32 %v7221, %v7524
  %v7526 = vrcp.pop %v7126
  %v7527 = vmul.f32 %v7126, %v7526
  %v7528 = vsub.f32 1.0, %v7527
  %v7529 = vmul.f32 %v7526, %v7528
  %v7530 = vadd.f32 %v7526, %v7529
  %vm7531 = vweird.f32 %v7126
  %vm7532 = vweird.f32 %v7526
  %vm7533 = vmor %vm7531, %vm7532
  %v7534 = vsel %vm7533, %v7526, %v7530
  %v7535 = vand.u32 2147483647, %v7126
  %vm7536 = vcmp.eq.f32.partialorder %v7535, 8.507059e+37
  %v7537 = vand.u32 %v7126, 2147483648
  %v7538 = vor.u32 1.1754944e-38, %v7537
  %v7539 = vsel %vm7536, %v7538, %v7534
  %v7540 = vmul.f32 %v7222, %v7539
  %v7541 = vrcp.pop %v7127
  %v7542 = vmul.f32 %v7127, %v7541
  %v7543 = vsub.f32 1.0, %v7542
  %v7544 = vmul.f32 %v7541, %v7543
  %v7545 = vadd.f32 %v7541, %v7544
  %vm7546 = vweird.f32 %v7127
  %vm7547 = vweird.f32 %v7541
  %vm7548 = vmor %vm7546, %vm7547
  %v7549 = vsel %vm7548, %v7541, %v7545
  %v7550 = vand.u32 2147483647, %v7127
  %vm7551 = vcmp.eq.f32.partialorder %v7550, 8.507059e+37
  %v7552 = vand.u32 %v7127, 2147483648
  %v7553 = vor.u32 1.1754944e-38, %v7552
  %v7554 = vsel %vm7551, %v7553, %v7549
  %v7555 = vmul.f32 %v7223, %v7554
  %v7556 = vrcp.pop %v7128
  %v7557 = vmul.f32 %v7128, %v7556
  %v7558 = vsub.f32 1.0, %v7557
  %v7559 = vmul.f32 %v7556, %v7558
  %v7560 = vadd.f32 %v7556, %v7559
  %vm7561 = vweird.f32 %v7128
  %vm7562 = vweird.f32 %v7556
  %vm7563 = vmor %vm7561, %vm7562
  %v7564 = vsel %vm7563, %v7556, %v7560
  %v7565 = vand.u32 2147483647, %v7128
  %vm7566 = vcmp.eq.f32.partialorder %v7565, 8.507059e+37
  %v7567 = vand.u32 %v7128, 2147483648
  %v7568 = vor.u32 1.1754944e-38, %v7567
  %v7569 = vsel %vm7566, %v7568, %v7564
  %v7570 = vmul.f32 %v7224, %v7569
  %v7571 = vrcp.pop %v7129
  %v7572 = vmul.f32 %v7129, %v7571
  %v7573 = vsub.f32 1.0, %v7572
  %v7574 = vmul.f32 %v7571, %v7573
  %v7575 = vadd.f32 %v7571, %v7574
  %vm7576 = vweird.f32 %v7129
  %vm7577 = vweird.f32 %v7571
  %vm7578 = vmor %vm7576, %vm7577
  %v7579 = vsel %vm7578, %v7571, %v7575
  %v7580 = vand.u32 2147483647, %v7129
  %vm7581 = vcmp.eq.f32.partialorder %v7580, 8.507059e+37
  %v7582 = vand.u32 %v7129, 2147483648
  %v7583 = vor.u32 1.1754944e-38, %v7582
  %v7584 = vsel %vm7581, %v7583, %v7579
  %v7585 = vmul.f32 %v7225, %v7584
  %v7586 = vsel %vm7178, 0.0, %v7240
  %v7587 = vsel %vm7179, 0.0, %v7255
  %v7588 = vsel %vm7180, 0.0, %v7270
  %v7589 = vsel %vm7181, 0.0, %v7285
  %v7590 = vsel %vm7182, 0.0, %v7300
  %v7591 = vsel %vm7183, 0.0, %v7315
  %v7592 = vsel %vm7184, 0.0, %v7330
  %v7593 = vsel %vm7185, 0.0, %v7345
  %v7594 = vsel %vm7186, 0.0, %v7360
  %v7595 = vsel %vm7187, 0.0, %v7375
  %v7596 = vsel %vm7188, 0.0, %v7390
  %v7597 = vsel %vm7189, 0.0, %v7405
  %v7598 = vsel %vm7190, 0.0, %v7420
  %v7599 = vsel %vm7191, 0.0, %v7435
  %v7600 = vsel %vm7192, 0.0, %v7450
  %v7601 = vsel %vm7193, 0.0, %v7465
  %v7602 = vsel %vm7194, 0.0, %v7480
  %v7603 = vsel %vm7195, 0.0, %v7495
  %v7604 = vsel %vm7196, 0.0, %v7510
  %v7605 = vsel %vm7197, 0.0, %v7525
  %v7606 = vsel %vm7198, 0.0, %v7540
  %v7607 = vsel %vm7199, 0.0, %v7555
  %v7608 = vsel %vm7200, 0.0, %v7570
  %v7609 = vsel %vm7201, 0.0, %v7585
  %v7634 = vrot.slane %v7586, 3
  %v7635 = vrot.slane %v7587, 3
  %v7636 = vsel %vm6284, %v7634, %v7635
  %v7637 = vrot.slane %v7588, 3
  %v7638 = vsel %vm6284, %v7635, %v7637
  %v7639 = vrot.slane %v7589, 3
  %v7640 = vsel %vm6284, %v7637, %v7639
  %v7641 = vrot.slane %v7590, 3
  %v7642 = vsel %vm6284, %v7639, %v7641
  %v7643 = vrot.slane %v7591, 3
  %v7644 = vsel %vm6284, %v7641, %v7643
  %v7645 = vrot.slane %v7592, 3
  %v7646 = vsel %vm6284, %v7643, %v7645
  %v7647 = vrot.slane %v7593, 3
  %v7648 = vsel %vm6284, %v7645, %v7647
  %v7649 = vrot.slane %v7594, 3
  %v7650 = vsel %vm6284, %v7647, %v7649
  %v7651 = vrot.slane %v7595, 3
  %v7652 = vsel %vm6284, %v7649, %v7651
  %v7653 = vrot.slane %v7596, 3
  %v7654 = vsel %vm6284, %v7651, %v7653
  %v7655 = vrot.slane %v7597, 3
  %v7656 = vsel %vm6284, %v7653, %v7655
  %v7657 = vrot.slane %v7598, 3
  %v7658 = vsel %vm6284, %v7655, %v7657
  %v7659 = vrot.slane %v7599, 3
  %v7660 = vsel %vm6284, %v7657, %v7659
  %v7661 = vrot.slane %v7600, 3
  %v7662 = vsel %vm6284, %v7659, %v7661
  %v7663 = vrot.slane %v7601, 3
  %v7664 = vsel %vm6284, %v7661, %v7663
  %v7665 = vrot.slane %v7602, 3
  %v7666 = vsel %vm6284, %v7663, %v7665
  %v7667 = vrot.slane %v7603, 3
  %v7668 = vsel %vm6284, %v7665, %v7667
  %v7669 = vrot.slane %v7604, 3
  %v7670 = vsel %vm6284, %v7667, %v7669
  %v7671 = vrot.slane %v7605, 3
  %v7672 = vsel %vm6284, %v7669, %v7671
  %v7673 = vrot.slane %v7606, 3
  %v7674 = vsel %vm6284, %v7671, %v7673
  %v7675 = vrot.slane %v7607, 3
  %v7676 = vsel %vm6284, %v7673, %v7675
  %v7677 = vrot.slane %v7608, 3
  %v7678 = vsel %vm6284, %v7675, %v7677
  %v7679 = vrot.slane %v7609, 3
  %v7680 = vsel %vm6284, %v7677, %v7679
  %v7705 = vsel %vm5591, 0.0, %v7636
  %v7706 = vsel %vm6172, %v7679, 0.0
  %vm7707 = vcmp.eq.s32.totalorder %v5106, %v6795
  %vm7708 = vcmp.eq.s32.totalorder %v6147, %v6795
  %vm7709 = vcmp.eq.s32.totalorder %v5107, %v6795
  %vm7710 = vcmp.eq.s32.totalorder %v5108, %v6795
  %vm7711 = vcmp.eq.s32.totalorder %v5109, %v6795
  %vm7712 = vcmp.eq.s32.totalorder %v5110, %v6795
  %vm7713 = vcmp.eq.s32.totalorder %v5111, %v6795
  %vm7714 = vcmp.eq.s32.totalorder %v5112, %v6795
  %vm7715 = vcmp.eq.s32.totalorder %v5113, %v6795
  %vm7716 = vcmp.eq.s32.totalorder %v5114, %v6795
  %vm7717 = vcmp.eq.s32.totalorder %v5115, %v6795
  %vm7718 = vcmp.eq.s32.totalorder %v5116, %v6795
  %vm7719 = vcmp.eq.s32.totalorder %v5117, %v6795
  %vm7720 = vcmp.eq.s32.totalorder %v5118, %v6795
  %vm7721 = vcmp.eq.s32.totalorder %v5119, %v6795
  %vm7722 = vcmp.eq.s32.totalorder %v5120, %v6795
  %vm7723 = vcmp.eq.s32.totalorder %v5121, %v6795
  %vm7724 = vcmp.eq.s32.totalorder %v5122, %v6795
  %vm7725 = vcmp.eq.s32.totalorder %v5123, %v6795
  %vm7726 = vcmp.eq.s32.totalorder %v5124, %v6795
  %vm7727 = vcmp.eq.s32.totalorder %v5125, %v6795
  %vm7728 = vcmp.eq.s32.totalorder %v5126, %v6795
  %vm7729 = vcmp.eq.s32.totalorder %v5127, %v6795
  %vm7730 = vcmp.eq.s32.totalorder %v5128, %v6795
  %v7731 = vsel %vm7707, %v7705, 0.0
  %v7732 = vsel %vm7708, %v7638, 0.0
  %v7733 = vsel %vm7709, %v7640, 0.0
  %v7734 = vsel %vm7710, %v7642, 0.0
  %v7735 = vsel %vm7711, %v7644, 0.0
  %v7736 = vsel %vm7712, %v7646, 0.0
  %v7737 = vsel %vm7713, %v7648, 0.0
  %v7738 = vsel %vm7714, %v7650, 0.0
  %v7739 = vsel %vm7715, %v7652, 0.0
  %v7740 = vsel %vm7716, %v7654, 0.0
  %v7741 = vsel %vm7717, %v7656, 0.0
  %v7742 = vsel %vm7718, %v7658, 0.0
  %v7743 = vsel %vm7719, %v7660, 0.0
  %v7744 = vsel %vm7720, %v7662, 0.0
  %v7745 = vsel %vm7721, %v7664, 0.0
  %v7746 = vsel %vm7722, %v7666, 0.0
  %v7747 = vsel %vm7723, %v7668, 0.0
  %v7748 = vsel %vm7724, %v7670, 0.0
  %v7749 = vsel %vm7725, %v7672, 0.0
  %v7750 = vsel %vm7726, %v7674, 0.0
  %v7751 = vsel %vm7727, %v7676, 0.0
  %v7752 = vsel %vm7728, %v7678, 0.0
  %v7753 = vsel %vm7729, %v7680, 0.0
  %v7754 = vsel %vm7730, %v7706, 0.0
  %v7755 = vadd.f32 %v7731, %v7732
  %v7756 = vadd.f32 %v7755, %v7733
  %v7757 = vadd.f32 %v7756, %v7734
  %v7758 = vadd.f32 %v7757, %v7735
  %v7759 = vadd.f32 %v7758, %v7736
  %v7760 = vadd.f32 %v7759, %v7737
  %v7761 = vadd.f32 %v7760, %v7738
  %v7762 = vadd.f32 %v7761, %v7739
  %v7763 = vadd.f32 %v7762, %v7740
  %v7764 = vadd.f32 %v7763, %v7741
  %v7765 = vadd.f32 %v7764, %v7742
  %v7766 = vadd.f32 %v7765, %v7743
  %v7767 = vadd.f32 %v7766, %v7744
  %v7768 = vadd.f32 %v7767, %v7745
  %v7769 = vadd.f32 %v7768, %v7746
  %v7770 = vadd.f32 %v7769, %v7747
  %v7771 = vadd.f32 %v7770, %v7748
  %v7772 = vadd.f32 %v7771, %v7749
  %v7773 = vadd.f32 %v7772, %v7750
  %v7774 = vadd.f32 %v7773, %v7751
  %v7775 = vadd.f32 %v7774, %v7752
  %v7776 = vadd.f32 %v7775, %v7753
  %v7777 = vsel %vm6775, %v7754, 0.0
  %v7778 = vadd.f32 %v7776, %v7777
  %v7779 = vrot.slane %v7778, 4
  %v7780 = vadd.f32 %v7778, %v7779
  %v7781 = vrot.slane %v7780, 2
  %v7782 = vadd.f32 %v7780, %v7781
  %v7783 = vrot.slane %v7782, 1
  %v7784 = vadd.f32 %v7782, %v7783
  %v7785 = vcvt.s32.f32 %v6795
  %v7786 = vadd.f32 %v7785, 27.0
  %v7787 = vadd.f32 %v7786, %v7784
  %vm7788 = vcmp.gt.s32.totalorder %v6795, 0
  %v7789 = vrcp.pop %v7787
  %v7790 = vmul.f32 %v7787, %v7789
  %v7791 = vsub.f32 1.0, %v7790
  %v7792 = vmul.f32 %v7789, %v7791
  %v7793 = vadd.f32 %v7789, %v7792
  %vm7794 = vweird.f32 %v7787
  %vm7795 = vweird.f32 %v7789
  %vm7796 = vmor %vm7794, %vm7795
  %v7797 = vsel %vm7796, %v7789, %v7793
  %v7798 = vand.u32 2147483647, %v7787
  %vm7799 = vcmp.eq.f32.partialorder %v7798, 8.507059e+37
  %v7800 = vand.u32 %v7787, 2147483648
  %v7801 = vor.u32 1.1754944e-38, %v7800
  %v7802 = vsel %vm7799, %v7801, %v7797
  %v7803 = vmul.f32 16000.0, %v7802
  %v7804 = vsel %vm7788, %v7803, 0.0
  %7805 = vst [vmem:[%s3] sm:$0x1] %v7804
  // Predicated region
  $region63: #{yin_pitch.1} parent=0 // pred_check
    _
  $region64: #{yin_pitch.1} parent=0 // pred_check_branch
    %7807 = sbr.rel (0) target = $region66
  $region65: #{yin_pitch.1} parent=0 // pred_region
    _
  $region66: #{yin_pitch.1} parent=0 // pred_fallthru
    _
  // Predicated region
  $region67: #{yin_pitch.1} parent=0 // pred_check
    _
  $region68: #{yin_pitch.1} parent=0 // pred_check_branch
    %7809 = sbr.rel (0) target = $region70
  $region69: #{yin_pitch.1} parent=0 // pred_region
    _
  $region70: #{yin_pitch.1} parent=0 // pred_fallthru
    _

</llo_original>
